<compile_context>
chip_gen: v5e
topology: v5e:2x2
jax: 0.10.0
libtpu: 0.0.40
codegen_flags: <defaults>
</compile_context>

<pallas_src>
import functools

import numpy as np
import jax
import jax.numpy as jnp
from jax.experimental import pallas as pl
from jax.experimental.pallas import tpu as pltpu


_BN_EPS = 1e-5
_SQRT1_2 = 0.7071067811865476


# ----------------------------- tiling helpers ---------------------------------

def _pick_row_tile(m, cap=512):
    """Largest row tile (multiple of 8, divides m, <= min(cap, m//2)) so that the
    grid has >= 2 parallel steps where possible (v7x megacore)."""
    upper = min(cap, m // 2)
    t = (upper // 8) * 8
    while t >= 8:
        if m % t == 0:
            return t
        t -= 8
    return m  # single full-extent block (legal: equals the full array dim)


def _lane_fold(m, c):
    """Fold factor kf so a (m, c) array can be viewed as (m//kf, kf*c) with a
    lane-dense (>=512 wide) last dim.  Falls back to 1 when shapes don't allow."""
    if c < 512 and 512 % c == 0 and m % (512 // c) == 0:
        return 512 // c
    if c < 128 and 128 % c == 0 and m % (128 // c) == 0:
        return 128 // c
    return 1


# --------------------- fused 1x1 conv (+bias, +BN stats) ----------------------

def _make_conv1x1_kernel(n_in, k_dims, has_bias, want_stats):
    """1x1 conv over channels-last rows.  Multiple (act, weight) pairs are summed
    (equivalent to one matmul against the row-concatenated weight, so channel
    concats never need to be materialized).  Optionally emits per-row-tile
    partial BN statistics (sum, sum of squares) of the conv output."""

    def kernel(*refs):
        a_refs = refs[:n_in]
        w_refs = refs[n_in:2 * n_in]
        pos = 2 * n_in
        bias_ref = refs[pos] if has_bias else None
        if has_bias:
            pos += 1
        o_ref = refs[pos]

        acc = None
        for t in range(n_in):
            if k_dims[t] < 16:
                # Tiny contraction (e.g. image channels): the MXU would be >90%
                # idle -- do K broadcast-MACs on the VPU instead.
                a = a_refs[t][...]
                w = w_refs[t][...].astype(jnp.float32)
                part = a[:, 0:1] * w[0:1, :]
                for c in range(1, k_dims[t]):
                    part = part + a[:, c:c + 1] * w[c:c + 1, :]
            else:
                # bf16 MXU operands, f32 accumulation.
                part = jnp.dot(a_refs[t][...].astype(jnp.bfloat16), w_refs[t][...],
                               preferred_element_type=jnp.float32)
            acc = part if acc is None else acc + part

        if has_bias:
            acc = acc + bias_ref[...]
        o_ref[...] = acc

        if want_stats:
            s_ref, q_ref = refs[pos + 1], refs[pos + 2]
            s_ref[0] = jnp.sum(acc, axis=0, keepdims=True)
            q_ref[0] = jnp.sum(acc * acc, axis=0, keepdims=True)

    return kernel


def conv1x1_fused(acts, weights, bias=None, want_stats=False):
    """acts: list of (M, K_t) f32; weights: list of (K_t, N) (bf16 or f32).
    Returns out (M, N) f32, plus per-channel (sum, sumsq) of out if requested."""
    M = acts[0].shape[0]
    n_out = weights[0].shape[1]
    n_in = len(acts)
    k_dims = tuple(int(w.shape[0]) for w in weights)
    tm = _pick_row_tile(M)
    gi = M // tm

    kernel = _make_conv1x1_kernel(n_in, k_dims, bias is not None, want_stats)

    in_specs = [pl.BlockSpec((tm, k), lambda i: (i, 0)) for k in k_dims]
    in_specs += [pl.BlockSpec((k, n_out), lambda i: (0, 0)) for k in k_dims]
    args = list(acts) + list(weights)
    if bias is not None:
        in_specs.append(pl.BlockSpec((1, n_out), lambda i: (0, 0)))
        args.append(bias.reshape(1, n_out).astype(jnp.float32))

    if want_stats:
        out_shape = (jax.ShapeDtypeStruct((M, n_out), jnp.float32),
                     jax.ShapeDtypeStruct((gi, 1, n_out), jnp.float32),
                     jax.ShapeDtypeStruct((gi, 1, n_out), jnp.float32))
        out_specs = [pl.BlockSpec((tm, n_out), lambda i: (i, 0)),
                     pl.BlockSpec((1, 1, n_out), lambda i: (i, 0, 0)),
                     pl.BlockSpec((1, 1, n_out), lambda i: (i, 0, 0))]
    else:
        out_shape = jax.ShapeDtypeStruct((M, n_out), jnp.float32)
        out_specs = pl.BlockSpec((tm, n_out), lambda i: (i, 0))

    res = pl.pallas_call(
        kernel,
        out_shape=out_shape,
        grid_spec=pltpu.PrefetchScalarGridSpec(
            num_scalar_prefetch=0,
            grid=(gi,),
            in_specs=in_specs,
            out_specs=out_specs,
        ),
        compiler_params=pltpu.CompilerParams(dimension_semantics=("parallel",)),
    )(*args)

    if want_stats:
        out, s_p, q_p = res
        return out, jnp.sum(s_p, axis=(0, 1)), jnp.sum(q_p, axis=(0, 1))
    return res


# --------------------- BatchNorm(batch stats) + SiLU --------------------------

def _bn_silu_kernel(x_ref, s_ref, q_ref, g_ref, b_ref, o_ref, *, inv_m, eps):
    mean = s_ref[...] * inv_m
    var = jnp.maximum(q_ref[...] * inv_m - mean * mean, 0.0)   # clamp cancellation
    scale = g_ref[...] * jax.lax.rsqrt(var + eps)
    shift = b_ref[...] - mean * scale
    y = x_ref[...] * scale + shift
    # SiLU: x * sigmoid(x); reciprocal on the EUP slot.
    o_ref[...] = y * pl.reciprocal(1.0 + jnp.exp(-y), approx=True)


def bn_silu(y2d, s, q, gamma, beta):
    """Training-mode BatchNorm (from fused sum/sumsq) + SiLU on (M, C) data,
    executed on a lane-dense (rows, kf*C) view."""
    M, C = y2d.shape
    kf = _lane_fold(M, C)
    rows, width = M // kf, kf * C
    tr = _pick_row_tile(rows)

    def rep(v):
        return jnp.tile(v.reshape(1, C).astype(jnp.float32), (1, kf))

    kern = functools.partial(_bn_silu_kernel, inv_m=1.0 / M, eps=_BN_EPS)
    out = pl.pallas_call(
        kern,
        out_shape=jax.ShapeDtypeStruct((rows, width), jnp.float32),
        grid_spec=pltpu.PrefetchScalarGridSpec(
            num_scalar_prefetch=0,
            grid=(rows // tr,),
            in_specs=[pl.BlockSpec((tr, width), lambda i: (i, 0))]
                     + [pl.BlockSpec((1, width), lambda i: (0, 0))] * 4,
            out_specs=pl.BlockSpec((tr, width), lambda i: (i, 0)),
        ),
        compiler_params=pltpu.CompilerParams(dimension_semantics=("parallel",)),
    )(y2d.reshape(rows, width), rep(s), rep(q), rep(gamma), rep(beta))
    return out.reshape(M, C)


# --------------------- residual add + exact GELU -------------------------------

# exact erf via the float32 rational polynomial XLA uses (|err| ~ 1e-7)
_ERF_ALPHA = (0.00022905065861350646, 0.0034082910107109506,
              0.050955695062380861, 0.18520832239976145, 1.128379143519084)
_ERF_BETA = (-1.1791602954361697e-7, 0.000023547966471313185,
             0.0010179625278914885, 0.014070470171167667,
             0.11098505178285362, 0.49746925110067538, 1.0)


def _erf_f32(x):
    x = jnp.clip(x, -4.0, 4.0)
    x2 = x * x
    p = jnp.full_like(x2, _ERF_ALPHA[0])
    for c in _ERF_ALPHA[1:]:
        p = p * x2 + c
    q = jnp.full_like(x2, _ERF_BETA[0])
    for c in _ERF_BETA[1:]:
        q = q * x2 + c
    return x * p / q


def _add_gelu_kernel(a_ref, b_ref, o_ref):
    x = a_ref[...] + b_ref[...]
    o_ref[...] = 0.5 * x * (1.0 + _erf_f32(x * _SQRT1_2))


def add_gelu(a2d, b2d):
    M, C = a2d.shape
    kf = _lane_fold(M, C)
    rows, width = M // kf, kf * C
    tr = _pick_row_tile(rows)
    out = pl.pallas_call(
        _add_gelu_kernel,
        out_shape=jax.ShapeDtypeStruct((rows, width), jnp.float32),
        grid_spec=pltpu.PrefetchScalarGridSpec(
            num_scalar_prefetch=0,
            grid=(rows // tr,),
            in_specs=[pl.BlockSpec((tr, width), lambda i: (i, 0))] * 2,
            out_specs=pl.BlockSpec((tr, width), lambda i: (i, 0)),
        ),
        compiler_params=pltpu.CompilerParams(dimension_semantics=("parallel",)),
    )(a2d.reshape(rows, width), b2d.reshape(rows, width))
    return out.reshape(M, C)


# --------------------- depthwise 5x5 conv (+fused BN stats) --------------------

def _dwconv5_stats_kernel(x_ref, w_ref, o_ref, s_ref, q_ref, *, H, W):
    w = w_ref[...]                          # (25, C) weights loaded once
    acc = None
    for ky in range(5):
        for kx in range(5):
            tap = x_ref[0, ky:ky + H, kx:kx + W, :] * w[ky * 5 + kx]
            acc = tap if acc is None else acc + tap
    o_ref[0] = acc
    s_ref[0] = jnp.sum(acc, axis=(0, 1)).reshape(1, -1)
    q_ref[0] = jnp.sum(acc * acc, axis=(0, 1)).reshape(1, -1)


def dwconv5_stats(x_nhwc, w25):
    """Depthwise 5x5 conv (stride 1, pad 2, no bias) with fused per-image
    partial BN statistics; partials are reduced over N in the wrapper."""
    N, H, W, C = x_nhwc.shape
    xpad = jnp.pad(x_nhwc, ((0, 0), (2, 2), (2, 2), (0, 0)))
    kern = functools.partial(_dwconv5_stats_kernel, H=H, W=W)
    out, s_p, q_p = pl.pallas_call(
        kern,
        out_shape=(jax.ShapeDtypeStruct((N, H, W, C), jnp.float32),
                   jax.ShapeDtypeStruct((N, 1, C), jnp.float32),
                   jax.ShapeDtypeStruct((N, 1, C), jnp.float32)),
        grid_spec=pltpu.PrefetchScalarGridSpec(
            num_scalar_prefetch=0,
            grid=(N,),
            in_specs=[pl.BlockSpec((1, H + 4, W + 4, C), lambda n: (n, 0, 0, 0)),
                      pl.BlockSpec((25, C), lambda n: (0, 0))],
            out_specs=[pl.BlockSpec((1, H, W, C), lambda n: (n, 0, 0, 0)),
                       pl.BlockSpec((1, 1, C), lambda n: (n, 0, 0)),
                       pl.BlockSpec((1, 1, C), lambda n: (n, 0, 0))],
        ),
        compiler_params=pltpu.CompilerParams(dimension_semantics=("parallel",)),
    )(xpad, w25)
    return out, jnp.sum(s_p, axis=(0, 1)), jnp.sum(q_p, axis=(0, 1))


# ----------------------------- GSConv_jilian forward ---------------------------

def _gsconv_halves(p, inputs, weights, N, H, W):
    """One GSConv, computed in un-shuffled 'cat' space.
    Returns the two halves (cv1 branch, depthwise branch), each (M, c_)."""
    M = N * H * W
    c_ = weights[0].shape[1]
    y, s, q = conv1x1_fused(inputs, weights, want_stats=True)       # 1x1, no bias
    a = bn_silu(y, s, q, p["cv1_g"], p["cv1_be"])
    d_pre, s2, q2 = dwconv5_stats(a.reshape(N, H, W, c_), p["cv2_w"])
    d = bn_silu(d_pre.reshape(M, c_), s2, q2, p["cv2_g"], p["cv2_be"])
    return a, d


def gsconv_jilian_forward(pp, x_nchw):
    x = jnp.transpose(x_nchw, (0, 2, 3, 1)).astype(jnp.float32)     # NCHW -> NHWC
    N, H, W, _ = x.shape
    M = N * H * W
    c_ = pp["g2"]["cv1_w"].shape[1]

    # C1: 1x1 conv with bias (no BN / activation)
    x1 = conv1x1_fused([x.reshape(M, -1)], [pp["C1_w"]], bias=pp["C1_b"])

    # gsconv2 (applied first), kept as un-shuffled halves.
    a2, d2 = _gsconv_halves(pp["g2"], [x1], [pp["g2"]["cv1_w"]], N, H, W)

    # gsconv1 (applied second): its 1x1 conv consumes the *shuffled* gsconv2
    # output; the shuffle is absorbed into the pre-permuted, pre-split weight
    # rows, so no activation gather is needed here.
    a3, d3 = _gsconv_halves(pp["g1"], [a2, d2],
                            [pp["g1"]["cv1_w_a"], pp["g1"]["cv1_w_d"]], N, H, W)

    # GELU(x2 + x3) == shuffle(GELU(cat2 + cat3)); compute per half so the
    # concatenated cat tensors are never materialized.
    g_lo = add_gelu(a2, a3)
    g_hi = add_gelu(d2, d3)
    u = jnp.concatenate([g_lo.reshape(N, H, W, c_),
                         g_hi.reshape(N, H, W, c_)], axis=-1)
    out = jnp.take(u, pp["perm"], axis=-1)          # single final channel shuffle
    return jnp.transpose(out, (0, 3, 1, 2))         # NHWC -> NCHW


# ----------------------------- parameters --------------------------------------

class _KeyGen:
    def __init__(self, key):
        self.key = key

    def __call__(self):
        self.key, k = jax.random.split(self.key)
        return k


def init_params(key, ch_in=4, ch_out=64):
    """Nominal (PyTorch-layout-equivalent) parameters, channels-last matmul form."""
    kg = _KeyGen(key)
    c_ = ch_out // 2

    def w(shape, fan_in):
        return jax.random.normal(kg(), shape, jnp.float32) / float(np.sqrt(fan_in))

    def bn(c):
        return (1.0 + 0.1 * jax.random.normal(kg(), (c,), jnp.float32),
                0.1 * jax.random.normal(kg(), (c,), jnp.float32))

    def gsconv():
        g1, b1 = bn(c_)
        g2, b2 = bn(c_)
        return {"cv1_w": w((ch_out, c_), ch_out), "cv1_g": g1, "cv1_be": b1,
                "cv2_w": w((25, c_), 25), "cv2_g": g2, "cv2_be": b2}

    return {
        "C1_w": w((ch_in, ch_out), ch_in),
        "C1_b": 0.05 * jax.random.normal(kg(), (ch_out,), jnp.float32),
        "g2": gsconv(),   # self.gsconv2 -- applied first in forward()
        "g1": gsconv(),   # self.gsconv1 -- applied second
        # NOTE: self.C2 of GSConv_jilian is unused in forward() and omitted.
    }


def prepare_pallas_params(p, ch_out):
    """Pallas-side parameter prep: bf16 MXU weight copies, and the GSConv channel
    shuffle absorbed into gsconv1's 1x1-conv weight rows (done once, offline)."""
    c_ = ch_out // 2
    # shuffled[c] = cat[perm[c]]  (even channels first, then odd channels)
    perm = np.concatenate([np.arange(0, ch_out, 2), np.arange(1, ch_out, 2)])
    inv = np.argsort(perm)

    def as_mxu(wt):
        # bf16 operands for the MXU (f32 accumulation); tiny-K weights stay f32
        return wt.astype(jnp.bfloat16) if wt.shape[0] >= 16 else wt.astype(jnp.float32)

    g2 = dict(p["g2"])
    g2["cv1_w"] = as_mxu(p["g2"]["cv1_w"])

    w1 = p["g1"]["cv1_w"][inv]        # absorb the shuffle into the weight rows
    g1 = dict(p["g1"])
    del g1["cv1_w"]
    g1["cv1_w_a"] = as_mxu(w1[:c_])   # rows multiplying the un-shuffled first half
    g1["cv1_w_d"] = as_mxu(w1[c_:])   # rows multiplying the second (depthwise) half

    return {"C1_w": as_mxu(p["C1_w"]), "C1_b": p["C1_b"],
            "g2": g2, "g1": g1, "perm": jnp.asarray(perm, jnp.int32)}


# ----------------------------- pure-JAX reference ------------------------------

def _ref_bn_silu(y, gamma, beta):
    mean = jnp.mean(y, axis=(0, 1, 2))
    var = jnp.var(y, axis=(0, 1, 2))                 # biased, training-mode BN
    z = (y - mean) / jnp.sqrt(var + _BN_EPS) * gamma + beta
    return z * jax.nn.sigmoid(z)


def _ref_dw5(x, w25):
    N, H, W, C = x.shape
    xp = jnp.pad(x, ((0, 0), (2, 2), (2, 2), (0, 0)))
    acc = jnp.zeros_like(x)
    for ky in range(5):
        for kx in range(5):
            acc = acc + xp[:, ky:ky + H, kx:kx + W, :] * w25[ky * 5 + kx]
    return acc


def _ref_gsconv(x, gp):
    a = _ref_bn_silu(jnp.einsum("nhwc,cd->nhwd", x, gp["cv1_w"]),
                     gp["cv1_g"], gp["cv1_be"])
    d = _ref_bn_silu(_ref_dw5(a, gp["cv2_w"]), gp["cv2_g"], gp["cv2_be"])
    cat = jnp.concatenate([a, d], axis=-1)
    return jnp.concatenate([cat[..., 0::2], cat[..., 1::2]], axis=-1)  # torch shuffle


def reference_forward(p, x_nchw):
    x = jnp.transpose(x_nchw, (0, 2, 3, 1)).astype(jnp.float32)
    x1 = jnp.einsum("nhwc,cd->nhwd", x, p["C1_w"]) + p["C1_b"]
    x2 = _ref_gsconv(x1, p["g2"])
    x3 = _ref_gsconv(x2, p["g1"])
    out = jax.nn.gelu(x2 + x3, approximate=False)
    return jnp.transpose(out, (0, 3, 1, 2))


# ----------------------------- main ---------------------------------------------

if __name__ == "__main__":
    CH_IN, CH_OUT = 4, 64
    root = jax.random.PRNGKey(0)
    pkey, xkey = jax.random.split(root)

    params = init_params(pkey, CH_IN, CH_OUT)
    pallas_params = prepare_pallas_params(params, CH_OUT)
    x = jax.random.normal(xkey, (2, CH_IN, 16, 16), jnp.float32)

    fwd = jax.jit(gsconv_jilian_forward)
    out = jax.block_until_ready(fwd(pallas_params, x))

    assert out.shape == (2, CH_OUT, 16, 16), out.shape
    assert bool(jnp.all(jnp.isfinite(out)))

    # validate against a pure-JAX f32 reference (bf16 MXU operands + approx
    # reciprocal in SiLU -> loose tolerance)
    ref = jax.block_until_ready(jax.jit(reference_forward)(params, x))
    err = float(jnp.max(jnp.abs(out - ref)))
    assert err < 1e-1, f"max abs err vs reference: {err}"

    print("KERNEL_OK")
</pallas_src>

<mosaic_0001>
module attributes {stable_mosaic.version = 11 : i64} {
  func.func @kernel(%arg0: i32, %arg1: memref<256x4xf32, #tpu.memory_space<vmem>>, %arg2: memref<4x64xf32, #tpu.memory_space<vmem>>, %arg3: memref<1x64xf32, #tpu.memory_space<vmem>>, %arg4: memref<256x64xf32, #tpu.memory_space<vmem>>) attributes {dimension_semantics = [#tpu.dimension_semantics<parallel>], iteration_bounds = array<i64: 2>, scalar_prefetch = 0 : i64, scratch_operands = 0 : i64, tpu.core_type = #tpu.core_type<tc>, window_params = [{transform_indices = @transform_0, window_bounds = array<i64: 256, 4>}, {pipeline_mode = #tpu.pipeline_mode<synchronous>, transform_indices = @transform_1, window_bounds = array<i64: 4, 64>}, {pipeline_mode = #tpu.pipeline_mode<synchronous>, transform_indices = @transform_2, window_bounds = array<i64: 1, 64>}, {transform_indices = @transform_3, window_bounds = array<i64: 256, 64>}]} {
    %c0 = arith.constant 0 : index
    %c0_0 = arith.constant 0 : index
    %0 = vector.load %arg1[%c0, %c0_0] : memref<256x4xf32, #tpu.memory_space<vmem>>, vector<256x4xf32>
    %c0_1 = arith.constant 0 : index
    %c0_2 = arith.constant 0 : index
    %1 = vector.load %arg2[%c0_1, %c0_2] : memref<4x64xf32, #tpu.memory_space<vmem>>, vector<4x64xf32>
    %2 = vector.extract_strided_slice %0 {offsets = [0, 0], sizes = [256, 1], strides = [1, 1]} : vector<256x4xf32> to vector<256x1xf32>
    %3 = vector.extract_strided_slice %1 {offsets = [0, 0], sizes = [1, 64], strides = [1, 1]} : vector<4x64xf32> to vector<1x64xf32>
    %4 = vector.broadcast %2 : vector<256x1xf32> to vector<256x64xf32>
    %5 = vector.broadcast %3 : vector<1x64xf32> to vector<256x64xf32>
    %6 = arith.mulf %4, %5 : vector<256x64xf32>
    %7 = vector.extract_strided_slice %0 {offsets = [0, 1], sizes = [256, 1], strides = [1, 1]} : vector<256x4xf32> to vector<256x1xf32>
    %8 = vector.extract_strided_slice %1 {offsets = [1, 0], sizes = [1, 64], strides = [1, 1]} : vector<4x64xf32> to vector<1x64xf32>
    %9 = vector.broadcast %7 : vector<256x1xf32> to vector<256x64xf32>
    %10 = vector.broadcast %8 : vector<1x64xf32> to vector<256x64xf32>
    %11 = arith.mulf %9, %10 : vector<256x64xf32>
    %12 = arith.addf %6, %11 : vector<256x64xf32>
    %13 = vector.extract_strided_slice %0 {offsets = [0, 2], sizes = [256, 1], strides = [1, 1]} : vector<256x4xf32> to vector<256x1xf32>
    %14 = vector.extract_strided_slice %1 {offsets = [2, 0], sizes = [1, 64], strides = [1, 1]} : vector<4x64xf32> to vector<1x64xf32>
    %15 = vector.broadcast %13 : vector<256x1xf32> to vector<256x64xf32>
    %16 = vector.broadcast %14 : vector<1x64xf32> to vector<256x64xf32>
    %17 = arith.mulf %15, %16 : vector<256x64xf32>
    %18 = arith.addf %12, %17 : vector<256x64xf32>
    %19 = vector.extract_strided_slice %0 {offsets = [0, 3], sizes = [256, 1], strides = [1, 1]} : vector<256x4xf32> to vector<256x1xf32>
    %20 = vector.extract_strided_slice %1 {offsets = [3, 0], sizes = [1, 64], strides = [1, 1]} : vector<4x64xf32> to vector<1x64xf32>
    %21 = vector.broadcast %19 : vector<256x1xf32> to vector<256x64xf32>
    %22 = vector.broadcast %20 : vector<1x64xf32> to vector<256x64xf32>
    %23 = arith.mulf %21, %22 : vector<256x64xf32>
    %24 = arith.addf %18, %23 : vector<256x64xf32>
    %c0_3 = arith.constant 0 : index
    %c0_4 = arith.constant 0 : index
    %25 = vector.load %arg3[%c0_3, %c0_4] : memref<1x64xf32, #tpu.memory_space<vmem>>, vector<1x64xf32>
    %26 = vector.broadcast %25 : vector<1x64xf32> to vector<256x64xf32>
    %27 = arith.addf %24, %26 : vector<256x64xf32>
    %c0_5 = arith.constant 0 : index
    %c0_6 = arith.constant 0 : index
    %28 = vector.load %arg4[%c0_5, %c0_6] : memref<256x64xf32, #tpu.memory_space<vmem>>, vector<256x64xf32>
    tpu.vector_store %arg4[%c0_5, %c0_6], %27 {strides = array<i32>} : memref<256x64xf32, #tpu.memory_space<vmem>>, vector<256x64xf32>,
    return
  }
  func.func @transform_0(%arg0: i32) -> (i32, i32) {
    %c0_i32 = arith.constant 0 : i32
    %c0_i32_0 = arith.constant 0 : i32
    return %arg0, %c0_i32 : i32, i32
  }
  func.func @transform_1(%arg0: i32) -> (i32, i32) {
    %c0_i32 = arith.constant 0 : i32
    %c0_i32_0 = arith.constant 0 : i32
    %c0_i32_1 = arith.constant 0 : i32
    return %c0_i32, %c0_i32_0 : i32, i32
  }
  func.func @transform_2(%arg0: i32) -> (i32, i32) {
    %c0_i32 = arith.constant 0 : i32
    %c0_i32_0 = arith.constant 0 : i32
    %c0_i32_1 = arith.constant 0 : i32
    return %c0_i32, %c0_i32_0 : i32, i32
  }
  func.func @transform_3(%arg0: i32) -> (i32, i32) {
    %c0_i32 = arith.constant 0 : i32
    %c0_i32_0 = arith.constant 0 : i32
    return %arg0, %c0_i32 : i32, i32
  }
}

module attributes {stable_mosaic.version = 11 : i64} {
  func.func @kernel(%arg0: i32, %arg1: memref<256x64xf32, #tpu.memory_space<vmem>>, %arg2: memref<64x32xbf16, #tpu.memory_space<vmem>>, %arg3: memref<256x32xf32, #tpu.memory_space<vmem>>, %arg4: memref<1x1x32xf32, #tpu.memory_space<vmem>>, %arg5: memref<1x1x32xf32, #tpu.memory_space<vmem>>) attributes {dimension_semantics = [#tpu.dimension_semantics<parallel>], iteration_bounds = array<i64: 2>, scalar_prefetch = 0 : i64, scratch_operands = 0 : i64, tpu.core_type = #tpu.core_type<tc>, window_params = [{transform_indices = @transform_0, window_bounds = array<i64: 256, 64>}, {pipeline_mode = #tpu.pipeline_mode<synchronous>, transform_indices = @transform_1, window_bounds = array<i64: 64, 32>}, {transform_indices = @transform_2, window_bounds = array<i64: 256, 32>}, {transform_indices = @transform_3, window_bounds = array<i64: 1, 1, 32>}, {transform_indices = @transform_4, window_bounds = array<i64: 1, 1, 32>}]} {
    %c0 = arith.constant 0 : index
    %c0_0 = arith.constant 0 : index
    %0 = vector.load %arg1[%c0, %c0_0] : memref<256x64xf32, #tpu.memory_space<vmem>>, vector<256x64xf32>
    %1 = arith.truncf %0 : vector<256x64xf32> to vector<256x64xbf16>
    %c0_1 = arith.constant 0 : index
    %c0_2 = arith.constant 0 : index
    %2 = vector.load %arg2[%c0_1, %c0_2] : memref<64x32xbf16, #tpu.memory_space<vmem>>, vector<64x32xbf16>
    %cst = arith.constant dense<0.000000e+00> : vector<256x32xf32>
    %3 = tpu.matmul %1, %2, %cst {dimension_numbers = #tpu.dot_dimension_numbers<[1], [0], [0], [1], [0, 0, 1, 1], [], []>} : vector<256x64xbf16>, vector<64x32xbf16>, vector<256x32xf32> -> vector<256x32xf32>
    %c0_3 = arith.constant 0 : index
    %c0_4 = arith.constant 0 : index
    %4 = vector.load %arg3[%c0_3, %c0_4] : memref<256x32xf32, #tpu.memory_space<vmem>>, vector<256x32xf32>
    tpu.vector_store %arg3[%c0_3, %c0_4], %3 {strides = array<i32>} : memref<256x32xf32, #tpu.memory_space<vmem>>, vector<256x32xf32>,
    %cst_5 = arith.constant dense<0.000000e+00> : vector<32xf32>
    %5 = vector.multi_reduction <add>, %3, %cst_5 [0] : vector<256x32xf32> to vector<32xf32>
    %6 = vector.shape_cast %5 : vector<32xf32> to vector<1x32xf32>
    %c0_6 = arith.constant 0 : index
    %c0_7 = arith.constant 0 : index
    %c0_8 = arith.constant 0 : index
    %7 = vector.load %arg4[%c0_6, %c0_7, %c0_8] : memref<1x1x32xf32, #tpu.memory_space<vmem>>, vector<1x1x32xf32>
    %8 = vector.shape_cast %7 : vector<1x1x32xf32> to vector<1x32xf32>
    %9 = vector.shape_cast %6 : vector<1x32xf32> to vector<1x1x32xf32>
    tpu.vector_store %arg4[%c0_6, %c0_7, %c0_8], %9 {strides = array<i32>} : memref<1x1x32xf32, #tpu.memory_space<vmem>>, vector<1x1x32xf32>,
    %10 = arith.mulf %3, %3 : vector<256x32xf32>
    %cst_9 = arith.constant dense<0.000000e+00> : vector<32xf32>
    %11 = vector.multi_reduction <add>, %10, %cst_9 [0] : vector<256x32xf32> to vector<32xf32>
    %12 = vector.shape_cast %11 : vector<32xf32> to vector<1x32xf32>
    %c0_10 = arith.constant 0 : index
    %c0_11 = arith.constant 0 : index
    %c0_12 = arith.constant 0 : index
    %13 = vector.load %arg5[%c0_10, %c0_11, %c0_12] : memref<1x1x32xf32, #tpu.memory_space<vmem>>, vector<1x1x32xf32>
    %14 = vector.shape_cast %13 : vector<1x1x32xf32> to vector<1x32xf32>
    %15 = vector.shape_cast %12 : vector<1x32xf32> to vector<1x1x32xf32>
    tpu.vector_store %arg5[%c0_10, %c0_11, %c0_12], %15 {strides = array<i32>} : memref<1x1x32xf32, #tpu.memory_space<vmem>>, vector<1x1x32xf32>,
    return
  }
  func.func @transform_0(%arg0: i32) -> (i32, i32) {
    %c0_i32 = arith.constant 0 : i32
    %c0_i32_0 = arith.constant 0 : i32
    return %arg0, %c0_i32 : i32, i32
  }
  func.func @transform_1(%arg0: i32) -> (i32, i32) {
    %c0_i32 = arith.constant 0 : i32
    %c0_i32_0 = arith.constant 0 : i32
    %c0_i32_1 = arith.constant 0 : i32
    return %c0_i32, %c0_i32_0 : i32, i32
  }
  func.func @transform_2(%arg0: i32) -> (i32, i32) {
    %c0_i32 = arith.constant 0 : i32
    %c0_i32_0 = arith.constant 0 : i32
    return %arg0, %c0_i32 : i32, i32
  }
  func.func @transform_3(%arg0: i32) -> (i32, i32, i32) {
    %c0_i32 = arith.constant 0 : i32
    %c0_i32_0 = arith.constant 0 : i32
    %c0_i32_1 = arith.constant 0 : i32
    return %arg0, %c0_i32, %c0_i32_0 : i32, i32, i32
  }
  func.func @transform_4(%arg0: i32) -> (i32, i32, i32) {
    %c0_i32 = arith.constant 0 : i32
    %c0_i32_0 = arith.constant 0 : i32
    %c0_i32_1 = arith.constant 0 : i32
    return %arg0, %c0_i32, %c0_i32_0 : i32, i32, i32
  }
}

module attributes {stable_mosaic.version = 11 : i64} {
  func.func @_bn_silu_kernel(%arg0: i32, %arg1: memref<16x512xf32, #tpu.memory_space<vmem>>, %arg2: memref<1x512xf32, #tpu.memory_space<vmem>>, %arg3: memref<1x512xf32, #tpu.memory_space<vmem>>, %arg4: memref<1x512xf32, #tpu.memory_space<vmem>>, %arg5: memref<1x512xf32, #tpu.memory_space<vmem>>, %arg6: memref<16x512xf32, #tpu.memory_space<vmem>>) attributes {dimension_semantics = [#tpu.dimension_semantics<parallel>], iteration_bounds = array<i64: 2>, scalar_prefetch = 0 : i64, scratch_operands = 0 : i64, tpu.core_type = #tpu.core_type<tc>, window_params = [{transform_indices = @transform_0, window_bounds = array<i64: 16, 512>}, {pipeline_mode = #tpu.pipeline_mode<synchronous>, transform_indices = @transform_1, window_bounds = array<i64: 1, 512>}, {pipeline_mode = #tpu.pipeline_mode<synchronous>, transform_indices = @transform_2, window_bounds = array<i64: 1, 512>}, {pipeline_mode = #tpu.pipeline_mode<synchronous>, transform_indices = @transform_3, window_bounds = array<i64: 1, 512>}, {pipeline_mode = #tpu.pipeline_mode<synchronous>, transform_indices = @transform_4, window_bounds = array<i64: 1, 512>}, {transform_indices = @transform_5, window_bounds = array<i64: 16, 512>}]} {
    %c0 = arith.constant 0 : index
    %c0_0 = arith.constant 0 : index
    %0 = vector.load %arg2[%c0, %c0_0] : memref<1x512xf32, #tpu.memory_space<vmem>>, vector<1x512xf32>
    %cst = arith.constant 0.001953125 : f32
    %1 = vector.broadcast %cst : f32 to vector<1x512xf32>
    %2 = arith.mulf %0, %1 : vector<1x512xf32>
    %c0_1 = arith.constant 0 : index
    %c0_2 = arith.constant 0 : index
    %3 = vector.load %arg3[%c0_1, %c0_2] : memref<1x512xf32, #tpu.memory_space<vmem>>, vector<1x512xf32>
    %cst_3 = arith.constant 0.001953125 : f32
    %4 = vector.broadcast %cst_3 : f32 to vector<1x512xf32>
    %5 = arith.mulf %3, %4 : vector<1x512xf32>
    %6 = arith.mulf %2, %2 : vector<1x512xf32>
    %7 = arith.subf %5, %6 : vector<1x512xf32>
    %cst_4 = arith.constant 0.000000e+00 : f32
    %8 = vector.broadcast %cst_4 : f32 to vector<1x512xf32>
    %9 = arith.maximumf %7, %8 : vector<1x512xf32>
    %c0_5 = arith.constant 0 : index
    %c0_6 = arith.constant 0 : index
    %10 = vector.load %arg4[%c0_5, %c0_6] : memref<1x512xf32, #tpu.memory_space<vmem>>, vector<1x512xf32>
    %cst_7 = arith.constant 9.99999974E-6 : f32
    %11 = vector.broadcast %cst_7 : f32 to vector<1x512xf32>
    %12 = arith.addf %9, %11 : vector<1x512xf32>
    %13 = math.rsqrt %12 : vector<1x512xf32>
    %14 = arith.mulf %10, %13 : vector<1x512xf32>
    %c0_8 = arith.constant 0 : index
    %c0_9 = arith.constant 0 : index
    %15 = vector.load %arg5[%c0_8, %c0_9] : memref<1x512xf32, #tpu.memory_space<vmem>>, vector<1x512xf32>
    %16 = arith.mulf %2, %14 : vector<1x512xf32>
    %17 = arith.subf %15, %16 : vector<1x512xf32>
    %c0_10 = arith.constant 0 : index
    %c0_11 = arith.constant 0 : index
    %18 = vector.load %arg1[%c0_10, %c0_11] : memref<16x512xf32, #tpu.memory_space<vmem>>, vector<16x512xf32>
    %19 = vector.broadcast %14 : vector<1x512xf32> to vector<16x512xf32>
    %20 = arith.mulf %18, %19 : vector<16x512xf32>
    %21 = vector.broadcast %17 : vector<1x512xf32> to vector<16x512xf32>
    %22 = arith.addf %20, %21 : vector<16x512xf32>
    %cst_12 = arith.constant 0.000000e+00 : f32
    %23 = vector.broadcast %cst_12 : f32 to vector<16x512xf32>
    %24 = arith.subf %23, %22 : vector<16x512xf32>
    %25 = math.exp %24 : vector<16x512xf32>
    %cst_13 = arith.constant 1.000000e+00 : f32
    %26 = vector.broadcast %cst_13 : f32 to vector<16x512xf32>
    %27 = arith.addf %26, %25 : vector<16x512xf32>
    %28 = tpu.reciprocal %27 {approx = true} : vector<16x512xf32> -> vector<16x512xf32>
    %29 = arith.mulf %22, %28 : vector<16x512xf32>
    %c0_14 = arith.constant 0 : index
    %c0_15 = arith.constant 0 : index
    %30 = vector.load %arg6[%c0_14, %c0_15] : memref<16x512xf32, #tpu.memory_space<vmem>>, vector<16x512xf32>
    tpu.vector_store %arg6[%c0_14, %c0_15], %29 {strides = array<i32>} : memref<16x512xf32, #tpu.memory_space<vmem>>, vector<16x512xf32>,
    return
  }
  func.func @transform_0(%arg0: i32) -> (i32, i32) {
    %c0_i32 = arith.constant 0 : i32
    %c0_i32_0 = arith.constant 0 : i32
    return %arg0, %c0_i32 : i32, i32
  }
  func.func @transform_1(%arg0: i32) -> (i32, i32) {
    %c0_i32 = arith.constant 0 : i32
    %c0_i32_0 = arith.constant 0 : i32
    %c0_i32_1 = arith.constant 0 : i32
    return %c0_i32, %c0_i32_0 : i32, i32
  }
  func.func @transform_2(%arg0: i32) -> (i32, i32) {
    %c0_i32 = arith.constant 0 : i32
    %c0_i32_0 = arith.constant 0 : i32
    %c0_i32_1 = arith.constant 0 : i32
    return %c0_i32, %c0_i32_0 : i32, i32
  }
  func.func @transform_3(%arg0: i32) -> (i32, i32) {
    %c0_i32 = arith.constant 0 : i32
    %c0_i32_0 = arith.constant 0 : i32
    %c0_i32_1 = arith.constant 0 : i32
    return %c0_i32, %c0_i32_0 : i32, i32
  }
  func.func @transform_4(%arg0: i32) -> (i32, i32) {
    %c0_i32 = arith.constant 0 : i32
    %c0_i32_0 = arith.constant 0 : i32
    %c0_i32_1 = arith.constant 0 : i32
    return %c0_i32, %c0_i32_0 : i32, i32
  }
  func.func @transform_5(%arg0: i32) -> (i32, i32) {
    %c0_i32 = arith.constant 0 : i32
    %c0_i32_0 = arith.constant 0 : i32
    return %arg0, %c0_i32 : i32, i32
  }
}

module attributes {stable_mosaic.version = 11 : i64} {
  func.func @_dwconv5_stats_kernel(%arg0: i32, %arg1: memref<1x20x20x32xf32, #tpu.memory_space<vmem>>, %arg2: memref<25x32xf32, #tpu.memory_space<vmem>>, %arg3: memref<1x16x16x32xf32, #tpu.memory_space<vmem>>, %arg4: memref<1x1x32xf32, #tpu.memory_space<vmem>>, %arg5: memref<1x1x32xf32, #tpu.memory_space<vmem>>) attributes {dimension_semantics = [#tpu.dimension_semantics<parallel>], iteration_bounds = array<i64: 2>, scalar_prefetch = 0 : i64, scratch_operands = 0 : i64, tpu.core_type = #tpu.core_type<tc>, window_params = [{transform_indices = @transform_0, window_bounds = array<i64: 1, 20, 20, 32>}, {pipeline_mode = #tpu.pipeline_mode<synchronous>, transform_indices = @transform_1, window_bounds = array<i64: 25, 32>}, {transform_indices = @transform_2, window_bounds = array<i64: 1, 16, 16, 32>}, {transform_indices = @transform_3, window_bounds = array<i64: 1, 1, 32>}, {transform_indices = @transform_4, window_bounds = array<i64: 1, 1, 32>}]} {
    %c0 = arith.constant 0 : index
    %c0_0 = arith.constant 0 : index
    %0 = vector.load %arg2[%c0, %c0_0] : memref<25x32xf32, #tpu.memory_space<vmem>>, vector<25x32xf32>
    %c0_1 = arith.constant 0 : index
    %c0_2 = arith.constant 0 : index
    %c0_3 = arith.constant 0 : index
    %c0_4 = arith.constant 0 : index
    %1 = vector.load %arg1[%c0_1, %c0_2, %c0_3, %c0_4] : memref<1x20x20x32xf32, #tpu.memory_space<vmem>>, vector<1x16x16x32xf32>
    %2 = vector.shape_cast %1 : vector<1x16x16x32xf32> to vector<16x16x32xf32>
    %3 = vector.extract_strided_slice %0 {offsets = [0, 0], sizes = [1, 32], strides = [1, 1]} : vector<25x32xf32> to vector<1x32xf32>
    %4 = vector.shape_cast %3 : vector<1x32xf32> to vector<32xf32>
    %5 = vector.shape_cast %4 : vector<32xf32> to vector<1x1x32xf32>
    %6 = vector.broadcast %5 : vector<1x1x32xf32> to vector<16x16x32xf32>
    %7 = arith.mulf %2, %6 : vector<16x16x32xf32>
    %c0_5 = arith.constant 0 : index
    %c0_6 = arith.constant 0 : index
    %c1 = arith.constant 1 : index
    %c0_7 = arith.constant 0 : index
    %8 = vector.load %arg1[%c0_5, %c0_6, %c1, %c0_7] : memref<1x20x20x32xf32, #tpu.memory_space<vmem>>, vector<1x16x16x32xf32>
    %9 = vector.shape_cast %8 : vector<1x16x16x32xf32> to vector<16x16x32xf32>
    %10 = vector.extract_strided_slice %0 {offsets = [1, 0], sizes = [1, 32], strides = [1, 1]} : vector<25x32xf32> to vector<1x32xf32>
    %11 = vector.shape_cast %10 : vector<1x32xf32> to vector<32xf32>
    %12 = vector.shape_cast %11 : vector<32xf32> to vector<1x1x32xf32>
    %13 = vector.broadcast %12 : vector<1x1x32xf32> to vector<16x16x32xf32>
    %14 = arith.mulf %9, %13 : vector<16x16x32xf32>
    %15 = arith.addf %7, %14 : vector<16x16x32xf32>
    %c0_8 = arith.constant 0 : index
    %c0_9 = arith.constant 0 : index
    %c2 = arith.constant 2 : index
    %c0_10 = arith.constant 0 : index
    %16 = vector.load %arg1[%c0_8, %c0_9, %c2, %c0_10] : memref<1x20x20x32xf32, #tpu.memory_space<vmem>>, vector<1x16x16x32xf32>
    %17 = vector.shape_cast %16 : vector<1x16x16x32xf32> to vector<16x16x32xf32>
    %18 = vector.extract_strided_slice %0 {offsets = [2, 0], sizes = [1, 32], strides = [1, 1]} : vector<25x32xf32> to vector<1x32xf32>
    %19 = vector.shape_cast %18 : vector<1x32xf32> to vector<32xf32>
    %20 = vector.shape_cast %19 : vector<32xf32> to vector<1x1x32xf32>
    %21 = vector.broadcast %20 : vector<1x1x32xf32> to vector<16x16x32xf32>
    %22 = arith.mulf %17, %21 : vector<16x16x32xf32>
    %23 = arith.addf %15, %22 : vector<16x16x32xf32>
    %c0_11 = arith.constant 0 : index
    %c0_12 = arith.constant 0 : index
    %c3 = arith.constant 3 : index
    %c0_13 = arith.constant 0 : index
    %24 = vector.load %arg1[%c0_11, %c0_12, %c3, %c0_13] : memref<1x20x20x32xf32, #tpu.memory_space<vmem>>, vector<1x16x16x32xf32>
    %25 = vector.shape_cast %24 : vector<1x16x16x32xf32> to vector<16x16x32xf32>
    %26 = vector.extract_strided_slice %0 {offsets = [3, 0], sizes = [1, 32], strides = [1, 1]} : vector<25x32xf32> to vector<1x32xf32>
    %27 = vector.shape_cast %26 : vector<1x32xf32> to vector<32xf32>
    %28 = vector.shape_cast %27 : vector<32xf32> to vector<1x1x32xf32>
    %29 = vector.broadcast %28 : vector<1x1x32xf32> to vector<16x16x32xf32>
    %30 = arith.mulf %25, %29 : vector<16x16x32xf32>
    %31 = arith.addf %23, %30 : vector<16x16x32xf32>
    %c0_14 = arith.constant 0 : index
    %c0_15 = arith.constant 0 : index
    %c4 = arith.constant 4 : index
    %c0_16 = arith.constant 0 : index
    %32 = vector.load %arg1[%c0_14, %c0_15, %c4, %c0_16] : memref<1x20x20x32xf32, #tpu.memory_space<vmem>>, vector<1x16x16x32xf32>
    %33 = vector.shape_cast %32 : vector<1x16x16x32xf32> to vector<16x16x32xf32>
    %34 = vector.extract_strided_slice %0 {offsets = [4, 0], sizes = [1, 32], strides = [1, 1]} : vector<25x32xf32> to vector<1x32xf32>
    %35 = vector.shape_cast %34 : vector<1x32xf32> to vector<32xf32>
    %36 = vector.shape_cast %35 : vector<32xf32> to vector<1x1x32xf32>
    %37 = vector.broadcast %36 : vector<1x1x32xf32> to vector<16x16x32xf32>
    %38 = arith.mulf %33, %37 : vector<16x16x32xf32>
    %39 = arith.addf %31, %38 : vector<16x16x32xf32>
    %c0_17 = arith.constant 0 : index
    %c1_18 = arith.constant 1 : index
    %c0_19 = arith.constant 0 : index
    %c0_20 = arith.constant 0 : index
    %40 = vector.load %arg1[%c0_17, %c1_18, %c0_19, %c0_20] : memref<1x20x20x32xf32, #tpu.memory_space<vmem>>, vector<1x16x16x32xf32>
    %41 = vector.shape_cast %40 : vector<1x16x16x32xf32> to vector<16x16x32xf32>
    %42 = vector.extract_strided_slice %0 {offsets = [5, 0], sizes = [1, 32], strides = [1, 1]} : vector<25x32xf32> to vector<1x32xf32>
    %43 = vector.shape_cast %42 : vector<1x32xf32> to vector<32xf32>
    %44 = vector.shape_cast %43 : vector<32xf32> to vector<1x1x32xf32>
    %45 = vector.broadcast %44 : vector<1x1x32xf32> to vector<16x16x32xf32>
    %46 = arith.mulf %41, %45 : vector<16x16x32xf32>
    %47 = arith.addf %39, %46 : vector<16x16x32xf32>
    %c0_21 = arith.constant 0 : index
    %c1_22 = arith.constant 1 : index
    %c1_23 = arith.constant 1 : index
    %c0_24 = arith.constant 0 : index
    %48 = vector.load %arg1[%c0_21, %c1_22, %c1_23, %c0_24] : memref<1x20x20x32xf32, #tpu.memory_space<vmem>>, vector<1x16x16x32xf32>
    %49 = vector.shape_cast %48 : vector<1x16x16x32xf32> to vector<16x16x32xf32>
    %50 = vector.extract_strided_slice %0 {offsets = [6, 0], sizes = [1, 32], strides = [1, 1]} : vector<25x32xf32> to vector<1x32xf32>
    %51 = vector.shape_cast %50 : vector<1x32xf32> to vector<32xf32>
    %52 = vector.shape_cast %51 : vector<32xf32> to vector<1x1x32xf32>
    %53 = vector.broadcast %52 : vector<1x1x32xf32> to vector<16x16x32xf32>
    %54 = arith.mulf %49, %53 : vector<16x16x32xf32>
    %55 = arith.addf %47, %54 : vector<16x16x32xf32>
    %c0_25 = arith.constant 0 : index
    %c1_26 = arith.constant 1 : index
    %c2_27 = arith.constant 2 : index
    %c0_28 = arith.constant 0 : index
    %56 = vector.load %arg1[%c0_25, %c1_26, %c2_27, %c0_28] : memref<1x20x20x32xf32, #tpu.memory_space<vmem>>, vector<1x16x16x32xf32>
    %57 = vector.shape_cast %56 : vector<1x16x16x32xf32> to vector<16x16x32xf32>
    %58 = vector.extract_strided_slice %0 {offsets = [7, 0], sizes = [1, 32], strides = [1, 1]} : vector<25x32xf32> to vector<1x32xf32>
    %59 = vector.shape_cast %58 : vector<1x32xf32> to vector<32xf32>
    %60 = vector.shape_cast %59 : vector<32xf32> to vector<1x1x32xf32>
    %61 = vector.broadcast %60 : vector<1x1x32xf32> to vector<16x16x32xf32>
    %62 = arith.mulf %57, %61 : vector<16x16x32xf32>
    %63 = arith.addf %55, %62 : vector<16x16x32xf32>
    %c0_29 = arith.constant 0 : index
    %c1_30 = arith.constant 1 : index
    %c3_31 = arith.constant 3 : index
    %c0_32 = arith.constant 0 : index
    %64 = vector.load %arg1[%c0_29, %c1_30, %c3_31, %c0_32] : memref<1x20x20x32xf32, #tpu.memory_space<vmem>>, vector<1x16x16x32xf32>
    %65 = vector.shape_cast %64 : vector<1x16x16x32xf32> to vector<16x16x32xf32>
    %66 = vector.extract_strided_slice %0 {offsets = [8, 0], sizes = [1, 32], strides = [1, 1]} : vector<25x32xf32> to vector<1x32xf32>
    %67 = vector.shape_cast %66 : vector<1x32xf32> to vector<32xf32>
    %68 = vector.shape_cast %67 : vector<32xf32> to vector<1x1x32xf32>
    %69 = vector.broadcast %68 : vector<1x1x32xf32> to vector<16x16x32xf32>
    %70 = arith.mulf %65, %69 : vector<16x16x32xf32>
    %71 = arith.addf %63, %70 : vector<16x16x32xf32>
    %c0_33 = arith.constant 0 : index
    %c1_34 = arith.constant 1 : index
    %c4_35 = arith.constant 4 : index
    %c0_36 = arith.constant 0 : index
    %72 = vector.load %arg1[%c0_33, %c1_34, %c4_35, %c0_36] : memref<1x20x20x32xf32, #tpu.memory_space<vmem>>, vector<1x16x16x32xf32>
    %73 = vector.shape_cast %72 : vector<1x16x16x32xf32> to vector<16x16x32xf32>
    %74 = vector.extract_strided_slice %0 {offsets = [9, 0], sizes = [1, 32], strides = [1, 1]} : vector<25x32xf32> to vector<1x32xf32>
    %75 = vector.shape_cast %74 : vector<1x32xf32> to vector<32xf32>
    %76 = vector.shape_cast %75 : vector<32xf32> to vector<1x1x32xf32>
    %77 = vector.broadcast %76 : vector<1x1x32xf32> to vector<16x16x32xf32>
    %78 = arith.mulf %73, %77 : vector<16x16x32xf32>
    %79 = arith.addf %71, %78 : vector<16x16x32xf32>
    %c0_37 = arith.constant 0 : index
    %c2_38 = arith.constant 2 : index
    %c0_39 = arith.constant 0 : index
    %c0_40 = arith.constant 0 : index
    %80 = vector.load %arg1[%c0_37, %c2_38, %c0_39, %c0_40] : memref<1x20x20x32xf32, #tpu.memory_space<vmem>>, vector<1x16x16x32xf32>
    %81 = vector.shape_cast %80 : vector<1x16x16x32xf32> to vector<16x16x32xf32>
    %82 = vector.extract_strided_slice %0 {offsets = [10, 0], sizes = [1, 32], strides = [1, 1]} : vector<25x32xf32> to vector<1x32xf32>
    %83 = vector.shape_cast %82 : vector<1x32xf32> to vector<32xf32>
    %84 = vector.shape_cast %83 : vector<32xf32> to vector<1x1x32xf32>
    %85 = vector.broadcast %84 : vector<1x1x32xf32> to vector<16x16x32xf32>
    %86 = arith.mulf %81, %85 : vector<16x16x32xf32>
    %87 = arith.addf %79, %86 : vector<16x16x32xf32>
    %c0_41 = arith.constant 0 : index
    %c2_42 = arith.constant 2 : index
    %c1_43 = arith.constant 1 : index
    %c0_44 = arith.constant 0 : index
    %88 = vector.load %arg1[%c0_41, %c2_42, %c1_43, %c0_44] : memref<1x20x20x32xf32, #tpu.memory_space<vmem>>, vector<1x16x16x32xf32>
    %89 = vector.shape_cast %88 : vector<1x16x16x32xf32> to vector<16x16x32xf32>
    %90 = vector.extract_strided_slice %0 {offsets = [11, 0], sizes = [1, 32], strides = [1, 1]} : vector<25x32xf32> to vector<1x32xf32>
    %91 = vector.shape_cast %90 : vector<1x32xf32> to vector<32xf32>
    %92 = vector.shape_cast %91 : vector<32xf32> to vector<1x1x32xf32>
    %93 = vector.broadcast %92 : vector<1x1x32xf32> to vector<16x16x32xf32>
    %94 = arith.mulf %89, %93 : vector<16x16x32xf32>
    %95 = arith.addf %87, %94 : vector<16x16x32xf32>
    %c0_45 = arith.constant 0 : index
    %c2_46 = arith.constant 2 : index
    %c2_47 = arith.constant 2 : index
    %c0_48 = arith.constant 0 : index
    %96 = vector.load %arg1[%c0_45, %c2_46, %c2_47, %c0_48] : memref<1x20x20x32xf32, #tpu.memory_space<vmem>>, vector<1x16x16x32xf32>
    %97 = vector.shape_cast %96 : vector<1x16x16x32xf32> to vector<16x16x32xf32>
    %98 = vector.extract_strided_slice %0 {offsets = [12, 0], sizes = [1, 32], strides = [1, 1]} : vector<25x32xf32> to vector<1x32xf32>
    %99 = vector.shape_cast %98 : vector<1x32xf32> to vector<32xf32>
    %100 = vector.shape_cast %99 : vector<32xf32> to vector<1x1x32xf32>
    %101 = vector.broadcast %100 : vector<1x1x32xf32> to vector<16x16x32xf32>
    %102 = arith.mulf %97, %101 : vector<16x16x32xf32>
    %103 = arith.addf %95, %102 : vector<16x16x32xf32>
    %c0_49 = arith.constant 0 : index
    %c2_50 = arith.constant 2 : index
    %c3_51 = arith.constant 3 : index
    %c0_52 = arith.constant 0 : index
    %104 = vector.load %arg1[%c0_49, %c2_50, %c3_51, %c0_52] : memref<1x20x20x32xf32, #tpu.memory_space<vmem>>, vector<1x16x16x32xf32>
    %105 = vector.shape_cast %104 : vector<1x16x16x32xf32> to vector<16x16x32xf32>
    %106 = vector.extract_strided_slice %0 {offsets = [13, 0], sizes = [1, 32], strides = [1, 1]} : vector<25x32xf32> to vector<1x32xf32>
    %107 = vector.shape_cast %106 : vector<1x32xf32> to vector<32xf32>
    %108 = vector.shape_cast %107 : vector<32xf32> to vector<1x1x32xf32>
    %109 = vector.broadcast %108 : vector<1x1x32xf32> to vector<16x16x32xf32>
    %110 = arith.mulf %105, %109 : vector<16x16x32xf32>
    %111 = arith.addf %103, %110 : vector<16x16x32xf32>
    %c0_53 = arith.constant 0 : index
    %c2_54 = arith.constant 2 : index
    %c4_55 = arith.constant 4 : index
    %c0_56 = arith.constant 0 : index
    %112 = vector.load %arg1[%c0_53, %c2_54, %c4_55, %c0_56] : memref<1x20x20x32xf32, #tpu.memory_space<vmem>>, vector<1x16x16x32xf32>
    %113 = vector.shape_cast %112 : vector<1x16x16x32xf32> to vector<16x16x32xf32>
    %114 = vector.extract_strided_slice %0 {offsets = [14, 0], sizes = [1, 32], strides = [1, 1]} : vector<25x32xf32> to vector<1x32xf32>
    %115 = vector.shape_cast %114 : vector<1x32xf32> to vector<32xf32>
    %116 = vector.shape_cast %115 : vector<32xf32> to vector<1x1x32xf32>
    %117 = vector.broadcast %116 : vector<1x1x32xf32> to vector<16x16x32xf32>
    %118 = arith.mulf %113, %117 : vector<16x16x32xf32>
    %119 = arith.addf %111, %118 : vector<16x16x32xf32>
    %c0_57 = arith.constant 0 : index
    %c3_58 = arith.constant 3 : index
    %c0_59 = arith.constant 0 : index
    %c0_60 = arith.constant 0 : index
    %120 = vector.load %arg1[%c0_57, %c3_58, %c0_59, %c0_60] : memref<1x20x20x32xf32, #tpu.memory_space<vmem>>, vector<1x16x16x32xf32>
    %121 = vector.shape_cast %120 : vector<1x16x16x32xf32> to vector<16x16x32xf32>
    %122 = vector.extract_strided_slice %0 {offsets = [15, 0], sizes = [1, 32], strides = [1, 1]} : vector<25x32xf32> to vector<1x32xf32>
    %123 = vector.shape_cast %122 : vector<1x32xf32> to vector<32xf32>
    %124 = vector.shape_cast %123 : vector<32xf32> to vector<1x1x32xf32>
    %125 = vector.broadcast %124 : vector<1x1x32xf32> to vector<16x16x32xf32>
    %126 = arith.mulf %121, %125 : vector<16x16x32xf32>
    %127 = arith.addf %119, %126 : vector<16x16x32xf32>
    %c0_61 = arith.constant 0 : index
    %c3_62 = arith.constant 3 : index
    %c1_63 = arith.constant 1 : index
    %c0_64 = arith.constant 0 : index
    %128 = vector.load %arg1[%c0_61, %c3_62, %c1_63, %c0_64] : memref<1x20x20x32xf32, #tpu.memory_space<vmem>>, vector<1x16x16x32xf32>
    %129 = vector.shape_cast %128 : vector<1x16x16x32xf32> to vector<16x16x32xf32>
    %130 = vector.extract_strided_slice %0 {offsets = [16, 0], sizes = [1, 32], strides = [1, 1]} : vector<25x32xf32> to vector<1x32xf32>
    %131 = vector.shape_cast %130 : vector<1x32xf32> to vector<32xf32>
    %132 = vector.shape_cast %131 : vector<32xf32> to vector<1x1x32xf32>
    %133 = vector.broadcast %132 : vector<1x1x32xf32> to vector<16x16x32xf32>
    %134 = arith.mulf %129, %133 : vector<16x16x32xf32>
    %135 = arith.addf %127, %134 : vector<16x16x32xf32>
    %c0_65 = arith.constant 0 : index
    %c3_66 = arith.constant 3 : index
    %c2_67 = arith.constant 2 : index
    %c0_68 = arith.constant 0 : index
    %136 = vector.load %arg1[%c0_65, %c3_66, %c2_67, %c0_68] : memref<1x20x20x32xf32, #tpu.memory_space<vmem>>, vector<1x16x16x32xf32>
    %137 = vector.shape_cast %136 : vector<1x16x16x32xf32> to vector<16x16x32xf32>
    %138 = vector.extract_strided_slice %0 {offsets = [17, 0], sizes = [1, 32], strides = [1, 1]} : vector<25x32xf32> to vector<1x32xf32>
    %139 = vector.shape_cast %138 : vector<1x32xf32> to vector<32xf32>
    %140 = vector.shape_cast %139 : vector<32xf32> to vector<1x1x32xf32>
    %141 = vector.broadcast %140 : vector<1x1x32xf32> to vector<16x16x32xf32>
    %142 = arith.mulf %137, %141 : vector<16x16x32xf32>
    %143 = arith.addf %135, %142 : vector<16x16x32xf32>
    %c0_69 = arith.constant 0 : index
    %c3_70 = arith.constant 3 : index
    %c3_71 = arith.constant 3 : index
    %c0_72 = arith.constant 0 : index
    %144 = vector.load %arg1[%c0_69, %c3_70, %c3_71, %c0_72] : memref<1x20x20x32xf32, #tpu.memory_space<vmem>>, vector<1x16x16x32xf32>
    %145 = vector.shape_cast %144 : vector<1x16x16x32xf32> to vector<16x16x32xf32>
    %146 = vector.extract_strided_slice %0 {offsets = [18, 0], sizes = [1, 32], strides = [1, 1]} : vector<25x32xf32> to vector<1x32xf32>
    %147 = vector.shape_cast %146 : vector<1x32xf32> to vector<32xf32>
    %148 = vector.shape_cast %147 : vector<32xf32> to vector<1x1x32xf32>
    %149 = vector.broadcast %148 : vector<1x1x32xf32> to vector<16x16x32xf32>
    %150 = arith.mulf %145, %149 : vector<16x16x32xf32>
    %151 = arith.addf %143, %150 : vector<16x16x32xf32>
    %c0_73 = arith.constant 0 : index
    %c3_74 = arith.constant 3 : index
    %c4_75 = arith.constant 4 : index
    %c0_76 = arith.constant 0 : index
    %152 = vector.load %arg1[%c0_73, %c3_74, %c4_75, %c0_76] : memref<1x20x20x32xf32, #tpu.memory_space<vmem>>, vector<1x16x16x32xf32>
    %153 = vector.shape_cast %152 : vector<1x16x16x32xf32> to vector<16x16x32xf32>
    %154 = vector.extract_strided_slice %0 {offsets = [19, 0], sizes = [1, 32], strides = [1, 1]} : vector<25x32xf32> to vector<1x32xf32>
    %155 = vector.shape_cast %154 : vector<1x32xf32> to vector<32xf32>
    %156 = vector.shape_cast %155 : vector<32xf32> to vector<1x1x32xf32>
    %157 = vector.broadcast %156 : vector<1x1x32xf32> to vector<16x16x32xf32>
    %158 = arith.mulf %153, %157 : vector<16x16x32xf32>
    %159 = arith.addf %151, %158 : vector<16x16x32xf32>
    %c0_77 = arith.constant 0 : index
    %c4_78 = arith.constant 4 : index
    %c0_79 = arith.constant 0 : index
    %c0_80 = arith.constant 0 : index
    %160 = vector.load %arg1[%c0_77, %c4_78, %c0_79, %c0_80] : memref<1x20x20x32xf32, #tpu.memory_space<vmem>>, vector<1x16x16x32xf32>
    %161 = vector.shape_cast %160 : vector<1x16x16x32xf32> to vector<16x16x32xf32>
    %162 = vector.extract_strided_slice %0 {offsets = [20, 0], sizes = [1, 32], strides = [1, 1]} : vector<25x32xf32> to vector<1x32xf32>
    %163 = vector.shape_cast %162 : vector<1x32xf32> to vector<32xf32>
    %164 = vector.shape_cast %163 : vector<32xf32> to vector<1x1x32xf32>
    %165 = vector.broadcast %164 : vector<1x1x32xf32> to vector<16x16x32xf32>
    %166 = arith.mulf %161, %165 : vector<16x16x32xf32>
    %167 = arith.addf %159, %166 : vector<16x16x32xf32>
    %c0_81 = arith.constant 0 : index
    %c4_82 = arith.constant 4 : index
    %c1_83 = arith.constant 1 : index
    %c0_84 = arith.constant 0 : index
    %168 = vector.load %arg1[%c0_81, %c4_82, %c1_83, %c0_84] : memref<1x20x20x32xf32, #tpu.memory_space<vmem>>, vector<1x16x16x32xf32>
    %169 = vector.shape_cast %168 : vector<1x16x16x32xf32> to vector<16x16x32xf32>
    %170 = vector.extract_strided_slice %0 {offsets = [21, 0], sizes = [1, 32], strides = [1, 1]} : vector<25x32xf32> to vector<1x32xf32>
    %171 = vector.shape_cast %170 : vector<1x32xf32> to vector<32xf32>
    %172 = vector.shape_cast %171 : vector<32xf32> to vector<1x1x32xf32>
    %173 = vector.broadcast %172 : vector<1x1x32xf32> to vector<16x16x32xf32>
    %174 = arith.mulf %169, %173 : vector<16x16x32xf32>
    %175 = arith.addf %167, %174 : vector<16x16x32xf32>
    %c0_85 = arith.constant 0 : index
    %c4_86 = arith.constant 4 : index
    %c2_87 = arith.constant 2 : index
    %c0_88 = arith.constant 0 : index
    %176 = vector.load %arg1[%c0_85, %c4_86, %c2_87, %c0_88] : memref<1x20x20x32xf32, #tpu.memory_space<vmem>>, vector<1x16x16x32xf32>
    %177 = vector.shape_cast %176 : vector<1x16x16x32xf32> to vector<16x16x32xf32>
    %178 = vector.extract_strided_slice %0 {offsets = [22, 0], sizes = [1, 32], strides = [1, 1]} : vector<25x32xf32> to vector<1x32xf32>
    %179 = vector.shape_cast %178 : vector<1x32xf32> to vector<32xf32>
    %180 = vector.shape_cast %179 : vector<32xf32> to vector<1x1x32xf32>
    %181 = vector.broadcast %180 : vector<1x1x32xf32> to vector<16x16x32xf32>
    %182 = arith.mulf %177, %181 : vector<16x16x32xf32>
    %183 = arith.addf %175, %182 : vector<16x16x32xf32>
    %c0_89 = arith.constant 0 : index
    %c4_90 = arith.constant 4 : index
    %c3_91 = arith.constant 3 : index
    %c0_92 = arith.constant 0 : index
    %184 = vector.load %arg1[%c0_89, %c4_90, %c3_91, %c0_92] : memref<1x20x20x32xf32, #tpu.memory_space<vmem>>, vector<1x16x16x32xf32>
    %185 = vector.shape_cast %184 : vector<1x16x16x32xf32> to vector<16x16x32xf32>
    %186 = vector.extract_strided_slice %0 {offsets = [23, 0], sizes = [1, 32], strides = [1, 1]} : vector<25x32xf32> to vector<1x32xf32>
    %187 = vector.shape_cast %186 : vector<1x32xf32> to vector<32xf32>
    %188 = vector.shape_cast %187 : vector<32xf32> to vector<1x1x32xf32>
    %189 = vector.broadcast %188 : vector<1x1x32xf32> to vector<16x16x32xf32>
    %190 = arith.mulf %185, %189 : vector<16x16x32xf32>
    %191 = arith.addf %183, %190 : vector<16x16x32xf32>
    %c0_93 = arith.constant 0 : index
    %c4_94 = arith.constant 4 : index
    %c4_95 = arith.constant 4 : index
    %c0_96 = arith.constant 0 : index
    %192 = vector.load %arg1[%c0_93, %c4_94, %c4_95, %c0_96] : memref<1x20x20x32xf32, #tpu.memory_space<vmem>>, vector<1x16x16x32xf32>
    %193 = vector.shape_cast %192 : vector<1x16x16x32xf32> to vector<16x16x32xf32>
    %194 = vector.extract_strided_slice %0 {offsets = [24, 0], sizes = [1, 32], strides = [1, 1]} : vector<25x32xf32> to vector<1x32xf32>
    %195 = vector.shape_cast %194 : vector<1x32xf32> to vector<32xf32>
    %196 = vector.shape_cast %195 : vector<32xf32> to vector<1x1x32xf32>
    %197 = vector.broadcast %196 : vector<1x1x32xf32> to vector<16x16x32xf32>
    %198 = arith.mulf %193, %197 : vector<16x16x32xf32>
    %199 = arith.addf %191, %198 : vector<16x16x32xf32>
    %c0_97 = arith.constant 0 : index
    %c0_98 = arith.constant 0 : index
    %c0_99 = arith.constant 0 : index
    %c0_100 = arith.constant 0 : index
    %200 = vector.load %arg3[%c0_97, %c0_98, %c0_99, %c0_100] : memref<1x16x16x32xf32, #tpu.memory_space<vmem>>, vector<1x16x16x32xf32>
    %201 = vector.shape_cast %200 : vector<1x16x16x32xf32> to vector<16x16x32xf32>
    %202 = vector.shape_cast %199 : vector<16x16x32xf32> to vector<1x16x16x32xf32>
    tpu.vector_store %arg3[%c0_97, %c0_98, %c0_99, %c0_100], %202 {strides = array<i32>} : memref<1x16x16x32xf32, #tpu.memory_space<vmem>>, vector<1x16x16x32xf32>,
    %cst = arith.constant dense<0.000000e+00> : vector<32xf32>
    %203 = vector.multi_reduction <add>, %199, %cst [0, 1] : vector<16x16x32xf32> to vector<32xf32>
    %204 = vector.shape_cast %203 : vector<32xf32> to vector<1x32xf32>
    %c0_101 = arith.constant 0 : index
    %c0_102 = arith.constant 0 : index
    %c0_103 = arith.constant 0 : index
    %205 = vector.load %arg4[%c0_101, %c0_102, %c0_103] : memref<1x1x32xf32, #tpu.memory_space<vmem>>, vector<1x1x32xf32>
    %206 = vector.shape_cast %205 : vector<1x1x32xf32> to vector<1x32xf32>
    %207 = vector.shape_cast %204 : vector<1x32xf32> to vector<1x1x32xf32>
    tpu.vector_store %arg4[%c0_101, %c0_102, %c0_103], %207 {strides = array<i32>} : memref<1x1x32xf32, #tpu.memory_space<vmem>>, vector<1x1x32xf32>,
    %208 = arith.mulf %199, %199 : vector<16x16x32xf32>
    %cst_104 = arith.constant dense<0.000000e+00> : vector<32xf32>
    %209 = vector.multi_reduction <add>, %208, %cst_104 [0, 1] : vector<16x16x32xf32> to vector<32xf32>
    %210 = vector.shape_cast %209 : vector<32xf32> to vector<1x32xf32>
    %c0_105 = arith.constant 0 : index
    %c0_106 = arith.constant 0 : index
    %c0_107 = arith.constant 0 : index
    %211 = vector.load %arg5[%c0_105, %c0_106, %c0_107] : memref<1x1x32xf32, #tpu.memory_space<vmem>>, vector<1x1x32xf32>
    %212 = vector.shape_cast %211 : vector<1x1x32xf32> to vector<1x32xf32>
    %213 = vector.shape_cast %210 : vector<1x32xf32> to vector<1x1x32xf32>
    tpu.vector_store %arg5[%c0_105, %c0_106, %c0_107], %213 {strides = array<i32>} : memref<1x1x32xf32, #tpu.memory_space<vmem>>, vector<1x1x32xf32>,
    return
  }
  func.func @transform_0(%arg0: i32) -> (i32, i32, i32, i32) {
    %c0_i32 = arith.constant 0 : i32
    %c0_i32_0 = arith.constant 0 : i32
    %c0_i32_1 = arith.constant 0 : i32
    %c0_i32_2 = arith.constant 0 : i32
    return %arg0, %c0_i32, %c0_i32_0, %c0_i32_1 : i32, i32, i32, i32
  }
  func.func @transform_1(%arg0: i32) -> (i32, i32) {
    %c0_i32 = arith.constant 0 : i32
    %c0_i32_0 = arith.constant 0 : i32
    %c0_i32_1 = arith.constant 0 : i32
    return %c0_i32, %c0_i32_0 : i32, i32
  }
  func.func @transform_2(%arg0: i32) -> (i32, i32, i32, i32) {
    %c0_i32 = arith.constant 0 : i32
    %c0_i32_0 = arith.constant 0 : i32
    %c0_i32_1 = arith.constant 0 : i32
    %c0_i32_2 = arith.constant 0 : i32
    return %arg0, %c0_i32, %c0_i32_0, %c0_i32_1 : i32, i32, i32, i32
  }
  func.func @transform_3(%arg0: i32) -> (i32, i32, i32) {
    %c0_i32 = arith.constant 0 : i32
    %c0_i32_0 = arith.constant 0 : i32
    %c0_i32_1 = arith.constant 0 : i32
    return %arg0, %c0_i32, %c0_i32_0 : i32, i32, i32
  }
  func.func @transform_4(%arg0: i32) -> (i32, i32, i32) {
    %c0_i32 = arith.constant 0 : i32
    %c0_i32_0 = arith.constant 0 : i32
    %c0_i32_1 = arith.constant 0 : i32
    return %arg0, %c0_i32, %c0_i32_0 : i32, i32, i32
  }
}

module attributes {stable_mosaic.version = 11 : i64} {
  func.func @kernel(%arg0: i32, %arg1: memref<256x32xf32, #tpu.memory_space<vmem>>, %arg2: memref<256x32xf32, #tpu.memory_space<vmem>>, %arg3: memref<32x32xbf16, #tpu.memory_space<vmem>>, %arg4: memref<32x32xbf16, #tpu.memory_space<vmem>>, %arg5: memref<256x32xf32, #tpu.memory_space<vmem>>, %arg6: memref<1x1x32xf32, #tpu.memory_space<vmem>>, %arg7: memref<1x1x32xf32, #tpu.memory_space<vmem>>) attributes {dimension_semantics = [#tpu.dimension_semantics<parallel>], iteration_bounds = array<i64: 2>, scalar_prefetch = 0 : i64, scratch_operands = 0 : i64, tpu.core_type = #tpu.core_type<tc>, window_params = [{transform_indices = @transform_0, window_bounds = array<i64: 256, 32>}, {transform_indices = @transform_1, window_bounds = array<i64: 256, 32>}, {pipeline_mode = #tpu.pipeline_mode<synchronous>, transform_indices = @transform_2, window_bounds = array<i64: 32, 32>}, {pipeline_mode = #tpu.pipeline_mode<synchronous>, transform_indices = @transform_3, window_bounds = array<i64: 32, 32>}, {transform_indices = @transform_4, window_bounds = array<i64: 256, 32>}, {transform_indices = @transform_5, window_bounds = array<i64: 1, 1, 32>}, {transform_indices = @transform_6, window_bounds = array<i64: 1, 1, 32>}]} {
    %c0 = arith.constant 0 : index
    %c0_0 = arith.constant 0 : index
    %0 = vector.load %arg1[%c0, %c0_0] : memref<256x32xf32, #tpu.memory_space<vmem>>, vector<256x32xf32>
    %1 = arith.truncf %0 : vector<256x32xf32> to vector<256x32xbf16>
    %c0_1 = arith.constant 0 : index
    %c0_2 = arith.constant 0 : index
    %2 = vector.load %arg3[%c0_1, %c0_2] : memref<32x32xbf16, #tpu.memory_space<vmem>>, vector<32x32xbf16>
    %cst = arith.constant dense<0.000000e+00> : vector<256x32xf32>
    %3 = tpu.matmul %1, %2, %cst {dimension_numbers = #tpu.dot_dimension_numbers<[1], [0], [0], [1], [0, 0, 1, 1], [], []>} : vector<256x32xbf16>, vector<32x32xbf16>, vector<256x32xf32> -> vector<256x32xf32>
    %c0_3 = arith.constant 0 : index
    %c0_4 = arith.constant 0 : index
    %4 = vector.load %arg2[%c0_3, %c0_4] : memref<256x32xf32, #tpu.memory_space<vmem>>, vector<256x32xf32>
    %5 = arith.truncf %4 : vector<256x32xf32> to vector<256x32xbf16>
    %c0_5 = arith.constant 0 : index
    %c0_6 = arith.constant 0 : index
    %6 = vector.load %arg4[%c0_5, %c0_6] : memref<32x32xbf16, #tpu.memory_space<vmem>>, vector<32x32xbf16>
    %cst_7 = arith.constant dense<0.000000e+00> : vector<256x32xf32>
    %7 = tpu.matmul %5, %6, %cst_7 {dimension_numbers = #tpu.dot_dimension_numbers<[1], [0], [0], [1], [0, 0, 1, 1], [], []>} : vector<256x32xbf16>, vector<32x32xbf16>, vector<256x32xf32> -> vector<256x32xf32>
    %8 = arith.addf %3, %7 : vector<256x32xf32>
    %c0_8 = arith.constant 0 : index
    %c0_9 = arith.constant 0 : index
    %9 = vector.load %arg5[%c0_8, %c0_9] : memref<256x32xf32, #tpu.memory_space<vmem>>, vector<256x32xf32>
    tpu.vector_store %arg5[%c0_8, %c0_9], %8 {strides = array<i32>} : memref<256x32xf32, #tpu.memory_space<vmem>>, vector<256x32xf32>,
    %cst_10 = arith.constant dense<0.000000e+00> : vector<32xf32>
    %10 = vector.multi_reduction <add>, %8, %cst_10 [0] : vector<256x32xf32> to vector<32xf32>
    %11 = vector.shape_cast %10 : vector<32xf32> to vector<1x32xf32>
    %c0_11 = arith.constant 0 : index
    %c0_12 = arith.constant 0 : index
    %c0_13 = arith.constant 0 : index
    %12 = vector.load %arg6[%c0_11, %c0_12, %c0_13] : memref<1x1x32xf32, #tpu.memory_space<vmem>>, vector<1x1x32xf32>
    %13 = vector.shape_cast %12 : vector<1x1x32xf32> to vector<1x32xf32>
    %14 = vector.shape_cast %11 : vector<1x32xf32> to vector<1x1x32xf32>
    tpu.vector_store %arg6[%c0_11, %c0_12, %c0_13], %14 {strides = array<i32>} : memref<1x1x32xf32, #tpu.memory_space<vmem>>, vector<1x1x32xf32>,
    %15 = arith.mulf %8, %8 : vector<256x32xf32>
    %cst_14 = arith.constant dense<0.000000e+00> : vector<32xf32>
    %16 = vector.multi_reduction <add>, %15, %cst_14 [0] : vector<256x32xf32> to vector<32xf32>
    %17 = vector.shape_cast %16 : vector<32xf32> to vector<1x32xf32>
    %c0_15 = arith.constant 0 : index
    %c0_16 = arith.constant 0 : index
    %c0_17 = arith.constant 0 : index
    %18 = vector.load %arg7[%c0_15, %c0_16, %c0_17] : memref<1x1x32xf32, #tpu.memory_space<vmem>>, vector<1x1x32xf32>
    %19 = vector.shape_cast %18 : vector<1x1x32xf32> to vector<1x32xf32>
    %20 = vector.shape_cast %17 : vector<1x32xf32> to vector<1x1x32xf32>
    tpu.vector_store %arg7[%c0_15, %c0_16, %c0_17], %20 {strides = array<i32>} : memref<1x1x32xf32, #tpu.memory_space<vmem>>, vector<1x1x32xf32>,
    return
  }
  func.func @transform_0(%arg0: i32) -> (i32, i32) {
    %c0_i32 = arith.constant 0 : i32
    %c0_i32_0 = arith.constant 0 : i32
    return %arg0, %c0_i32 : i32, i32
  }
  func.func @transform_1(%arg0: i32) -> (i32, i32) {
    %c0_i32 = arith.constant 0 : i32
    %c0_i32_0 = arith.constant 0 : i32
    return %arg0, %c0_i32 : i32, i32
  }
  func.func @transform_2(%arg0: i32) -> (i32, i32) {
    %c0_i32 = arith.constant 0 : i32
    %c0_i32_0 = arith.constant 0 : i32
    %c0_i32_1 = arith.constant 0 : i32
    return %c0_i32, %c0_i32_0 : i32, i32
  }
  func.func @transform_3(%arg0: i32) -> (i32, i32) {
    %c0_i32 = arith.constant 0 : i32
    %c0_i32_0 = arith.constant 0 : i32
    %c0_i32_1 = arith.constant 0 : i32
    return %c0_i32, %c0_i32_0 : i32, i32
  }
  func.func @transform_4(%arg0: i32) -> (i32, i32) {
    %c0_i32 = arith.constant 0 : i32
    %c0_i32_0 = arith.constant 0 : i32
    return %arg0, %c0_i32 : i32, i32
  }
  func.func @transform_5(%arg0: i32) -> (i32, i32, i32) {
    %c0_i32 = arith.constant 0 : i32
    %c0_i32_0 = arith.constant 0 : i32
    %c0_i32_1 = arith.constant 0 : i32
    return %arg0, %c0_i32, %c0_i32_0 : i32, i32, i32
  }
  func.func @transform_6(%arg0: i32) -> (i32, i32, i32) {
    %c0_i32 = arith.constant 0 : i32
    %c0_i32_0 = arith.constant 0 : i32
    %c0_i32_1 = arith.constant 0 : i32
    return %arg0, %c0_i32, %c0_i32_0 : i32, i32, i32
  }
}

module attributes {stable_mosaic.version = 11 : i64} {
  func.func @_add_gelu_kernel(%arg0: i32, %arg1: memref<16x512xf32, #tpu.memory_space<vmem>>, %arg2: memref<16x512xf32, #tpu.memory_space<vmem>>, %arg3: memref<16x512xf32, #tpu.memory_space<vmem>>) attributes {dimension_semantics = [#tpu.dimension_semantics<parallel>], iteration_bounds = array<i64: 2>, scalar_prefetch = 0 : i64, scratch_operands = 0 : i64, tpu.core_type = #tpu.core_type<tc>, window_params = [{transform_indices = @transform_0, window_bounds = array<i64: 16, 512>}, {transform_indices = @transform_1, window_bounds = array<i64: 16, 512>}, {transform_indices = @transform_2, window_bounds = array<i64: 16, 512>}]} {
    %c0 = arith.constant 0 : index
    %c0_0 = arith.constant 0 : index
    %0 = vector.load %arg1[%c0, %c0_0] : memref<16x512xf32, #tpu.memory_space<vmem>>, vector<16x512xf32>
    %c0_1 = arith.constant 0 : index
    %c0_2 = arith.constant 0 : index
    %1 = vector.load %arg2[%c0_1, %c0_2] : memref<16x512xf32, #tpu.memory_space<vmem>>, vector<16x512xf32>
    %2 = arith.addf %0, %1 : vector<16x512xf32>
    %cst = arith.constant 5.000000e-01 : f32
    %3 = vector.broadcast %cst : f32 to vector<16x512xf32>
    %4 = arith.mulf %3, %2 : vector<16x512xf32>
    %cst_3 = arith.constant 0.707106769 : f32
    %5 = vector.broadcast %cst_3 : f32 to vector<16x512xf32>
    %6 = arith.mulf %2, %5 : vector<16x512xf32>
    %cst_4 = arith.constant -4.000000e+00 : f32
    %cst_5 = arith.constant 4.000000e+00 : f32
    %7 = vector.broadcast %cst_4 : f32 to vector<16x512xf32>
    %8 = arith.maximumf %7, %6 : vector<16x512xf32>
    %9 = vector.broadcast %cst_5 : f32 to vector<16x512xf32>
    %10 = arith.minimumf %9, %8 : vector<16x512xf32>
    %11 = arith.mulf %10, %10 : vector<16x512xf32>
    %cst_6 = arith.constant 2.29050653E-4 : f32
    %12 = vector.broadcast %cst_6 : f32 to vector<16x512xf32>
    %13 = arith.mulf %12, %11 : vector<16x512xf32>
    %cst_7 = arith.constant 0.00340829091 : f32
    %14 = vector.broadcast %cst_7 : f32 to vector<16x512xf32>
    %15 = arith.addf %13, %14 : vector<16x512xf32>
    %16 = arith.mulf %15, %11 : vector<16x512xf32>
    %cst_8 = arith.constant 0.0509556942 : f32
    %17 = vector.broadcast %cst_8 : f32 to vector<16x512xf32>
    %18 = arith.addf %16, %17 : vector<16x512xf32>
    %19 = arith.mulf %18, %11 : vector<16x512xf32>
    %cst_9 = arith.constant 0.185208321 : f32
    %20 = vector.broadcast %cst_9 : f32 to vector<16x512xf32>
    %21 = arith.addf %19, %20 : vector<16x512xf32>
    %22 = arith.mulf %21, %11 : vector<16x512xf32>
    %cst_10 = arith.constant 1.12837911 : f32
    %23 = vector.broadcast %cst_10 : f32 to vector<16x512xf32>
    %24 = arith.addf %22, %23 : vector<16x512xf32>
    %cst_11 = arith.constant -1.17916031E-7 : f32
    %25 = vector.broadcast %cst_11 : f32 to vector<16x512xf32>
    %26 = arith.mulf %25, %11 : vector<16x512xf32>
    %cst_12 = arith.constant 2.35479656E-5 : f32
    %27 = vector.broadcast %cst_12 : f32 to vector<16x512xf32>
    %28 = arith.addf %26, %27 : vector<16x512xf32>
    %29 = arith.mulf %28, %11 : vector<16x512xf32>
    %cst_13 = arith.constant 0.00101796258 : f32
    %30 = vector.broadcast %cst_13 : f32 to vector<16x512xf32>
    %31 = arith.addf %29, %30 : vector<16x512xf32>
    %32 = arith.mulf %31, %11 : vector<16x512xf32>
    %cst_14 = arith.constant 0.0140704699 : f32
    %33 = vector.broadcast %cst_14 : f32 to vector<16x512xf32>
    %34 = arith.addf %32, %33 : vector<16x512xf32>
    %35 = arith.mulf %34, %11 : vector<16x512xf32>
    %cst_15 = arith.constant 0.110985048 : f32
    %36 = vector.broadcast %cst_15 : f32 to vector<16x512xf32>
    %37 = arith.addf %35, %36 : vector<16x512xf32>
    %38 = arith.mulf %37, %11 : vector<16x512xf32>
    %cst_16 = arith.constant 0.497469246 : f32
    %39 = vector.broadcast %cst_16 : f32 to vector<16x512xf32>
    %40 = arith.addf %38, %39 : vector<16x512xf32>
    %41 = arith.mulf %40, %11 : vector<16x512xf32>
    %cst_17 = arith.constant 1.000000e+00 : f32
    %42 = vector.broadcast %cst_17 : f32 to vector<16x512xf32>
    %43 = arith.addf %41, %42 : vector<16x512xf32>
    %44 = arith.mulf %10, %24 : vector<16x512xf32>
    %45 = arith.divf %44, %43 : vector<16x512xf32>
    %cst_18 = arith.constant 1.000000e+00 : f32
    %46 = vector.broadcast %cst_18 : f32 to vector<16x512xf32>
    %47 = arith.addf %46, %45 : vector<16x512xf32>
    %48 = arith.mulf %4, %47 : vector<16x512xf32>
    %c0_19 = arith.constant 0 : index
    %c0_20 = arith.constant 0 : index
    %49 = vector.load %arg3[%c0_19, %c0_20] : memref<16x512xf32, #tpu.memory_space<vmem>>, vector<16x512xf32>
    tpu.vector_store %arg3[%c0_19, %c0_20], %48 {strides = array<i32>} : memref<16x512xf32, #tpu.memory_space<vmem>>, vector<16x512xf32>,
    return
  }
  func.func @transform_0(%arg0: i32) -> (i32, i32) {
    %c0_i32 = arith.constant 0 : i32
    %c0_i32_0 = arith.constant 0 : i32
    return %arg0, %c0_i32 : i32, i32
  }
  func.func @transform_1(%arg0: i32) -> (i32, i32) {
    %c0_i32 = arith.constant 0 : i32
    %c0_i32_0 = arith.constant 0 : i32
    return %arg0, %c0_i32 : i32, i32
  }
  func.func @transform_2(%arg0: i32) -> (i32, i32) {
    %c0_i32 = arith.constant 0 : i32
    %c0_i32_0 = arith.constant 0 : i32
    return %arg0, %c0_i32 : i32, i32
  }
}

</mosaic_0001>

<llo_original>
// kernel: gsconv_jilian_forward.11
$region0: #{gsconv_jilian_forward.11}
  #allocation0 [shape = 'u32[]', space=smem, size = 0x4, offset = 0x4, fixed_abs, tag = 'smem constant byte address 0x4 - core index']
  #allocation1 [shape = 'u32[72,128]{1,0:T(1,128)}', space=vmem, size = 0x9000, scoped, tag = 'internal scratch']
  %s0 = inlined_call_operand.vmem [shape: f32[512,4], index: 0, kind: input, shape index: {}]
  %s1 = inlined_call_operand.vmem [shape: f32[4,64], index: 1, kind: input, shape index: {}]
  %s2 = inlined_call_operand.vmem [shape: f32[1,64], index: 2, kind: input, shape index: {}]
  %s3 = inlined_call_operand.vmem [shape: f32[512,64], index: 3, kind: output, shape index: {}]
  %s4 = sld [smem:[#allocation0]]
  $region45: #{gsconv_jilian_forward.11} parent=0
    _
  %s6 = ssub.s32 1, %s4
  %s7 = scalar_select 0, %s6, %s4
  loop: start=0, step=1, limit=4
  $region2: #{gsconv_jilian_forward.11} parent=0 // loop_pre_header
    _
  $region3: #{gsconv_jilian_forward.11} parent=0 // loop_header
    %s9 = sphi 0, %s13
    %p10 = scmp.ge.s32.totalorder %s9, 4
    %s19 = sphi 0, %s21
    %s22 = sphi 0, %s19
    %s23 = sphi 0, %s22
    %s39 = sphi 0, %s23
    %s43 = sphi 0, %s43
    %s45 = sphi 0, %s43
    %s46 = sphi 0, %s45
    %s60 = sphi 0, %s46
    %s64 = sphi 0, %s64
    %s66 = sphi 0, %s64
    %s67 = sphi 0, %s66
    %s81 = sphi 0, %s67
    %s87 = sphi 0, %s89
    %s90 = sphi 0, %s87
    %s91 = sphi 0, %s90
    %s107 = sphi 0, %s91
  $region4: #{gsconv_jilian_forward.11} parent=0 // loop_header_branch
    %12 = sbr.rel (%p10) target = $region8
  $region5: #{gsconv_jilian_forward.11} parent=0 // loop_body
    %s14 = ssub.s32 %s9, 1
    %s15 = ssub.s32 %s9, 2
    %s16 = sadd.s32 %s9, 1
    %s17 = ssub.s32 %s9, %s16
    %p18 = scmp.eq.s32.totalorder %s17, 0
    %s20 = sadd.s32 %s19, 1
    %s21 = scalar_select %p18, %s19, %s20
    %p24 = pneg %p18
    %p25 = scmp.eq.s32.totalorder %s9, 1
    %p26 = por %p24, %p25
    %p27 = scmp.ne.s32.totalorder %s19, %s22
    %p28 = scmp.eq.s32.totalorder %s9, 0
    %p29 = por %p27, %p28
    %p30 = scmp.ne.s32.totalorder %s19, %s22
    %p31 = scmp.eq.s32.totalorder %s14, 1
    %p32 = por %p30, %p31
    %p33 = scmp.ne.s32.totalorder %s22, %s23
    %p34 = scmp.eq.s32.totalorder %s14, 0
    %p35 = por %p33, %p34
    %p36 = scmp.ne.s32.totalorder %s22, %s23
    %p37 = scmp.eq.s32.totalorder %s15, 1
    %p38 = por %p36, %p37
    %p40 = scmp.ne.s32.totalorder %s23, %s39
    %p41 = scmp.eq.s32.totalorder %s15, 0
    %p42 = por %p40, %p41
    %s44 = sadd.s32 %s43, 1
    %p47 = scmp.eq.s32.totalorder %s9, 1
    %p48 = scmp.ne.s32.totalorder %s43, %s45
    %p49 = scmp.eq.s32.totalorder %s9, 0
    %p50 = por %p48, %p49
    %p51 = scmp.ne.s32.totalorder %s43, %s45
    %p52 = scmp.eq.s32.totalorder %s14, 1
    %p53 = por %p51, %p52
    %p54 = scmp.ne.s32.totalorder %s45, %s46
    %p55 = scmp.eq.s32.totalorder %s14, 0
    %p56 = por %p54, %p55
    %p57 = scmp.ne.s32.totalorder %s45, %s46
    %p58 = scmp.eq.s32.totalorder %s15, 1
    %p59 = por %p57, %p58
    %p61 = scmp.ne.s32.totalorder %s46, %s60
    %p62 = scmp.eq.s32.totalorder %s15, 0
    %p63 = por %p61, %p62
    %s65 = sadd.s32 %s64, 1
    %p68 = scmp.eq.s32.totalorder %s9, 1
    %p69 = scmp.ne.s32.totalorder %s64, %s66
    %p70 = scmp.eq.s32.totalorder %s9, 0
    %p71 = por %p69, %p70
    %p72 = scmp.ne.s32.totalorder %s64, %s66
    %p73 = scmp.eq.s32.totalorder %s14, 1
    %p74 = por %p72, %p73
    %p75 = scmp.ne.s32.totalorder %s66, %s67
    %p76 = scmp.eq.s32.totalorder %s14, 0
    %p77 = por %p75, %p76
    %p78 = scmp.ne.s32.totalorder %s66, %s67
    %p79 = scmp.eq.s32.totalorder %s15, 1
    %p80 = por %p78, %p79
    %p82 = scmp.ne.s32.totalorder %s67, %s81
    %p83 = scmp.eq.s32.totalorder %s15, 0
    %p84 = por %p82, %p83
    %s85 = ssub.s32 %s9, %s16
    %p86 = scmp.eq.s32.totalorder %s85, 0
    %s88 = sadd.s32 %s87, 1
    %s89 = scalar_select %p86, %s87, %s88
    %p92 = pneg %p86
    %p93 = scmp.eq.s32.totalorder %s9, 1
    %p94 = por %p92, %p93
    %p95 = scmp.ne.s32.totalorder %s87, %s90
    %p96 = scmp.eq.s32.totalorder %s9, 0
    %p97 = por %p95, %p96
    %p98 = scmp.ne.s32.totalorder %s87, %s90
    %p99 = scmp.eq.s32.totalorder %s14, 1
    %p100 = por %p98, %p99
    %p101 = scmp.ne.s32.totalorder %s90, %s91
    %p102 = scmp.eq.s32.totalorder %s14, 0
    %p103 = por %p101, %p102
    %p104 = scmp.ne.s32.totalorder %s90, %s91
    %p105 = scmp.eq.s32.totalorder %s15, 1
    %p106 = por %p104, %p105
    %p108 = scmp.ne.s32.totalorder %s91, %s107
    %p109 = scmp.eq.s32.totalorder %s15, 0
    %p110 = por %p108, %p109
    %p111 = scmp.le.s32.totalorder 1, %s9
    %p112 = scmp.lt.s32.totalorder %s9, 3
    %p113 = pnand %p111, %p112
    %p114 = pneg %p113
    // Predicated region
    $region9: #{gsconv_jilian_forward.11} parent=5 // pred_check
      _
    $region10: #{gsconv_jilian_forward.11} parent=5 // pred_check_branch
      %116 = sbr.rel (%p113) target = $region12
    $region11: #{gsconv_jilian_forward.11} parent=5 // pred_region
      %s117 = ssub.s32 %s9, 1
      // Predicated region
      $region13: #{gsconv_jilian_forward.11} parent=11 // pred_check
        %p118 = pneg %p56
      $region14: #{gsconv_jilian_forward.11} parent=11 // pred_check_branch
        %120 = sbr.rel (%p118) target = $region16
      $region15: #{gsconv_jilian_forward.11} parent=11 // pred_region
        _
      $region16: #{gsconv_jilian_forward.11} parent=11 // pred_fallthru
        _
      // Predicated region
      $region17: #{gsconv_jilian_forward.11} parent=11 // pred_check
        %p121 = pneg %p77
      $region18: #{gsconv_jilian_forward.11} parent=11 // pred_check_branch
        %123 = sbr.rel (%p121) target = $region20
      $region19: #{gsconv_jilian_forward.11} parent=11 // pred_region
        _
      $region20: #{gsconv_jilian_forward.11} parent=11 // pred_fallthru
        _
    $region12: #{gsconv_jilian_forward.11} parent=5 // pred_fallthru
      _
    %p124 = scmp.lt.s32.totalorder %s9, 2
    // Predicated region
    $region21: #{gsconv_jilian_forward.11} parent=5 // pred_check
      %p125 = pneg %p124
    $region22: #{gsconv_jilian_forward.11} parent=5 // pred_check_branch
      %127 = sbr.rel (%p125) target = $region24
    $region23: #{gsconv_jilian_forward.11} parent=5 // pred_region
      // Predicated region
      $region25: #{gsconv_jilian_forward.11} parent=23 // pred_check
        %p128 = pneg %p29
      $region26: #{gsconv_jilian_forward.11} parent=23 // pred_check_branch
        %130 = sbr.rel (%p128) target = $region28
      $region27: #{gsconv_jilian_forward.11} parent=23 // pred_region
        %s131 = smul.u32 32, %s9
        %p132 = scmp.lt.s32.totalorder %s131, 63
        %s133 = scalar_select %p132, %s131, 63
        %s134 = smul.addr %s133, 8
        %s135 = scalar_lea.vmem %s0, %s134
        %s136 = smul.u32 32, %s9
      $region28: #{gsconv_jilian_forward.11} parent=23 // pred_fallthru
        _
    $region24: #{gsconv_jilian_forward.11} parent=5 // pred_fallthru
      _
    %p137 = scmp.le.s32.totalorder 1, %s9
    %p138 = scmp.lt.s32.totalorder %s9, 3
    %p139 = pnand %p137, %p138
    %p140 = pneg %p139
    // Predicated region
    $region29: #{gsconv_jilian_forward.11} parent=5 // pred_check
      _
    $region30: #{gsconv_jilian_forward.11} parent=5 // pred_check_branch
      %142 = sbr.rel (%p139) target = $region32
    $region31: #{gsconv_jilian_forward.11} parent=5 // pred_region
      %s143 = ssub.s32 %s9, 1
      %s144 = smul.u32 32, %s14
      %p145 = scmp.lt.s32.totalorder %s144, 63
      %s146 = scalar_select %p145, %s144, 63
      %s147 = smul.addr %s146, 8
      %s148 = scalar_lea.vmem %s0, %s147
      %p149 = pneg %p35
      %p150 = pneg %p32
      %p151 = pneg %p56
      %p152 = pneg %p53
      %p153 = pneg %p77
      %p154 = pneg %p74
      %p155 = pneg %p103
      %p156 = pneg %p100
      %s157 = smul.u32 32, %s14
      %p158 = scmp.lt.s32.totalorder %s157, 63
      %s159 = scalar_select %p158, %s157, 63
      %s160 = smul.addr %s159, 8
      %s161 = scalar_lea.vmem %s3, %s160
      %s162 = smul.u32 32, %s14
      %p163 = scmp.lt.s32.totalorder %s162, 63
      %s164 = scalar_select %p163, %s162, 63
      %s165 = smul.addr %s164, 8
      %s166 = scalar_lea.vmem %s0, %s165
      %s167 = smul.u32 32, %s14
      %s168 = smul.u32 32, %s14
      %p169 = scmp.lt.s32.totalorder %s168, 63
      %s170 = scalar_select %p169, %s168, 63
      %s171 = smul.addr %s170, 8
      %s172 = scalar_lea.vmem %s3, %s171
      %s173 = smul.u32 32, %s14
      %v174 = vld [vmem:[%s166] sm:$0xff]
      %v175 = vld [vmem:[%s166 + $0x8] sm:$0xff]
      %v176 = vld [vmem:[%s166 + $0x10] sm:$0xff]
      %v177 = vld [vmem:[%s166 + $0x18] sm:$0xff]
      %v178 = vld [vmem:[%s166 + $0x20] sm:$0xff]
      %v179 = vld [vmem:[%s166 + $0x28] sm:$0xff]
      %v180 = vld [vmem:[%s166 + $0x30] sm:$0xff]
      %v181 = vld [vmem:[%s166 + $0x38] sm:$0xff]
      %v182 = vld [vmem:[%s166 + $0x40] sm:$0xff]
      %v183 = vld [vmem:[%s166 + $0x48] sm:$0xff]
      %v184 = vld [vmem:[%s166 + $0x50] sm:$0xff]
      %v185 = vld [vmem:[%s166 + $0x58] sm:$0xff]
      %v186 = vld [vmem:[%s166 + $0x60] sm:$0xff]
      %v187 = vld [vmem:[%s166 + $0x68] sm:$0xff]
      %v188 = vld [vmem:[%s166 + $0x70] sm:$0xff]
      %v189 = vld [vmem:[%s166 + $0x78] sm:$0xff]
      %v190 = vld [vmem:[%s166 + $0x80] sm:$0xff]
      %v191 = vld [vmem:[%s166 + $0x88] sm:$0xff]
      %v192 = vld [vmem:[%s166 + $0x90] sm:$0xff]
      %v193 = vld [vmem:[%s166 + $0x98] sm:$0xff]
      %v194 = vld [vmem:[%s166 + $0xa0] sm:$0xff]
      %v195 = vld [vmem:[%s166 + $0xa8] sm:$0xff]
      %v196 = vld [vmem:[%s166 + $0xb0] sm:$0xff]
      %v197 = vld [vmem:[%s166 + $0xb8] sm:$0xff]
      %v198 = vld [vmem:[%s166 + $0xc0] sm:$0xff]
      %v199 = vld [vmem:[%s166 + $0xc8] sm:$0xff]
      %v200 = vld [vmem:[%s166 + $0xd0] sm:$0xff]
      %v201 = vld [vmem:[%s166 + $0xd8] sm:$0xff]
      %v202 = vld [vmem:[%s166 + $0xe0] sm:$0xff]
      %v203 = vld [vmem:[%s166 + $0xe8] sm:$0xff]
      %v204 = vld [vmem:[%s166 + $0xf0] sm:$0xff]
      %v205 = vld [vmem:[%s166 + $0xf8] sm:$0xff]
      %v206 = vld [vmem:[%s1] sm:$0xf]
      %208 = vset.pattern.permute.xlu0 0
      %209 = vperm.xlu0 %208, %v174
      %v210 = vpop.permute.xlu0 %209
      %213 = vset.pattern.permute.xlu0 0
      %214 = vperm.xlu0 %213, %v175
      %v215 = vpop.permute.xlu0 %214
      %218 = vset.pattern.permute.xlu0 0
      %219 = vperm.xlu0 %218, %v176
      %v220 = vpop.permute.xlu0 %219
      %223 = vset.pattern.permute.xlu0 0
      %224 = vperm.xlu0 %223, %v177
      %v225 = vpop.permute.xlu0 %224
      %228 = vset.pattern.permute.xlu0 0
      %229 = vperm.xlu0 %228, %v178
      %v230 = vpop.permute.xlu0 %229
      %233 = vset.pattern.permute.xlu0 0
      %234 = vperm.xlu0 %233, %v179
      %v235 = vpop.permute.xlu0 %234
      %238 = vset.pattern.permute.xlu0 0
      %239 = vperm.xlu0 %238, %v180
      %v240 = vpop.permute.xlu0 %239
      %243 = vset.pattern.permute.xlu0 0
      %244 = vperm.xlu0 %243, %v181
      %v245 = vpop.permute.xlu0 %244
      %248 = vset.pattern.permute.xlu0 0
      %249 = vperm.xlu0 %248, %v182
      %v250 = vpop.permute.xlu0 %249
      %253 = vset.pattern.permute.xlu0 0
      %254 = vperm.xlu0 %253, %v183
      %v255 = vpop.permute.xlu0 %254
      %258 = vset.pattern.permute.xlu0 0
      %259 = vperm.xlu0 %258, %v184
      %v260 = vpop.permute.xlu0 %259
      %263 = vset.pattern.permute.xlu0 0
      %264 = vperm.xlu0 %263, %v185
      %v265 = vpop.permute.xlu0 %264
      %268 = vset.pattern.permute.xlu0 0
      %269 = vperm.xlu0 %268, %v186
      %v270 = vpop.permute.xlu0 %269
      %273 = vset.pattern.permute.xlu0 0
      %274 = vperm.xlu0 %273, %v187
      %v275 = vpop.permute.xlu0 %274
      %278 = vset.pattern.permute.xlu0 0
      %279 = vperm.xlu0 %278, %v188
      %v280 = vpop.permute.xlu0 %279
      %283 = vset.pattern.permute.xlu0 0
      %284 = vperm.xlu0 %283, %v189
      %v285 = vpop.permute.xlu0 %284
      %288 = vset.pattern.permute.xlu0 0
      %289 = vperm.xlu0 %288, %v190
      %v290 = vpop.permute.xlu0 %289
      %293 = vset.pattern.permute.xlu0 0
      %294 = vperm.xlu0 %293, %v191
      %v295 = vpop.permute.xlu0 %294
      %298 = vset.pattern.permute.xlu0 0
      %299 = vperm.xlu0 %298, %v192
      %v300 = vpop.permute.xlu0 %299
      %303 = vset.pattern.permute.xlu0 0
      %304 = vperm.xlu0 %303, %v193
      %v305 = vpop.permute.xlu0 %304
      %308 = vset.pattern.permute.xlu0 0
      %309 = vperm.xlu0 %308, %v194
      %v310 = vpop.permute.xlu0 %309
      %313 = vset.pattern.permute.xlu0 0
      %314 = vperm.xlu0 %313, %v195
      %v315 = vpop.permute.xlu0 %314
      %318 = vset.pattern.permute.xlu0 0
      %319 = vperm.xlu0 %318, %v196
      %v320 = vpop.permute.xlu0 %319
      %323 = vset.pattern.permute.xlu0 0
      %324 = vperm.xlu0 %323, %v197
      %v325 = vpop.permute.xlu0 %324
      %328 = vset.pattern.permute.xlu0 0
      %329 = vperm.xlu0 %328, %v198
      %v330 = vpop.permute.xlu0 %329
      %333 = vset.pattern.permute.xlu0 0
      %334 = vperm.xlu0 %333, %v199
      %v335 = vpop.permute.xlu0 %334
      %338 = vset.pattern.permute.xlu0 0
      %339 = vperm.xlu0 %338, %v200
      %v340 = vpop.permute.xlu0 %339
      %343 = vset.pattern.permute.xlu0 0
      %344 = vperm.xlu0 %343, %v201
      %v345 = vpop.permute.xlu0 %344
      %348 = vset.pattern.permute.xlu0 0
      %349 = vperm.xlu0 %348, %v202
      %v350 = vpop.permute.xlu0 %349
      %353 = vset.pattern.permute.xlu0 0
      %354 = vperm.xlu0 %353, %v203
      %v355 = vpop.permute.xlu0 %354
      %358 = vset.pattern.permute.xlu0 0
      %359 = vperm.xlu0 %358, %v204
      %v360 = vpop.permute.xlu0 %359
      %363 = vset.pattern.permute.xlu0 0
      %364 = vperm.xlu0 %363, %v205
      %v365 = vpop.permute.xlu0 %364
      %v367 = vperm.slane %v206, 0
      %v368 = vmul.f32 %v210, %v367
      %v369 = vmul.f32 %v215, %v367
      %v370 = vmul.f32 %v220, %v367
      %v371 = vmul.f32 %v225, %v367
      %v372 = vmul.f32 %v230, %v367
      %v373 = vmul.f32 %v235, %v367
      %v374 = vmul.f32 %v240, %v367
      %v375 = vmul.f32 %v245, %v367
      %v376 = vmul.f32 %v250, %v367
      %v377 = vmul.f32 %v255, %v367
      %v378 = vmul.f32 %v260, %v367
      %v379 = vmul.f32 %v265, %v367
      %v380 = vmul.f32 %v270, %v367
      %v381 = vmul.f32 %v275, %v367
      %v382 = vmul.f32 %v280, %v367
      %v383 = vmul.f32 %v285, %v367
      %v384 = vmul.f32 %v290, %v367
      %v385 = vmul.f32 %v295, %v367
      %v386 = vmul.f32 %v300, %v367
      %v387 = vmul.f32 %v305, %v367
      %v388 = vmul.f32 %v310, %v367
      %v389 = vmul.f32 %v315, %v367
      %v390 = vmul.f32 %v320, %v367
      %v391 = vmul.f32 %v325, %v367
      %v392 = vmul.f32 %v330, %v367
      %v393 = vmul.f32 %v335, %v367
      %v394 = vmul.f32 %v340, %v367
      %v395 = vmul.f32 %v345, %v367
      %v396 = vmul.f32 %v350, %v367
      %v397 = vmul.f32 %v355, %v367
      %v398 = vmul.f32 %v360, %v367
      %v399 = vmul.f32 %v365, %v367
      %400 = vset.pattern.permute.xlu0 1
      %401 = vperm.xlu0 %400, %v174
      %v402 = vpop.permute.xlu0 %401
      %404 = vset.pattern.permute.xlu0 1
      %405 = vperm.xlu0 %404, %v175
      %v406 = vpop.permute.xlu0 %405
      %408 = vset.pattern.permute.xlu0 1
      %409 = vperm.xlu0 %408, %v176
      %v410 = vpop.permute.xlu0 %409
      %412 = vset.pattern.permute.xlu0 1
      %413 = vperm.xlu0 %412, %v177
      %v414 = vpop.permute.xlu0 %413
      %416 = vset.pattern.permute.xlu0 1
      %417 = vperm.xlu0 %416, %v178
      %v418 = vpop.permute.xlu0 %417
      %420 = vset.pattern.permute.xlu0 1
      %421 = vperm.xlu0 %420, %v179
      %v422 = vpop.permute.xlu0 %421
      %424 = vset.pattern.permute.xlu0 1
      %425 = vperm.xlu0 %424, %v180
      %v426 = vpop.permute.xlu0 %425
      %428 = vset.pattern.permute.xlu0 1
      %429 = vperm.xlu0 %428, %v181
      %v430 = vpop.permute.xlu0 %429
      %432 = vset.pattern.permute.xlu0 1
      %433 = vperm.xlu0 %432, %v182
      %v434 = vpop.permute.xlu0 %433
      %436 = vset.pattern.permute.xlu0 1
      %437 = vperm.xlu0 %436, %v183
      %v438 = vpop.permute.xlu0 %437
      %440 = vset.pattern.permute.xlu0 1
      %441 = vperm.xlu0 %440, %v184
      %v442 = vpop.permute.xlu0 %441
      %444 = vset.pattern.permute.xlu0 1
      %445 = vperm.xlu0 %444, %v185
      %v446 = vpop.permute.xlu0 %445
      %448 = vset.pattern.permute.xlu0 1
      %449 = vperm.xlu0 %448, %v186
      %v450 = vpop.permute.xlu0 %449
      %452 = vset.pattern.permute.xlu0 1
      %453 = vperm.xlu0 %452, %v187
      %v454 = vpop.permute.xlu0 %453
      %456 = vset.pattern.permute.xlu0 1
      %457 = vperm.xlu0 %456, %v188
      %v458 = vpop.permute.xlu0 %457
      %460 = vset.pattern.permute.xlu0 1
      %461 = vperm.xlu0 %460, %v189
      %v462 = vpop.permute.xlu0 %461
      %464 = vset.pattern.permute.xlu0 1
      %465 = vperm.xlu0 %464, %v190
      %v466 = vpop.permute.xlu0 %465
      %468 = vset.pattern.permute.xlu0 1
      %469 = vperm.xlu0 %468, %v191
      %v470 = vpop.permute.xlu0 %469
      %472 = vset.pattern.permute.xlu0 1
      %473 = vperm.xlu0 %472, %v192
      %v474 = vpop.permute.xlu0 %473
      %476 = vset.pattern.permute.xlu0 1
      %477 = vperm.xlu0 %476, %v193
      %v478 = vpop.permute.xlu0 %477
      %480 = vset.pattern.permute.xlu0 1
      %481 = vperm.xlu0 %480, %v194
      %v482 = vpop.permute.xlu0 %481
      %484 = vset.pattern.permute.xlu0 1
      %485 = vperm.xlu0 %484, %v195
      %v486 = vpop.permute.xlu0 %485
      %488 = vset.pattern.permute.xlu0 1
      %489 = vperm.xlu0 %488, %v196
      %v490 = vpop.permute.xlu0 %489
      %492 = vset.pattern.permute.xlu0 1
      %493 = vperm.xlu0 %492, %v197
      %v494 = vpop.permute.xlu0 %493
      %496 = vset.pattern.permute.xlu0 1
      %497 = vperm.xlu0 %496, %v198
      %v498 = vpop.permute.xlu0 %497
      %500 = vset.pattern.permute.xlu0 1
      %501 = vperm.xlu0 %500, %v199
      %v502 = vpop.permute.xlu0 %501
      %504 = vset.pattern.permute.xlu0 1
      %505 = vperm.xlu0 %504, %v200
      %v506 = vpop.permute.xlu0 %505
      %508 = vset.pattern.permute.xlu0 1
      %509 = vperm.xlu0 %508, %v201
      %v510 = vpop.permute.xlu0 %509
      %512 = vset.pattern.permute.xlu0 1
      %513 = vperm.xlu0 %512, %v202
      %v514 = vpop.permute.xlu0 %513
      %516 = vset.pattern.permute.xlu0 1
      %517 = vperm.xlu0 %516, %v203
      %v518 = vpop.permute.xlu0 %517
      %520 = vset.pattern.permute.xlu0 1
      %521 = vperm.xlu0 %520, %v204
      %v522 = vpop.permute.xlu0 %521
      %524 = vset.pattern.permute.xlu0 1
      %525 = vperm.xlu0 %524, %v205
      %v526 = vpop.permute.xlu0 %525
      %v528 = vperm.slane %v206, 1
      %v529 = vmul.f32 %v402, %v528
      %v530 = vmul.f32 %v406, %v528
      %v531 = vmul.f32 %v410, %v528
      %v532 = vmul.f32 %v414, %v528
      %v533 = vmul.f32 %v418, %v528
      %v534 = vmul.f32 %v422, %v528
      %v535 = vmul.f32 %v426, %v528
      %v536 = vmul.f32 %v430, %v528
      %v537 = vmul.f32 %v434, %v528
      %v538 = vmul.f32 %v438, %v528
      %v539 = vmul.f32 %v442, %v528
      %v540 = vmul.f32 %v446, %v528
      %v541 = vmul.f32 %v450, %v528
      %v542 = vmul.f32 %v454, %v528
      %v543 = vmul.f32 %v458, %v528
      %v544 = vmul.f32 %v462, %v528
      %v545 = vmul.f32 %v466, %v528
      %v546 = vmul.f32 %v470, %v528
      %v547 = vmul.f32 %v474, %v528
      %v548 = vmul.f32 %v478, %v528
      %v549 = vmul.f32 %v482, %v528
      %v550 = vmul.f32 %v486, %v528
      %v551 = vmul.f32 %v490, %v528
      %v552 = vmul.f32 %v494, %v528
      %v553 = vmul.f32 %v498, %v528
      %v554 = vmul.f32 %v502, %v528
      %v555 = vmul.f32 %v506, %v528
      %v556 = vmul.f32 %v510, %v528
      %v557 = vmul.f32 %v514, %v528
      %v558 = vmul.f32 %v518, %v528
      %v559 = vmul.f32 %v522, %v528
      %v560 = vmul.f32 %v526, %v528
      %v561 = vadd.f32 %v368, %v529
      %v562 = vadd.f32 %v369, %v530
      %v563 = vadd.f32 %v370, %v531
      %v564 = vadd.f32 %v371, %v532
      %v565 = vadd.f32 %v372, %v533
      %v566 = vadd.f32 %v373, %v534
      %v567 = vadd.f32 %v374, %v535
      %v568 = vadd.f32 %v375, %v536
      %v569 = vadd.f32 %v376, %v537
      %v570 = vadd.f32 %v377, %v538
      %v571 = vadd.f32 %v378, %v539
      %v572 = vadd.f32 %v379, %v540
      %v573 = vadd.f32 %v380, %v541
      %v574 = vadd.f32 %v381, %v542
      %v575 = vadd.f32 %v382, %v543
      %v576 = vadd.f32 %v383, %v544
      %v577 = vadd.f32 %v384, %v545
      %v578 = vadd.f32 %v385, %v546
      %v579 = vadd.f32 %v386, %v547
      %v580 = vadd.f32 %v387, %v548
      %v581 = vadd.f32 %v388, %v549
      %v582 = vadd.f32 %v389, %v550
      %v583 = vadd.f32 %v390, %v551
      %v584 = vadd.f32 %v391, %v552
      %v585 = vadd.f32 %v392, %v553
      %v586 = vadd.f32 %v393, %v554
      %v587 = vadd.f32 %v394, %v555
      %v588 = vadd.f32 %v395, %v556
      %v589 = vadd.f32 %v396, %v557
      %v590 = vadd.f32 %v397, %v558
      %v591 = vadd.f32 %v398, %v559
      %v592 = vadd.f32 %v399, %v560
      %593 = vset.pattern.permute.xlu0 2
      %594 = vperm.xlu0 %593, %v174
      %v595 = vpop.permute.xlu0 %594
      %597 = vset.pattern.permute.xlu0 2
      %598 = vperm.xlu0 %597, %v175
      %v599 = vpop.permute.xlu0 %598
      %601 = vset.pattern.permute.xlu0 2
      %602 = vperm.xlu0 %601, %v176
      %v603 = vpop.permute.xlu0 %602
      %605 = vset.pattern.permute.xlu0 2
      %606 = vperm.xlu0 %605, %v177
      %v607 = vpop.permute.xlu0 %606
      %609 = vset.pattern.permute.xlu0 2
      %610 = vperm.xlu0 %609, %v178
      %v611 = vpop.permute.xlu0 %610
      %613 = vset.pattern.permute.xlu0 2
      %614 = vperm.xlu0 %613, %v179
      %v615 = vpop.permute.xlu0 %614
      %617 = vset.pattern.permute.xlu0 2
      %618 = vperm.xlu0 %617, %v180
      %v619 = vpop.permute.xlu0 %618
      %621 = vset.pattern.permute.xlu0 2
      %622 = vperm.xlu0 %621, %v181
      %v623 = vpop.permute.xlu0 %622
      %625 = vset.pattern.permute.xlu0 2
      %626 = vperm.xlu0 %625, %v182
      %v627 = vpop.permute.xlu0 %626
      %629 = vset.pattern.permute.xlu0 2
      %630 = vperm.xlu0 %629, %v183
      %v631 = vpop.permute.xlu0 %630
      %633 = vset.pattern.permute.xlu0 2
      %634 = vperm.xlu0 %633, %v184
      %v635 = vpop.permute.xlu0 %634
      %637 = vset.pattern.permute.xlu0 2
      %638 = vperm.xlu0 %637, %v185
      %v639 = vpop.permute.xlu0 %638
      %641 = vset.pattern.permute.xlu0 2
      %642 = vperm.xlu0 %641, %v186
      %v643 = vpop.permute.xlu0 %642
      %645 = vset.pattern.permute.xlu0 2
      %646 = vperm.xlu0 %645, %v187
      %v647 = vpop.permute.xlu0 %646
      %649 = vset.pattern.permute.xlu0 2
      %650 = vperm.xlu0 %649, %v188
      %v651 = vpop.permute.xlu0 %650
      %653 = vset.pattern.permute.xlu0 2
      %654 = vperm.xlu0 %653, %v189
      %v655 = vpop.permute.xlu0 %654
      %657 = vset.pattern.permute.xlu0 2
      %658 = vperm.xlu0 %657, %v190
      %v659 = vpop.permute.xlu0 %658
      %661 = vset.pattern.permute.xlu0 2
      %662 = vperm.xlu0 %661, %v191
      %v663 = vpop.permute.xlu0 %662
      %665 = vset.pattern.permute.xlu0 2
      %666 = vperm.xlu0 %665, %v192
      %v667 = vpop.permute.xlu0 %666
      %669 = vset.pattern.permute.xlu0 2
      %670 = vperm.xlu0 %669, %v193
      %v671 = vpop.permute.xlu0 %670
      %673 = vset.pattern.permute.xlu0 2
      %674 = vperm.xlu0 %673, %v194
      %v675 = vpop.permute.xlu0 %674
      %677 = vset.pattern.permute.xlu0 2
      %678 = vperm.xlu0 %677, %v195
      %v679 = vpop.permute.xlu0 %678
      %681 = vset.pattern.permute.xlu0 2
      %682 = vperm.xlu0 %681, %v196
      %v683 = vpop.permute.xlu0 %682
      %685 = vset.pattern.permute.xlu0 2
      %686 = vperm.xlu0 %685, %v197
      %v687 = vpop.permute.xlu0 %686
      %689 = vset.pattern.permute.xlu0 2
      %690 = vperm.xlu0 %689, %v198
      %v691 = vpop.permute.xlu0 %690
      %693 = vset.pattern.permute.xlu0 2
      %694 = vperm.xlu0 %693, %v199
      %v695 = vpop.permute.xlu0 %694
      %697 = vset.pattern.permute.xlu0 2
      %698 = vperm.xlu0 %697, %v200
      %v699 = vpop.permute.xlu0 %698
      %701 = vset.pattern.permute.xlu0 2
      %702 = vperm.xlu0 %701, %v201
      %v703 = vpop.permute.xlu0 %702
      %705 = vset.pattern.permute.xlu0 2
      %706 = vperm.xlu0 %705, %v202
      %v707 = vpop.permute.xlu0 %706
      %709 = vset.pattern.permute.xlu0 2
      %710 = vperm.xlu0 %709, %v203
      %v711 = vpop.permute.xlu0 %710
      %713 = vset.pattern.permute.xlu0 2
      %714 = vperm.xlu0 %713, %v204
      %v715 = vpop.permute.xlu0 %714
      %717 = vset.pattern.permute.xlu0 2
      %718 = vperm.xlu0 %717, %v205
      %v719 = vpop.permute.xlu0 %718
      %v721 = vperm.slane %v206, 2
      %v722 = vmul.f32 %v595, %v721
      %v723 = vmul.f32 %v599, %v721
      %v724 = vmul.f32 %v603, %v721
      %v725 = vmul.f32 %v607, %v721
      %v726 = vmul.f32 %v611, %v721
      %v727 = vmul.f32 %v615, %v721
      %v728 = vmul.f32 %v619, %v721
      %v729 = vmul.f32 %v623, %v721
      %v730 = vmul.f32 %v627, %v721
      %v731 = vmul.f32 %v631, %v721
      %v732 = vmul.f32 %v635, %v721
      %v733 = vmul.f32 %v639, %v721
      %v734 = vmul.f32 %v643, %v721
      %v735 = vmul.f32 %v647, %v721
      %v736 = vmul.f32 %v651, %v721
      %v737 = vmul.f32 %v655, %v721
      %v738 = vmul.f32 %v659, %v721
      %v739 = vmul.f32 %v663, %v721
      %v740 = vmul.f32 %v667, %v721
      %v741 = vmul.f32 %v671, %v721
      %v742 = vmul.f32 %v675, %v721
      %v743 = vmul.f32 %v679, %v721
      %v744 = vmul.f32 %v683, %v721
      %v745 = vmul.f32 %v687, %v721
      %v746 = vmul.f32 %v691, %v721
      %v747 = vmul.f32 %v695, %v721
      %v748 = vmul.f32 %v699, %v721
      %v749 = vmul.f32 %v703, %v721
      %v750 = vmul.f32 %v707, %v721
      %v751 = vmul.f32 %v711, %v721
      %v752 = vmul.f32 %v715, %v721
      %v753 = vmul.f32 %v719, %v721
      %v754 = vadd.f32 %v561, %v722
      %v755 = vadd.f32 %v562, %v723
      %v756 = vadd.f32 %v563, %v724
      %v757 = vadd.f32 %v564, %v725
      %v758 = vadd.f32 %v565, %v726
      %v759 = vadd.f32 %v566, %v727
      %v760 = vadd.f32 %v567, %v728
      %v761 = vadd.f32 %v568, %v729
      %v762 = vadd.f32 %v569, %v730
      %v763 = vadd.f32 %v570, %v731
      %v764 = vadd.f32 %v571, %v732
      %v765 = vadd.f32 %v572, %v733
      %v766 = vadd.f32 %v573, %v734
      %v767 = vadd.f32 %v574, %v735
      %v768 = vadd.f32 %v575, %v736
      %v769 = vadd.f32 %v576, %v737
      %v770 = vadd.f32 %v577, %v738
      %v771 = vadd.f32 %v578, %v739
      %v772 = vadd.f32 %v579, %v740
      %v773 = vadd.f32 %v580, %v741
      %v774 = vadd.f32 %v581, %v742
      %v775 = vadd.f32 %v582, %v743
      %v776 = vadd.f32 %v583, %v744
      %v777 = vadd.f32 %v584, %v745
      %v778 = vadd.f32 %v585, %v746
      %v779 = vadd.f32 %v586, %v747
      %v780 = vadd.f32 %v587, %v748
      %v781 = vadd.f32 %v588, %v749
      %v782 = vadd.f32 %v589, %v750
      %v783 = vadd.f32 %v590, %v751
      %v784 = vadd.f32 %v591, %v752
      %v785 = vadd.f32 %v592, %v753
      %786 = vset.pattern.permute.xlu0 3
      %787 = vperm.xlu0 %786, %v174
      %v788 = vpop.permute.xlu0 %787
      %790 = vset.pattern.permute.xlu0 3
      %791 = vperm.xlu0 %790, %v175
      %v792 = vpop.permute.xlu0 %791
      %794 = vset.pattern.permute.xlu0 3
      %795 = vperm.xlu0 %794, %v176
      %v796 = vpop.permute.xlu0 %795
      %798 = vset.pattern.permute.xlu0 3
      %799 = vperm.xlu0 %798, %v177
      %v800 = vpop.permute.xlu0 %799
      %802 = vset.pattern.permute.xlu0 3
      %803 = vperm.xlu0 %802, %v178
      %v804 = vpop.permute.xlu0 %803
      %806 = vset.pattern.permute.xlu0 3
      %807 = vperm.xlu0 %806, %v179
      %v808 = vpop.permute.xlu0 %807
      %810 = vset.pattern.permute.xlu0 3
      %811 = vperm.xlu0 %810, %v180
      %v812 = vpop.permute.xlu0 %811
      %814 = vset.pattern.permute.xlu0 3
      %815 = vperm.xlu0 %814, %v181
      %v816 = vpop.permute.xlu0 %815
      %818 = vset.pattern.permute.xlu0 3
      %819 = vperm.xlu0 %818, %v182
      %v820 = vpop.permute.xlu0 %819
      %822 = vset.pattern.permute.xlu0 3
      %823 = vperm.xlu0 %822, %v183
      %v824 = vpop.permute.xlu0 %823
      %826 = vset.pattern.permute.xlu0 3
      %827 = vperm.xlu0 %826, %v184
      %v828 = vpop.permute.xlu0 %827
      %830 = vset.pattern.permute.xlu0 3
      %831 = vperm.xlu0 %830, %v185
      %v832 = vpop.permute.xlu0 %831
      %834 = vset.pattern.permute.xlu0 3
      %835 = vperm.xlu0 %834, %v186
      %v836 = vpop.permute.xlu0 %835
      %838 = vset.pattern.permute.xlu0 3
      %839 = vperm.xlu0 %838, %v187
      %v840 = vpop.permute.xlu0 %839
      %842 = vset.pattern.permute.xlu0 3
      %843 = vperm.xlu0 %842, %v188
      %v844 = vpop.permute.xlu0 %843
      %846 = vset.pattern.permute.xlu0 3
      %847 = vperm.xlu0 %846, %v189
      %v848 = vpop.permute.xlu0 %847
      %850 = vset.pattern.permute.xlu0 3
      %851 = vperm.xlu0 %850, %v190
      %v852 = vpop.permute.xlu0 %851
      %854 = vset.pattern.permute.xlu0 3
      %855 = vperm.xlu0 %854, %v191
      %v856 = vpop.permute.xlu0 %855
      %858 = vset.pattern.permute.xlu0 3
      %859 = vperm.xlu0 %858, %v192
      %v860 = vpop.permute.xlu0 %859
      %862 = vset.pattern.permute.xlu0 3
      %863 = vperm.xlu0 %862, %v193
      %v864 = vpop.permute.xlu0 %863
      %866 = vset.pattern.permute.xlu0 3
      %867 = vperm.xlu0 %866, %v194
      %v868 = vpop.permute.xlu0 %867
      %870 = vset.pattern.permute.xlu0 3
      %871 = vperm.xlu0 %870, %v195
      %v872 = vpop.permute.xlu0 %871
      %874 = vset.pattern.permute.xlu0 3
      %875 = vperm.xlu0 %874, %v196
      %v876 = vpop.permute.xlu0 %875
      %878 = vset.pattern.permute.xlu0 3
      %879 = vperm.xlu0 %878, %v197
      %v880 = vpop.permute.xlu0 %879
      %882 = vset.pattern.permute.xlu0 3
      %883 = vperm.xlu0 %882, %v198
      %v884 = vpop.permute.xlu0 %883
      %886 = vset.pattern.permute.xlu0 3
      %887 = vperm.xlu0 %886, %v199
      %v888 = vpop.permute.xlu0 %887
      %890 = vset.pattern.permute.xlu0 3
      %891 = vperm.xlu0 %890, %v200
      %v892 = vpop.permute.xlu0 %891
      %894 = vset.pattern.permute.xlu0 3
      %895 = vperm.xlu0 %894, %v201
      %v896 = vpop.permute.xlu0 %895
      %898 = vset.pattern.permute.xlu0 3
      %899 = vperm.xlu0 %898, %v202
      %v900 = vpop.permute.xlu0 %899
      %902 = vset.pattern.permute.xlu0 3
      %903 = vperm.xlu0 %902, %v203
      %v904 = vpop.permute.xlu0 %903
      %906 = vset.pattern.permute.xlu0 3
      %907 = vperm.xlu0 %906, %v204
      %v908 = vpop.permute.xlu0 %907
      %910 = vset.pattern.permute.xlu0 3
      %911 = vperm.xlu0 %910, %v205
      %v912 = vpop.permute.xlu0 %911
      %v914 = vperm.slane %v206, 3
      %v915 = vmul.f32 %v788, %v914
      %v916 = vmul.f32 %v792, %v914
      %v917 = vmul.f32 %v796, %v914
      %v918 = vmul.f32 %v800, %v914
      %v919 = vmul.f32 %v804, %v914
      %v920 = vmul.f32 %v808, %v914
      %v921 = vmul.f32 %v812, %v914
      %v922 = vmul.f32 %v816, %v914
      %v923 = vmul.f32 %v820, %v914
      %v924 = vmul.f32 %v824, %v914
      %v925 = vmul.f32 %v828, %v914
      %v926 = vmul.f32 %v832, %v914
      %v927 = vmul.f32 %v836, %v914
      %v928 = vmul.f32 %v840, %v914
      %v929 = vmul.f32 %v844, %v914
      %v930 = vmul.f32 %v848, %v914
      %v931 = vmul.f32 %v852, %v914
      %v932 = vmul.f32 %v856, %v914
      %v933 = vmul.f32 %v860, %v914
      %v934 = vmul.f32 %v864, %v914
      %v935 = vmul.f32 %v868, %v914
      %v936 = vmul.f32 %v872, %v914
      %v937 = vmul.f32 %v876, %v914
      %v938 = vmul.f32 %v880, %v914
      %v939 = vmul.f32 %v884, %v914
      %v940 = vmul.f32 %v888, %v914
      %v941 = vmul.f32 %v892, %v914
      %v942 = vmul.f32 %v896, %v914
      %v943 = vmul.f32 %v900, %v914
      %v944 = vmul.f32 %v904, %v914
      %v945 = vmul.f32 %v908, %v914
      %v946 = vmul.f32 %v912, %v914
      %v947 = vadd.f32 %v754, %v915
      %v948 = vadd.f32 %v755, %v916
      %v949 = vadd.f32 %v756, %v917
      %v950 = vadd.f32 %v757, %v918
      %v951 = vadd.f32 %v758, %v919
      %v952 = vadd.f32 %v759, %v920
      %v953 = vadd.f32 %v760, %v921
      %v954 = vadd.f32 %v761, %v922
      %v955 = vadd.f32 %v762, %v923
      %v956 = vadd.f32 %v763, %v924
      %v957 = vadd.f32 %v764, %v925
      %v958 = vadd.f32 %v765, %v926
      %v959 = vadd.f32 %v766, %v927
      %v960 = vadd.f32 %v767, %v928
      %v961 = vadd.f32 %v768, %v929
      %v962 = vadd.f32 %v769, %v930
      %v963 = vadd.f32 %v770, %v931
      %v964 = vadd.f32 %v771, %v932
      %v965 = vadd.f32 %v772, %v933
      %v966 = vadd.f32 %v773, %v934
      %v967 = vadd.f32 %v774, %v935
      %v968 = vadd.f32 %v775, %v936
      %v969 = vadd.f32 %v776, %v937
      %v970 = vadd.f32 %v777, %v938
      %v971 = vadd.f32 %v778, %v939
      %v972 = vadd.f32 %v779, %v940
      %v973 = vadd.f32 %v780, %v941
      %v974 = vadd.f32 %v781, %v942
      %v975 = vadd.f32 %v782, %v943
      %v976 = vadd.f32 %v783, %v944
      %v977 = vadd.f32 %v784, %v945
      %v978 = vadd.f32 %v785, %v946
      %v979 = vld [vmem:[%s2] sm:$0x1]
      %v981 = vperm.slane %v979, 0
      %v983 = vadd.f32 %v947, %v981
      %v984 = vadd.f32 %v948, %v981
      %v985 = vadd.f32 %v949, %v981
      %v986 = vadd.f32 %v950, %v981
      %v987 = vadd.f32 %v951, %v981
      %v988 = vadd.f32 %v952, %v981
      %v989 = vadd.f32 %v953, %v981
      %v990 = vadd.f32 %v954, %v981
      %v991 = vadd.f32 %v955, %v981
      %v992 = vadd.f32 %v956, %v981
      %v993 = vadd.f32 %v957, %v981
      %v994 = vadd.f32 %v958, %v981
      %v995 = vadd.f32 %v959, %v981
      %v996 = vadd.f32 %v960, %v981
      %v997 = vadd.f32 %v961, %v981
      %v998 = vadd.f32 %v962, %v981
      %v999 = vadd.f32 %v963, %v981
      %v1000 = vadd.f32 %v964, %v981
      %v1001 = vadd.f32 %v965, %v981
      %v1002 = vadd.f32 %v966, %v981
      %v1003 = vadd.f32 %v967, %v981
      %v1004 = vadd.f32 %v968, %v981
      %v1005 = vadd.f32 %v969, %v981
      %v1006 = vadd.f32 %v970, %v981
      %v1007 = vadd.f32 %v971, %v981
      %v1008 = vadd.f32 %v972, %v981
      %v1009 = vadd.f32 %v973, %v981
      %v1010 = vadd.f32 %v974, %v981
      %v1011 = vadd.f32 %v975, %v981
      %v1012 = vadd.f32 %v976, %v981
      %v1013 = vadd.f32 %v977, %v981
      %v1014 = vadd.f32 %v978, %v981
      %vm1015 = vcmask 523264
      %1016 = vst.msk [vmem:[%s172] sm:$0xff] %vm1015, %v983
      %1017 = vst.msk [vmem:[%s172 + $0x8] sm:$0xff] %vm1015, %v984
      %1018 = vst.msk [vmem:[%s172 + $0x10] sm:$0xff] %vm1015, %v985
      %1019 = vst.msk [vmem:[%s172 + $0x18] sm:$0xff] %vm1015, %v986
      %1020 = vst.msk [vmem:[%s172 + $0x20] sm:$0xff] %vm1015, %v987
      %1021 = vst.msk [vmem:[%s172 + $0x28] sm:$0xff] %vm1015, %v988
      %1022 = vst.msk [vmem:[%s172 + $0x30] sm:$0xff] %vm1015, %v989
      %1023 = vst.msk [vmem:[%s172 + $0x38] sm:$0xff] %vm1015, %v990
      %1024 = vst.msk [vmem:[%s172 + $0x40] sm:$0xff] %vm1015, %v991
      %1025 = vst.msk [vmem:[%s172 + $0x48] sm:$0xff] %vm1015, %v992
      %1026 = vst.msk [vmem:[%s172 + $0x50] sm:$0xff] %vm1015, %v993
      %1027 = vst.msk [vmem:[%s172 + $0x58] sm:$0xff] %vm1015, %v994
      %1028 = vst.msk [vmem:[%s172 + $0x60] sm:$0xff] %vm1015, %v995
      %1029 = vst.msk [vmem:[%s172 + $0x68] sm:$0xff] %vm1015, %v996
      %1030 = vst.msk [vmem:[%s172 + $0x70] sm:$0xff] %vm1015, %v997
      %1031 = vst.msk [vmem:[%s172 + $0x78] sm:$0xff] %vm1015, %v998
      %1032 = vst.msk [vmem:[%s172 + $0x80] sm:$0xff] %vm1015, %v999
      %1033 = vst.msk [vmem:[%s172 + $0x88] sm:$0xff] %vm1015, %v1000
      %1034 = vst.msk [vmem:[%s172 + $0x90] sm:$0xff] %vm1015, %v1001
      %1035 = vst.msk [vmem:[%s172 + $0x98] sm:$0xff] %vm1015, %v1002
      %1036 = vst.msk [vmem:[%s172 + $0xa0] sm:$0xff] %vm1015, %v1003
      %1037 = vst.msk [vmem:[%s172 + $0xa8] sm:$0xff] %vm1015, %v1004
      %1038 = vst.msk [vmem:[%s172 + $0xb0] sm:$0xff] %vm1015, %v1005
      %1039 = vst.msk [vmem:[%s172 + $0xb8] sm:$0xff] %vm1015, %v1006
      %1040 = vst.msk [vmem:[%s172 + $0xc0] sm:$0xff] %vm1015, %v1007
      %1041 = vst.msk [vmem:[%s172 + $0xc8] sm:$0xff] %vm1015, %v1008
      %1042 = vst.msk [vmem:[%s172 + $0xd0] sm:$0xff] %vm1015, %v1009
      %1043 = vst.msk [vmem:[%s172 + $0xd8] sm:$0xff] %vm1015, %v1010
      %1044 = vst.msk [vmem:[%s172 + $0xe0] sm:$0xff] %vm1015, %v1011
      %1045 = vst.msk [vmem:[%s172 + $0xe8] sm:$0xff] %vm1015, %v1012
      %1046 = vst.msk [vmem:[%s172 + $0xf0] sm:$0xff] %vm1015, %v1013
      %1047 = vst.msk [vmem:[%s172 + $0xf8] sm:$0xff] %vm1015, %v1014
      %s1048 = smul.u32 32, %s14
      %p1049 = scmp.lt.s32.totalorder %s1048, 63
      %s1050 = scalar_select %p1049, %s1048, 63
      %s1051 = smul.addr %s1050, 8
      %s1052 = scalar_lea.vmem %s3, %s1051
      // Predicated region
      $region33: #{gsconv_jilian_forward.11} parent=31 // pred_check
        %p1053 = pneg %p100
      $region34: #{gsconv_jilian_forward.11} parent=31 // pred_check_branch
        %1055 = sbr.rel (%p1053) target = $region36
      $region35: #{gsconv_jilian_forward.11} parent=31 // pred_region
        %s1056 = smul.u32 32, %s14
      $region36: #{gsconv_jilian_forward.11} parent=31 // pred_fallthru
        _
    $region32: #{gsconv_jilian_forward.11} parent=5 // pred_fallthru
      _
    %p1057 = scmp.le.s32.totalorder 2, %s9
    // Predicated region
    $region37: #{gsconv_jilian_forward.11} parent=5 // pred_check
      %p1058 = pneg %p1057
    $region38: #{gsconv_jilian_forward.11} parent=5 // pred_check_branch
      %1060 = sbr.rel (%p1058) target = $region40
    $region39: #{gsconv_jilian_forward.11} parent=5 // pred_region
      %s1061 = ssub.s32 %s9, 2
      // Predicated region
      $region41: #{gsconv_jilian_forward.11} parent=39 // pred_check
        %p1062 = pneg %p106
      $region42: #{gsconv_jilian_forward.11} parent=39 // pred_check_branch
        %1064 = sbr.rel (%p1062) target = $region44
      $region43: #{gsconv_jilian_forward.11} parent=39 // pred_region
        %s1065 = smul.u32 32, %s15
        %p1066 = scmp.lt.s32.totalorder %s1065, 63
        %s1067 = scalar_select %p1066, %s1065, 63
        %s1068 = smul.addr %s1067, 8
        %s1069 = scalar_lea.vmem %s3, %s1068
      $region44: #{gsconv_jilian_forward.11} parent=39 // pred_fallthru
        _
    $region40: #{gsconv_jilian_forward.11} parent=5 // pred_fallthru
      _
  $region6: #{gsconv_jilian_forward.11} parent=0 // loop_footer
    %s13 = sadd.s32 1, %s9
  $region7: #{gsconv_jilian_forward.11} parent=0 // loop_footer_branch
    %8 = sbr.rel target = $region3
  $region8: #{gsconv_jilian_forward.11} parent=0 // loop_exit
    _

// kernel: gsconv_jilian_forward.12
$region0: #{gsconv_jilian_forward.12}
  #allocation0 [shape = 'u32[]', space=smem, size = 0x4, offset = 0x4, fixed_abs, tag = 'smem constant byte address 0x4 - core index']
  #allocation1 [shape = 'u32[72,128]{1,0:T(1,128)}', space=vmem, size = 0x9000, scoped, tag = 'internal scratch']
  %s0 = inlined_call_operand.vmem [shape: f32[512,64], index: 0, kind: input, shape index: {}]
  %s1 = inlined_call_operand.vmem [shape: bf16[64,32], index: 1, kind: input, shape index: {}]
  %s2 = inlined_call_operand.vmem [shape: f32[512,32], index: 2, kind: output, shape index: {0}]
  %s3 = inlined_call_operand.vmem [shape: f32[2,1,32], index: 3, kind: output, shape index: {1}]
  %s4 = inlined_call_operand.vmem [shape: f32[2,1,32], index: 4, kind: output, shape index: {2}]
  %5 = xla_tuple %s2, %s3, %s4
  %s6 = sld [smem:[#allocation0]]
  $region57: #{gsconv_jilian_forward.12} parent=0
    _
  %s8 = ssub.s32 1, %s6
  %s9 = scalar_select 0, %s8, %s6
  loop: start=0, step=1, limit=4
  $region2: #{gsconv_jilian_forward.12} parent=0 // loop_pre_header
    _
  $region3: #{gsconv_jilian_forward.12} parent=0 // loop_header
    %s11 = sphi 0, %s15
    %p12 = scmp.ge.s32.totalorder %s11, 4
    %s21 = sphi 0, %s23
    %s24 = sphi 0, %s21
    %s25 = sphi 0, %s24
    %s41 = sphi 0, %s25
    %s45 = sphi 0, %s45
    %s47 = sphi 0, %s45
    %s48 = sphi 0, %s47
    %s62 = sphi 0, %s48
    %s68 = sphi 0, %s70
    %s71 = sphi 0, %s68
    %s72 = sphi 0, %s71
    %s88 = sphi 0, %s72
    %s94 = sphi 0, %s96
    %s97 = sphi 0, %s94
    %s98 = sphi 0, %s97
    %s114 = sphi 0, %s98
    %s120 = sphi 0, %s122
    %s123 = sphi 0, %s120
    %s124 = sphi 0, %s123
    %s140 = sphi 0, %s124
  $region4: #{gsconv_jilian_forward.12} parent=0 // loop_header_branch
    %14 = sbr.rel (%p12) target = $region8
  $region5: #{gsconv_jilian_forward.12} parent=0 // loop_body
    %s16 = ssub.s32 %s11, 1
    %s17 = ssub.s32 %s11, 2
    %s18 = sadd.s32 %s11, 1
    %s19 = ssub.s32 %s11, %s18
    %p20 = scmp.eq.s32.totalorder %s19, 0
    %s22 = sadd.s32 %s21, 1
    %s23 = scalar_select %p20, %s21, %s22
    %p26 = pneg %p20
    %p27 = scmp.eq.s32.totalorder %s11, 1
    %p28 = por %p26, %p27
    %p29 = scmp.ne.s32.totalorder %s21, %s24
    %p30 = scmp.eq.s32.totalorder %s11, 0
    %p31 = por %p29, %p30
    %p32 = scmp.ne.s32.totalorder %s21, %s24
    %p33 = scmp.eq.s32.totalorder %s16, 1
    %p34 = por %p32, %p33
    %p35 = scmp.ne.s32.totalorder %s24, %s25
    %p36 = scmp.eq.s32.totalorder %s16, 0
    %p37 = por %p35, %p36
    %p38 = scmp.ne.s32.totalorder %s24, %s25
    %p39 = scmp.eq.s32.totalorder %s17, 1
    %p40 = por %p38, %p39
    %p42 = scmp.ne.s32.totalorder %s25, %s41
    %p43 = scmp.eq.s32.totalorder %s17, 0
    %p44 = por %p42, %p43
    %s46 = sadd.s32 %s45, 1
    %p49 = scmp.eq.s32.totalorder %s11, 1
    %p50 = scmp.ne.s32.totalorder %s45, %s47
    %p51 = scmp.eq.s32.totalorder %s11, 0
    %p52 = por %p50, %p51
    %p53 = scmp.ne.s32.totalorder %s45, %s47
    %p54 = scmp.eq.s32.totalorder %s16, 1
    %p55 = por %p53, %p54
    %p56 = scmp.ne.s32.totalorder %s47, %s48
    %p57 = scmp.eq.s32.totalorder %s16, 0
    %p58 = por %p56, %p57
    %p59 = scmp.ne.s32.totalorder %s47, %s48
    %p60 = scmp.eq.s32.totalorder %s17, 1
    %p61 = por %p59, %p60
    %p63 = scmp.ne.s32.totalorder %s48, %s62
    %p64 = scmp.eq.s32.totalorder %s17, 0
    %p65 = por %p63, %p64
    %s66 = ssub.s32 %s11, %s18
    %p67 = scmp.eq.s32.totalorder %s66, 0
    %s69 = sadd.s32 %s68, 1
    %s70 = scalar_select %p67, %s68, %s69
    %p73 = pneg %p67
    %p74 = scmp.eq.s32.totalorder %s11, 1
    %p75 = por %p73, %p74
    %p76 = scmp.ne.s32.totalorder %s68, %s71
    %p77 = scmp.eq.s32.totalorder %s11, 0
    %p78 = por %p76, %p77
    %p79 = scmp.ne.s32.totalorder %s68, %s71
    %p80 = scmp.eq.s32.totalorder %s16, 1
    %p81 = por %p79, %p80
    %p82 = scmp.ne.s32.totalorder %s71, %s72
    %p83 = scmp.eq.s32.totalorder %s16, 0
    %p84 = por %p82, %p83
    %p85 = scmp.ne.s32.totalorder %s71, %s72
    %p86 = scmp.eq.s32.totalorder %s17, 1
    %p87 = por %p85, %p86
    %p89 = scmp.ne.s32.totalorder %s72, %s88
    %p90 = scmp.eq.s32.totalorder %s17, 0
    %p91 = por %p89, %p90
    %s92 = ssub.s32 %s11, %s18
    %p93 = scmp.eq.s32.totalorder %s92, 0
    %s95 = sadd.s32 %s94, 1
    %s96 = scalar_select %p93, %s94, %s95
    %p99 = pneg %p93
    %p100 = scmp.eq.s32.totalorder %s11, 1
    %p101 = por %p99, %p100
    %p102 = scmp.ne.s32.totalorder %s94, %s97
    %p103 = scmp.eq.s32.totalorder %s11, 0
    %p104 = por %p102, %p103
    %p105 = scmp.ne.s32.totalorder %s94, %s97
    %p106 = scmp.eq.s32.totalorder %s16, 1
    %p107 = por %p105, %p106
    %p108 = scmp.ne.s32.totalorder %s97, %s98
    %p109 = scmp.eq.s32.totalorder %s16, 0
    %p110 = por %p108, %p109
    %p111 = scmp.ne.s32.totalorder %s97, %s98
    %p112 = scmp.eq.s32.totalorder %s17, 1
    %p113 = por %p111, %p112
    %p115 = scmp.ne.s32.totalorder %s98, %s114
    %p116 = scmp.eq.s32.totalorder %s17, 0
    %p117 = por %p115, %p116
    %s118 = ssub.s32 %s11, %s18
    %p119 = scmp.eq.s32.totalorder %s118, 0
    %s121 = sadd.s32 %s120, 1
    %s122 = scalar_select %p119, %s120, %s121
    %p125 = pneg %p119
    %p126 = scmp.eq.s32.totalorder %s11, 1
    %p127 = por %p125, %p126
    %p128 = scmp.ne.s32.totalorder %s120, %s123
    %p129 = scmp.eq.s32.totalorder %s11, 0
    %p130 = por %p128, %p129
    %p131 = scmp.ne.s32.totalorder %s120, %s123
    %p132 = scmp.eq.s32.totalorder %s16, 1
    %p133 = por %p131, %p132
    %p134 = scmp.ne.s32.totalorder %s123, %s124
    %p135 = scmp.eq.s32.totalorder %s16, 0
    %p136 = por %p134, %p135
    %p137 = scmp.ne.s32.totalorder %s123, %s124
    %p138 = scmp.eq.s32.totalorder %s17, 1
    %p139 = por %p137, %p138
    %p141 = scmp.ne.s32.totalorder %s124, %s140
    %p142 = scmp.eq.s32.totalorder %s17, 0
    %p143 = por %p141, %p142
    %p144 = scmp.le.s32.totalorder 1, %s11
    %p145 = scmp.lt.s32.totalorder %s11, 3
    %p146 = pnand %p144, %p145
    %p147 = pneg %p146
    // Predicated region
    $region9: #{gsconv_jilian_forward.12} parent=5 // pred_check
      _
    $region10: #{gsconv_jilian_forward.12} parent=5 // pred_check_branch
      %149 = sbr.rel (%p146) target = $region12
    $region11: #{gsconv_jilian_forward.12} parent=5 // pred_region
      %s150 = ssub.s32 %s11, 1
      // Predicated region
      $region13: #{gsconv_jilian_forward.12} parent=11 // pred_check
        %p151 = pneg %p58
      $region14: #{gsconv_jilian_forward.12} parent=11 // pred_check_branch
        %153 = sbr.rel (%p151) target = $region16
      $region15: #{gsconv_jilian_forward.12} parent=11 // pred_region
        _
      $region16: #{gsconv_jilian_forward.12} parent=11 // pred_fallthru
        _
    $region12: #{gsconv_jilian_forward.12} parent=5 // pred_fallthru
      _
    %p154 = scmp.lt.s32.totalorder %s11, 2
    // Predicated region
    $region17: #{gsconv_jilian_forward.12} parent=5 // pred_check
      %p155 = pneg %p154
    $region18: #{gsconv_jilian_forward.12} parent=5 // pred_check_branch
      %157 = sbr.rel (%p155) target = $region20
    $region19: #{gsconv_jilian_forward.12} parent=5 // pred_region
      // Predicated region
      $region21: #{gsconv_jilian_forward.12} parent=19 // pred_check
        %p158 = pneg %p31
      $region22: #{gsconv_jilian_forward.12} parent=19 // pred_check_branch
        %160 = sbr.rel (%p158) target = $region24
      $region23: #{gsconv_jilian_forward.12} parent=19 // pred_region
        %s161 = smul.u32 32, %s11
        %p162 = scmp.lt.s32.totalorder %s161, 63
        %s163 = scalar_select %p162, %s161, 63
        %s164 = smul.addr %s163, 8
        %s165 = scalar_lea.vmem %s0, %s164
        %s166 = smul.u32 32, %s11
      $region24: #{gsconv_jilian_forward.12} parent=19 // pred_fallthru
        _
    $region20: #{gsconv_jilian_forward.12} parent=5 // pred_fallthru
      _
    %p167 = scmp.le.s32.totalorder 1, %s11
    %p168 = scmp.lt.s32.totalorder %s11, 3
    %p169 = pnand %p167, %p168
    %p170 = pneg %p169
    // Predicated region
    $region25: #{gsconv_jilian_forward.12} parent=5 // pred_check
      _
    $region26: #{gsconv_jilian_forward.12} parent=5 // pred_check_branch
      %172 = sbr.rel (%p169) target = $region28
    $region27: #{gsconv_jilian_forward.12} parent=5 // pred_region
      %s173 = ssub.s32 %s11, 1
      %s174 = smul.u32 32, %s16
      %p175 = scmp.lt.s32.totalorder %s174, 63
      %s176 = scalar_select %p175, %s174, 63
      %s177 = smul.addr %s176, 8
      %s178 = scalar_lea.vmem %s0, %s177
      %p179 = pneg %p37
      %p180 = pneg %p34
      %p181 = pneg %p58
      %p182 = pneg %p55
      %p183 = pneg %p84
      %p184 = pneg %p81
      %s185 = smul.u32 32, %s16
      %p186 = scmp.lt.s32.totalorder %s185, 63
      %s187 = scalar_select %p186, %s185, 63
      %s188 = smul.addr %s187, 8
      %s189 = scalar_lea.vmem %s2, %s188
      %p190 = pneg %p110
      %p191 = pneg %p107
      %p192 = scmp.lt.s32.totalorder %s16, 1
      %s193 = scalar_select %p192, %s16, 1
      %s194 = scalar_lea.vmem %s3, %s193
      %p195 = pneg %p136
      %p196 = pneg %p133
      %p197 = scmp.lt.s32.totalorder %s16, 1
      %s198 = scalar_select %p197, %s16, 1
      %s199 = scalar_lea.vmem %s4, %s198
      %s200 = smul.u32 32, %s16
      %p201 = scmp.lt.s32.totalorder %s200, 63
      %s202 = scalar_select %p201, %s200, 63
      %s203 = smul.addr %s202, 8
      %s204 = scalar_lea.vmem %s0, %s203
      %s205 = smul.u32 32, %s16
      %s206 = smul.u32 32, %s16
      %p207 = scmp.lt.s32.totalorder %s206, 63
      %s208 = scalar_select %p207, %s206, 63
      %s209 = smul.addr %s208, 8
      %s210 = scalar_lea.vmem %s2, %s209
      %s211 = smul.u32 32, %s16
      %p212 = scmp.lt.s32.totalorder %s16, 1
      %s213 = scalar_select %p212, %s16, 1
      %s214 = scalar_lea.vmem %s3, %s213
      %p215 = scmp.lt.s32.totalorder %s16, 1
      %s216 = scalar_select %p215, %s16, 1
      %s217 = scalar_lea.vmem %s4, %s216
      %v219 = vld [vmem:[%s204] sm:$0xff]
      %v220 = vld [vmem:[%s204 + $0x8] sm:$0xff]
      %v221 = vld [vmem:[%s204 + $0x10] sm:$0xff]
      %v222 = vld [vmem:[%s204 + $0x18] sm:$0xff]
      %v223 = vld [vmem:[%s204 + $0x20] sm:$0xff]
      %v224 = vld [vmem:[%s204 + $0x28] sm:$0xff]
      %v225 = vld [vmem:[%s204 + $0x30] sm:$0xff]
      %v226 = vld [vmem:[%s204 + $0x38] sm:$0xff]
      %v227 = vld [vmem:[%s204 + $0x40] sm:$0xff]
      %v228 = vld [vmem:[%s204 + $0x48] sm:$0xff]
      %v229 = vld [vmem:[%s204 + $0x50] sm:$0xff]
      %v230 = vld [vmem:[%s204 + $0x58] sm:$0xff]
      %v231 = vld [vmem:[%s204 + $0x60] sm:$0xff]
      %v232 = vld [vmem:[%s204 + $0x68] sm:$0xff]
      %v233 = vld [vmem:[%s204 + $0x70] sm:$0xff]
      %v234 = vld [vmem:[%s204 + $0x78] sm:$0xff]
      %v235 = vld [vmem:[%s204 + $0x80] sm:$0xff]
      %v236 = vld [vmem:[%s204 + $0x88] sm:$0xff]
      %v237 = vld [vmem:[%s204 + $0x90] sm:$0xff]
      %v238 = vld [vmem:[%s204 + $0x98] sm:$0xff]
      %v239 = vld [vmem:[%s204 + $0xa0] sm:$0xff]
      %v240 = vld [vmem:[%s204 + $0xa8] sm:$0xff]
      %v241 = vld [vmem:[%s204 + $0xb0] sm:$0xff]
      %v242 = vld [vmem:[%s204 + $0xb8] sm:$0xff]
      %v243 = vld [vmem:[%s204 + $0xc0] sm:$0xff]
      %v244 = vld [vmem:[%s204 + $0xc8] sm:$0xff]
      %v245 = vld [vmem:[%s204 + $0xd0] sm:$0xff]
      %v246 = vld [vmem:[%s204 + $0xd8] sm:$0xff]
      %v247 = vld [vmem:[%s204 + $0xe0] sm:$0xff]
      %v248 = vld [vmem:[%s204 + $0xe8] sm:$0xff]
      %v249 = vld [vmem:[%s204 + $0xf0] sm:$0xff]
      %v250 = vld [vmem:[%s204 + $0xf8] sm:$0xff]
      %v251 = vpack.c.bf16 %v220, %v219
      %v252 = vpack.c.bf16 %v222, %v221
      %v253 = vpack.c.bf16 %v224, %v223
      %v254 = vpack.c.bf16 %v226, %v225
      %v255 = vpack.c.bf16 %v228, %v227
      %v256 = vpack.c.bf16 %v230, %v229
      %v257 = vpack.c.bf16 %v232, %v231
      %v258 = vpack.c.bf16 %v234, %v233
      %v259 = vpack.c.bf16 %v236, %v235
      %v260 = vpack.c.bf16 %v238, %v237
      %v261 = vpack.c.bf16 %v240, %v239
      %v262 = vpack.c.bf16 %v242, %v241
      %v263 = vpack.c.bf16 %v244, %v243
      %v264 = vpack.c.bf16 %v246, %v245
      %v265 = vpack.c.bf16 %v248, %v247
      %v266 = vpack.c.bf16 %v250, %v249
      %v267 = vld [vmem:[%s1] sm:$0xf]
      %v268 = vld [vmem:[%s1 + $0x4] sm:$0xf]
      %v269 = vld [vmem:[%s1 + $0x8] sm:$0xf]
      %v270 = vld [vmem:[%s1 + $0xc] sm:$0xf]
      %v271 = vld [vmem:[%s1 + $0x10] sm:$0xf]
      %v272 = vld [vmem:[%s1 + $0x14] sm:$0xf]
      %v273 = vld [vmem:[%s1 + $0x18] sm:$0xf]
      %v274 = vld [vmem:[%s1 + $0x1c] sm:$0xf]
      %v283 = vunpack.c.l.b16 %v267
      %v284 = vunpack.c.l.b16 %v268
      %v285 = vunpack.c.l.b16 %v269
      %v286 = vunpack.c.l.b16 %v270
      %v287 = vunpack.c.l.b16 %v271
      %v288 = vunpack.c.l.b16 %v272
      %v289 = vunpack.c.l.b16 %v273
      %v290 = vunpack.c.l.b16 %v274
      %v291 = vpack.c.b16 %v284, %v283
      %v292 = vpack.c.b16 %v286, %v285
      %v293 = vpack.c.b16 %v288, %v287
      %v294 = vpack.c.b16 %v290, %v289
      %vm299 = vcmask 523264
      %v301 = vsel %vm299, %v251, 0
      %v304 = vsel %vm299, %v252, 0
      %v307 = vsel %vm299, %v253, 0
      %v310 = vsel %vm299, %v254, 0
      %v313 = vsel %vm299, %v255, 0
      %v316 = vsel %vm299, %v256, 0
      %v319 = vsel %vm299, %v257, 0
      %v322 = vsel %vm299, %v258, 0
      %v325 = vsel %vm299, %v259, 0
      %v328 = vsel %vm299, %v260, 0
      %v331 = vsel %vm299, %v261, 0
      %v334 = vsel %vm299, %v262, 0
      %v337 = vsel %vm299, %v263, 0
      %v340 = vsel %vm299, %v264, 0
      %v343 = vsel %vm299, %v265, 0
      %v346 = vsel %vm299, %v266, 0
      %348 = vmatpush.bf16.msra.mxu0 0
      %349 = vmatpush.bf16.msra.mxu0 0
      %350 = vmatpush.bf16.msra.mxu0 0
      %351 = vmatpush.bf16.msra.mxu0 0
      %352 = vmatpush.bf16.msra.mxu0 %v294
      %353 = vmatpush.bf16.msra.mxu0 %v293
      %354 = vmatpush.bf16.msra.mxu0 %v292
      %355 = vmatpush.bf16.msra.mxu0 %v291
      %356 = vmatmul.bf16.gmra.mxu0 %v301
      %v357 = vpop.f32.mrf.mxu0
      %v358 = vadd.f32 0.0, %v357
      %v359 = vpop.f32.mrf.mxu0
      %v360 = vadd.f32 0.0, %v359
      %361 = vmatmul.bf16.gmra.mxu0 %v304
      %v362 = vpop.f32.mrf.mxu0
      %v363 = vadd.f32 0.0, %v362
      %v364 = vpop.f32.mrf.mxu0
      %v365 = vadd.f32 0.0, %v364
      %366 = vmatmul.bf16.gmra.mxu0 %v307
      %v367 = vpop.f32.mrf.mxu0
      %v368 = vadd.f32 0.0, %v367
      %v369 = vpop.f32.mrf.mxu0
      %v370 = vadd.f32 0.0, %v369
      %371 = vmatmul.bf16.gmra.mxu0 %v310
      %v372 = vpop.f32.mrf.mxu0
      %v373 = vadd.f32 0.0, %v372
      %v374 = vpop.f32.mrf.mxu0
      %v375 = vadd.f32 0.0, %v374
      %376 = vmatmul.bf16.gmra.mxu0 %v313
      %v377 = vpop.f32.mrf.mxu0
      %v378 = vadd.f32 0.0, %v377
      %v379 = vpop.f32.mrf.mxu0
      %v380 = vadd.f32 0.0, %v379
      %381 = vmatmul.bf16.gmra.mxu0 %v316
      %v382 = vpop.f32.mrf.mxu0
      %v383 = vadd.f32 0.0, %v382
      %v384 = vpop.f32.mrf.mxu0
      %v385 = vadd.f32 0.0, %v384
      %386 = vmatmul.bf16.gmra.mxu0 %v319
      %v387 = vpop.f32.mrf.mxu0
      %v388 = vadd.f32 0.0, %v387
      %v389 = vpop.f32.mrf.mxu0
      %v390 = vadd.f32 0.0, %v389
      %391 = vmatmul.bf16.gmra.mxu0 %v322
      %v392 = vpop.f32.mrf.mxu0
      %v393 = vadd.f32 0.0, %v392
      %v394 = vpop.f32.mrf.mxu0
      %v395 = vadd.f32 0.0, %v394
      %396 = vmatmul.bf16.gmra.mxu0 %v325
      %v397 = vpop.f32.mrf.mxu0
      %v398 = vadd.f32 0.0, %v397
      %v399 = vpop.f32.mrf.mxu0
      %v400 = vadd.f32 0.0, %v399
      %401 = vmatmul.bf16.gmra.mxu0 %v328
      %v402 = vpop.f32.mrf.mxu0
      %v403 = vadd.f32 0.0, %v402
      %v404 = vpop.f32.mrf.mxu0
      %v405 = vadd.f32 0.0, %v404
      %406 = vmatmul.bf16.gmra.mxu0 %v331
      %v407 = vpop.f32.mrf.mxu0
      %v408 = vadd.f32 0.0, %v407
      %v409 = vpop.f32.mrf.mxu0
      %v410 = vadd.f32 0.0, %v409
      %411 = vmatmul.bf16.gmra.mxu0 %v334
      %v412 = vpop.f32.mrf.mxu0
      %v413 = vadd.f32 0.0, %v412
      %v414 = vpop.f32.mrf.mxu0
      %v415 = vadd.f32 0.0, %v414
      %416 = vmatmul.bf16.gmra.mxu0 %v337
      %v417 = vpop.f32.mrf.mxu0
      %v418 = vadd.f32 0.0, %v417
      %v419 = vpop.f32.mrf.mxu0
      %v420 = vadd.f32 0.0, %v419
      %421 = vmatmul.bf16.gmra.mxu0 %v340
      %v422 = vpop.f32.mrf.mxu0
      %v423 = vadd.f32 0.0, %v422
      %v424 = vpop.f32.mrf.mxu0
      %v425 = vadd.f32 0.0, %v424
      %426 = vmatmul.bf16.gmra.mxu0 %v343
      %v427 = vpop.f32.mrf.mxu0
      %v428 = vadd.f32 0.0, %v427
      %v429 = vpop.f32.mrf.mxu0
      %v430 = vadd.f32 0.0, %v429
      %431 = vmatmul.bf16.gmra.mxu0 %v346
      %v432 = vpop.f32.mrf.mxu0
      %v433 = vadd.f32 0.0, %v432
      %v434 = vpop.f32.mrf.mxu0
      %v435 = vadd.f32 0.0, %v434
      %436 = vdwg.mxu0
      %vm437 = vcmask 261120
      %438 = vst.msk [vmem:[%s210] sm:$0xff] %vm437, %v358
      %439 = vst.msk [vmem:[%s210 + $0x8] sm:$0xff] %vm437, %v360
      %440 = vst.msk [vmem:[%s210 + $0x10] sm:$0xff] %vm437, %v363
      %441 = vst.msk [vmem:[%s210 + $0x18] sm:$0xff] %vm437, %v365
      %442 = vst.msk [vmem:[%s210 + $0x20] sm:$0xff] %vm437, %v368
      %443 = vst.msk [vmem:[%s210 + $0x28] sm:$0xff] %vm437, %v370
      %444 = vst.msk [vmem:[%s210 + $0x30] sm:$0xff] %vm437, %v373
      %445 = vst.msk [vmem:[%s210 + $0x38] sm:$0xff] %vm437, %v375
      %446 = vst.msk [vmem:[%s210 + $0x40] sm:$0xff] %vm437, %v378
      %447 = vst.msk [vmem:[%s210 + $0x48] sm:$0xff] %vm437, %v380
      %448 = vst.msk [vmem:[%s210 + $0x50] sm:$0xff] %vm437, %v383
      %449 = vst.msk [vmem:[%s210 + $0x58] sm:$0xff] %vm437, %v385
      %450 = vst.msk [vmem:[%s210 + $0x60] sm:$0xff] %vm437, %v388
      %451 = vst.msk [vmem:[%s210 + $0x68] sm:$0xff] %vm437, %v390
      %452 = vst.msk [vmem:[%s210 + $0x70] sm:$0xff] %vm437, %v393
      %453 = vst.msk [vmem:[%s210 + $0x78] sm:$0xff] %vm437, %v395
      %454 = vst.msk [vmem:[%s210 + $0x80] sm:$0xff] %vm437, %v398
      %455 = vst.msk [vmem:[%s210 + $0x88] sm:$0xff] %vm437, %v400
      %456 = vst.msk [vmem:[%s210 + $0x90] sm:$0xff] %vm437, %v403
      %457 = vst.msk [vmem:[%s210 + $0x98] sm:$0xff] %vm437, %v405
      %458 = vst.msk [vmem:[%s210 + $0xa0] sm:$0xff] %vm437, %v408
      %459 = vst.msk [vmem:[%s210 + $0xa8] sm:$0xff] %vm437, %v410
      %460 = vst.msk [vmem:[%s210 + $0xb0] sm:$0xff] %vm437, %v413
      %461 = vst.msk [vmem:[%s210 + $0xb8] sm:$0xff] %vm437, %v415
      %462 = vst.msk [vmem:[%s210 + $0xc0] sm:$0xff] %vm437, %v418
      %463 = vst.msk [vmem:[%s210 + $0xc8] sm:$0xff] %vm437, %v420
      %464 = vst.msk [vmem:[%s210 + $0xd0] sm:$0xff] %vm437, %v423
      %465 = vst.msk [vmem:[%s210 + $0xd8] sm:$0xff] %vm437, %v425
      %466 = vst.msk [vmem:[%s210 + $0xe0] sm:$0xff] %vm437, %v428
      %467 = vst.msk [vmem:[%s210 + $0xe8] sm:$0xff] %vm437, %v430
      %468 = vst.msk [vmem:[%s210 + $0xf0] sm:$0xff] %vm437, %v433
      %469 = vst.msk [vmem:[%s210 + $0xf8] sm:$0xff] %vm437, %v435
      %v470 = vsel %vm437, %v358, 0.0
      %v471 = vsel %vm437, %v360, 0.0
      %v472 = vadd.f32 %v470, %v471
      %v473 = vsel %vm437, %v363, 0.0
      %v474 = vadd.f32 %v472, %v473
      %v475 = vsel %vm437, %v365, 0.0
      %v476 = vadd.f32 %v474, %v475
      %v477 = vsel %vm437, %v368, 0.0
      %v478 = vadd.f32 %v476, %v477
      %v479 = vsel %vm437, %v370, 0.0
      %v480 = vadd.f32 %v478, %v479
      %v481 = vsel %vm437, %v373, 0.0
      %v482 = vadd.f32 %v480, %v481
      %v483 = vsel %vm437, %v375, 0.0
      %v484 = vadd.f32 %v482, %v483
      %v485 = vsel %vm437, %v378, 0.0
      %v486 = vadd.f32 %v484, %v485
      %v487 = vsel %vm437, %v380, 0.0
      %v488 = vadd.f32 %v486, %v487
      %v489 = vsel %vm437, %v383, 0.0
      %v490 = vadd.f32 %v488, %v489
      %v491 = vsel %vm437, %v385, 0.0
      %v492 = vadd.f32 %v490, %v491
      %v493 = vsel %vm437, %v388, 0.0
      %v494 = vadd.f32 %v492, %v493
      %v495 = vsel %vm437, %v390, 0.0
      %v496 = vadd.f32 %v494, %v495
      %v497 = vsel %vm437, %v393, 0.0
      %v498 = vadd.f32 %v496, %v497
      %v499 = vsel %vm437, %v395, 0.0
      %v500 = vadd.f32 %v498, %v499
      %v501 = vsel %vm437, %v398, 0.0
      %v502 = vadd.f32 %v500, %v501
      %v503 = vsel %vm437, %v400, 0.0
      %v504 = vadd.f32 %v502, %v503
      %v505 = vsel %vm437, %v403, 0.0
      %v506 = vadd.f32 %v504, %v505
      %v507 = vsel %vm437, %v405, 0.0
      %v508 = vadd.f32 %v506, %v507
      %v509 = vsel %vm437, %v408, 0.0
      %v510 = vadd.f32 %v508, %v509
      %v511 = vsel %vm437, %v410, 0.0
      %v512 = vadd.f32 %v510, %v511
      %v513 = vsel %vm437, %v413, 0.0
      %v514 = vadd.f32 %v512, %v513
      %v515 = vsel %vm437, %v415, 0.0
      %v516 = vadd.f32 %v514, %v515
      %v517 = vsel %vm437, %v418, 0.0
      %v518 = vadd.f32 %v516, %v517
      %v519 = vsel %vm437, %v420, 0.0
      %v520 = vadd.f32 %v518, %v519
      %v521 = vsel %vm437, %v423, 0.0
      %v522 = vadd.f32 %v520, %v521
      %v523 = vsel %vm437, %v425, 0.0
      %v524 = vadd.f32 %v522, %v523
      %v525 = vsel %vm437, %v428, 0.0
      %v526 = vadd.f32 %v524, %v525
      %v527 = vsel %vm437, %v430, 0.0
      %v528 = vadd.f32 %v526, %v527
      %v529 = vsel %vm437, %v433, 0.0
      %v530 = vadd.f32 %v528, %v529
      %v531 = vsel %vm437, %v435, 0.0
      %v532 = vadd.f32 %v530, %v531
      %v533 = vrot.slane %v532, 4
      %v534 = vadd.f32 %v532, %v533
      %v535 = vrot.slane %v534, 2
      %v536 = vadd.f32 %v534, %v535
      %v537 = vrot.slane %v536, 1
      %v538 = vadd.f32 %v536, %v537
      %vm539 = vcmask 253952
      %540 = vst.msk [vmem:[%s214] sm:$0x1] %vm539, %v538
      %v541 = vmul.f32 %v358, %v358
      %v542 = vmul.f32 %v360, %v360
      %v543 = vmul.f32 %v363, %v363
      %v544 = vmul.f32 %v365, %v365
      %v545 = vmul.f32 %v368, %v368
      %v546 = vmul.f32 %v370, %v370
      %v547 = vmul.f32 %v373, %v373
      %v548 = vmul.f32 %v375, %v375
      %v549 = vmul.f32 %v378, %v378
      %v550 = vmul.f32 %v380, %v380
      %v551 = vmul.f32 %v383, %v383
      %v552 = vmul.f32 %v385, %v385
      %v553 = vmul.f32 %v388, %v388
      %v554 = vmul.f32 %v390, %v390
      %v555 = vmul.f32 %v393, %v393
      %v556 = vmul.f32 %v395, %v395
      %v557 = vmul.f32 %v398, %v398
      %v558 = vmul.f32 %v400, %v400
      %v559 = vmul.f32 %v403, %v403
      %v560 = vmul.f32 %v405, %v405
      %v561 = vmul.f32 %v408, %v408
      %v562 = vmul.f32 %v410, %v410
      %v563 = vmul.f32 %v413, %v413
      %v564 = vmul.f32 %v415, %v415
      %v565 = vmul.f32 %v418, %v418
      %v566 = vmul.f32 %v420, %v420
      %v567 = vmul.f32 %v423, %v423
      %v568 = vmul.f32 %v425, %v425
      %v569 = vmul.f32 %v428, %v428
      %v570 = vmul.f32 %v430, %v430
      %v571 = vmul.f32 %v433, %v433
      %v572 = vmul.f32 %v435, %v435
      %v573 = vsel %vm437, %v541, 0.0
      %v574 = vsel %vm437, %v542, 0.0
      %v575 = vadd.f32 %v573, %v574
      %v576 = vsel %vm437, %v543, 0.0
      %v577 = vadd.f32 %v575, %v576
      %v578 = vsel %vm437, %v544, 0.0
      %v579 = vadd.f32 %v577, %v578
      %v580 = vsel %vm437, %v545, 0.0
      %v581 = vadd.f32 %v579, %v580
      %v582 = vsel %vm437, %v546, 0.0
      %v583 = vadd.f32 %v581, %v582
      %v584 = vsel %vm437, %v547, 0.0
      %v585 = vadd.f32 %v583, %v584
      %v586 = vsel %vm437, %v548, 0.0
      %v587 = vadd.f32 %v585, %v586
      %v588 = vsel %vm437, %v549, 0.0
      %v589 = vadd.f32 %v587, %v588
      %v590 = vsel %vm437, %v550, 0.0
      %v591 = vadd.f32 %v589, %v590
      %v592 = vsel %vm437, %v551, 0.0
      %v593 = vadd.f32 %v591, %v592
      %v594 = vsel %vm437, %v552, 0.0
      %v595 = vadd.f32 %v593, %v594
      %v596 = vsel %vm437, %v553, 0.0
      %v597 = vadd.f32 %v595, %v596
      %v598 = vsel %vm437, %v554, 0.0
      %v599 = vadd.f32 %v597, %v598
      %v600 = vsel %vm437, %v555, 0.0
      %v601 = vadd.f32 %v599, %v600
      %v602 = vsel %vm437, %v556, 0.0
      %v603 = vadd.f32 %v601, %v602
      %v604 = vsel %vm437, %v557, 0.0
      %v605 = vadd.f32 %v603, %v604
      %v606 = vsel %vm437, %v558, 0.0
      %v607 = vadd.f32 %v605, %v606
      %v608 = vsel %vm437, %v559, 0.0
      %v609 = vadd.f32 %v607, %v608
      %v610 = vsel %vm437, %v560, 0.0
      %v611 = vadd.f32 %v609, %v610
      %v612 = vsel %vm437, %v561, 0.0
      %v613 = vadd.f32 %v611, %v612
      %v614 = vsel %vm437, %v562, 0.0
      %v615 = vadd.f32 %v613, %v614
      %v616 = vsel %vm437, %v563, 0.0
      %v617 = vadd.f32 %v615, %v616
      %v618 = vsel %vm437, %v564, 0.0
      %v619 = vadd.f32 %v617, %v618
      %v620 = vsel %vm437, %v565, 0.0
      %v621 = vadd.f32 %v619, %v620
      %v622 = vsel %vm437, %v566, 0.0
      %v623 = vadd.f32 %v621, %v622
      %v624 = vsel %vm437, %v567, 0.0
      %v625 = vadd.f32 %v623, %v624
      %v626 = vsel %vm437, %v568, 0.0
      %v627 = vadd.f32 %v625, %v626
      %v628 = vsel %vm437, %v569, 0.0
      %v629 = vadd.f32 %v627, %v628
      %v630 = vsel %vm437, %v570, 0.0
      %v631 = vadd.f32 %v629, %v630
      %v632 = vsel %vm437, %v571, 0.0
      %v633 = vadd.f32 %v631, %v632
      %v634 = vsel %vm437, %v572, 0.0
      %v635 = vadd.f32 %v633, %v634
      %v636 = vrot.slane %v635, 4
      %v637 = vadd.f32 %v635, %v636
      %v638 = vrot.slane %v637, 2
      %v639 = vadd.f32 %v637, %v638
      %v640 = vrot.slane %v639, 1
      %v641 = vadd.f32 %v639, %v640
      %642 = vst.msk [vmem:[%s217] sm:$0x1] %vm539, %v641
      %s643 = smul.u32 32, %s16
      %p644 = scmp.lt.s32.totalorder %s643, 63
      %s645 = scalar_select %p644, %s643, 63
      %s646 = smul.addr %s645, 8
      %s647 = scalar_lea.vmem %s2, %s646
      %p648 = scmp.lt.s32.totalorder %s16, 1
      %s649 = scalar_select %p648, %s16, 1
      %s650 = scalar_lea.vmem %s3, %s649
      %p651 = scmp.lt.s32.totalorder %s16, 1
      %s652 = scalar_select %p651, %s16, 1
      %s653 = scalar_lea.vmem %s4, %s652
      // Predicated region
      $region29: #{gsconv_jilian_forward.12} parent=27 // pred_check
        %p654 = pneg %p81
      $region30: #{gsconv_jilian_forward.12} parent=27 // pred_check_branch
        %656 = sbr.rel (%p654) target = $region32
      $region31: #{gsconv_jilian_forward.12} parent=27 // pred_region
        %s657 = smul.u32 32, %s16
      $region32: #{gsconv_jilian_forward.12} parent=27 // pred_fallthru
        _
      // Predicated region
      $region33: #{gsconv_jilian_forward.12} parent=27 // pred_check
        %p658 = pneg %p107
      $region34: #{gsconv_jilian_forward.12} parent=27 // pred_check_branch
        %660 = sbr.rel (%p658) target = $region36
      $region35: #{gsconv_jilian_forward.12} parent=27 // pred_region
        _
      $region36: #{gsconv_jilian_forward.12} parent=27 // pred_fallthru
        _
      // Predicated region
      $region37: #{gsconv_jilian_forward.12} parent=27 // pred_check
        %p661 = pneg %p133
      $region38: #{gsconv_jilian_forward.12} parent=27 // pred_check_branch
        %663 = sbr.rel (%p661) target = $region40
      $region39: #{gsconv_jilian_forward.12} parent=27 // pred_region
        _
      $region40: #{gsconv_jilian_forward.12} parent=27 // pred_fallthru
        _
    $region28: #{gsconv_jilian_forward.12} parent=5 // pred_fallthru
      _
    %p664 = scmp.le.s32.totalorder 2, %s11
    // Predicated region
    $region41: #{gsconv_jilian_forward.12} parent=5 // pred_check
      %p665 = pneg %p664
    $region42: #{gsconv_jilian_forward.12} parent=5 // pred_check_branch
      %667 = sbr.rel (%p665) target = $region44
    $region43: #{gsconv_jilian_forward.12} parent=5 // pred_region
      %s668 = ssub.s32 %s11, 2
      // Predicated region
      $region45: #{gsconv_jilian_forward.12} parent=43 // pred_check
        %p669 = pneg %p87
      $region46: #{gsconv_jilian_forward.12} parent=43 // pred_check_branch
        %671 = sbr.rel (%p669) target = $region48
      $region47: #{gsconv_jilian_forward.12} parent=43 // pred_region
        %s672 = smul.u32 32, %s17
        %p673 = scmp.lt.s32.totalorder %s672, 63
        %s674 = scalar_select %p673, %s672, 63
        %s675 = smul.addr %s674, 8
        %s676 = scalar_lea.vmem %s2, %s675
      $region48: #{gsconv_jilian_forward.12} parent=43 // pred_fallthru
        _
      // Predicated region
      $region49: #{gsconv_jilian_forward.12} parent=43 // pred_check
        %p677 = pneg %p113
      $region50: #{gsconv_jilian_forward.12} parent=43 // pred_check_branch
        %679 = sbr.rel (%p677) target = $region52
      $region51: #{gsconv_jilian_forward.12} parent=43 // pred_region
        %p680 = scmp.lt.s32.totalorder %s17, 1
        %s681 = scalar_select %p680, %s17, 1
        %s682 = scalar_lea.vmem %s3, %s681
      $region52: #{gsconv_jilian_forward.12} parent=43 // pred_fallthru
        _
      // Predicated region
      $region53: #{gsconv_jilian_forward.12} parent=43 // pred_check
        %p683 = pneg %p139
      $region54: #{gsconv_jilian_forward.12} parent=43 // pred_check_branch
        %685 = sbr.rel (%p683) target = $region56
      $region55: #{gsconv_jilian_forward.12} parent=43 // pred_region
        %p686 = scmp.lt.s32.totalorder %s17, 1
        %s687 = scalar_select %p686, %s17, 1
        %s688 = scalar_lea.vmem %s4, %s687
      $region56: #{gsconv_jilian_forward.12} parent=43 // pred_fallthru
        _
    $region44: #{gsconv_jilian_forward.12} parent=5 // pred_fallthru
      _
  $region6: #{gsconv_jilian_forward.12} parent=0 // loop_footer
    %s15 = sadd.s32 1, %s11
  $region7: #{gsconv_jilian_forward.12} parent=0 // loop_footer_branch
    %10 = sbr.rel target = $region3
  $region8: #{gsconv_jilian_forward.12} parent=0 // loop_exit
    _

// kernel: gsconv_jilian_forward.13
$region0: #{gsconv_jilian_forward.13}
  #allocation0 [shape = 'u32[]', space=smem, size = 0x4, offset = 0x4, fixed_abs, tag = 'smem constant byte address 0x4 - core index']
  #allocation1 [shape = 'u32[72,128]{1,0:T(1,128)}', space=vmem, size = 0x9000, scoped, tag = 'internal scratch']
  %s0 = inlined_call_operand.vmem [shape: f32[32,512], index: 0, kind: input, shape index: {}]
  %s1 = inlined_call_operand.vmem [shape: f32[1,512], index: 1, kind: input, shape index: {}]
  %s2 = inlined_call_operand.vmem [shape: f32[1,512], index: 2, kind: input, shape index: {}]
  %s3 = inlined_call_operand.vmem [shape: f32[1,512], index: 3, kind: input, shape index: {}]
  %s4 = inlined_call_operand.vmem [shape: f32[1,512], index: 4, kind: input, shape index: {}]
  %s5 = inlined_call_operand.vmem [shape: f32[32,512], index: 5, kind: output, shape index: {}]
  %s6 = sld [smem:[#allocation0]]
  $region53: #{gsconv_jilian_forward.13} parent=0
    _
  %s8 = ssub.s32 1, %s6
  %s9 = scalar_select 0, %s8, %s6
  loop: start=0, step=1, limit=4
  $region2: #{gsconv_jilian_forward.13} parent=0 // loop_pre_header
    _
  $region3: #{gsconv_jilian_forward.13} parent=0 // loop_header
    %s11 = sphi 0, %s15
    %p12 = scmp.ge.s32.totalorder %s11, 4
    %s21 = sphi 0, %s23
    %s24 = sphi 0, %s21
    %s25 = sphi 0, %s24
    %s41 = sphi 0, %s25
    %s45 = sphi 0, %s45
    %s47 = sphi 0, %s45
    %s48 = sphi 0, %s47
    %s62 = sphi 0, %s48
    %s66 = sphi 0, %s66
    %s68 = sphi 0, %s66
    %s69 = sphi 0, %s68
    %s83 = sphi 0, %s69
    %s87 = sphi 0, %s87
    %s89 = sphi 0, %s87
    %s90 = sphi 0, %s89
    %s104 = sphi 0, %s90
    %s108 = sphi 0, %s108
    %s110 = sphi 0, %s108
    %s111 = sphi 0, %s110
    %s125 = sphi 0, %s111
    %s131 = sphi 0, %s133
    %s134 = sphi 0, %s131
    %s135 = sphi 0, %s134
    %s151 = sphi 0, %s135
  $region4: #{gsconv_jilian_forward.13} parent=0 // loop_header_branch
    %14 = sbr.rel (%p12) target = $region8
  $region5: #{gsconv_jilian_forward.13} parent=0 // loop_body
    %s16 = ssub.s32 %s11, 1
    %s17 = ssub.s32 %s11, 2
    %s18 = sadd.s32 %s11, 1
    %s19 = ssub.s32 %s11, %s18
    %p20 = scmp.eq.s32.totalorder %s19, 0
    %s22 = sadd.s32 %s21, 1
    %s23 = scalar_select %p20, %s21, %s22
    %p26 = pneg %p20
    %p27 = scmp.eq.s32.totalorder %s11, 1
    %p28 = por %p26, %p27
    %p29 = scmp.ne.s32.totalorder %s21, %s24
    %p30 = scmp.eq.s32.totalorder %s11, 0
    %p31 = por %p29, %p30
    %p32 = scmp.ne.s32.totalorder %s21, %s24
    %p33 = scmp.eq.s32.totalorder %s16, 1
    %p34 = por %p32, %p33
    %p35 = scmp.ne.s32.totalorder %s24, %s25
    %p36 = scmp.eq.s32.totalorder %s16, 0
    %p37 = por %p35, %p36
    %p38 = scmp.ne.s32.totalorder %s24, %s25
    %p39 = scmp.eq.s32.totalorder %s17, 1
    %p40 = por %p38, %p39
    %p42 = scmp.ne.s32.totalorder %s25, %s41
    %p43 = scmp.eq.s32.totalorder %s17, 0
    %p44 = por %p42, %p43
    %s46 = sadd.s32 %s45, 1
    %p49 = scmp.eq.s32.totalorder %s11, 1
    %p50 = scmp.ne.s32.totalorder %s45, %s47
    %p51 = scmp.eq.s32.totalorder %s11, 0
    %p52 = por %p50, %p51
    %p53 = scmp.ne.s32.totalorder %s45, %s47
    %p54 = scmp.eq.s32.totalorder %s16, 1
    %p55 = por %p53, %p54
    %p56 = scmp.ne.s32.totalorder %s47, %s48
    %p57 = scmp.eq.s32.totalorder %s16, 0
    %p58 = por %p56, %p57
    %p59 = scmp.ne.s32.totalorder %s47, %s48
    %p60 = scmp.eq.s32.totalorder %s17, 1
    %p61 = por %p59, %p60
    %p63 = scmp.ne.s32.totalorder %s48, %s62
    %p64 = scmp.eq.s32.totalorder %s17, 0
    %p65 = por %p63, %p64
    %s67 = sadd.s32 %s66, 1
    %p70 = scmp.eq.s32.totalorder %s11, 1
    %p71 = scmp.ne.s32.totalorder %s66, %s68
    %p72 = scmp.eq.s32.totalorder %s11, 0
    %p73 = por %p71, %p72
    %p74 = scmp.ne.s32.totalorder %s66, %s68
    %p75 = scmp.eq.s32.totalorder %s16, 1
    %p76 = por %p74, %p75
    %p77 = scmp.ne.s32.totalorder %s68, %s69
    %p78 = scmp.eq.s32.totalorder %s16, 0
    %p79 = por %p77, %p78
    %p80 = scmp.ne.s32.totalorder %s68, %s69
    %p81 = scmp.eq.s32.totalorder %s17, 1
    %p82 = por %p80, %p81
    %p84 = scmp.ne.s32.totalorder %s69, %s83
    %p85 = scmp.eq.s32.totalorder %s17, 0
    %p86 = por %p84, %p85
    %s88 = sadd.s32 %s87, 1
    %p91 = scmp.eq.s32.totalorder %s11, 1
    %p92 = scmp.ne.s32.totalorder %s87, %s89
    %p93 = scmp.eq.s32.totalorder %s11, 0
    %p94 = por %p92, %p93
    %p95 = scmp.ne.s32.totalorder %s87, %s89
    %p96 = scmp.eq.s32.totalorder %s16, 1
    %p97 = por %p95, %p96
    %p98 = scmp.ne.s32.totalorder %s89, %s90
    %p99 = scmp.eq.s32.totalorder %s16, 0
    %p100 = por %p98, %p99
    %p101 = scmp.ne.s32.totalorder %s89, %s90
    %p102 = scmp.eq.s32.totalorder %s17, 1
    %p103 = por %p101, %p102
    %p105 = scmp.ne.s32.totalorder %s90, %s104
    %p106 = scmp.eq.s32.totalorder %s17, 0
    %p107 = por %p105, %p106
    %s109 = sadd.s32 %s108, 1
    %p112 = scmp.eq.s32.totalorder %s11, 1
    %p113 = scmp.ne.s32.totalorder %s108, %s110
    %p114 = scmp.eq.s32.totalorder %s11, 0
    %p115 = por %p113, %p114
    %p116 = scmp.ne.s32.totalorder %s108, %s110
    %p117 = scmp.eq.s32.totalorder %s16, 1
    %p118 = por %p116, %p117
    %p119 = scmp.ne.s32.totalorder %s110, %s111
    %p120 = scmp.eq.s32.totalorder %s16, 0
    %p121 = por %p119, %p120
    %p122 = scmp.ne.s32.totalorder %s110, %s111
    %p123 = scmp.eq.s32.totalorder %s17, 1
    %p124 = por %p122, %p123
    %p126 = scmp.ne.s32.totalorder %s111, %s125
    %p127 = scmp.eq.s32.totalorder %s17, 0
    %p128 = por %p126, %p127
    %s129 = ssub.s32 %s11, %s18
    %p130 = scmp.eq.s32.totalorder %s129, 0
    %s132 = sadd.s32 %s131, 1
    %s133 = scalar_select %p130, %s131, %s132
    %p136 = pneg %p130
    %p137 = scmp.eq.s32.totalorder %s11, 1
    %p138 = por %p136, %p137
    %p139 = scmp.ne.s32.totalorder %s131, %s134
    %p140 = scmp.eq.s32.totalorder %s11, 0
    %p141 = por %p139, %p140
    %p142 = scmp.ne.s32.totalorder %s131, %s134
    %p143 = scmp.eq.s32.totalorder %s16, 1
    %p144 = por %p142, %p143
    %p145 = scmp.ne.s32.totalorder %s134, %s135
    %p146 = scmp.eq.s32.totalorder %s16, 0
    %p147 = por %p145, %p146
    %p148 = scmp.ne.s32.totalorder %s134, %s135
    %p149 = scmp.eq.s32.totalorder %s17, 1
    %p150 = por %p148, %p149
    %p152 = scmp.ne.s32.totalorder %s135, %s151
    %p153 = scmp.eq.s32.totalorder %s17, 0
    %p154 = por %p152, %p153
    %p155 = scmp.le.s32.totalorder 1, %s11
    %p156 = scmp.lt.s32.totalorder %s11, 3
    %p157 = pnand %p155, %p156
    %p158 = pneg %p157
    // Predicated region
    $region9: #{gsconv_jilian_forward.13} parent=5 // pred_check
      _
    $region10: #{gsconv_jilian_forward.13} parent=5 // pred_check_branch
      %160 = sbr.rel (%p157) target = $region12
    $region11: #{gsconv_jilian_forward.13} parent=5 // pred_region
      %s161 = ssub.s32 %s11, 1
      // Predicated region
      $region13: #{gsconv_jilian_forward.13} parent=11 // pred_check
        %p162 = pneg %p58
      $region14: #{gsconv_jilian_forward.13} parent=11 // pred_check_branch
        %164 = sbr.rel (%p162) target = $region16
      $region15: #{gsconv_jilian_forward.13} parent=11 // pred_region
        _
      $region16: #{gsconv_jilian_forward.13} parent=11 // pred_fallthru
        _
      // Predicated region
      $region17: #{gsconv_jilian_forward.13} parent=11 // pred_check
        %p165 = pneg %p79
      $region18: #{gsconv_jilian_forward.13} parent=11 // pred_check_branch
        %167 = sbr.rel (%p165) target = $region20
      $region19: #{gsconv_jilian_forward.13} parent=11 // pred_region
        _
      $region20: #{gsconv_jilian_forward.13} parent=11 // pred_fallthru
        _
      // Predicated region
      $region21: #{gsconv_jilian_forward.13} parent=11 // pred_check
        %p168 = pneg %p100
      $region22: #{gsconv_jilian_forward.13} parent=11 // pred_check_branch
        %170 = sbr.rel (%p168) target = $region24
      $region23: #{gsconv_jilian_forward.13} parent=11 // pred_region
        _
      $region24: #{gsconv_jilian_forward.13} parent=11 // pred_fallthru
        _
      // Predicated region
      $region25: #{gsconv_jilian_forward.13} parent=11 // pred_check
        %p171 = pneg %p121
      $region26: #{gsconv_jilian_forward.13} parent=11 // pred_check_branch
        %173 = sbr.rel (%p171) target = $region28
      $region27: #{gsconv_jilian_forward.13} parent=11 // pred_region
        _
      $region28: #{gsconv_jilian_forward.13} parent=11 // pred_fallthru
        _
    $region12: #{gsconv_jilian_forward.13} parent=5 // pred_fallthru
      _
    %p174 = scmp.lt.s32.totalorder %s11, 2
    // Predicated region
    $region29: #{gsconv_jilian_forward.13} parent=5 // pred_check
      %p175 = pneg %p174
    $region30: #{gsconv_jilian_forward.13} parent=5 // pred_check_branch
      %177 = sbr.rel (%p175) target = $region32
    $region31: #{gsconv_jilian_forward.13} parent=5 // pred_region
      // Predicated region
      $region33: #{gsconv_jilian_forward.13} parent=31 // pred_check
        %p178 = pneg %p31
      $region34: #{gsconv_jilian_forward.13} parent=31 // pred_check_branch
        %180 = sbr.rel (%p178) target = $region36
      $region35: #{gsconv_jilian_forward.13} parent=31 // pred_region
        %s181 = smul.u32 2, %s11
        %p182 = scmp.lt.s32.totalorder %s181, 3
        %s183 = scalar_select %p182, %s181, 3
        %s184 = smul.addr %s183, 4
        %s185 = smul.addr %s184, 8
        %s186 = scalar_lea.vmem %s0, %s185
        %s187 = smul.u32 2, %s11
      $region36: #{gsconv_jilian_forward.13} parent=31 // pred_fallthru
        _
    $region32: #{gsconv_jilian_forward.13} parent=5 // pred_fallthru
      _
    %p188 = scmp.le.s32.totalorder 1, %s11
    %p189 = scmp.lt.s32.totalorder %s11, 3
    %p190 = pnand %p188, %p189
    %p191 = pneg %p190
    // Predicated region
    $region37: #{gsconv_jilian_forward.13} parent=5 // pred_check
      _
    $region38: #{gsconv_jilian_forward.13} parent=5 // pred_check_branch
      %193 = sbr.rel (%p190) target = $region40
    $region39: #{gsconv_jilian_forward.13} parent=5 // pred_region
      %s194 = ssub.s32 %s11, 1
      %s195 = smul.u32 2, %s16
      %p196 = scmp.lt.s32.totalorder %s195, 3
      %s197 = scalar_select %p196, %s195, 3
      %s198 = smul.addr %s197, 4
      %s199 = smul.addr %s198, 8
      %s200 = scalar_lea.vmem %s0, %s199
      %p201 = pneg %p37
      %p202 = pneg %p34
      %p203 = pneg %p58
      %p204 = pneg %p55
      %p205 = pneg %p79
      %p206 = pneg %p76
      %p207 = pneg %p100
      %p208 = pneg %p97
      %p209 = pneg %p121
      %p210 = pneg %p118
      %p211 = pneg %p147
      %p212 = pneg %p144
      %s213 = smul.u32 2, %s16
      %p214 = scmp.lt.s32.totalorder %s213, 3
      %s215 = scalar_select %p214, %s213, 3
      %s216 = smul.addr %s215, 4
      %s217 = smul.addr %s216, 8
      %s218 = scalar_lea.vmem %s5, %s217
      %s219 = smul.u32 2, %s16
      %p220 = scmp.lt.s32.totalorder %s219, 3
      %s221 = scalar_select %p220, %s219, 3
      %s222 = smul.addr %s221, 4
      %s223 = smul.addr %s222, 8
      %s224 = scalar_lea.vmem %s0, %s223
      %s225 = smul.u32 2, %s16
      %s226 = smul.u32 2, %s16
      %p227 = scmp.lt.s32.totalorder %s226, 3
      %s228 = scalar_select %p227, %s226, 3
      %s229 = smul.addr %s228, 4
      %s230 = smul.addr %s229, 8
      %s231 = scalar_lea.vmem %s5, %s230
      %s232 = smul.u32 2, %s16
      %v233 = vld [vmem:[%s1] sm:$0xf]
      %v234 = vmul.f32 %v233, 0.001953125
      %v235 = vld [vmem:[%s2] sm:$0xf]
      %v236 = vmul.f32 %v235, 0.001953125
      %v237 = vmul.f32 %v234, %v234
      %v238 = vsub.f32 %v236, %v237
      %v239 = vmax.f32 %v238, 0.0
      %v240 = vld [vmem:[%s3] sm:$0xf]
      %v241 = vadd.f32 %v239, 1e-05
      %v242 = vrsqrt.pop %v241
      %v243 = vmul.f32 %v242, %v241
      %v244 = vmul.f32 %v243, %v242
      %v245 = vmul.f32 0.5, %v244
      %v246 = vsub.f32 1.5, %v245
      %v247 = vmul.f32 %v242, %v246
      %vm248 = vweird.f32 %v241
      %vm249 = vweird.f32 %v242
      %vm250 = vmor %vm248, %vm249
      %v251 = vsel %vm250, %v242, %v247
      %v252 = vmul.f32 %v240, %v251
      %v253 = vld [vmem:[%s4] sm:$0xf]
      %v254 = vmul.f32 %v234, %v252
      %v255 = vsub.f32 %v253, %v254
      %v256 = vld [vmem:[%s224] sm:$0xff]
      %v257 = vld [vmem:[%s224 + $0x8] sm:$0xff]
      %v258 = vld [vmem:[%s224 + $0x10] sm:$0xff]
      %v259 = vld [vmem:[%s224 + $0x18] sm:$0xff]
      %v260 = vld [vmem:[%s224 + $0x20] sm:$0xff]
      %v261 = vld [vmem:[%s224 + $0x28] sm:$0xff]
      %v262 = vld [vmem:[%s224 + $0x30] sm:$0xff]
      %v263 = vld [vmem:[%s224 + $0x38] sm:$0xff]
      %v265 = vperm.slane %v252, 0
      %v266 = vperm.slane %v252, 1
      %v267 = vperm.slane %v252, 2
      %v268 = vperm.slane %v252, 3
      %v273 = vmul.f32 %v256, %v265
      %v274 = vmul.f32 %v257, %v266
      %v275 = vmul.f32 %v258, %v267
      %v276 = vmul.f32 %v259, %v268
      %v277 = vmul.f32 %v260, %v265
      %v278 = vmul.f32 %v261, %v266
      %v279 = vmul.f32 %v262, %v267
      %v280 = vmul.f32 %v263, %v268
      %v282 = vperm.slane %v255, 0
      %v283 = vperm.slane %v255, 1
      %v284 = vperm.slane %v255, 2
      %v285 = vperm.slane %v255, 3
      %v290 = vadd.f32 %v273, %v282
      %v291 = vadd.f32 %v274, %v283
      %v292 = vadd.f32 %v275, %v284
      %v293 = vadd.f32 %v276, %v285
      %v294 = vadd.f32 %v277, %v282
      %v295 = vadd.f32 %v278, %v283
      %v296 = vadd.f32 %v279, %v284
      %v297 = vadd.f32 %v280, %v285
      %v298 = vsub.f32 0.0, %v290
      %v299 = vsub.f32 0.0, %v291
      %v300 = vsub.f32 0.0, %v292
      %v301 = vsub.f32 0.0, %v293
      %v302 = vsub.f32 0.0, %v294
      %v303 = vsub.f32 0.0, %v295
      %v304 = vsub.f32 0.0, %v296
      %v305 = vsub.f32 0.0, %v297
      %v306 = vmul.f32 %v298, 1.442695
      %v307 = vpow.pop %v306
      %v308 = vmul.f32 %v299, 1.442695
      %v309 = vpow.pop %v308
      %v310 = vmul.f32 %v300, 1.442695
      %v311 = vpow.pop %v310
      %v312 = vmul.f32 %v301, 1.442695
      %v313 = vpow.pop %v312
      %v314 = vmul.f32 %v302, 1.442695
      %v315 = vpow.pop %v314
      %v316 = vmul.f32 %v303, 1.442695
      %v317 = vpow.pop %v316
      %v318 = vmul.f32 %v304, 1.442695
      %v319 = vpow.pop %v318
      %v320 = vmul.f32 %v305, 1.442695
      %v321 = vpow.pop %v320
      %v322 = vadd.f32 %v307, 1.0
      %v323 = vadd.f32 %v309, 1.0
      %v324 = vadd.f32 %v311, 1.0
      %v325 = vadd.f32 %v313, 1.0
      %v326 = vadd.f32 %v315, 1.0
      %v327 = vadd.f32 %v317, 1.0
      %v328 = vadd.f32 %v319, 1.0
      %v329 = vadd.f32 %v321, 1.0
      %v330 = vrcp.pop %v322
      %v331 = vrcp.pop %v323
      %v332 = vrcp.pop %v324
      %v333 = vrcp.pop %v325
      %v334 = vrcp.pop %v326
      %v335 = vrcp.pop %v327
      %v336 = vrcp.pop %v328
      %v337 = vrcp.pop %v329
      %v338 = vmul.f32 %v290, %v330
      %v339 = vmul.f32 %v291, %v331
      %v340 = vmul.f32 %v292, %v332
      %v341 = vmul.f32 %v293, %v333
      %v342 = vmul.f32 %v294, %v334
      %v343 = vmul.f32 %v295, %v335
      %v344 = vmul.f32 %v296, %v336
      %v345 = vmul.f32 %v297, %v337
      %346 = vst [vmem:[%s231] sm:$0xff] %v338
      %347 = vst [vmem:[%s231 + $0x8] sm:$0xff] %v339
      %348 = vst [vmem:[%s231 + $0x10] sm:$0xff] %v340
      %349 = vst [vmem:[%s231 + $0x18] sm:$0xff] %v341
      %350 = vst [vmem:[%s231 + $0x20] sm:$0xff] %v342
      %351 = vst [vmem:[%s231 + $0x28] sm:$0xff] %v343
      %352 = vst [vmem:[%s231 + $0x30] sm:$0xff] %v344
      %353 = vst [vmem:[%s231 + $0x38] sm:$0xff] %v345
      %s354 = smul.u32 2, %s16
      %p355 = scmp.lt.s32.totalorder %s354, 3
      %s356 = scalar_select %p355, %s354, 3
      %s357 = smul.addr %s356, 4
      %s358 = smul.addr %s357, 8
      %s359 = scalar_lea.vmem %s5, %s358
      // Predicated region
      $region41: #{gsconv_jilian_forward.13} parent=39 // pred_check
        %p360 = pneg %p144
      $region42: #{gsconv_jilian_forward.13} parent=39 // pred_check_branch
        %362 = sbr.rel (%p360) target = $region44
      $region43: #{gsconv_jilian_forward.13} parent=39 // pred_region
        %s363 = smul.u32 2, %s16
      $region44: #{gsconv_jilian_forward.13} parent=39 // pred_fallthru
        _
    $region40: #{gsconv_jilian_forward.13} parent=5 // pred_fallthru
      _
    %p364 = scmp.le.s32.totalorder 2, %s11
    // Predicated region
    $region45: #{gsconv_jilian_forward.13} parent=5 // pred_check
      %p365 = pneg %p364
    $region46: #{gsconv_jilian_forward.13} parent=5 // pred_check_branch
      %367 = sbr.rel (%p365) target = $region48
    $region47: #{gsconv_jilian_forward.13} parent=5 // pred_region
      %s368 = ssub.s32 %s11, 2
      // Predicated region
      $region49: #{gsconv_jilian_forward.13} parent=47 // pred_check
        %p369 = pneg %p150
      $region50: #{gsconv_jilian_forward.13} parent=47 // pred_check_branch
        %371 = sbr.rel (%p369) target = $region52
      $region51: #{gsconv_jilian_forward.13} parent=47 // pred_region
        %s372 = smul.u32 2, %s17
        %p373 = scmp.lt.s32.totalorder %s372, 3
        %s374 = scalar_select %p373, %s372, 3
        %s375 = smul.addr %s374, 4
        %s376 = smul.addr %s375, 8
        %s377 = scalar_lea.vmem %s5, %s376
      $region52: #{gsconv_jilian_forward.13} parent=47 // pred_fallthru
        _
    $region48: #{gsconv_jilian_forward.13} parent=5 // pred_fallthru
      _
  $region6: #{gsconv_jilian_forward.13} parent=0 // loop_footer
    %s15 = sadd.s32 1, %s11
  $region7: #{gsconv_jilian_forward.13} parent=0 // loop_footer_branch
    %10 = sbr.rel target = $region3
  $region8: #{gsconv_jilian_forward.13} parent=0 // loop_exit
    _

// kernel: gsconv_jilian_forward.21
$region0: #{gsconv_jilian_forward.21}
  #allocation0 [shape = 'u32[]', space=smem, size = 0x4, offset = 0x4, fixed_abs, tag = 'smem constant byte address 0x4 - core index']
  #allocation1 [shape = 'u32[72,128]{1,0:T(1,128)}', space=vmem, size = 0x9000, scoped, tag = 'internal scratch']
  %s0 = inlined_call_operand.vmem [shape: f32[32,512], index: 0, kind: input, shape index: {}]
  %s1 = inlined_call_operand.vmem [shape: f32[32,512], index: 1, kind: input, shape index: {}]
  %s2 = inlined_call_operand.vmem [shape: f32[32,512], index: 2, kind: output, shape index: {}]
  %s3 = sld [smem:[#allocation0]]
  $region41: #{gsconv_jilian_forward.21} parent=0
    _
  %s5 = ssub.s32 1, %s3
  %s6 = scalar_select 0, %s5, %s3
  loop: start=0, step=1, limit=4
  $region2: #{gsconv_jilian_forward.21} parent=0 // loop_pre_header
    _
  $region3: #{gsconv_jilian_forward.21} parent=0 // loop_header
    %s8 = sphi 0, %s12
    %p9 = scmp.ge.s32.totalorder %s8, 4
    %s18 = sphi 0, %s20
    %s21 = sphi 0, %s18
    %s22 = sphi 0, %s21
    %s38 = sphi 0, %s22
    %s44 = sphi 0, %s46
    %s47 = sphi 0, %s44
    %s48 = sphi 0, %s47
    %s64 = sphi 0, %s48
    %s70 = sphi 0, %s72
    %s73 = sphi 0, %s70
    %s74 = sphi 0, %s73
    %s90 = sphi 0, %s74
  $region4: #{gsconv_jilian_forward.21} parent=0 // loop_header_branch
    %11 = sbr.rel (%p9) target = $region8
  $region5: #{gsconv_jilian_forward.21} parent=0 // loop_body
    %s13 = ssub.s32 %s8, 1
    %s14 = ssub.s32 %s8, 2
    %s15 = sadd.s32 %s8, 1
    %s16 = ssub.s32 %s8, %s15
    %p17 = scmp.eq.s32.totalorder %s16, 0
    %s19 = sadd.s32 %s18, 1
    %s20 = scalar_select %p17, %s18, %s19
    %p23 = pneg %p17
    %p24 = scmp.eq.s32.totalorder %s8, 1
    %p25 = por %p23, %p24
    %p26 = scmp.ne.s32.totalorder %s18, %s21
    %p27 = scmp.eq.s32.totalorder %s8, 0
    %p28 = por %p26, %p27
    %p29 = scmp.ne.s32.totalorder %s18, %s21
    %p30 = scmp.eq.s32.totalorder %s13, 1
    %p31 = por %p29, %p30
    %p32 = scmp.ne.s32.totalorder %s21, %s22
    %p33 = scmp.eq.s32.totalorder %s13, 0
    %p34 = por %p32, %p33
    %p35 = scmp.ne.s32.totalorder %s21, %s22
    %p36 = scmp.eq.s32.totalorder %s14, 1
    %p37 = por %p35, %p36
    %p39 = scmp.ne.s32.totalorder %s22, %s38
    %p40 = scmp.eq.s32.totalorder %s14, 0
    %p41 = por %p39, %p40
    %s42 = ssub.s32 %s8, %s15
    %p43 = scmp.eq.s32.totalorder %s42, 0
    %s45 = sadd.s32 %s44, 1
    %s46 = scalar_select %p43, %s44, %s45
    %p49 = pneg %p43
    %p50 = scmp.eq.s32.totalorder %s8, 1
    %p51 = por %p49, %p50
    %p52 = scmp.ne.s32.totalorder %s44, %s47
    %p53 = scmp.eq.s32.totalorder %s8, 0
    %p54 = por %p52, %p53
    %p55 = scmp.ne.s32.totalorder %s44, %s47
    %p56 = scmp.eq.s32.totalorder %s13, 1
    %p57 = por %p55, %p56
    %p58 = scmp.ne.s32.totalorder %s47, %s48
    %p59 = scmp.eq.s32.totalorder %s13, 0
    %p60 = por %p58, %p59
    %p61 = scmp.ne.s32.totalorder %s47, %s48
    %p62 = scmp.eq.s32.totalorder %s14, 1
    %p63 = por %p61, %p62
    %p65 = scmp.ne.s32.totalorder %s48, %s64
    %p66 = scmp.eq.s32.totalorder %s14, 0
    %p67 = por %p65, %p66
    %s68 = ssub.s32 %s8, %s15
    %p69 = scmp.eq.s32.totalorder %s68, 0
    %s71 = sadd.s32 %s70, 1
    %s72 = scalar_select %p69, %s70, %s71
    %p75 = pneg %p69
    %p76 = scmp.eq.s32.totalorder %s8, 1
    %p77 = por %p75, %p76
    %p78 = scmp.ne.s32.totalorder %s70, %s73
    %p79 = scmp.eq.s32.totalorder %s8, 0
    %p80 = por %p78, %p79
    %p81 = scmp.ne.s32.totalorder %s70, %s73
    %p82 = scmp.eq.s32.totalorder %s13, 1
    %p83 = por %p81, %p82
    %p84 = scmp.ne.s32.totalorder %s73, %s74
    %p85 = scmp.eq.s32.totalorder %s13, 0
    %p86 = por %p84, %p85
    %p87 = scmp.ne.s32.totalorder %s73, %s74
    %p88 = scmp.eq.s32.totalorder %s14, 1
    %p89 = por %p87, %p88
    %p91 = scmp.ne.s32.totalorder %s74, %s90
    %p92 = scmp.eq.s32.totalorder %s14, 0
    %p93 = por %p91, %p92
    %p94 = scmp.le.s32.totalorder 1, %s8
    %p95 = scmp.lt.s32.totalorder %s8, 3
    %p96 = pnand %p94, %p95
    %p97 = pneg %p96
    // Predicated region
    $region9: #{gsconv_jilian_forward.21} parent=5 // pred_check
      _
    $region10: #{gsconv_jilian_forward.21} parent=5 // pred_check_branch
      %99 = sbr.rel (%p96) target = $region12
    $region11: #{gsconv_jilian_forward.21} parent=5 // pred_region
      %s100 = ssub.s32 %s8, 1
    $region12: #{gsconv_jilian_forward.21} parent=5 // pred_fallthru
      _
    %p101 = scmp.lt.s32.totalorder %s8, 2
    // Predicated region
    $region13: #{gsconv_jilian_forward.21} parent=5 // pred_check
      %p102 = pneg %p101
    $region14: #{gsconv_jilian_forward.21} parent=5 // pred_check_branch
      %104 = sbr.rel (%p102) target = $region16
    $region15: #{gsconv_jilian_forward.21} parent=5 // pred_region
      // Predicated region
      $region17: #{gsconv_jilian_forward.21} parent=15 // pred_check
        %p105 = pneg %p28
      $region18: #{gsconv_jilian_forward.21} parent=15 // pred_check_branch
        %107 = sbr.rel (%p105) target = $region20
      $region19: #{gsconv_jilian_forward.21} parent=15 // pred_region
        %s108 = smul.u32 2, %s8
        %p109 = scmp.lt.s32.totalorder %s108, 3
        %s110 = scalar_select %p109, %s108, 3
        %s111 = smul.addr %s110, 4
        %s112 = smul.addr %s111, 8
        %s113 = scalar_lea.vmem %s0, %s112
        %s114 = smul.u32 2, %s8
      $region20: #{gsconv_jilian_forward.21} parent=15 // pred_fallthru
        _
      // Predicated region
      $region21: #{gsconv_jilian_forward.21} parent=15 // pred_check
        %p115 = pneg %p54
      $region22: #{gsconv_jilian_forward.21} parent=15 // pred_check_branch
        %117 = sbr.rel (%p115) target = $region24
      $region23: #{gsconv_jilian_forward.21} parent=15 // pred_region
        %s118 = smul.u32 2, %s8
        %p119 = scmp.lt.s32.totalorder %s118, 3
        %s120 = scalar_select %p119, %s118, 3
        %s121 = smul.addr %s120, 4
        %s122 = smul.addr %s121, 8
        %s123 = scalar_lea.vmem %s1, %s122
        %s124 = smul.u32 2, %s8
      $region24: #{gsconv_jilian_forward.21} parent=15 // pred_fallthru
        _
    $region16: #{gsconv_jilian_forward.21} parent=5 // pred_fallthru
      _
    %p125 = scmp.le.s32.totalorder 1, %s8
    %p126 = scmp.lt.s32.totalorder %s8, 3
    %p127 = pnand %p125, %p126
    %p128 = pneg %p127
    // Predicated region
    $region25: #{gsconv_jilian_forward.21} parent=5 // pred_check
      _
    $region26: #{gsconv_jilian_forward.21} parent=5 // pred_check_branch
      %130 = sbr.rel (%p127) target = $region28
    $region27: #{gsconv_jilian_forward.21} parent=5 // pred_region
      %s131 = ssub.s32 %s8, 1
      %s132 = smul.u32 2, %s13
      %p133 = scmp.lt.s32.totalorder %s132, 3
      %s134 = scalar_select %p133, %s132, 3
      %s135 = smul.addr %s134, 4
      %s136 = smul.addr %s135, 8
      %s137 = scalar_lea.vmem %s0, %s136
      %p138 = pneg %p34
      %p139 = pneg %p31
      %s140 = smul.u32 2, %s13
      %p141 = scmp.lt.s32.totalorder %s140, 3
      %s142 = scalar_select %p141, %s140, 3
      %s143 = smul.addr %s142, 4
      %s144 = smul.addr %s143, 8
      %s145 = scalar_lea.vmem %s1, %s144
      %p146 = pneg %p60
      %p147 = pneg %p57
      %p148 = pneg %p86
      %p149 = pneg %p83
      %s150 = smul.u32 2, %s13
      %p151 = scmp.lt.s32.totalorder %s150, 3
      %s152 = scalar_select %p151, %s150, 3
      %s153 = smul.addr %s152, 4
      %s154 = smul.addr %s153, 8
      %s155 = scalar_lea.vmem %s2, %s154
      %s156 = smul.u32 2, %s13
      %p157 = scmp.lt.s32.totalorder %s156, 3
      %s158 = scalar_select %p157, %s156, 3
      %s159 = smul.addr %s158, 4
      %s160 = smul.addr %s159, 8
      %s161 = scalar_lea.vmem %s0, %s160
      %s162 = smul.u32 2, %s13
      %s163 = smul.u32 2, %s13
      %p164 = scmp.lt.s32.totalorder %s163, 3
      %s165 = scalar_select %p164, %s163, 3
      %s166 = smul.addr %s165, 4
      %s167 = smul.addr %s166, 8
      %s168 = scalar_lea.vmem %s1, %s167
      %s169 = smul.u32 2, %s13
      %s170 = smul.u32 2, %s13
      %p171 = scmp.lt.s32.totalorder %s170, 3
      %s172 = scalar_select %p171, %s170, 3
      %s173 = smul.addr %s172, 4
      %s174 = smul.addr %s173, 8
      %s175 = scalar_lea.vmem %s2, %s174
      %s176 = smul.u32 2, %s13
      %v177 = vld [vmem:[%s161] sm:$0xff]
      %v178 = vld [vmem:[%s161 + $0x8] sm:$0xff]
      %v179 = vld [vmem:[%s161 + $0x10] sm:$0xff]
      %v180 = vld [vmem:[%s161 + $0x18] sm:$0xff]
      %v181 = vld [vmem:[%s161 + $0x20] sm:$0xff]
      %v182 = vld [vmem:[%s161 + $0x28] sm:$0xff]
      %v183 = vld [vmem:[%s161 + $0x30] sm:$0xff]
      %v184 = vld [vmem:[%s161 + $0x38] sm:$0xff]
      %v185 = vld [vmem:[%s168] sm:$0xff]
      %v186 = vld [vmem:[%s168 + $0x8] sm:$0xff]
      %v187 = vld [vmem:[%s168 + $0x10] sm:$0xff]
      %v188 = vld [vmem:[%s168 + $0x18] sm:$0xff]
      %v189 = vld [vmem:[%s168 + $0x20] sm:$0xff]
      %v190 = vld [vmem:[%s168 + $0x28] sm:$0xff]
      %v191 = vld [vmem:[%s168 + $0x30] sm:$0xff]
      %v192 = vld [vmem:[%s168 + $0x38] sm:$0xff]
      %v193 = vadd.f32 %v177, %v185
      %v194 = vadd.f32 %v178, %v186
      %v195 = vadd.f32 %v179, %v187
      %v196 = vadd.f32 %v180, %v188
      %v197 = vadd.f32 %v181, %v189
      %v198 = vadd.f32 %v182, %v190
      %v199 = vadd.f32 %v183, %v191
      %v200 = vadd.f32 %v184, %v192
      %v201 = vmul.f32 %v193, 0.5
      %v202 = vmul.f32 %v194, 0.5
      %v203 = vmul.f32 %v195, 0.5
      %v204 = vmul.f32 %v196, 0.5
      %v205 = vmul.f32 %v197, 0.5
      %v206 = vmul.f32 %v198, 0.5
      %v207 = vmul.f32 %v199, 0.5
      %v208 = vmul.f32 %v200, 0.5
      %v209 = vmul.f32 %v193, 0.70710677
      %v210 = vmul.f32 %v194, 0.70710677
      %v211 = vmul.f32 %v195, 0.70710677
      %v212 = vmul.f32 %v196, 0.70710677
      %v213 = vmul.f32 %v197, 0.70710677
      %v214 = vmul.f32 %v198, 0.70710677
      %v215 = vmul.f32 %v199, 0.70710677
      %v216 = vmul.f32 %v200, 0.70710677
      %v217 = vmax.f32 %v209, -4.0
      %v218 = vmax.f32 %v210, -4.0
      %v219 = vmax.f32 %v211, -4.0
      %v220 = vmax.f32 %v212, -4.0
      %v221 = vmax.f32 %v213, -4.0
      %v222 = vmax.f32 %v214, -4.0
      %v223 = vmax.f32 %v215, -4.0
      %v224 = vmax.f32 %v216, -4.0
      %v225 = vmin.f32 %v217, 4.0
      %v226 = vmin.f32 %v218, 4.0
      %v227 = vmin.f32 %v219, 4.0
      %v228 = vmin.f32 %v220, 4.0
      %v229 = vmin.f32 %v221, 4.0
      %v230 = vmin.f32 %v222, 4.0
      %v231 = vmin.f32 %v223, 4.0
      %v232 = vmin.f32 %v224, 4.0
      %v233 = vmul.f32 %v225, %v225
      %v234 = vmul.f32 %v226, %v226
      %v235 = vmul.f32 %v227, %v227
      %v236 = vmul.f32 %v228, %v228
      %v237 = vmul.f32 %v229, %v229
      %v238 = vmul.f32 %v230, %v230
      %v239 = vmul.f32 %v231, %v231
      %v240 = vmul.f32 %v232, %v232
      %v241 = vmul.f32 %v233, 0.00022905065
      %v242 = vmul.f32 %v234, 0.00022905065
      %v243 = vmul.f32 %v235, 0.00022905065
      %v244 = vmul.f32 %v236, 0.00022905065
      %v245 = vmul.f32 %v237, 0.00022905065
      %v246 = vmul.f32 %v238, 0.00022905065
      %v247 = vmul.f32 %v239, 0.00022905065
      %v248 = vmul.f32 %v240, 0.00022905065
      %v249 = vadd.f32 %v241, 0.003408291
      %v250 = vadd.f32 %v242, 0.003408291
      %v251 = vadd.f32 %v243, 0.003408291
      %v252 = vadd.f32 %v244, 0.003408291
      %v253 = vadd.f32 %v245, 0.003408291
      %v254 = vadd.f32 %v246, 0.003408291
      %v255 = vadd.f32 %v247, 0.003408291
      %v256 = vadd.f32 %v248, 0.003408291
      %v257 = vmul.f32 %v249, %v233
      %v258 = vmul.f32 %v250, %v234
      %v259 = vmul.f32 %v251, %v235
      %v260 = vmul.f32 %v252, %v236
      %v261 = vmul.f32 %v253, %v237
      %v262 = vmul.f32 %v254, %v238
      %v263 = vmul.f32 %v255, %v239
      %v264 = vmul.f32 %v256, %v240
      %v265 = vadd.f32 %v257, 0.050955694
      %v266 = vadd.f32 %v258, 0.050955694
      %v267 = vadd.f32 %v259, 0.050955694
      %v268 = vadd.f32 %v260, 0.050955694
      %v269 = vadd.f32 %v261, 0.050955694
      %v270 = vadd.f32 %v262, 0.050955694
      %v271 = vadd.f32 %v263, 0.050955694
      %v272 = vadd.f32 %v264, 0.050955694
      %v273 = vmul.f32 %v265, %v233
      %v274 = vmul.f32 %v266, %v234
      %v275 = vmul.f32 %v267, %v235
      %v276 = vmul.f32 %v268, %v236
      %v277 = vmul.f32 %v269, %v237
      %v278 = vmul.f32 %v270, %v238
      %v279 = vmul.f32 %v271, %v239
      %v280 = vmul.f32 %v272, %v240
      %v281 = vadd.f32 %v273, 0.18520832
      %v282 = vadd.f32 %v274, 0.18520832
      %v283 = vadd.f32 %v275, 0.18520832
      %v284 = vadd.f32 %v276, 0.18520832
      %v285 = vadd.f32 %v277, 0.18520832
      %v286 = vadd.f32 %v278, 0.18520832
      %v287 = vadd.f32 %v279, 0.18520832
      %v288 = vadd.f32 %v280, 0.18520832
      %v289 = vmul.f32 %v281, %v233
      %v290 = vmul.f32 %v282, %v234
      %v291 = vmul.f32 %v283, %v235
      %v292 = vmul.f32 %v284, %v236
      %v293 = vmul.f32 %v285, %v237
      %v294 = vmul.f32 %v286, %v238
      %v295 = vmul.f32 %v287, %v239
      %v296 = vmul.f32 %v288, %v240
      %v297 = vadd.f32 %v289, 1.1283791
      %v298 = vadd.f32 %v290, 1.1283791
      %v299 = vadd.f32 %v291, 1.1283791
      %v300 = vadd.f32 %v292, 1.1283791
      %v301 = vadd.f32 %v293, 1.1283791
      %v302 = vadd.f32 %v294, 1.1283791
      %v303 = vadd.f32 %v295, 1.1283791
      %v304 = vadd.f32 %v296, 1.1283791
      %v305 = vmul.f32 %v233, -1.1791603e-07
      %v306 = vmul.f32 %v234, -1.1791603e-07
      %v307 = vmul.f32 %v235, -1.1791603e-07
      %v308 = vmul.f32 %v236, -1.1791603e-07
      %v309 = vmul.f32 %v237, -1.1791603e-07
      %v310 = vmul.f32 %v238, -1.1791603e-07
      %v311 = vmul.f32 %v239, -1.1791603e-07
      %v312 = vmul.f32 %v240, -1.1791603e-07
      %v313 = vadd.f32 %v305, 2.3547966e-05
      %v314 = vadd.f32 %v306, 2.3547966e-05
      %v315 = vadd.f32 %v307, 2.3547966e-05
      %v316 = vadd.f32 %v308, 2.3547966e-05
      %v317 = vadd.f32 %v309, 2.3547966e-05
      %v318 = vadd.f32 %v310, 2.3547966e-05
      %v319 = vadd.f32 %v311, 2.3547966e-05
      %v320 = vadd.f32 %v312, 2.3547966e-05
      %v321 = vmul.f32 %v313, %v233
      %v322 = vmul.f32 %v314, %v234
      %v323 = vmul.f32 %v315, %v235
      %v324 = vmul.f32 %v316, %v236
      %v325 = vmul.f32 %v317, %v237
      %v326 = vmul.f32 %v318, %v238
      %v327 = vmul.f32 %v319, %v239
      %v328 = vmul.f32 %v320, %v240
      %v329 = vadd.f32 %v321, 0.0010179626
      %v330 = vadd.f32 %v322, 0.0010179626
      %v331 = vadd.f32 %v323, 0.0010179626
      %v332 = vadd.f32 %v324, 0.0010179626
      %v333 = vadd.f32 %v325, 0.0010179626
      %v334 = vadd.f32 %v326, 0.0010179626
      %v335 = vadd.f32 %v327, 0.0010179626
      %v336 = vadd.f32 %v328, 0.0010179626
      %v337 = vmul.f32 %v329, %v233
      %v338 = vmul.f32 %v330, %v234
      %v339 = vmul.f32 %v331, %v235
      %v340 = vmul.f32 %v332, %v236
      %v341 = vmul.f32 %v333, %v237
      %v342 = vmul.f32 %v334, %v238
      %v343 = vmul.f32 %v335, %v239
      %v344 = vmul.f32 %v336, %v240
      %v345 = vadd.f32 %v337, 0.01407047
      %v346 = vadd.f32 %v338, 0.01407047
      %v347 = vadd.f32 %v339, 0.01407047
      %v348 = vadd.f32 %v340, 0.01407047
      %v349 = vadd.f32 %v341, 0.01407047
      %v350 = vadd.f32 %v342, 0.01407047
      %v351 = vadd.f32 %v343, 0.01407047
      %v352 = vadd.f32 %v344, 0.01407047
      %v353 = vmul.f32 %v345, %v233
      %v354 = vmul.f32 %v346, %v234
      %v355 = vmul.f32 %v347, %v235
      %v356 = vmul.f32 %v348, %v236
      %v357 = vmul.f32 %v349, %v237
      %v358 = vmul.f32 %v350, %v238
      %v359 = vmul.f32 %v351, %v239
      %v360 = vmul.f32 %v352, %v240
      %v361 = vadd.f32 %v353, 0.11098505
      %v362 = vadd.f32 %v354, 0.11098505
      %v363 = vadd.f32 %v355, 0.11098505
      %v364 = vadd.f32 %v356, 0.11098505
      %v365 = vadd.f32 %v357, 0.11098505
      %v366 = vadd.f32 %v358, 0.11098505
      %v367 = vadd.f32 %v359, 0.11098505
      %v368 = vadd.f32 %v360, 0.11098505
      %v369 = vmul.f32 %v361, %v233
      %v370 = vmul.f32 %v362, %v234
      %v371 = vmul.f32 %v363, %v235
      %v372 = vmul.f32 %v364, %v236
      %v373 = vmul.f32 %v365, %v237
      %v374 = vmul.f32 %v366, %v238
      %v375 = vmul.f32 %v367, %v239
      %v376 = vmul.f32 %v368, %v240
      %v377 = vadd.f32 %v369, 0.49746925
      %v378 = vadd.f32 %v370, 0.49746925
      %v379 = vadd.f32 %v371, 0.49746925
      %v380 = vadd.f32 %v372, 0.49746925
      %v381 = vadd.f32 %v373, 0.49746925
      %v382 = vadd.f32 %v374, 0.49746925
      %v383 = vadd.f32 %v375, 0.49746925
      %v384 = vadd.f32 %v376, 0.49746925
      %v385 = vmul.f32 %v377, %v233
      %v386 = vmul.f32 %v378, %v234
      %v387 = vmul.f32 %v379, %v235
      %v388 = vmul.f32 %v380, %v236
      %v389 = vmul.f32 %v381, %v237
      %v390 = vmul.f32 %v382, %v238
      %v391 = vmul.f32 %v383, %v239
      %v392 = vmul.f32 %v384, %v240
      %v393 = vadd.f32 %v385, 1.0
      %v394 = vadd.f32 %v386, 1.0
      %v395 = vadd.f32 %v387, 1.0
      %v396 = vadd.f32 %v388, 1.0
      %v397 = vadd.f32 %v389, 1.0
      %v398 = vadd.f32 %v390, 1.0
      %v399 = vadd.f32 %v391, 1.0
      %v400 = vadd.f32 %v392, 1.0
      %v401 = vmul.f32 %v225, %v297
      %v402 = vmul.f32 %v226, %v298
      %v403 = vmul.f32 %v227, %v299
      %v404 = vmul.f32 %v228, %v300
      %v405 = vmul.f32 %v229, %v301
      %v406 = vmul.f32 %v230, %v302
      %v407 = vmul.f32 %v231, %v303
      %v408 = vmul.f32 %v232, %v304
      %v409 = vrcp.pop %v393
      %v410 = vmul.f32 %v393, %v409
      %v411 = vsub.f32 1.0, %v410
      %v412 = vmul.f32 %v409, %v411
      %v413 = vadd.f32 %v409, %v412
      %vm414 = vweird.f32 %v393
      %vm415 = vweird.f32 %v409
      %vm416 = vmor %vm414, %vm415
      %v417 = vsel %vm416, %v409, %v413
      %v418 = vand.u32 2147483647, %v393
      %vm419 = vcmp.eq.f32.partialorder %v418, 8.507059e+37
      %v420 = vand.u32 %v393, 2147483648
      %v421 = vor.u32 1.1754944e-38, %v420
      %v422 = vsel %vm419, %v421, %v417
      %v423 = vmul.f32 %v401, %v422
      %v424 = vrcp.pop %v394
      %v425 = vmul.f32 %v394, %v424
      %v426 = vsub.f32 1.0, %v425
      %v427 = vmul.f32 %v424, %v426
      %v428 = vadd.f32 %v424, %v427
      %vm429 = vweird.f32 %v394
      %vm430 = vweird.f32 %v424
      %vm431 = vmor %vm429, %vm430
      %v432 = vsel %vm431, %v424, %v428
      %v433 = vand.u32 2147483647, %v394
      %vm434 = vcmp.eq.f32.partialorder %v433, 8.507059e+37
      %v435 = vand.u32 %v394, 2147483648
      %v436 = vor.u32 1.1754944e-38, %v435
      %v437 = vsel %vm434, %v436, %v432
      %v438 = vmul.f32 %v402, %v437
      %v439 = vrcp.pop %v395
      %v440 = vmul.f32 %v395, %v439
      %v441 = vsub.f32 1.0, %v440
      %v442 = vmul.f32 %v439, %v441
      %v443 = vadd.f32 %v439, %v442
      %vm444 = vweird.f32 %v395
      %vm445 = vweird.f32 %v439
      %vm446 = vmor %vm444, %vm445
      %v447 = vsel %vm446, %v439, %v443
      %v448 = vand.u32 2147483647, %v395
      %vm449 = vcmp.eq.f32.partialorder %v448, 8.507059e+37
      %v450 = vand.u32 %v395, 2147483648
      %v451 = vor.u32 1.1754944e-38, %v450
      %v452 = vsel %vm449, %v451, %v447
      %v453 = vmul.f32 %v403, %v452
      %v454 = vrcp.pop %v396
      %v455 = vmul.f32 %v396, %v454
      %v456 = vsub.f32 1.0, %v455
      %v457 = vmul.f32 %v454, %v456
      %v458 = vadd.f32 %v454, %v457
      %vm459 = vweird.f32 %v396
      %vm460 = vweird.f32 %v454
      %vm461 = vmor %vm459, %vm460
      %v462 = vsel %vm461, %v454, %v458
      %v463 = vand.u32 2147483647, %v396
      %vm464 = vcmp.eq.f32.partialorder %v463, 8.507059e+37
      %v465 = vand.u32 %v396, 2147483648
      %v466 = vor.u32 1.1754944e-38, %v465
      %v467 = vsel %vm464, %v466, %v462
      %v468 = vmul.f32 %v404, %v467
      %v469 = vrcp.pop %v397
      %v470 = vmul.f32 %v397, %v469
      %v471 = vsub.f32 1.0, %v470
      %v472 = vmul.f32 %v469, %v471
      %v473 = vadd.f32 %v469, %v472
      %vm474 = vweird.f32 %v397
      %vm475 = vweird.f32 %v469
      %vm476 = vmor %vm474, %vm475
      %v477 = vsel %vm476, %v469, %v473
      %v478 = vand.u32 2147483647, %v397
      %vm479 = vcmp.eq.f32.partialorder %v478, 8.507059e+37
      %v480 = vand.u32 %v397, 2147483648
      %v481 = vor.u32 1.1754944e-38, %v480
      %v482 = vsel %vm479, %v481, %v477
      %v483 = vmul.f32 %v405, %v482
      %v484 = vrcp.pop %v398
      %v485 = vmul.f32 %v398, %v484
      %v486 = vsub.f32 1.0, %v485
      %v487 = vmul.f32 %v484, %v486
      %v488 = vadd.f32 %v484, %v487
      %vm489 = vweird.f32 %v398
      %vm490 = vweird.f32 %v484
      %vm491 = vmor %vm489, %vm490
      %v492 = vsel %vm491, %v484, %v488
      %v493 = vand.u32 2147483647, %v398
      %vm494 = vcmp.eq.f32.partialorder %v493, 8.507059e+37
      %v495 = vand.u32 %v398, 2147483648
      %v496 = vor.u32 1.1754944e-38, %v495
      %v497 = vsel %vm494, %v496, %v492
      %v498 = vmul.f32 %v406, %v497
      %v499 = vrcp.pop %v399
      %v500 = vmul.f32 %v399, %v499
      %v501 = vsub.f32 1.0, %v500
      %v502 = vmul.f32 %v499, %v501
      %v503 = vadd.f32 %v499, %v502
      %vm504 = vweird.f32 %v399
      %vm505 = vweird.f32 %v499
      %vm506 = vmor %vm504, %vm505
      %v507 = vsel %vm506, %v499, %v503
      %v508 = vand.u32 2147483647, %v399
      %vm509 = vcmp.eq.f32.partialorder %v508, 8.507059e+37
      %v510 = vand.u32 %v399, 2147483648
      %v511 = vor.u32 1.1754944e-38, %v510
      %v512 = vsel %vm509, %v511, %v507
      %v513 = vmul.f32 %v407, %v512
      %v514 = vrcp.pop %v400
      %v515 = vmul.f32 %v400, %v514
      %v516 = vsub.f32 1.0, %v515
      %v517 = vmul.f32 %v514, %v516
      %v518 = vadd.f32 %v514, %v517
      %vm519 = vweird.f32 %v400
      %vm520 = vweird.f32 %v514
      %vm521 = vmor %vm519, %vm520
      %v522 = vsel %vm521, %v514, %v518
      %v523 = vand.u32 2147483647, %v400
      %vm524 = vcmp.eq.f32.partialorder %v523, 8.507059e+37
      %v525 = vand.u32 %v400, 2147483648
      %v526 = vor.u32 1.1754944e-38, %v525
      %v527 = vsel %vm524, %v526, %v522
      %v528 = vmul.f32 %v408, %v527
      %v529 = vadd.f32 %v423, 1.0
      %v530 = vadd.f32 %v438, 1.0
      %v531 = vadd.f32 %v453, 1.0
      %v532 = vadd.f32 %v468, 1.0
      %v533 = vadd.f32 %v483, 1.0
      %v534 = vadd.f32 %v498, 1.0
      %v535 = vadd.f32 %v513, 1.0
      %v536 = vadd.f32 %v528, 1.0
      %v537 = vmul.f32 %v201, %v529
      %v538 = vmul.f32 %v202, %v530
      %v539 = vmul.f32 %v203, %v531
      %v540 = vmul.f32 %v204, %v532
      %v541 = vmul.f32 %v205, %v533
      %v542 = vmul.f32 %v206, %v534
      %v543 = vmul.f32 %v207, %v535
      %v544 = vmul.f32 %v208, %v536
      %545 = vst [vmem:[%s175] sm:$0xff] %v537
      %546 = vst [vmem:[%s175 + $0x8] sm:$0xff] %v538
      %547 = vst [vmem:[%s175 + $0x10] sm:$0xff] %v539
      %548 = vst [vmem:[%s175 + $0x18] sm:$0xff] %v540
      %549 = vst [vmem:[%s175 + $0x20] sm:$0xff] %v541
      %550 = vst [vmem:[%s175 + $0x28] sm:$0xff] %v542
      %551 = vst [vmem:[%s175 + $0x30] sm:$0xff] %v543
      %552 = vst [vmem:[%s175 + $0x38] sm:$0xff] %v544
      %s553 = smul.u32 2, %s13
      %p554 = scmp.lt.s32.totalorder %s553, 3
      %s555 = scalar_select %p554, %s553, 3
      %s556 = smul.addr %s555, 4
      %s557 = smul.addr %s556, 8
      %s558 = scalar_lea.vmem %s2, %s557
      // Predicated region
      $region29: #{gsconv_jilian_forward.21} parent=27 // pred_check
        %p559 = pneg %p83
      $region30: #{gsconv_jilian_forward.21} parent=27 // pred_check_branch
        %561 = sbr.rel (%p559) target = $region32
      $region31: #{gsconv_jilian_forward.21} parent=27 // pred_region
        %s562 = smul.u32 2, %s13
      $region32: #{gsconv_jilian_forward.21} parent=27 // pred_fallthru
        _
    $region28: #{gsconv_jilian_forward.21} parent=5 // pred_fallthru
      _
    %p563 = scmp.le.s32.totalorder 2, %s8
    // Predicated region
    $region33: #{gsconv_jilian_forward.21} parent=5 // pred_check
      %p564 = pneg %p563
    $region34: #{gsconv_jilian_forward.21} parent=5 // pred_check_branch
      %566 = sbr.rel (%p564) target = $region36
    $region35: #{gsconv_jilian_forward.21} parent=5 // pred_region
      %s567 = ssub.s32 %s8, 2
      // Predicated region
      $region37: #{gsconv_jilian_forward.21} parent=35 // pred_check
        %p568 = pneg %p89
      $region38: #{gsconv_jilian_forward.21} parent=35 // pred_check_branch
        %570 = sbr.rel (%p568) target = $region40
      $region39: #{gsconv_jilian_forward.21} parent=35 // pred_region
        %s571 = smul.u32 2, %s14
        %p572 = scmp.lt.s32.totalorder %s571, 3
        %s573 = scalar_select %p572, %s571, 3
        %s574 = smul.addr %s573, 4
        %s575 = smul.addr %s574, 8
        %s576 = scalar_lea.vmem %s2, %s575
      $region40: #{gsconv_jilian_forward.21} parent=35 // pred_fallthru
        _
    $region36: #{gsconv_jilian_forward.21} parent=5 // pred_fallthru
      _
  $region6: #{gsconv_jilian_forward.21} parent=0 // loop_footer
    %s12 = sadd.s32 1, %s8
  $region7: #{gsconv_jilian_forward.21} parent=0 // loop_footer_branch
    %7 = sbr.rel target = $region3
  $region8: #{gsconv_jilian_forward.21} parent=0 // loop_exit
    _

// kernel: gsconv_jilian_forward.16
$region0: #{gsconv_jilian_forward.16}
  #allocation0 [shape = 'u32[]', space=smem, size = 0x4, offset = 0x4, fixed_abs, tag = 'smem constant byte address 0x4 - core index']
  #allocation1 [shape = 'u32[72,128]{1,0:T(1,128)}', space=vmem, size = 0x9000, scoped, tag = 'internal scratch']
  %s0 = inlined_call_operand.vmem [shape: f32[512,32], index: 0, kind: input, shape index: {}]
  %s1 = inlined_call_operand.vmem [shape: f32[512,32], index: 1, kind: input, shape index: {}]
  %s2 = inlined_call_operand.vmem [shape: bf16[32,32], index: 2, kind: input, shape index: {}]
  %s3 = inlined_call_operand.vmem [shape: bf16[32,32], index: 3, kind: input, shape index: {}]
  %s4 = inlined_call_operand.vmem [shape: f32[512,32], index: 4, kind: output, shape index: {0}]
  %s5 = inlined_call_operand.vmem [shape: f32[2,1,32], index: 5, kind: output, shape index: {1}]
  %s6 = inlined_call_operand.vmem [shape: f32[2,1,32], index: 6, kind: output, shape index: {2}]
  %7 = xla_tuple %s4, %s5, %s6
  %s8 = sld [smem:[#allocation0]]
  $region65: #{gsconv_jilian_forward.16} parent=0
    _
  %s10 = ssub.s32 1, %s8
  %s11 = scalar_select 0, %s10, %s8
  loop: start=0, step=1, limit=4
  $region2: #{gsconv_jilian_forward.16} parent=0 // loop_pre_header
    _
  $region3: #{gsconv_jilian_forward.16} parent=0 // loop_header
    %s13 = sphi 0, %s17
    %p14 = scmp.ge.s32.totalorder %s13, 4
    %s23 = sphi 0, %s25
    %s26 = sphi 0, %s23
    %s27 = sphi 0, %s26
    %s43 = sphi 0, %s27
    %s49 = sphi 0, %s51
    %s52 = sphi 0, %s49
    %s53 = sphi 0, %s52
    %s69 = sphi 0, %s53
    %s73 = sphi 0, %s73
    %s75 = sphi 0, %s73
    %s76 = sphi 0, %s75
    %s90 = sphi 0, %s76
    %s94 = sphi 0, %s94
    %s96 = sphi 0, %s94
    %s97 = sphi 0, %s96
    %s111 = sphi 0, %s97
    %s117 = sphi 0, %s119
    %s120 = sphi 0, %s117
    %s121 = sphi 0, %s120
    %s137 = sphi 0, %s121
    %s143 = sphi 0, %s145
    %s146 = sphi 0, %s143
    %s147 = sphi 0, %s146
    %s163 = sphi 0, %s147
    %s169 = sphi 0, %s171
    %s172 = sphi 0, %s169
    %s173 = sphi 0, %s172
    %s189 = sphi 0, %s173
  $region4: #{gsconv_jilian_forward.16} parent=0 // loop_header_branch
    %16 = sbr.rel (%p14) target = $region8
  $region5: #{gsconv_jilian_forward.16} parent=0 // loop_body
    %s18 = ssub.s32 %s13, 1
    %s19 = ssub.s32 %s13, 2
    %s20 = sadd.s32 %s13, 1
    %s21 = ssub.s32 %s13, %s20
    %p22 = scmp.eq.s32.totalorder %s21, 0
    %s24 = sadd.s32 %s23, 1
    %s25 = scalar_select %p22, %s23, %s24
    %p28 = pneg %p22
    %p29 = scmp.eq.s32.totalorder %s13, 1
    %p30 = por %p28, %p29
    %p31 = scmp.ne.s32.totalorder %s23, %s26
    %p32 = scmp.eq.s32.totalorder %s13, 0
    %p33 = por %p31, %p32
    %p34 = scmp.ne.s32.totalorder %s23, %s26
    %p35 = scmp.eq.s32.totalorder %s18, 1
    %p36 = por %p34, %p35
    %p37 = scmp.ne.s32.totalorder %s26, %s27
    %p38 = scmp.eq.s32.totalorder %s18, 0
    %p39 = por %p37, %p38
    %p40 = scmp.ne.s32.totalorder %s26, %s27
    %p41 = scmp.eq.s32.totalorder %s19, 1
    %p42 = por %p40, %p41
    %p44 = scmp.ne.s32.totalorder %s27, %s43
    %p45 = scmp.eq.s32.totalorder %s19, 0
    %p46 = por %p44, %p45
    %s47 = ssub.s32 %s13, %s20
    %p48 = scmp.eq.s32.totalorder %s47, 0
    %s50 = sadd.s32 %s49, 1
    %s51 = scalar_select %p48, %s49, %s50
    %p54 = pneg %p48
    %p55 = scmp.eq.s32.totalorder %s13, 1
    %p56 = por %p54, %p55
    %p57 = scmp.ne.s32.totalorder %s49, %s52
    %p58 = scmp.eq.s32.totalorder %s13, 0
    %p59 = por %p57, %p58
    %p60 = scmp.ne.s32.totalorder %s49, %s52
    %p61 = scmp.eq.s32.totalorder %s18, 1
    %p62 = por %p60, %p61
    %p63 = scmp.ne.s32.totalorder %s52, %s53
    %p64 = scmp.eq.s32.totalorder %s18, 0
    %p65 = por %p63, %p64
    %p66 = scmp.ne.s32.totalorder %s52, %s53
    %p67 = scmp.eq.s32.totalorder %s19, 1
    %p68 = por %p66, %p67
    %p70 = scmp.ne.s32.totalorder %s53, %s69
    %p71 = scmp.eq.s32.totalorder %s19, 0
    %p72 = por %p70, %p71
    %s74 = sadd.s32 %s73, 1
    %p77 = scmp.eq.s32.totalorder %s13, 1
    %p78 = scmp.ne.s32.totalorder %s73, %s75
    %p79 = scmp.eq.s32.totalorder %s13, 0
    %p80 = por %p78, %p79
    %p81 = scmp.ne.s32.totalorder %s73, %s75
    %p82 = scmp.eq.s32.totalorder %s18, 1
    %p83 = por %p81, %p82
    %p84 = scmp.ne.s32.totalorder %s75, %s76
    %p85 = scmp.eq.s32.totalorder %s18, 0
    %p86 = por %p84, %p85
    %p87 = scmp.ne.s32.totalorder %s75, %s76
    %p88 = scmp.eq.s32.totalorder %s19, 1
    %p89 = por %p87, %p88
    %p91 = scmp.ne.s32.totalorder %s76, %s90
    %p92 = scmp.eq.s32.totalorder %s19, 0
    %p93 = por %p91, %p92
    %s95 = sadd.s32 %s94, 1
    %p98 = scmp.eq.s32.totalorder %s13, 1
    %p99 = scmp.ne.s32.totalorder %s94, %s96
    %p100 = scmp.eq.s32.totalorder %s13, 0
    %p101 = por %p99, %p100
    %p102 = scmp.ne.s32.totalorder %s94, %s96
    %p103 = scmp.eq.s32.totalorder %s18, 1
    %p104 = por %p102, %p103
    %p105 = scmp.ne.s32.totalorder %s96, %s97
    %p106 = scmp.eq.s32.totalorder %s18, 0
    %p107 = por %p105, %p106
    %p108 = scmp.ne.s32.totalorder %s96, %s97
    %p109 = scmp.eq.s32.totalorder %s19, 1
    %p110 = por %p108, %p109
    %p112 = scmp.ne.s32.totalorder %s97, %s111
    %p113 = scmp.eq.s32.totalorder %s19, 0
    %p114 = por %p112, %p113
    %s115 = ssub.s32 %s13, %s20
    %p116 = scmp.eq.s32.totalorder %s115, 0
    %s118 = sadd.s32 %s117, 1
    %s119 = scalar_select %p116, %s117, %s118
    %p122 = pneg %p116
    %p123 = scmp.eq.s32.totalorder %s13, 1
    %p124 = por %p122, %p123
    %p125 = scmp.ne.s32.totalorder %s117, %s120
    %p126 = scmp.eq.s32.totalorder %s13, 0
    %p127 = por %p125, %p126
    %p128 = scmp.ne.s32.totalorder %s117, %s120
    %p129 = scmp.eq.s32.totalorder %s18, 1
    %p130 = por %p128, %p129
    %p131 = scmp.ne.s32.totalorder %s120, %s121
    %p132 = scmp.eq.s32.totalorder %s18, 0
    %p133 = por %p131, %p132
    %p134 = scmp.ne.s32.totalorder %s120, %s121
    %p135 = scmp.eq.s32.totalorder %s19, 1
    %p136 = por %p134, %p135
    %p138 = scmp.ne.s32.totalorder %s121, %s137
    %p139 = scmp.eq.s32.totalorder %s19, 0
    %p140 = por %p138, %p139
    %s141 = ssub.s32 %s13, %s20
    %p142 = scmp.eq.s32.totalorder %s141, 0
    %s144 = sadd.s32 %s143, 1
    %s145 = scalar_select %p142, %s143, %s144
    %p148 = pneg %p142
    %p149 = scmp.eq.s32.totalorder %s13, 1
    %p150 = por %p148, %p149
    %p151 = scmp.ne.s32.totalorder %s143, %s146
    %p152 = scmp.eq.s32.totalorder %s13, 0
    %p153 = por %p151, %p152
    %p154 = scmp.ne.s32.totalorder %s143, %s146
    %p155 = scmp.eq.s32.totalorder %s18, 1
    %p156 = por %p154, %p155
    %p157 = scmp.ne.s32.totalorder %s146, %s147
    %p158 = scmp.eq.s32.totalorder %s18, 0
    %p159 = por %p157, %p158
    %p160 = scmp.ne.s32.totalorder %s146, %s147
    %p161 = scmp.eq.s32.totalorder %s19, 1
    %p162 = por %p160, %p161
    %p164 = scmp.ne.s32.totalorder %s147, %s163
    %p165 = scmp.eq.s32.totalorder %s19, 0
    %p166 = por %p164, %p165
    %s167 = ssub.s32 %s13, %s20
    %p168 = scmp.eq.s32.totalorder %s167, 0
    %s170 = sadd.s32 %s169, 1
    %s171 = scalar_select %p168, %s169, %s170
    %p174 = pneg %p168
    %p175 = scmp.eq.s32.totalorder %s13, 1
    %p176 = por %p174, %p175
    %p177 = scmp.ne.s32.totalorder %s169, %s172
    %p178 = scmp.eq.s32.totalorder %s13, 0
    %p179 = por %p177, %p178
    %p180 = scmp.ne.s32.totalorder %s169, %s172
    %p181 = scmp.eq.s32.totalorder %s18, 1
    %p182 = por %p180, %p181
    %p183 = scmp.ne.s32.totalorder %s172, %s173
    %p184 = scmp.eq.s32.totalorder %s18, 0
    %p185 = por %p183, %p184
    %p186 = scmp.ne.s32.totalorder %s172, %s173
    %p187 = scmp.eq.s32.totalorder %s19, 1
    %p188 = por %p186, %p187
    %p190 = scmp.ne.s32.totalorder %s173, %s189
    %p191 = scmp.eq.s32.totalorder %s19, 0
    %p192 = por %p190, %p191
    %p193 = scmp.le.s32.totalorder 1, %s13
    %p194 = scmp.lt.s32.totalorder %s13, 3
    %p195 = pnand %p193, %p194
    %p196 = pneg %p195
    // Predicated region
    $region9: #{gsconv_jilian_forward.16} parent=5 // pred_check
      _
    $region10: #{gsconv_jilian_forward.16} parent=5 // pred_check_branch
      %198 = sbr.rel (%p195) target = $region12
    $region11: #{gsconv_jilian_forward.16} parent=5 // pred_region
      %s199 = ssub.s32 %s13, 1
      // Predicated region
      $region13: #{gsconv_jilian_forward.16} parent=11 // pred_check
        %p200 = pneg %p86
      $region14: #{gsconv_jilian_forward.16} parent=11 // pred_check_branch
        %202 = sbr.rel (%p200) target = $region16
      $region15: #{gsconv_jilian_forward.16} parent=11 // pred_region
        _
      $region16: #{gsconv_jilian_forward.16} parent=11 // pred_fallthru
        _
      // Predicated region
      $region17: #{gsconv_jilian_forward.16} parent=11 // pred_check
        %p203 = pneg %p107
      $region18: #{gsconv_jilian_forward.16} parent=11 // pred_check_branch
        %205 = sbr.rel (%p203) target = $region20
      $region19: #{gsconv_jilian_forward.16} parent=11 // pred_region
        _
      $region20: #{gsconv_jilian_forward.16} parent=11 // pred_fallthru
        _
    $region12: #{gsconv_jilian_forward.16} parent=5 // pred_fallthru
      _
    %p206 = scmp.lt.s32.totalorder %s13, 2
    // Predicated region
    $region21: #{gsconv_jilian_forward.16} parent=5 // pred_check
      %p207 = pneg %p206
    $region22: #{gsconv_jilian_forward.16} parent=5 // pred_check_branch
      %209 = sbr.rel (%p207) target = $region24
    $region23: #{gsconv_jilian_forward.16} parent=5 // pred_region
      // Predicated region
      $region25: #{gsconv_jilian_forward.16} parent=23 // pred_check
        %p210 = pneg %p33
      $region26: #{gsconv_jilian_forward.16} parent=23 // pred_check_branch
        %212 = sbr.rel (%p210) target = $region28
      $region27: #{gsconv_jilian_forward.16} parent=23 // pred_region
        %s213 = smul.u32 32, %s13
        %p214 = scmp.lt.s32.totalorder %s213, 63
        %s215 = scalar_select %p214, %s213, 63
        %s216 = smul.addr %s215, 8
        %s217 = scalar_lea.vmem %s0, %s216
        %s218 = smul.u32 32, %s13
      $region28: #{gsconv_jilian_forward.16} parent=23 // pred_fallthru
        _
      // Predicated region
      $region29: #{gsconv_jilian_forward.16} parent=23 // pred_check
        %p219 = pneg %p59
      $region30: #{gsconv_jilian_forward.16} parent=23 // pred_check_branch
        %221 = sbr.rel (%p219) target = $region32
      $region31: #{gsconv_jilian_forward.16} parent=23 // pred_region
        %s222 = smul.u32 32, %s13
        %p223 = scmp.lt.s32.totalorder %s222, 63
        %s224 = scalar_select %p223, %s222, 63
        %s225 = smul.addr %s224, 8
        %s226 = scalar_lea.vmem %s1, %s225
        %s227 = smul.u32 32, %s13
      $region32: #{gsconv_jilian_forward.16} parent=23 // pred_fallthru
        _
    $region24: #{gsconv_jilian_forward.16} parent=5 // pred_fallthru
      _
    %p228 = scmp.le.s32.totalorder 1, %s13
    %p229 = scmp.lt.s32.totalorder %s13, 3
    %p230 = pnand %p228, %p229
    %p231 = pneg %p230
    // Predicated region
    $region33: #{gsconv_jilian_forward.16} parent=5 // pred_check
      _
    $region34: #{gsconv_jilian_forward.16} parent=5 // pred_check_branch
      %233 = sbr.rel (%p230) target = $region36
    $region35: #{gsconv_jilian_forward.16} parent=5 // pred_region
      %s234 = ssub.s32 %s13, 1
      %s235 = smul.u32 32, %s18
      %p236 = scmp.lt.s32.totalorder %s235, 63
      %s237 = scalar_select %p236, %s235, 63
      %s238 = smul.addr %s237, 8
      %s239 = scalar_lea.vmem %s0, %s238
      %p240 = pneg %p39
      %p241 = pneg %p36
      %s242 = smul.u32 32, %s18
      %p243 = scmp.lt.s32.totalorder %s242, 63
      %s244 = scalar_select %p243, %s242, 63
      %s245 = smul.addr %s244, 8
      %s246 = scalar_lea.vmem %s1, %s245
      %p247 = pneg %p65
      %p248 = pneg %p62
      %p249 = pneg %p86
      %p250 = pneg %p83
      %p251 = pneg %p107
      %p252 = pneg %p104
      %p253 = pneg %p133
      %p254 = pneg %p130
      %s255 = smul.u32 32, %s18
      %p256 = scmp.lt.s32.totalorder %s255, 63
      %s257 = scalar_select %p256, %s255, 63
      %s258 = smul.addr %s257, 8
      %s259 = scalar_lea.vmem %s4, %s258
      %p260 = pneg %p159
      %p261 = pneg %p156
      %p262 = scmp.lt.s32.totalorder %s18, 1
      %s263 = scalar_select %p262, %s18, 1
      %s264 = scalar_lea.vmem %s5, %s263
      %p265 = pneg %p185
      %p266 = pneg %p182
      %p267 = scmp.lt.s32.totalorder %s18, 1
      %s268 = scalar_select %p267, %s18, 1
      %s269 = scalar_lea.vmem %s6, %s268
      %s270 = smul.u32 32, %s18
      %p271 = scmp.lt.s32.totalorder %s270, 63
      %s272 = scalar_select %p271, %s270, 63
      %s273 = smul.addr %s272, 8
      %s274 = scalar_lea.vmem %s0, %s273
      %s275 = smul.u32 32, %s18
      %s276 = smul.u32 32, %s18
      %p277 = scmp.lt.s32.totalorder %s276, 63
      %s278 = scalar_select %p277, %s276, 63
      %s279 = smul.addr %s278, 8
      %s280 = scalar_lea.vmem %s1, %s279
      %s281 = smul.u32 32, %s18
      %s282 = smul.u32 32, %s18
      %p283 = scmp.lt.s32.totalorder %s282, 63
      %s284 = scalar_select %p283, %s282, 63
      %s285 = smul.addr %s284, 8
      %s286 = scalar_lea.vmem %s4, %s285
      %s287 = smul.u32 32, %s18
      %p288 = scmp.lt.s32.totalorder %s18, 1
      %s289 = scalar_select %p288, %s18, 1
      %s290 = scalar_lea.vmem %s5, %s289
      %p291 = scmp.lt.s32.totalorder %s18, 1
      %s292 = scalar_select %p291, %s18, 1
      %s293 = scalar_lea.vmem %s6, %s292
      %v295 = vld [vmem:[%s274] sm:$0xff]
      %v296 = vld [vmem:[%s274 + $0x8] sm:$0xff]
      %v297 = vld [vmem:[%s274 + $0x10] sm:$0xff]
      %v298 = vld [vmem:[%s274 + $0x18] sm:$0xff]
      %v299 = vld [vmem:[%s274 + $0x20] sm:$0xff]
      %v300 = vld [vmem:[%s274 + $0x28] sm:$0xff]
      %v301 = vld [vmem:[%s274 + $0x30] sm:$0xff]
      %v302 = vld [vmem:[%s274 + $0x38] sm:$0xff]
      %v303 = vld [vmem:[%s274 + $0x40] sm:$0xff]
      %v304 = vld [vmem:[%s274 + $0x48] sm:$0xff]
      %v305 = vld [vmem:[%s274 + $0x50] sm:$0xff]
      %v306 = vld [vmem:[%s274 + $0x58] sm:$0xff]
      %v307 = vld [vmem:[%s274 + $0x60] sm:$0xff]
      %v308 = vld [vmem:[%s274 + $0x68] sm:$0xff]
      %v309 = vld [vmem:[%s274 + $0x70] sm:$0xff]
      %v310 = vld [vmem:[%s274 + $0x78] sm:$0xff]
      %v311 = vld [vmem:[%s274 + $0x80] sm:$0xff]
      %v312 = vld [vmem:[%s274 + $0x88] sm:$0xff]
      %v313 = vld [vmem:[%s274 + $0x90] sm:$0xff]
      %v314 = vld [vmem:[%s274 + $0x98] sm:$0xff]
      %v315 = vld [vmem:[%s274 + $0xa0] sm:$0xff]
      %v316 = vld [vmem:[%s274 + $0xa8] sm:$0xff]
      %v317 = vld [vmem:[%s274 + $0xb0] sm:$0xff]
      %v318 = vld [vmem:[%s274 + $0xb8] sm:$0xff]
      %v319 = vld [vmem:[%s274 + $0xc0] sm:$0xff]
      %v320 = vld [vmem:[%s274 + $0xc8] sm:$0xff]
      %v321 = vld [vmem:[%s274 + $0xd0] sm:$0xff]
      %v322 = vld [vmem:[%s274 + $0xd8] sm:$0xff]
      %v323 = vld [vmem:[%s274 + $0xe0] sm:$0xff]
      %v324 = vld [vmem:[%s274 + $0xe8] sm:$0xff]
      %v325 = vld [vmem:[%s274 + $0xf0] sm:$0xff]
      %v326 = vld [vmem:[%s274 + $0xf8] sm:$0xff]
      %v327 = vpack.c.bf16 %v296, %v295
      %v328 = vpack.c.bf16 %v298, %v297
      %v329 = vpack.c.bf16 %v300, %v299
      %v330 = vpack.c.bf16 %v302, %v301
      %v331 = vpack.c.bf16 %v304, %v303
      %v332 = vpack.c.bf16 %v306, %v305
      %v333 = vpack.c.bf16 %v308, %v307
      %v334 = vpack.c.bf16 %v310, %v309
      %v335 = vpack.c.bf16 %v312, %v311
      %v336 = vpack.c.bf16 %v314, %v313
      %v337 = vpack.c.bf16 %v316, %v315
      %v338 = vpack.c.bf16 %v318, %v317
      %v339 = vpack.c.bf16 %v320, %v319
      %v340 = vpack.c.bf16 %v322, %v321
      %v341 = vpack.c.bf16 %v324, %v323
      %v342 = vpack.c.bf16 %v326, %v325
      %v343 = vld [vmem:[%s2] sm:$0xf]
      %v344 = vld [vmem:[%s2 + $0x4] sm:$0xf]
      %v345 = vld [vmem:[%s2 + $0x8] sm:$0xf]
      %v346 = vld [vmem:[%s2 + $0xc] sm:$0xf]
      %v347 = vld [vmem:[%s280] sm:$0xff]
      %v348 = vld [vmem:[%s280 + $0x8] sm:$0xff]
      %v349 = vld [vmem:[%s280 + $0x10] sm:$0xff]
      %v350 = vld [vmem:[%s280 + $0x18] sm:$0xff]
      %v351 = vld [vmem:[%s280 + $0x20] sm:$0xff]
      %v352 = vld [vmem:[%s280 + $0x28] sm:$0xff]
      %v353 = vld [vmem:[%s280 + $0x30] sm:$0xff]
      %v354 = vld [vmem:[%s280 + $0x38] sm:$0xff]
      %v355 = vld [vmem:[%s280 + $0x40] sm:$0xff]
      %v356 = vld [vmem:[%s280 + $0x48] sm:$0xff]
      %v357 = vld [vmem:[%s280 + $0x50] sm:$0xff]
      %v358 = vld [vmem:[%s280 + $0x58] sm:$0xff]
      %v359 = vld [vmem:[%s280 + $0x60] sm:$0xff]
      %v360 = vld [vmem:[%s280 + $0x68] sm:$0xff]
      %v361 = vld [vmem:[%s280 + $0x70] sm:$0xff]
      %v362 = vld [vmem:[%s280 + $0x78] sm:$0xff]
      %v363 = vld [vmem:[%s280 + $0x80] sm:$0xff]
      %v364 = vld [vmem:[%s280 + $0x88] sm:$0xff]
      %v365 = vld [vmem:[%s280 + $0x90] sm:$0xff]
      %v366 = vld [vmem:[%s280 + $0x98] sm:$0xff]
      %v367 = vld [vmem:[%s280 + $0xa0] sm:$0xff]
      %v368 = vld [vmem:[%s280 + $0xa8] sm:$0xff]
      %v369 = vld [vmem:[%s280 + $0xb0] sm:$0xff]
      %v370 = vld [vmem:[%s280 + $0xb8] sm:$0xff]
      %v371 = vld [vmem:[%s280 + $0xc0] sm:$0xff]
      %v372 = vld [vmem:[%s280 + $0xc8] sm:$0xff]
      %v373 = vld [vmem:[%s280 + $0xd0] sm:$0xff]
      %v374 = vld [vmem:[%s280 + $0xd8] sm:$0xff]
      %v375 = vld [vmem:[%s280 + $0xe0] sm:$0xff]
      %v376 = vld [vmem:[%s280 + $0xe8] sm:$0xff]
      %v377 = vld [vmem:[%s280 + $0xf0] sm:$0xff]
      %v378 = vld [vmem:[%s280 + $0xf8] sm:$0xff]
      %v379 = vpack.c.bf16 %v348, %v347
      %v380 = vpack.c.bf16 %v350, %v349
      %v381 = vpack.c.bf16 %v352, %v351
      %v382 = vpack.c.bf16 %v354, %v353
      %v383 = vpack.c.bf16 %v356, %v355
      %v384 = vpack.c.bf16 %v358, %v357
      %v385 = vpack.c.bf16 %v360, %v359
      %v386 = vpack.c.bf16 %v362, %v361
      %v387 = vpack.c.bf16 %v364, %v363
      %v388 = vpack.c.bf16 %v366, %v365
      %v389 = vpack.c.bf16 %v368, %v367
      %v390 = vpack.c.bf16 %v370, %v369
      %v391 = vpack.c.bf16 %v372, %v371
      %v392 = vpack.c.bf16 %v374, %v373
      %v393 = vpack.c.bf16 %v376, %v375
      %v394 = vpack.c.bf16 %v378, %v377
      %v395 = vld [vmem:[%s3] sm:$0xf]
      %v396 = vld [vmem:[%s3 + $0x4] sm:$0xf]
      %v397 = vld [vmem:[%s3 + $0x8] sm:$0xf]
      %v398 = vld [vmem:[%s3 + $0xc] sm:$0xf]
      %v403 = vunpack.c.l.b16 %v395
      %v404 = vunpack.c.l.b16 %v396
      %v405 = vunpack.c.l.b16 %v397
      %v406 = vunpack.c.l.b16 %v398
      %v407 = vpack.c.b16 %v404, %v403
      %v408 = vpack.c.b16 %v406, %v405
      %vm411 = vcmask 261120
      %v413 = vsel %vm411, %v379, 0
      %v416 = vsel %vm411, %v380, 0
      %v419 = vsel %vm411, %v381, 0
      %v422 = vsel %vm411, %v382, 0
      %v425 = vsel %vm411, %v383, 0
      %v428 = vsel %vm411, %v384, 0
      %v431 = vsel %vm411, %v385, 0
      %v434 = vsel %vm411, %v386, 0
      %v437 = vsel %vm411, %v387, 0
      %v440 = vsel %vm411, %v388, 0
      %v443 = vsel %vm411, %v389, 0
      %v446 = vsel %vm411, %v390, 0
      %v449 = vsel %vm411, %v391, 0
      %v452 = vsel %vm411, %v392, 0
      %v455 = vsel %vm411, %v393, 0
      %v458 = vsel %vm411, %v394, 0
      %460 = vmatpush.bf16.msra.mxu0 0
      %461 = vmatpush.bf16.msra.mxu0 0
      %462 = vmatpush.bf16.msra.mxu0 0
      %463 = vmatpush.bf16.msra.mxu0 0
      %464 = vmatpush.bf16.msra.mxu0 0
      %465 = vmatpush.bf16.msra.mxu0 0
      %466 = vmatpush.bf16.msra.mxu0 %v408
      %467 = vmatpush.bf16.msra.mxu0 %v407
      %468 = vmatmul.bf16.gmra.mxu0 %v413
      %v469 = vpop.f32.mrf.mxu0
      %v470 = vadd.f32 0.0, %v469
      %v471 = vpop.f32.mrf.mxu0
      %v472 = vadd.f32 0.0, %v471
      %473 = vmatmul.bf16.gmra.mxu0 %v416
      %v474 = vpop.f32.mrf.mxu0
      %v475 = vadd.f32 0.0, %v474
      %v476 = vpop.f32.mrf.mxu0
      %v477 = vadd.f32 0.0, %v476
      %478 = vmatmul.bf16.gmra.mxu0 %v419
      %v479 = vpop.f32.mrf.mxu0
      %v480 = vadd.f32 0.0, %v479
      %v481 = vpop.f32.mrf.mxu0
      %v482 = vadd.f32 0.0, %v481
      %483 = vmatmul.bf16.gmra.mxu0 %v422
      %v484 = vpop.f32.mrf.mxu0
      %v485 = vadd.f32 0.0, %v484
      %v486 = vpop.f32.mrf.mxu0
      %v487 = vadd.f32 0.0, %v486
      %488 = vmatmul.bf16.gmra.mxu0 %v425
      %v489 = vpop.f32.mrf.mxu0
      %v490 = vadd.f32 0.0, %v489
      %v491 = vpop.f32.mrf.mxu0
      %v492 = vadd.f32 0.0, %v491
      %493 = vmatmul.bf16.gmra.mxu0 %v428
      %v494 = vpop.f32.mrf.mxu0
      %v495 = vadd.f32 0.0, %v494
      %v496 = vpop.f32.mrf.mxu0
      %v497 = vadd.f32 0.0, %v496
      %498 = vmatmul.bf16.gmra.mxu0 %v431
      %v499 = vpop.f32.mrf.mxu0
      %v500 = vadd.f32 0.0, %v499
      %v501 = vpop.f32.mrf.mxu0
      %v502 = vadd.f32 0.0, %v501
      %503 = vmatmul.bf16.gmra.mxu0 %v434
      %v504 = vpop.f32.mrf.mxu0
      %v505 = vadd.f32 0.0, %v504
      %v506 = vpop.f32.mrf.mxu0
      %v507 = vadd.f32 0.0, %v506
      %508 = vmatmul.bf16.gmra.mxu0 %v437
      %v509 = vpop.f32.mrf.mxu0
      %v510 = vadd.f32 0.0, %v509
      %v511 = vpop.f32.mrf.mxu0
      %v512 = vadd.f32 0.0, %v511
      %513 = vmatmul.bf16.gmra.mxu0 %v440
      %v514 = vpop.f32.mrf.mxu0
      %v515 = vadd.f32 0.0, %v514
      %v516 = vpop.f32.mrf.mxu0
      %v517 = vadd.f32 0.0, %v516
      %518 = vmatmul.bf16.gmra.mxu0 %v443
      %v519 = vpop.f32.mrf.mxu0
      %v520 = vadd.f32 0.0, %v519
      %v521 = vpop.f32.mrf.mxu0
      %v522 = vadd.f32 0.0, %v521
      %523 = vmatmul.bf16.gmra.mxu0 %v446
      %v524 = vpop.f32.mrf.mxu0
      %v525 = vadd.f32 0.0, %v524
      %v526 = vpop.f32.mrf.mxu0
      %v527 = vadd.f32 0.0, %v526
      %528 = vmatmul.bf16.gmra.mxu0 %v449
      %v529 = vpop.f32.mrf.mxu0
      %v530 = vadd.f32 0.0, %v529
      %v531 = vpop.f32.mrf.mxu0
      %v532 = vadd.f32 0.0, %v531
      %533 = vmatmul.bf16.gmra.mxu0 %v452
      %v534 = vpop.f32.mrf.mxu0
      %v535 = vadd.f32 0.0, %v534
      %v536 = vpop.f32.mrf.mxu0
      %v537 = vadd.f32 0.0, %v536
      %538 = vmatmul.bf16.gmra.mxu0 %v455
      %v539 = vpop.f32.mrf.mxu0
      %v540 = vadd.f32 0.0, %v539
      %v541 = vpop.f32.mrf.mxu0
      %v542 = vadd.f32 0.0, %v541
      %543 = vmatmul.bf16.gmra.mxu0 %v458
      %v544 = vpop.f32.mrf.mxu0
      %v545 = vadd.f32 0.0, %v544
      %v546 = vpop.f32.mrf.mxu0
      %v547 = vadd.f32 0.0, %v546
      %548 = vdwg.mxu0
      %v553 = vunpack.c.l.b16 %v343
      %v554 = vunpack.c.l.b16 %v344
      %v555 = vunpack.c.l.b16 %v345
      %v556 = vunpack.c.l.b16 %v346
      %v557 = vpack.c.b16 %v554, %v553
      %v558 = vpack.c.b16 %v556, %v555
      %v562 = vsel %vm411, %v327, 0
      %v565 = vsel %vm411, %v328, 0
      %v568 = vsel %vm411, %v329, 0
      %v571 = vsel %vm411, %v330, 0
      %v574 = vsel %vm411, %v331, 0
      %v577 = vsel %vm411, %v332, 0
      %v580 = vsel %vm411, %v333, 0
      %v583 = vsel %vm411, %v334, 0
      %v586 = vsel %vm411, %v335, 0
      %v589 = vsel %vm411, %v336, 0
      %v592 = vsel %vm411, %v337, 0
      %v595 = vsel %vm411, %v338, 0
      %v598 = vsel %vm411, %v339, 0
      %v601 = vsel %vm411, %v340, 0
      %v604 = vsel %vm411, %v341, 0
      %v607 = vsel %vm411, %v342, 0
      %609 = vmatpush.bf16.msra.mxu0 0
      %610 = vmatpush.bf16.msra.mxu0 0
      %611 = vmatpush.bf16.msra.mxu0 0
      %612 = vmatpush.bf16.msra.mxu0 0
      %613 = vmatpush.bf16.msra.mxu0 0
      %614 = vmatpush.bf16.msra.mxu0 0
      %615 = vmatpush.bf16.msra.mxu0 %v558
      %616 = vmatpush.bf16.msra.mxu0 %v557
      %617 = vmatmul.bf16.gmra.mxu0 %v562
      %v618 = vpop.f32.mrf.mxu0
      %v619 = vadd.f32 %v470, %v618
      %v620 = vpop.f32.mrf.mxu0
      %v621 = vadd.f32 %v472, %v620
      %622 = vmatmul.bf16.gmra.mxu0 %v565
      %v623 = vpop.f32.mrf.mxu0
      %v624 = vadd.f32 %v475, %v623
      %v625 = vpop.f32.mrf.mxu0
      %v626 = vadd.f32 %v477, %v625
      %627 = vmatmul.bf16.gmra.mxu0 %v568
      %v628 = vpop.f32.mrf.mxu0
      %v629 = vadd.f32 %v480, %v628
      %v630 = vpop.f32.mrf.mxu0
      %v631 = vadd.f32 %v482, %v630
      %632 = vmatmul.bf16.gmra.mxu0 %v571
      %v633 = vpop.f32.mrf.mxu0
      %v634 = vadd.f32 %v485, %v633
      %v635 = vpop.f32.mrf.mxu0
      %v636 = vadd.f32 %v487, %v635
      %637 = vmatmul.bf16.gmra.mxu0 %v574
      %v638 = vpop.f32.mrf.mxu0
      %v639 = vadd.f32 %v490, %v638
      %v640 = vpop.f32.mrf.mxu0
      %v641 = vadd.f32 %v492, %v640
      %642 = vmatmul.bf16.gmra.mxu0 %v577
      %v643 = vpop.f32.mrf.mxu0
      %v644 = vadd.f32 %v495, %v643
      %v645 = vpop.f32.mrf.mxu0
      %v646 = vadd.f32 %v497, %v645
      %647 = vmatmul.bf16.gmra.mxu0 %v580
      %v648 = vpop.f32.mrf.mxu0
      %v649 = vadd.f32 %v500, %v648
      %v650 = vpop.f32.mrf.mxu0
      %v651 = vadd.f32 %v502, %v650
      %652 = vmatmul.bf16.gmra.mxu0 %v583
      %v653 = vpop.f32.mrf.mxu0
      %v654 = vadd.f32 %v505, %v653
      %v655 = vpop.f32.mrf.mxu0
      %v656 = vadd.f32 %v507, %v655
      %657 = vmatmul.bf16.gmra.mxu0 %v586
      %v658 = vpop.f32.mrf.mxu0
      %v659 = vadd.f32 %v510, %v658
      %v660 = vpop.f32.mrf.mxu0
      %v661 = vadd.f32 %v512, %v660
      %662 = vmatmul.bf16.gmra.mxu0 %v589
      %v663 = vpop.f32.mrf.mxu0
      %v664 = vadd.f32 %v515, %v663
      %v665 = vpop.f32.mrf.mxu0
      %v666 = vadd.f32 %v517, %v665
      %667 = vmatmul.bf16.gmra.mxu0 %v592
      %v668 = vpop.f32.mrf.mxu0
      %v669 = vadd.f32 %v520, %v668
      %v670 = vpop.f32.mrf.mxu0
      %v671 = vadd.f32 %v522, %v670
      %672 = vmatmul.bf16.gmra.mxu0 %v595
      %v673 = vpop.f32.mrf.mxu0
      %v674 = vadd.f32 %v525, %v673
      %v675 = vpop.f32.mrf.mxu0
      %v676 = vadd.f32 %v527, %v675
      %677 = vmatmul.bf16.gmra.mxu0 %v598
      %v678 = vpop.f32.mrf.mxu0
      %v679 = vadd.f32 %v530, %v678
      %v680 = vpop.f32.mrf.mxu0
      %v681 = vadd.f32 %v532, %v680
      %682 = vmatmul.bf16.gmra.mxu0 %v601
      %v683 = vpop.f32.mrf.mxu0
      %v684 = vadd.f32 %v535, %v683
      %v685 = vpop.f32.mrf.mxu0
      %v686 = vadd.f32 %v537, %v685
      %687 = vmatmul.bf16.gmra.mxu0 %v604
      %v688 = vpop.f32.mrf.mxu0
      %v689 = vadd.f32 %v540, %v688
      %v690 = vpop.f32.mrf.mxu0
      %v691 = vadd.f32 %v542, %v690
      %692 = vmatmul.bf16.gmra.mxu0 %v607
      %v693 = vpop.f32.mrf.mxu0
      %v694 = vadd.f32 %v545, %v693
      %v695 = vpop.f32.mrf.mxu0
      %v696 = vadd.f32 %v547, %v695
      %697 = vdwg.mxu0
      %698 = vst.msk [vmem:[%s286] sm:$0xff] %vm411, %v619
      %699 = vst.msk [vmem:[%s286 + $0x8] sm:$0xff] %vm411, %v621
      %700 = vst.msk [vmem:[%s286 + $0x10] sm:$0xff] %vm411, %v624
      %701 = vst.msk [vmem:[%s286 + $0x18] sm:$0xff] %vm411, %v626
      %702 = vst.msk [vmem:[%s286 + $0x20] sm:$0xff] %vm411, %v629
      %703 = vst.msk [vmem:[%s286 + $0x28] sm:$0xff] %vm411, %v631
      %704 = vst.msk [vmem:[%s286 + $0x30] sm:$0xff] %vm411, %v634
      %705 = vst.msk [vmem:[%s286 + $0x38] sm:$0xff] %vm411, %v636
      %706 = vst.msk [vmem:[%s286 + $0x40] sm:$0xff] %vm411, %v639
      %707 = vst.msk [vmem:[%s286 + $0x48] sm:$0xff] %vm411, %v641
      %708 = vst.msk [vmem:[%s286 + $0x50] sm:$0xff] %vm411, %v644
      %709 = vst.msk [vmem:[%s286 + $0x58] sm:$0xff] %vm411, %v646
      %710 = vst.msk [vmem:[%s286 + $0x60] sm:$0xff] %vm411, %v649
      %711 = vst.msk [vmem:[%s286 + $0x68] sm:$0xff] %vm411, %v651
      %712 = vst.msk [vmem:[%s286 + $0x70] sm:$0xff] %vm411, %v654
      %713 = vst.msk [vmem:[%s286 + $0x78] sm:$0xff] %vm411, %v656
      %714 = vst.msk [vmem:[%s286 + $0x80] sm:$0xff] %vm411, %v659
      %715 = vst.msk [vmem:[%s286 + $0x88] sm:$0xff] %vm411, %v661
      %716 = vst.msk [vmem:[%s286 + $0x90] sm:$0xff] %vm411, %v664
      %717 = vst.msk [vmem:[%s286 + $0x98] sm:$0xff] %vm411, %v666
      %718 = vst.msk [vmem:[%s286 + $0xa0] sm:$0xff] %vm411, %v669
      %719 = vst.msk [vmem:[%s286 + $0xa8] sm:$0xff] %vm411, %v671
      %720 = vst.msk [vmem:[%s286 + $0xb0] sm:$0xff] %vm411, %v674
      %721 = vst.msk [vmem:[%s286 + $0xb8] sm:$0xff] %vm411, %v676
      %722 = vst.msk [vmem:[%s286 + $0xc0] sm:$0xff] %vm411, %v679
      %723 = vst.msk [vmem:[%s286 + $0xc8] sm:$0xff] %vm411, %v681
      %724 = vst.msk [vmem:[%s286 + $0xd0] sm:$0xff] %vm411, %v684
      %725 = vst.msk [vmem:[%s286 + $0xd8] sm:$0xff] %vm411, %v686
      %726 = vst.msk [vmem:[%s286 + $0xe0] sm:$0xff] %vm411, %v689
      %727 = vst.msk [vmem:[%s286 + $0xe8] sm:$0xff] %vm411, %v691
      %728 = vst.msk [vmem:[%s286 + $0xf0] sm:$0xff] %vm411, %v694
      %729 = vst.msk [vmem:[%s286 + $0xf8] sm:$0xff] %vm411, %v696
      %v730 = vsel %vm411, %v619, 0.0
      %v731 = vsel %vm411, %v621, 0.0
      %v732 = vadd.f32 %v730, %v731
      %v733 = vsel %vm411, %v624, 0.0
      %v734 = vadd.f32 %v732, %v733
      %v735 = vsel %vm411, %v626, 0.0
      %v736 = vadd.f32 %v734, %v735
      %v737 = vsel %vm411, %v629, 0.0
      %v738 = vadd.f32 %v736, %v737
      %v739 = vsel %vm411, %v631, 0.0
      %v740 = vadd.f32 %v738, %v739
      %v741 = vsel %vm411, %v634, 0.0
      %v742 = vadd.f32 %v740, %v741
      %v743 = vsel %vm411, %v636, 0.0
      %v744 = vadd.f32 %v742, %v743
      %v745 = vsel %vm411, %v639, 0.0
      %v746 = vadd.f32 %v744, %v745
      %v747 = vsel %vm411, %v641, 0.0
      %v748 = vadd.f32 %v746, %v747
      %v749 = vsel %vm411, %v644, 0.0
      %v750 = vadd.f32 %v748, %v749
      %v751 = vsel %vm411, %v646, 0.0
      %v752 = vadd.f32 %v750, %v751
      %v753 = vsel %vm411, %v649, 0.0
      %v754 = vadd.f32 %v752, %v753
      %v755 = vsel %vm411, %v651, 0.0
      %v756 = vadd.f32 %v754, %v755
      %v757 = vsel %vm411, %v654, 0.0
      %v758 = vadd.f32 %v756, %v757
      %v759 = vsel %vm411, %v656, 0.0
      %v760 = vadd.f32 %v758, %v759
      %v761 = vsel %vm411, %v659, 0.0
      %v762 = vadd.f32 %v760, %v761
      %v763 = vsel %vm411, %v661, 0.0
      %v764 = vadd.f32 %v762, %v763
      %v765 = vsel %vm411, %v664, 0.0
      %v766 = vadd.f32 %v764, %v765
      %v767 = vsel %vm411, %v666, 0.0
      %v768 = vadd.f32 %v766, %v767
      %v769 = vsel %vm411, %v669, 0.0
      %v770 = vadd.f32 %v768, %v769
      %v771 = vsel %vm411, %v671, 0.0
      %v772 = vadd.f32 %v770, %v771
      %v773 = vsel %vm411, %v674, 0.0
      %v774 = vadd.f32 %v772, %v773
      %v775 = vsel %vm411, %v676, 0.0
      %v776 = vadd.f32 %v774, %v775
      %v777 = vsel %vm411, %v679, 0.0
      %v778 = vadd.f32 %v776, %v777
      %v779 = vsel %vm411, %v681, 0.0
      %v780 = vadd.f32 %v778, %v779
      %v781 = vsel %vm411, %v684, 0.0
      %v782 = vadd.f32 %v780, %v781
      %v783 = vsel %vm411, %v686, 0.0
      %v784 = vadd.f32 %v782, %v783
      %v785 = vsel %vm411, %v689, 0.0
      %v786 = vadd.f32 %v784, %v785
      %v787 = vsel %vm411, %v691, 0.0
      %v788 = vadd.f32 %v786, %v787
      %v789 = vsel %vm411, %v694, 0.0
      %v790 = vadd.f32 %v788, %v789
      %v791 = vsel %vm411, %v696, 0.0
      %v792 = vadd.f32 %v790, %v791
      %v793 = vrot.slane %v792, 4
      %v794 = vadd.f32 %v792, %v793
      %v795 = vrot.slane %v794, 2
      %v796 = vadd.f32 %v794, %v795
      %v797 = vrot.slane %v796, 1
      %v798 = vadd.f32 %v796, %v797
      %vm799 = vcmask 253952
      %800 = vst.msk [vmem:[%s290] sm:$0x1] %vm799, %v798
      %v801 = vmul.f32 %v619, %v619
      %v802 = vmul.f32 %v621, %v621
      %v803 = vmul.f32 %v624, %v624
      %v804 = vmul.f32 %v626, %v626
      %v805 = vmul.f32 %v629, %v629
      %v806 = vmul.f32 %v631, %v631
      %v807 = vmul.f32 %v634, %v634
      %v808 = vmul.f32 %v636, %v636
      %v809 = vmul.f32 %v639, %v639
      %v810 = vmul.f32 %v641, %v641
      %v811 = vmul.f32 %v644, %v644
      %v812 = vmul.f32 %v646, %v646
      %v813 = vmul.f32 %v649, %v649
      %v814 = vmul.f32 %v651, %v651
      %v815 = vmul.f32 %v654, %v654
      %v816 = vmul.f32 %v656, %v656
      %v817 = vmul.f32 %v659, %v659
      %v818 = vmul.f32 %v661, %v661
      %v819 = vmul.f32 %v664, %v664
      %v820 = vmul.f32 %v666, %v666
      %v821 = vmul.f32 %v669, %v669
      %v822 = vmul.f32 %v671, %v671
      %v823 = vmul.f32 %v674, %v674
      %v824 = vmul.f32 %v676, %v676
      %v825 = vmul.f32 %v679, %v679
      %v826 = vmul.f32 %v681, %v681
      %v827 = vmul.f32 %v684, %v684
      %v828 = vmul.f32 %v686, %v686
      %v829 = vmul.f32 %v689, %v689
      %v830 = vmul.f32 %v691, %v691
      %v831 = vmul.f32 %v694, %v694
      %v832 = vmul.f32 %v696, %v696
      %v833 = vsel %vm411, %v801, 0.0
      %v834 = vsel %vm411, %v802, 0.0
      %v835 = vadd.f32 %v833, %v834
      %v836 = vsel %vm411, %v803, 0.0
      %v837 = vadd.f32 %v835, %v836
      %v838 = vsel %vm411, %v804, 0.0
      %v839 = vadd.f32 %v837, %v838
      %v840 = vsel %vm411, %v805, 0.0
      %v841 = vadd.f32 %v839, %v840
      %v842 = vsel %vm411, %v806, 0.0
      %v843 = vadd.f32 %v841, %v842
      %v844 = vsel %vm411, %v807, 0.0
      %v845 = vadd.f32 %v843, %v844
      %v846 = vsel %vm411, %v808, 0.0
      %v847 = vadd.f32 %v845, %v846
      %v848 = vsel %vm411, %v809, 0.0
      %v849 = vadd.f32 %v847, %v848
      %v850 = vsel %vm411, %v810, 0.0
      %v851 = vadd.f32 %v849, %v850
      %v852 = vsel %vm411, %v811, 0.0
      %v853 = vadd.f32 %v851, %v852
      %v854 = vsel %vm411, %v812, 0.0
      %v855 = vadd.f32 %v853, %v854
      %v856 = vsel %vm411, %v813, 0.0
      %v857 = vadd.f32 %v855, %v856
      %v858 = vsel %vm411, %v814, 0.0
      %v859 = vadd.f32 %v857, %v858
      %v860 = vsel %vm411, %v815, 0.0
      %v861 = vadd.f32 %v859, %v860
      %v862 = vsel %vm411, %v816, 0.0
      %v863 = vadd.f32 %v861, %v862
      %v864 = vsel %vm411, %v817, 0.0
      %v865 = vadd.f32 %v863, %v864
      %v866 = vsel %vm411, %v818, 0.0
      %v867 = vadd.f32 %v865, %v866
      %v868 = vsel %vm411, %v819, 0.0
      %v869 = vadd.f32 %v867, %v868
      %v870 = vsel %vm411, %v820, 0.0
      %v871 = vadd.f32 %v869, %v870
      %v872 = vsel %vm411, %v821, 0.0
      %v873 = vadd.f32 %v871, %v872
      %v874 = vsel %vm411, %v822, 0.0
      %v875 = vadd.f32 %v873, %v874
      %v876 = vsel %vm411, %v823, 0.0
      %v877 = vadd.f32 %v875, %v876
      %v878 = vsel %vm411, %v824, 0.0
      %v879 = vadd.f32 %v877, %v878
      %v880 = vsel %vm411, %v825, 0.0
      %v881 = vadd.f32 %v879, %v880
      %v882 = vsel %vm411, %v826, 0.0
      %v883 = vadd.f32 %v881, %v882
      %v884 = vsel %vm411, %v827, 0.0
      %v885 = vadd.f32 %v883, %v884
      %v886 = vsel %vm411, %v828, 0.0
      %v887 = vadd.f32 %v885, %v886
      %v888 = vsel %vm411, %v829, 0.0
      %v889 = vadd.f32 %v887, %v888
      %v890 = vsel %vm411, %v830, 0.0
      %v891 = vadd.f32 %v889, %v890
      %v892 = vsel %vm411, %v831, 0.0
      %v893 = vadd.f32 %v891, %v892
      %v894 = vsel %vm411, %v832, 0.0
      %v895 = vadd.f32 %v893, %v894
      %v896 = vrot.slane %v895, 4
      %v897 = vadd.f32 %v895, %v896
      %v898 = vrot.slane %v897, 2
      %v899 = vadd.f32 %v897, %v898
      %v900 = vrot.slane %v899, 1
      %v901 = vadd.f32 %v899, %v900
      %902 = vst.msk [vmem:[%s293] sm:$0x1] %vm799, %v901
      %s903 = smul.u32 32, %s18
      %p904 = scmp.lt.s32.totalorder %s903, 63
      %s905 = scalar_select %p904, %s903, 63
      %s906 = smul.addr %s905, 8
      %s907 = scalar_lea.vmem %s4, %s906
      %p908 = scmp.lt.s32.totalorder %s18, 1
      %s909 = scalar_select %p908, %s18, 1
      %s910 = scalar_lea.vmem %s5, %s909
      %p911 = scmp.lt.s32.totalorder %s18, 1
      %s912 = scalar_select %p911, %s18, 1
      %s913 = scalar_lea.vmem %s6, %s912
      // Predicated region
      $region37: #{gsconv_jilian_forward.16} parent=35 // pred_check
        %p914 = pneg %p130
      $region38: #{gsconv_jilian_forward.16} parent=35 // pred_check_branch
        %916 = sbr.rel (%p914) target = $region40
      $region39: #{gsconv_jilian_forward.16} parent=35 // pred_region
        %s917 = smul.u32 32, %s18
      $region40: #{gsconv_jilian_forward.16} parent=35 // pred_fallthru
        _
      // Predicated region
      $region41: #{gsconv_jilian_forward.16} parent=35 // pred_check
        %p918 = pneg %p156
      $region42: #{gsconv_jilian_forward.16} parent=35 // pred_check_branch
        %920 = sbr.rel (%p918) target = $region44
      $region43: #{gsconv_jilian_forward.16} parent=35 // pred_region
        _
      $region44: #{gsconv_jilian_forward.16} parent=35 // pred_fallthru
        _
      // Predicated region
      $region45: #{gsconv_jilian_forward.16} parent=35 // pred_check
        %p921 = pneg %p182
      $region46: #{gsconv_jilian_forward.16} parent=35 // pred_check_branch
        %923 = sbr.rel (%p921) target = $region48
      $region47: #{gsconv_jilian_forward.16} parent=35 // pred_region
        _
      $region48: #{gsconv_jilian_forward.16} parent=35 // pred_fallthru
        _
    $region36: #{gsconv_jilian_forward.16} parent=5 // pred_fallthru
      _
    %p924 = scmp.le.s32.totalorder 2, %s13
    // Predicated region
    $region49: #{gsconv_jilian_forward.16} parent=5 // pred_check
      %p925 = pneg %p924
    $region50: #{gsconv_jilian_forward.16} parent=5 // pred_check_branch
      %927 = sbr.rel (%p925) target = $region52
    $region51: #{gsconv_jilian_forward.16} parent=5 // pred_region
      %s928 = ssub.s32 %s13, 2
      // Predicated region
      $region53: #{gsconv_jilian_forward.16} parent=51 // pred_check
        %p929 = pneg %p136
      $region54: #{gsconv_jilian_forward.16} parent=51 // pred_check_branch
        %931 = sbr.rel (%p929) target = $region56
      $region55: #{gsconv_jilian_forward.16} parent=51 // pred_region
        %s932 = smul.u32 32, %s19
        %p933 = scmp.lt.s32.totalorder %s932, 63
        %s934 = scalar_select %p933, %s932, 63
        %s935 = smul.addr %s934, 8
        %s936 = scalar_lea.vmem %s4, %s935
      $region56: #{gsconv_jilian_forward.16} parent=51 // pred_fallthru
        _
      // Predicated region
      $region57: #{gsconv_jilian_forward.16} parent=51 // pred_check
        %p937 = pneg %p162
      $region58: #{gsconv_jilian_forward.16} parent=51 // pred_check_branch
        %939 = sbr.rel (%p937) target = $region60
      $region59: #{gsconv_jilian_forward.16} parent=51 // pred_region
        %p940 = scmp.lt.s32.totalorder %s19, 1
        %s941 = scalar_select %p940, %s19, 1
        %s942 = scalar_lea.vmem %s5, %s941
      $region60: #{gsconv_jilian_forward.16} parent=51 // pred_fallthru
        _
      // Predicated region
      $region61: #{gsconv_jilian_forward.16} parent=51 // pred_check
        %p943 = pneg %p188
      $region62: #{gsconv_jilian_forward.16} parent=51 // pred_check_branch
        %945 = sbr.rel (%p943) target = $region64
      $region63: #{gsconv_jilian_forward.16} parent=51 // pred_region
        %p946 = scmp.lt.s32.totalorder %s19, 1
        %s947 = scalar_select %p946, %s19, 1
        %s948 = scalar_lea.vmem %s6, %s947
      $region64: #{gsconv_jilian_forward.16} parent=51 // pred_fallthru
        _
    $region52: #{gsconv_jilian_forward.16} parent=5 // pred_fallthru
      _
  $region6: #{gsconv_jilian_forward.16} parent=0 // loop_footer
    %s17 = sadd.s32 1, %s13
  $region7: #{gsconv_jilian_forward.16} parent=0 // loop_footer_branch
    %12 = sbr.rel target = $region3
  $region8: #{gsconv_jilian_forward.16} parent=0 // loop_exit
    _

// kernel: gsconv_jilian_forward.14
$region0: #{gsconv_jilian_forward.14}
  #allocation0 [shape = 'u32[]', space=smem, size = 0x4, offset = 0x4, fixed_abs, tag = 'smem constant byte address 0x4 - core index']
  #allocation1 [shape = 'u32[72,128]{1,0:T(1,128)}', space=vmem, size = 0x9000, scoped, tag = 'internal scratch']
  %s0 = inlined_call_operand.vmem [shape: f32[2,20,20,32], index: 0, kind: input, shape index: {}]
  %s1 = inlined_call_operand.vmem [shape: f32[25,32], index: 1, kind: input, shape index: {}]
  %s2 = inlined_call_operand.vmem [shape: f32[2,16,16,32], index: 2, kind: output, shape index: {0}]
  %s3 = inlined_call_operand.vmem [shape: f32[2,1,32], index: 3, kind: output, shape index: {1}]
  %s4 = inlined_call_operand.vmem [shape: f32[2,1,32], index: 4, kind: output, shape index: {2}]
  %5 = xla_tuple %s2, %s3, %s4
  %s6 = sld [smem:[#allocation0]]
  $region57: #{gsconv_jilian_forward.14} parent=0
    _
  %s8 = ssub.s32 1, %s6
  %s9 = scalar_select 0, %s8, %s6
  loop: start=0, step=1, limit=4
  $region2: #{gsconv_jilian_forward.14} parent=0 // loop_pre_header
    _
  $region3: #{gsconv_jilian_forward.14} parent=0 // loop_header
    %s11 = sphi 0, %s15
    %p12 = scmp.ge.s32.totalorder %s11, 4
    %s21 = sphi 0, %s23
    %s24 = sphi 0, %s21
    %s25 = sphi 0, %s24
    %s41 = sphi 0, %s25
    %s45 = sphi 0, %s45
    %s47 = sphi 0, %s45
    %s48 = sphi 0, %s47
    %s62 = sphi 0, %s48
    %s68 = sphi 0, %s70
    %s71 = sphi 0, %s68
    %s72 = sphi 0, %s71
    %s88 = sphi 0, %s72
    %s94 = sphi 0, %s96
    %s97 = sphi 0, %s94
    %s98 = sphi 0, %s97
    %s114 = sphi 0, %s98
    %s120 = sphi 0, %s122
    %s123 = sphi 0, %s120
    %s124 = sphi 0, %s123
    %s140 = sphi 0, %s124
  $region4: #{gsconv_jilian_forward.14} parent=0 // loop_header_branch
    %14 = sbr.rel (%p12) target = $region8
  $region5: #{gsconv_jilian_forward.14} parent=0 // loop_body
    %s16 = ssub.s32 %s11, 1
    %s17 = ssub.s32 %s11, 2
    %s18 = sadd.s32 %s11, 1
    %s19 = ssub.s32 %s11, %s18
    %p20 = scmp.eq.s32.totalorder %s19, 0
    %s22 = sadd.s32 %s21, 1
    %s23 = scalar_select %p20, %s21, %s22
    %p26 = pneg %p20
    %p27 = scmp.eq.s32.totalorder %s11, 1
    %p28 = por %p26, %p27
    %p29 = scmp.ne.s32.totalorder %s21, %s24
    %p30 = scmp.eq.s32.totalorder %s11, 0
    %p31 = por %p29, %p30
    %p32 = scmp.ne.s32.totalorder %s21, %s24
    %p33 = scmp.eq.s32.totalorder %s16, 1
    %p34 = por %p32, %p33
    %p35 = scmp.ne.s32.totalorder %s24, %s25
    %p36 = scmp.eq.s32.totalorder %s16, 0
    %p37 = por %p35, %p36
    %p38 = scmp.ne.s32.totalorder %s24, %s25
    %p39 = scmp.eq.s32.totalorder %s17, 1
    %p40 = por %p38, %p39
    %p42 = scmp.ne.s32.totalorder %s25, %s41
    %p43 = scmp.eq.s32.totalorder %s17, 0
    %p44 = por %p42, %p43
    %s46 = sadd.s32 %s45, 1
    %p49 = scmp.eq.s32.totalorder %s11, 1
    %p50 = scmp.ne.s32.totalorder %s45, %s47
    %p51 = scmp.eq.s32.totalorder %s11, 0
    %p52 = por %p50, %p51
    %p53 = scmp.ne.s32.totalorder %s45, %s47
    %p54 = scmp.eq.s32.totalorder %s16, 1
    %p55 = por %p53, %p54
    %p56 = scmp.ne.s32.totalorder %s47, %s48
    %p57 = scmp.eq.s32.totalorder %s16, 0
    %p58 = por %p56, %p57
    %p59 = scmp.ne.s32.totalorder %s47, %s48
    %p60 = scmp.eq.s32.totalorder %s17, 1
    %p61 = por %p59, %p60
    %p63 = scmp.ne.s32.totalorder %s48, %s62
    %p64 = scmp.eq.s32.totalorder %s17, 0
    %p65 = por %p63, %p64
    %s66 = ssub.s32 %s11, %s18
    %p67 = scmp.eq.s32.totalorder %s66, 0
    %s69 = sadd.s32 %s68, 1
    %s70 = scalar_select %p67, %s68, %s69
    %p73 = pneg %p67
    %p74 = scmp.eq.s32.totalorder %s11, 1
    %p75 = por %p73, %p74
    %p76 = scmp.ne.s32.totalorder %s68, %s71
    %p77 = scmp.eq.s32.totalorder %s11, 0
    %p78 = por %p76, %p77
    %p79 = scmp.ne.s32.totalorder %s68, %s71
    %p80 = scmp.eq.s32.totalorder %s16, 1
    %p81 = por %p79, %p80
    %p82 = scmp.ne.s32.totalorder %s71, %s72
    %p83 = scmp.eq.s32.totalorder %s16, 0
    %p84 = por %p82, %p83
    %p85 = scmp.ne.s32.totalorder %s71, %s72
    %p86 = scmp.eq.s32.totalorder %s17, 1
    %p87 = por %p85, %p86
    %p89 = scmp.ne.s32.totalorder %s72, %s88
    %p90 = scmp.eq.s32.totalorder %s17, 0
    %p91 = por %p89, %p90
    %s92 = ssub.s32 %s11, %s18
    %p93 = scmp.eq.s32.totalorder %s92, 0
    %s95 = sadd.s32 %s94, 1
    %s96 = scalar_select %p93, %s94, %s95
    %p99 = pneg %p93
    %p100 = scmp.eq.s32.totalorder %s11, 1
    %p101 = por %p99, %p100
    %p102 = scmp.ne.s32.totalorder %s94, %s97
    %p103 = scmp.eq.s32.totalorder %s11, 0
    %p104 = por %p102, %p103
    %p105 = scmp.ne.s32.totalorder %s94, %s97
    %p106 = scmp.eq.s32.totalorder %s16, 1
    %p107 = por %p105, %p106
    %p108 = scmp.ne.s32.totalorder %s97, %s98
    %p109 = scmp.eq.s32.totalorder %s16, 0
    %p110 = por %p108, %p109
    %p111 = scmp.ne.s32.totalorder %s97, %s98
    %p112 = scmp.eq.s32.totalorder %s17, 1
    %p113 = por %p111, %p112
    %p115 = scmp.ne.s32.totalorder %s98, %s114
    %p116 = scmp.eq.s32.totalorder %s17, 0
    %p117 = por %p115, %p116
    %s118 = ssub.s32 %s11, %s18
    %p119 = scmp.eq.s32.totalorder %s118, 0
    %s121 = sadd.s32 %s120, 1
    %s122 = scalar_select %p119, %s120, %s121
    %p125 = pneg %p119
    %p126 = scmp.eq.s32.totalorder %s11, 1
    %p127 = por %p125, %p126
    %p128 = scmp.ne.s32.totalorder %s120, %s123
    %p129 = scmp.eq.s32.totalorder %s11, 0
    %p130 = por %p128, %p129
    %p131 = scmp.ne.s32.totalorder %s120, %s123
    %p132 = scmp.eq.s32.totalorder %s16, 1
    %p133 = por %p131, %p132
    %p134 = scmp.ne.s32.totalorder %s123, %s124
    %p135 = scmp.eq.s32.totalorder %s16, 0
    %p136 = por %p134, %p135
    %p137 = scmp.ne.s32.totalorder %s123, %s124
    %p138 = scmp.eq.s32.totalorder %s17, 1
    %p139 = por %p137, %p138
    %p141 = scmp.ne.s32.totalorder %s124, %s140
    %p142 = scmp.eq.s32.totalorder %s17, 0
    %p143 = por %p141, %p142
    %p144 = scmp.le.s32.totalorder 1, %s11
    %p145 = scmp.lt.s32.totalorder %s11, 3
    %p146 = pnand %p144, %p145
    %p147 = pneg %p146
    // Predicated region
    $region9: #{gsconv_jilian_forward.14} parent=5 // pred_check
      _
    $region10: #{gsconv_jilian_forward.14} parent=5 // pred_check_branch
      %149 = sbr.rel (%p146) target = $region12
    $region11: #{gsconv_jilian_forward.14} parent=5 // pred_region
      %s150 = ssub.s32 %s11, 1
      // Predicated region
      $region13: #{gsconv_jilian_forward.14} parent=11 // pred_check
        %p151 = pneg %p58
      $region14: #{gsconv_jilian_forward.14} parent=11 // pred_check_branch
        %153 = sbr.rel (%p151) target = $region16
      $region15: #{gsconv_jilian_forward.14} parent=11 // pred_region
        _
      $region16: #{gsconv_jilian_forward.14} parent=11 // pred_fallthru
        _
    $region12: #{gsconv_jilian_forward.14} parent=5 // pred_fallthru
      _
    %p154 = scmp.lt.s32.totalorder %s11, 2
    // Predicated region
    $region17: #{gsconv_jilian_forward.14} parent=5 // pred_check
      %p155 = pneg %p154
    $region18: #{gsconv_jilian_forward.14} parent=5 // pred_check_branch
      %157 = sbr.rel (%p155) target = $region20
    $region19: #{gsconv_jilian_forward.14} parent=5 // pred_region
      // Predicated region
      $region21: #{gsconv_jilian_forward.14} parent=19 // pred_check
        %p158 = pneg %p31
      $region22: #{gsconv_jilian_forward.14} parent=19 // pred_check_branch
        %160 = sbr.rel (%p158) target = $region24
      $region23: #{gsconv_jilian_forward.14} parent=19 // pred_region
        %p161 = scmp.lt.s32.totalorder %s11, 1
        %s162 = scalar_select %p161, %s11, 1
        %s163 = smul.addr %s162, 60
        %s164 = smul.addr %s163, 8
        %s165 = scalar_lea.vmem %s0, %s164
      $region24: #{gsconv_jilian_forward.14} parent=19 // pred_fallthru
        _
    $region20: #{gsconv_jilian_forward.14} parent=5 // pred_fallthru
      _
    %p166 = scmp.le.s32.totalorder 1, %s11
    %p167 = scmp.lt.s32.totalorder %s11, 3
    %p168 = pnand %p166, %p167
    %p169 = pneg %p168
    // Predicated region
    $region25: #{gsconv_jilian_forward.14} parent=5 // pred_check
      _
    $region26: #{gsconv_jilian_forward.14} parent=5 // pred_check_branch
      %171 = sbr.rel (%p168) target = $region28
    $region27: #{gsconv_jilian_forward.14} parent=5 // pred_region
      %s172 = ssub.s32 %s11, 1
      %p173 = scmp.lt.s32.totalorder %s16, 1
      %s174 = scalar_select %p173, %s16, 1
      %s175 = smul.addr %s174, 60
      %s176 = smul.addr %s175, 8
      %s177 = scalar_lea.vmem %s0, %s176
      %p178 = pneg %p37
      %p179 = pneg %p34
      %p180 = pneg %p58
      %p181 = pneg %p55
      %p182 = pneg %p84
      %p183 = pneg %p81
      %p184 = scmp.lt.s32.totalorder %s16, 1
      %s185 = scalar_select %p184, %s16, 1
      %s186 = smul.addr %s185, 32
      %s187 = smul.addr %s186, 8
      %s188 = scalar_lea.vmem %s2, %s187
      %p189 = pneg %p110
      %p190 = pneg %p107
      %p191 = scmp.lt.s32.totalorder %s16, 1
      %s192 = scalar_select %p191, %s16, 1
      %s193 = scalar_lea.vmem %s3, %s192
      %p194 = pneg %p136
      %p195 = pneg %p133
      %p196 = scmp.lt.s32.totalorder %s16, 1
      %s197 = scalar_select %p196, %s16, 1
      %s198 = scalar_lea.vmem %s4, %s197
      %p199 = scmp.lt.s32.totalorder %s16, 1
      %s200 = scalar_select %p199, %s16, 1
      %s201 = smul.addr %s200, 60
      %s202 = smul.addr %s201, 8
      %s203 = scalar_lea.vmem %s0, %s202
      %p204 = scmp.lt.s32.totalorder %s16, 1
      %s205 = scalar_select %p204, %s16, 1
      %s206 = smul.addr %s205, 32
      %s207 = smul.addr %s206, 8
      %s208 = scalar_lea.vmem %s2, %s207
      %p209 = scmp.lt.s32.totalorder %s16, 1
      %s210 = scalar_select %p209, %s16, 1
      %s211 = scalar_lea.vmem %s3, %s210
      %p212 = scmp.lt.s32.totalorder %s16, 1
      %s213 = scalar_select %p212, %s16, 1
      %s214 = scalar_lea.vmem %s4, %s213
      %v215 = vld [vmem:[%s1] sm:$0xff]
      %v216 = vld [vmem:[%s1 + $0x8] sm:$0xff]
      %v217 = vld [vmem:[%s1 + $0x10] sm:$0xff]
      %v218 = vld [vmem:[%s1 + $0x18] sm:$0x1]
      %v219 = vld [vmem:[%s203] sm:$0xff]
      %v220 = vld [vmem:[%s203 + $0x8] sm:$0xff]
      %v221 = vld [vmem:[%s203 + $0x18] sm:$0xff]
      %v222 = vld [vmem:[%s203 + $0x20] sm:$0xff]
      %v223 = vld [vmem:[%s203 + $0x30] sm:$0xff]
      %v224 = vld [vmem:[%s203 + $0x38] sm:$0xff]
      %v225 = vld [vmem:[%s203 + $0x48] sm:$0xff]
      %v226 = vld [vmem:[%s203 + $0x50] sm:$0xff]
      %v227 = vld [vmem:[%s203 + $0x60] sm:$0xff]
      %v228 = vld [vmem:[%s203 + $0x68] sm:$0xff]
      %v229 = vld [vmem:[%s203 + $0x78] sm:$0xff]
      %v230 = vld [vmem:[%s203 + $0x80] sm:$0xff]
      %v231 = vld [vmem:[%s203 + $0x90] sm:$0xff]
      %v232 = vld [vmem:[%s203 + $0x98] sm:$0xff]
      %v233 = vld [vmem:[%s203 + $0xa8] sm:$0xff]
      %v234 = vld [vmem:[%s203 + $0xb0] sm:$0xff]
      %v235 = vld [vmem:[%s203 + $0xc0] sm:$0xff]
      %v236 = vld [vmem:[%s203 + $0xc8] sm:$0xff]
      %v237 = vld [vmem:[%s203 + $0xd8] sm:$0xff]
      %v238 = vld [vmem:[%s203 + $0xe0] sm:$0xff]
      %v239 = vld [vmem:[%s203 + $0xf0] sm:$0xff]
      %v240 = vld [vmem:[%s203 + $0xf8] sm:$0xff]
      %v241 = vld [vmem:[%s203 + $0x108] sm:$0xff]
      %v242 = vld [vmem:[%s203 + $0x110] sm:$0xff]
      %v243 = vld [vmem:[%s203 + $0x120] sm:$0xff]
      %v244 = vld [vmem:[%s203 + $0x128] sm:$0xff]
      %v245 = vld [vmem:[%s203 + $0x138] sm:$0xff]
      %v246 = vld [vmem:[%s203 + $0x140] sm:$0xff]
      %v247 = vld [vmem:[%s203 + $0x150] sm:$0xff]
      %v248 = vld [vmem:[%s203 + $0x158] sm:$0xff]
      %v249 = vld [vmem:[%s203 + $0x168] sm:$0xff]
      %v250 = vld [vmem:[%s203 + $0x170] sm:$0xff]
      %v251 = vperm.slane %v215, 0
      %v252 = vmul.f32 %v219, %v251
      %v253 = vmul.f32 %v220, %v251
      %v254 = vmul.f32 %v221, %v251
      %v255 = vmul.f32 %v222, %v251
      %v256 = vmul.f32 %v223, %v251
      %v257 = vmul.f32 %v224, %v251
      %v258 = vmul.f32 %v225, %v251
      %v259 = vmul.f32 %v226, %v251
      %v260 = vmul.f32 %v227, %v251
      %v261 = vmul.f32 %v228, %v251
      %v262 = vmul.f32 %v229, %v251
      %v263 = vmul.f32 %v230, %v251
      %v264 = vmul.f32 %v231, %v251
      %v265 = vmul.f32 %v232, %v251
      %v266 = vmul.f32 %v233, %v251
      %v267 = vmul.f32 %v234, %v251
      %v268 = vmul.f32 %v235, %v251
      %v269 = vmul.f32 %v236, %v251
      %v270 = vmul.f32 %v237, %v251
      %v271 = vmul.f32 %v238, %v251
      %v272 = vmul.f32 %v239, %v251
      %v273 = vmul.f32 %v240, %v251
      %v274 = vmul.f32 %v241, %v251
      %v275 = vmul.f32 %v242, %v251
      %v276 = vmul.f32 %v243, %v251
      %v277 = vmul.f32 %v244, %v251
      %v278 = vmul.f32 %v245, %v251
      %v279 = vmul.f32 %v246, %v251
      %v280 = vmul.f32 %v247, %v251
      %v281 = vmul.f32 %v248, %v251
      %v282 = vmul.f32 %v249, %v251
      %v283 = vmul.f32 %v250, %v251
      %v284 = vld [vmem:[%s203 + $0x1] sm:$0xff]
      %v285 = vld [vmem:[%s203 + $0x9] sm:$0xff]
      %v286 = vld [vmem:[%s203 + $0x19] sm:$0xff]
      %v287 = vld [vmem:[%s203 + $0x21] sm:$0xff]
      %v288 = vld [vmem:[%s203 + $0x31] sm:$0xff]
      %v289 = vld [vmem:[%s203 + $0x39] sm:$0xff]
      %v290 = vld [vmem:[%s203 + $0x49] sm:$0xff]
      %v291 = vld [vmem:[%s203 + $0x51] sm:$0xff]
      %v292 = vld [vmem:[%s203 + $0x61] sm:$0xff]
      %v293 = vld [vmem:[%s203 + $0x69] sm:$0xff]
      %v294 = vld [vmem:[%s203 + $0x79] sm:$0xff]
      %v295 = vld [vmem:[%s203 + $0x81] sm:$0xff]
      %v296 = vld [vmem:[%s203 + $0x91] sm:$0xff]
      %v297 = vld [vmem:[%s203 + $0x99] sm:$0xff]
      %v298 = vld [vmem:[%s203 + $0xa9] sm:$0xff]
      %v299 = vld [vmem:[%s203 + $0xb1] sm:$0xff]
      %v300 = vld [vmem:[%s203 + $0xc1] sm:$0xff]
      %v301 = vld [vmem:[%s203 + $0xc9] sm:$0xff]
      %v302 = vld [vmem:[%s203 + $0xd9] sm:$0xff]
      %v303 = vld [vmem:[%s203 + $0xe1] sm:$0xff]
      %v304 = vld [vmem:[%s203 + $0xf1] sm:$0xff]
      %v305 = vld [vmem:[%s203 + $0xf9] sm:$0xff]
      %v306 = vld [vmem:[%s203 + $0x109] sm:$0xff]
      %v307 = vld [vmem:[%s203 + $0x111] sm:$0xff]
      %v308 = vld [vmem:[%s203 + $0x121] sm:$0xff]
      %v309 = vld [vmem:[%s203 + $0x129] sm:$0xff]
      %v310 = vld [vmem:[%s203 + $0x139] sm:$0xff]
      %v311 = vld [vmem:[%s203 + $0x141] sm:$0xff]
      %v312 = vld [vmem:[%s203 + $0x151] sm:$0xff]
      %v313 = vld [vmem:[%s203 + $0x159] sm:$0xff]
      %v314 = vld [vmem:[%s203 + $0x169] sm:$0xff]
      %v315 = vld [vmem:[%s203 + $0x171] sm:$0xff]
      %v316 = vperm.slane %v215, 1
      %v317 = vmul.f32 %v284, %v316
      %v318 = vmul.f32 %v285, %v316
      %v319 = vmul.f32 %v286, %v316
      %v320 = vmul.f32 %v287, %v316
      %v321 = vmul.f32 %v288, %v316
      %v322 = vmul.f32 %v289, %v316
      %v323 = vmul.f32 %v290, %v316
      %v324 = vmul.f32 %v291, %v316
      %v325 = vmul.f32 %v292, %v316
      %v326 = vmul.f32 %v293, %v316
      %v327 = vmul.f32 %v294, %v316
      %v328 = vmul.f32 %v295, %v316
      %v329 = vmul.f32 %v296, %v316
      %v330 = vmul.f32 %v297, %v316
      %v331 = vmul.f32 %v298, %v316
      %v332 = vmul.f32 %v299, %v316
      %v333 = vmul.f32 %v300, %v316
      %v334 = vmul.f32 %v301, %v316
      %v335 = vmul.f32 %v302, %v316
      %v336 = vmul.f32 %v303, %v316
      %v337 = vmul.f32 %v304, %v316
      %v338 = vmul.f32 %v305, %v316
      %v339 = vmul.f32 %v306, %v316
      %v340 = vmul.f32 %v307, %v316
      %v341 = vmul.f32 %v308, %v316
      %v342 = vmul.f32 %v309, %v316
      %v343 = vmul.f32 %v310, %v316
      %v344 = vmul.f32 %v311, %v316
      %v345 = vmul.f32 %v312, %v316
      %v346 = vmul.f32 %v313, %v316
      %v347 = vmul.f32 %v314, %v316
      %v348 = vmul.f32 %v315, %v316
      %v349 = vadd.f32 %v252, %v317
      %v350 = vadd.f32 %v253, %v318
      %v351 = vadd.f32 %v254, %v319
      %v352 = vadd.f32 %v255, %v320
      %v353 = vadd.f32 %v256, %v321
      %v354 = vadd.f32 %v257, %v322
      %v355 = vadd.f32 %v258, %v323
      %v356 = vadd.f32 %v259, %v324
      %v357 = vadd.f32 %v260, %v325
      %v358 = vadd.f32 %v261, %v326
      %v359 = vadd.f32 %v262, %v327
      %v360 = vadd.f32 %v263, %v328
      %v361 = vadd.f32 %v264, %v329
      %v362 = vadd.f32 %v265, %v330
      %v363 = vadd.f32 %v266, %v331
      %v364 = vadd.f32 %v267, %v332
      %v365 = vadd.f32 %v268, %v333
      %v366 = vadd.f32 %v269, %v334
      %v367 = vadd.f32 %v270, %v335
      %v368 = vadd.f32 %v271, %v336
      %v369 = vadd.f32 %v272, %v337
      %v370 = vadd.f32 %v273, %v338
      %v371 = vadd.f32 %v274, %v339
      %v372 = vadd.f32 %v275, %v340
      %v373 = vadd.f32 %v276, %v341
      %v374 = vadd.f32 %v277, %v342
      %v375 = vadd.f32 %v278, %v343
      %v376 = vadd.f32 %v279, %v344
      %v377 = vadd.f32 %v280, %v345
      %v378 = vadd.f32 %v281, %v346
      %v379 = vadd.f32 %v282, %v347
      %v380 = vadd.f32 %v283, %v348
      %v381 = vld [vmem:[%s203 + $0x2] sm:$0xff]
      %v382 = vld [vmem:[%s203 + $0xa] sm:$0xff]
      %v383 = vld [vmem:[%s203 + $0x1a] sm:$0xff]
      %v384 = vld [vmem:[%s203 + $0x22] sm:$0xff]
      %v385 = vld [vmem:[%s203 + $0x32] sm:$0xff]
      %v386 = vld [vmem:[%s203 + $0x3a] sm:$0xff]
      %v387 = vld [vmem:[%s203 + $0x4a] sm:$0xff]
      %v388 = vld [vmem:[%s203 + $0x52] sm:$0xff]
      %v389 = vld [vmem:[%s203 + $0x62] sm:$0xff]
      %v390 = vld [vmem:[%s203 + $0x6a] sm:$0xff]
      %v391 = vld [vmem:[%s203 + $0x7a] sm:$0xff]
      %v392 = vld [vmem:[%s203 + $0x82] sm:$0xff]
      %v393 = vld [vmem:[%s203 + $0x92] sm:$0xff]
      %v394 = vld [vmem:[%s203 + $0x9a] sm:$0xff]
      %v395 = vld [vmem:[%s203 + $0xaa] sm:$0xff]
      %v396 = vld [vmem:[%s203 + $0xb2] sm:$0xff]
      %v397 = vld [vmem:[%s203 + $0xc2] sm:$0xff]
      %v398 = vld [vmem:[%s203 + $0xca] sm:$0xff]
      %v399 = vld [vmem:[%s203 + $0xda] sm:$0xff]
      %v400 = vld [vmem:[%s203 + $0xe2] sm:$0xff]
      %v401 = vld [vmem:[%s203 + $0xf2] sm:$0xff]
      %v402 = vld [vmem:[%s203 + $0xfa] sm:$0xff]
      %v403 = vld [vmem:[%s203 + $0x10a] sm:$0xff]
      %v404 = vld [vmem:[%s203 + $0x112] sm:$0xff]
      %v405 = vld [vmem:[%s203 + $0x122] sm:$0xff]
      %v406 = vld [vmem:[%s203 + $0x12a] sm:$0xff]
      %v407 = vld [vmem:[%s203 + $0x13a] sm:$0xff]
      %v408 = vld [vmem:[%s203 + $0x142] sm:$0xff]
      %v409 = vld [vmem:[%s203 + $0x152] sm:$0xff]
      %v410 = vld [vmem:[%s203 + $0x15a] sm:$0xff]
      %v411 = vld [vmem:[%s203 + $0x16a] sm:$0xff]
      %v412 = vld [vmem:[%s203 + $0x172] sm:$0xff]
      %v413 = vperm.slane %v215, 2
      %v414 = vmul.f32 %v381, %v413
      %v415 = vmul.f32 %v382, %v413
      %v416 = vmul.f32 %v383, %v413
      %v417 = vmul.f32 %v384, %v413
      %v418 = vmul.f32 %v385, %v413
      %v419 = vmul.f32 %v386, %v413
      %v420 = vmul.f32 %v387, %v413
      %v421 = vmul.f32 %v388, %v413
      %v422 = vmul.f32 %v389, %v413
      %v423 = vmul.f32 %v390, %v413
      %v424 = vmul.f32 %v391, %v413
      %v425 = vmul.f32 %v392, %v413
      %v426 = vmul.f32 %v393, %v413
      %v427 = vmul.f32 %v394, %v413
      %v428 = vmul.f32 %v395, %v413
      %v429 = vmul.f32 %v396, %v413
      %v430 = vmul.f32 %v397, %v413
      %v431 = vmul.f32 %v398, %v413
      %v432 = vmul.f32 %v399, %v413
      %v433 = vmul.f32 %v400, %v413
      %v434 = vmul.f32 %v401, %v413
      %v435 = vmul.f32 %v402, %v413
      %v436 = vmul.f32 %v403, %v413
      %v437 = vmul.f32 %v404, %v413
      %v438 = vmul.f32 %v405, %v413
      %v439 = vmul.f32 %v406, %v413
      %v440 = vmul.f32 %v407, %v413
      %v441 = vmul.f32 %v408, %v413
      %v442 = vmul.f32 %v409, %v413
      %v443 = vmul.f32 %v410, %v413
      %v444 = vmul.f32 %v411, %v413
      %v445 = vmul.f32 %v412, %v413
      %v446 = vadd.f32 %v349, %v414
      %v447 = vadd.f32 %v350, %v415
      %v448 = vadd.f32 %v351, %v416
      %v449 = vadd.f32 %v352, %v417
      %v450 = vadd.f32 %v353, %v418
      %v451 = vadd.f32 %v354, %v419
      %v452 = vadd.f32 %v355, %v420
      %v453 = vadd.f32 %v356, %v421
      %v454 = vadd.f32 %v357, %v422
      %v455 = vadd.f32 %v358, %v423
      %v456 = vadd.f32 %v359, %v424
      %v457 = vadd.f32 %v360, %v425
      %v458 = vadd.f32 %v361, %v426
      %v459 = vadd.f32 %v362, %v427
      %v460 = vadd.f32 %v363, %v428
      %v461 = vadd.f32 %v364, %v429
      %v462 = vadd.f32 %v365, %v430
      %v463 = vadd.f32 %v366, %v431
      %v464 = vadd.f32 %v367, %v432
      %v465 = vadd.f32 %v368, %v433
      %v466 = vadd.f32 %v369, %v434
      %v467 = vadd.f32 %v370, %v435
      %v468 = vadd.f32 %v371, %v436
      %v469 = vadd.f32 %v372, %v437
      %v470 = vadd.f32 %v373, %v438
      %v471 = vadd.f32 %v374, %v439
      %v472 = vadd.f32 %v375, %v440
      %v473 = vadd.f32 %v376, %v441
      %v474 = vadd.f32 %v377, %v442
      %v475 = vadd.f32 %v378, %v443
      %v476 = vadd.f32 %v379, %v444
      %v477 = vadd.f32 %v380, %v445
      %v478 = vld [vmem:[%s203 + $0x3] sm:$0xff]
      %v479 = vld [vmem:[%s203 + $0xb] sm:$0xff]
      %v480 = vld [vmem:[%s203 + $0x1b] sm:$0xff]
      %v481 = vld [vmem:[%s203 + $0x23] sm:$0xff]
      %v482 = vld [vmem:[%s203 + $0x33] sm:$0xff]
      %v483 = vld [vmem:[%s203 + $0x3b] sm:$0xff]
      %v484 = vld [vmem:[%s203 + $0x4b] sm:$0xff]
      %v485 = vld [vmem:[%s203 + $0x53] sm:$0xff]
      %v486 = vld [vmem:[%s203 + $0x63] sm:$0xff]
      %v487 = vld [vmem:[%s203 + $0x6b] sm:$0xff]
      %v488 = vld [vmem:[%s203 + $0x7b] sm:$0xff]
      %v489 = vld [vmem:[%s203 + $0x83] sm:$0xff]
      %v490 = vld [vmem:[%s203 + $0x93] sm:$0xff]
      %v491 = vld [vmem:[%s203 + $0x9b] sm:$0xff]
      %v492 = vld [vmem:[%s203 + $0xab] sm:$0xff]
      %v493 = vld [vmem:[%s203 + $0xb3] sm:$0xff]
      %v494 = vld [vmem:[%s203 + $0xc3] sm:$0xff]
      %v495 = vld [vmem:[%s203 + $0xcb] sm:$0xff]
      %v496 = vld [vmem:[%s203 + $0xdb] sm:$0xff]
      %v497 = vld [vmem:[%s203 + $0xe3] sm:$0xff]
      %v498 = vld [vmem:[%s203 + $0xf3] sm:$0xff]
      %v499 = vld [vmem:[%s203 + $0xfb] sm:$0xff]
      %v500 = vld [vmem:[%s203 + $0x10b] sm:$0xff]
      %v501 = vld [vmem:[%s203 + $0x113] sm:$0xff]
      %v502 = vld [vmem:[%s203 + $0x123] sm:$0xff]
      %v503 = vld [vmem:[%s203 + $0x12b] sm:$0xff]
      %v504 = vld [vmem:[%s203 + $0x13b] sm:$0xff]
      %v505 = vld [vmem:[%s203 + $0x143] sm:$0xff]
      %v506 = vld [vmem:[%s203 + $0x153] sm:$0xff]
      %v507 = vld [vmem:[%s203 + $0x15b] sm:$0xff]
      %v508 = vld [vmem:[%s203 + $0x16b] sm:$0xff]
      %v509 = vld [vmem:[%s203 + $0x173] sm:$0xff]
      %v510 = vperm.slane %v215, 3
      %v511 = vmul.f32 %v478, %v510
      %v512 = vmul.f32 %v479, %v510
      %v513 = vmul.f32 %v480, %v510
      %v514 = vmul.f32 %v481, %v510
      %v515 = vmul.f32 %v482, %v510
      %v516 = vmul.f32 %v483, %v510
      %v517 = vmul.f32 %v484, %v510
      %v518 = vmul.f32 %v485, %v510
      %v519 = vmul.f32 %v486, %v510
      %v520 = vmul.f32 %v487, %v510
      %v521 = vmul.f32 %v488, %v510
      %v522 = vmul.f32 %v489, %v510
      %v523 = vmul.f32 %v490, %v510
      %v524 = vmul.f32 %v491, %v510
      %v525 = vmul.f32 %v492, %v510
      %v526 = vmul.f32 %v493, %v510
      %v527 = vmul.f32 %v494, %v510
      %v528 = vmul.f32 %v495, %v510
      %v529 = vmul.f32 %v496, %v510
      %v530 = vmul.f32 %v497, %v510
      %v531 = vmul.f32 %v498, %v510
      %v532 = vmul.f32 %v499, %v510
      %v533 = vmul.f32 %v500, %v510
      %v534 = vmul.f32 %v501, %v510
      %v535 = vmul.f32 %v502, %v510
      %v536 = vmul.f32 %v503, %v510
      %v537 = vmul.f32 %v504, %v510
      %v538 = vmul.f32 %v505, %v510
      %v539 = vmul.f32 %v506, %v510
      %v540 = vmul.f32 %v507, %v510
      %v541 = vmul.f32 %v508, %v510
      %v542 = vmul.f32 %v509, %v510
      %v543 = vadd.f32 %v446, %v511
      %v544 = vadd.f32 %v447, %v512
      %v545 = vadd.f32 %v448, %v513
      %v546 = vadd.f32 %v449, %v514
      %v547 = vadd.f32 %v450, %v515
      %v548 = vadd.f32 %v451, %v516
      %v549 = vadd.f32 %v452, %v517
      %v550 = vadd.f32 %v453, %v518
      %v551 = vadd.f32 %v454, %v519
      %v552 = vadd.f32 %v455, %v520
      %v553 = vadd.f32 %v456, %v521
      %v554 = vadd.f32 %v457, %v522
      %v555 = vadd.f32 %v458, %v523
      %v556 = vadd.f32 %v459, %v524
      %v557 = vadd.f32 %v460, %v525
      %v558 = vadd.f32 %v461, %v526
      %v559 = vadd.f32 %v462, %v527
      %v560 = vadd.f32 %v463, %v528
      %v561 = vadd.f32 %v464, %v529
      %v562 = vadd.f32 %v465, %v530
      %v563 = vadd.f32 %v466, %v531
      %v564 = vadd.f32 %v467, %v532
      %v565 = vadd.f32 %v468, %v533
      %v566 = vadd.f32 %v469, %v534
      %v567 = vadd.f32 %v470, %v535
      %v568 = vadd.f32 %v471, %v536
      %v569 = vadd.f32 %v472, %v537
      %v570 = vadd.f32 %v473, %v538
      %v571 = vadd.f32 %v474, %v539
      %v572 = vadd.f32 %v475, %v540
      %v573 = vadd.f32 %v476, %v541
      %v574 = vadd.f32 %v477, %v542
      %v575 = vld [vmem:[%s203 + $0x4] sm:$0xff]
      %v576 = vld [vmem:[%s203 + $0xc] sm:$0xff]
      %v577 = vld [vmem:[%s203 + $0x1c] sm:$0xff]
      %v578 = vld [vmem:[%s203 + $0x24] sm:$0xff]
      %v579 = vld [vmem:[%s203 + $0x34] sm:$0xff]
      %v580 = vld [vmem:[%s203 + $0x3c] sm:$0xff]
      %v581 = vld [vmem:[%s203 + $0x4c] sm:$0xff]
      %v582 = vld [vmem:[%s203 + $0x54] sm:$0xff]
      %v583 = vld [vmem:[%s203 + $0x64] sm:$0xff]
      %v584 = vld [vmem:[%s203 + $0x6c] sm:$0xff]
      %v585 = vld [vmem:[%s203 + $0x7c] sm:$0xff]
      %v586 = vld [vmem:[%s203 + $0x84] sm:$0xff]
      %v587 = vld [vmem:[%s203 + $0x94] sm:$0xff]
      %v588 = vld [vmem:[%s203 + $0x9c] sm:$0xff]
      %v589 = vld [vmem:[%s203 + $0xac] sm:$0xff]
      %v590 = vld [vmem:[%s203 + $0xb4] sm:$0xff]
      %v591 = vld [vmem:[%s203 + $0xc4] sm:$0xff]
      %v592 = vld [vmem:[%s203 + $0xcc] sm:$0xff]
      %v593 = vld [vmem:[%s203 + $0xdc] sm:$0xff]
      %v594 = vld [vmem:[%s203 + $0xe4] sm:$0xff]
      %v595 = vld [vmem:[%s203 + $0xf4] sm:$0xff]
      %v596 = vld [vmem:[%s203 + $0xfc] sm:$0xff]
      %v597 = vld [vmem:[%s203 + $0x10c] sm:$0xff]
      %v598 = vld [vmem:[%s203 + $0x114] sm:$0xff]
      %v599 = vld [vmem:[%s203 + $0x124] sm:$0xff]
      %v600 = vld [vmem:[%s203 + $0x12c] sm:$0xff]
      %v601 = vld [vmem:[%s203 + $0x13c] sm:$0xff]
      %v602 = vld [vmem:[%s203 + $0x144] sm:$0xff]
      %v603 = vld [vmem:[%s203 + $0x154] sm:$0xff]
      %v604 = vld [vmem:[%s203 + $0x15c] sm:$0xff]
      %v605 = vld [vmem:[%s203 + $0x16c] sm:$0xff]
      %v606 = vld [vmem:[%s203 + $0x174] sm:$0xff]
      %v607 = vperm.slane %v215, 4
      %v608 = vmul.f32 %v575, %v607
      %v609 = vmul.f32 %v576, %v607
      %v610 = vmul.f32 %v577, %v607
      %v611 = vmul.f32 %v578, %v607
      %v612 = vmul.f32 %v579, %v607
      %v613 = vmul.f32 %v580, %v607
      %v614 = vmul.f32 %v581, %v607
      %v615 = vmul.f32 %v582, %v607
      %v616 = vmul.f32 %v583, %v607
      %v617 = vmul.f32 %v584, %v607
      %v618 = vmul.f32 %v585, %v607
      %v619 = vmul.f32 %v586, %v607
      %v620 = vmul.f32 %v587, %v607
      %v621 = vmul.f32 %v588, %v607
      %v622 = vmul.f32 %v589, %v607
      %v623 = vmul.f32 %v590, %v607
      %v624 = vmul.f32 %v591, %v607
      %v625 = vmul.f32 %v592, %v607
      %v626 = vmul.f32 %v593, %v607
      %v627 = vmul.f32 %v594, %v607
      %v628 = vmul.f32 %v595, %v607
      %v629 = vmul.f32 %v596, %v607
      %v630 = vmul.f32 %v597, %v607
      %v631 = vmul.f32 %v598, %v607
      %v632 = vmul.f32 %v599, %v607
      %v633 = vmul.f32 %v600, %v607
      %v634 = vmul.f32 %v601, %v607
      %v635 = vmul.f32 %v602, %v607
      %v636 = vmul.f32 %v603, %v607
      %v637 = vmul.f32 %v604, %v607
      %v638 = vmul.f32 %v605, %v607
      %v639 = vmul.f32 %v606, %v607
      %v640 = vadd.f32 %v543, %v608
      %v641 = vadd.f32 %v544, %v609
      %v642 = vadd.f32 %v545, %v610
      %v643 = vadd.f32 %v546, %v611
      %v644 = vadd.f32 %v547, %v612
      %v645 = vadd.f32 %v548, %v613
      %v646 = vadd.f32 %v549, %v614
      %v647 = vadd.f32 %v550, %v615
      %v648 = vadd.f32 %v551, %v616
      %v649 = vadd.f32 %v552, %v617
      %v650 = vadd.f32 %v553, %v618
      %v651 = vadd.f32 %v554, %v619
      %v652 = vadd.f32 %v555, %v620
      %v653 = vadd.f32 %v556, %v621
      %v654 = vadd.f32 %v557, %v622
      %v655 = vadd.f32 %v558, %v623
      %v656 = vadd.f32 %v559, %v624
      %v657 = vadd.f32 %v560, %v625
      %v658 = vadd.f32 %v561, %v626
      %v659 = vadd.f32 %v562, %v627
      %v660 = vadd.f32 %v563, %v628
      %v661 = vadd.f32 %v564, %v629
      %v662 = vadd.f32 %v565, %v630
      %v663 = vadd.f32 %v566, %v631
      %v664 = vadd.f32 %v567, %v632
      %v665 = vadd.f32 %v568, %v633
      %v666 = vadd.f32 %v569, %v634
      %v667 = vadd.f32 %v570, %v635
      %v668 = vadd.f32 %v571, %v636
      %v669 = vadd.f32 %v572, %v637
      %v670 = vadd.f32 %v573, %v638
      %v671 = vadd.f32 %v574, %v639
      %s672 = scalar_lea.vmem %s203, 24
      %v673 = vld [vmem:[%s672] sm:$0xff]
      %v674 = vld [vmem:[%s672 + $0x8] sm:$0xff]
      %v675 = vld [vmem:[%s672 + $0x18] sm:$0xff]
      %v676 = vld [vmem:[%s672 + $0x20] sm:$0xff]
      %v677 = vld [vmem:[%s672 + $0x30] sm:$0xff]
      %v678 = vld [vmem:[%s672 + $0x38] sm:$0xff]
      %v679 = vld [vmem:[%s672 + $0x48] sm:$0xff]
      %v680 = vld [vmem:[%s672 + $0x50] sm:$0xff]
      %v681 = vld [vmem:[%s672 + $0x60] sm:$0xff]
      %v682 = vld [vmem:[%s672 + $0x68] sm:$0xff]
      %v683 = vld [vmem:[%s672 + $0x78] sm:$0xff]
      %v684 = vld [vmem:[%s672 + $0x80] sm:$0xff]
      %v685 = vld [vmem:[%s672 + $0x90] sm:$0xff]
      %v686 = vld [vmem:[%s672 + $0x98] sm:$0xff]
      %v687 = vld [vmem:[%s672 + $0xa8] sm:$0xff]
      %v688 = vld [vmem:[%s672 + $0xb0] sm:$0xff]
      %v689 = vld [vmem:[%s672 + $0xc0] sm:$0xff]
      %v690 = vld [vmem:[%s672 + $0xc8] sm:$0xff]
      %v691 = vld [vmem:[%s672 + $0xd8] sm:$0xff]
      %v692 = vld [vmem:[%s672 + $0xe0] sm:$0xff]
      %v693 = vld [vmem:[%s672 + $0xf0] sm:$0xff]
      %v694 = vld [vmem:[%s672 + $0xf8] sm:$0xff]
      %v695 = vld [vmem:[%s672 + $0x108] sm:$0xff]
      %v696 = vld [vmem:[%s672 + $0x110] sm:$0xff]
      %v697 = vld [vmem:[%s672 + $0x120] sm:$0xff]
      %v698 = vld [vmem:[%s672 + $0x128] sm:$0xff]
      %v699 = vld [vmem:[%s672 + $0x138] sm:$0xff]
      %v700 = vld [vmem:[%s672 + $0x140] sm:$0xff]
      %v701 = vld [vmem:[%s672 + $0x150] sm:$0xff]
      %v702 = vld [vmem:[%s672 + $0x158] sm:$0xff]
      %v703 = vld [vmem:[%s672 + $0x168] sm:$0xff]
      %v704 = vld [vmem:[%s672 + $0x170] sm:$0xff]
      %v705 = vperm.slane %v215, 5
      %v706 = vmul.f32 %v673, %v705
      %v707 = vmul.f32 %v674, %v705
      %v708 = vmul.f32 %v675, %v705
      %v709 = vmul.f32 %v676, %v705
      %v710 = vmul.f32 %v677, %v705
      %v711 = vmul.f32 %v678, %v705
      %v712 = vmul.f32 %v679, %v705
      %v713 = vmul.f32 %v680, %v705
      %v714 = vmul.f32 %v681, %v705
      %v715 = vmul.f32 %v682, %v705
      %v716 = vmul.f32 %v683, %v705
      %v717 = vmul.f32 %v684, %v705
      %v718 = vmul.f32 %v685, %v705
      %v719 = vmul.f32 %v686, %v705
      %v720 = vmul.f32 %v687, %v705
      %v721 = vmul.f32 %v688, %v705
      %v722 = vmul.f32 %v689, %v705
      %v723 = vmul.f32 %v690, %v705
      %v724 = vmul.f32 %v691, %v705
      %v725 = vmul.f32 %v692, %v705
      %v726 = vmul.f32 %v693, %v705
      %v727 = vmul.f32 %v694, %v705
      %v728 = vmul.f32 %v695, %v705
      %v729 = vmul.f32 %v696, %v705
      %v730 = vmul.f32 %v697, %v705
      %v731 = vmul.f32 %v698, %v705
      %v732 = vmul.f32 %v699, %v705
      %v733 = vmul.f32 %v700, %v705
      %v734 = vmul.f32 %v701, %v705
      %v735 = vmul.f32 %v702, %v705
      %v736 = vmul.f32 %v703, %v705
      %v737 = vmul.f32 %v704, %v705
      %v738 = vadd.f32 %v640, %v706
      %v739 = vadd.f32 %v641, %v707
      %v740 = vadd.f32 %v642, %v708
      %v741 = vadd.f32 %v643, %v709
      %v742 = vadd.f32 %v644, %v710
      %v743 = vadd.f32 %v645, %v711
      %v744 = vadd.f32 %v646, %v712
      %v745 = vadd.f32 %v647, %v713
      %v746 = vadd.f32 %v648, %v714
      %v747 = vadd.f32 %v649, %v715
      %v748 = vadd.f32 %v650, %v716
      %v749 = vadd.f32 %v651, %v717
      %v750 = vadd.f32 %v652, %v718
      %v751 = vadd.f32 %v653, %v719
      %v752 = vadd.f32 %v654, %v720
      %v753 = vadd.f32 %v655, %v721
      %v754 = vadd.f32 %v656, %v722
      %v755 = vadd.f32 %v657, %v723
      %v756 = vadd.f32 %v658, %v724
      %v757 = vadd.f32 %v659, %v725
      %v758 = vadd.f32 %v660, %v726
      %v759 = vadd.f32 %v661, %v727
      %v760 = vadd.f32 %v662, %v728
      %v761 = vadd.f32 %v663, %v729
      %v762 = vadd.f32 %v664, %v730
      %v763 = vadd.f32 %v665, %v731
      %v764 = vadd.f32 %v666, %v732
      %v765 = vadd.f32 %v667, %v733
      %v766 = vadd.f32 %v668, %v734
      %v767 = vadd.f32 %v669, %v735
      %v768 = vadd.f32 %v670, %v736
      %v769 = vadd.f32 %v671, %v737
      %v770 = vld [vmem:[%s672 + $0x1] sm:$0xff]
      %v771 = vld [vmem:[%s672 + $0x9] sm:$0xff]
      %v772 = vld [vmem:[%s672 + $0x19] sm:$0xff]
      %v773 = vld [vmem:[%s672 + $0x21] sm:$0xff]
      %v774 = vld [vmem:[%s672 + $0x31] sm:$0xff]
      %v775 = vld [vmem:[%s672 + $0x39] sm:$0xff]
      %v776 = vld [vmem:[%s672 + $0x49] sm:$0xff]
      %v777 = vld [vmem:[%s672 + $0x51] sm:$0xff]
      %v778 = vld [vmem:[%s672 + $0x61] sm:$0xff]
      %v779 = vld [vmem:[%s672 + $0x69] sm:$0xff]
      %v780 = vld [vmem:[%s672 + $0x79] sm:$0xff]
      %v781 = vld [vmem:[%s672 + $0x81] sm:$0xff]
      %v782 = vld [vmem:[%s672 + $0x91] sm:$0xff]
      %v783 = vld [vmem:[%s672 + $0x99] sm:$0xff]
      %v784 = vld [vmem:[%s672 + $0xa9] sm:$0xff]
      %v785 = vld [vmem:[%s672 + $0xb1] sm:$0xff]
      %v786 = vld [vmem:[%s672 + $0xc1] sm:$0xff]
      %v787 = vld [vmem:[%s672 + $0xc9] sm:$0xff]
      %v788 = vld [vmem:[%s672 + $0xd9] sm:$0xff]
      %v789 = vld [vmem:[%s672 + $0xe1] sm:$0xff]
      %v790 = vld [vmem:[%s672 + $0xf1] sm:$0xff]
      %v791 = vld [vmem:[%s672 + $0xf9] sm:$0xff]
      %v792 = vld [vmem:[%s672 + $0x109] sm:$0xff]
      %v793 = vld [vmem:[%s672 + $0x111] sm:$0xff]
      %v794 = vld [vmem:[%s672 + $0x121] sm:$0xff]
      %v795 = vld [vmem:[%s672 + $0x129] sm:$0xff]
      %v796 = vld [vmem:[%s672 + $0x139] sm:$0xff]
      %v797 = vld [vmem:[%s672 + $0x141] sm:$0xff]
      %v798 = vld [vmem:[%s672 + $0x151] sm:$0xff]
      %v799 = vld [vmem:[%s672 + $0x159] sm:$0xff]
      %v800 = vld [vmem:[%s672 + $0x169] sm:$0xff]
      %v801 = vld [vmem:[%s672 + $0x171] sm:$0xff]
      %v802 = vperm.slane %v215, 6
      %v803 = vmul.f32 %v770, %v802
      %v804 = vmul.f32 %v771, %v802
      %v805 = vmul.f32 %v772, %v802
      %v806 = vmul.f32 %v773, %v802
      %v807 = vmul.f32 %v774, %v802
      %v808 = vmul.f32 %v775, %v802
      %v809 = vmul.f32 %v776, %v802
      %v810 = vmul.f32 %v777, %v802
      %v811 = vmul.f32 %v778, %v802
      %v812 = vmul.f32 %v779, %v802
      %v813 = vmul.f32 %v780, %v802
      %v814 = vmul.f32 %v781, %v802
      %v815 = vmul.f32 %v782, %v802
      %v816 = vmul.f32 %v783, %v802
      %v817 = vmul.f32 %v784, %v802
      %v818 = vmul.f32 %v785, %v802
      %v819 = vmul.f32 %v786, %v802
      %v820 = vmul.f32 %v787, %v802
      %v821 = vmul.f32 %v788, %v802
      %v822 = vmul.f32 %v789, %v802
      %v823 = vmul.f32 %v790, %v802
      %v824 = vmul.f32 %v791, %v802
      %v825 = vmul.f32 %v792, %v802
      %v826 = vmul.f32 %v793, %v802
      %v827 = vmul.f32 %v794, %v802
      %v828 = vmul.f32 %v795, %v802
      %v829 = vmul.f32 %v796, %v802
      %v830 = vmul.f32 %v797, %v802
      %v831 = vmul.f32 %v798, %v802
      %v832 = vmul.f32 %v799, %v802
      %v833 = vmul.f32 %v800, %v802
      %v834 = vmul.f32 %v801, %v802
      %v835 = vadd.f32 %v738, %v803
      %v836 = vadd.f32 %v739, %v804
      %v837 = vadd.f32 %v740, %v805
      %v838 = vadd.f32 %v741, %v806
      %v839 = vadd.f32 %v742, %v807
      %v840 = vadd.f32 %v743, %v808
      %v841 = vadd.f32 %v744, %v809
      %v842 = vadd.f32 %v745, %v810
      %v843 = vadd.f32 %v746, %v811
      %v844 = vadd.f32 %v747, %v812
      %v845 = vadd.f32 %v748, %v813
      %v846 = vadd.f32 %v749, %v814
      %v847 = vadd.f32 %v750, %v815
      %v848 = vadd.f32 %v751, %v816
      %v849 = vadd.f32 %v752, %v817
      %v850 = vadd.f32 %v753, %v818
      %v851 = vadd.f32 %v754, %v819
      %v852 = vadd.f32 %v755, %v820
      %v853 = vadd.f32 %v756, %v821
      %v854 = vadd.f32 %v757, %v822
      %v855 = vadd.f32 %v758, %v823
      %v856 = vadd.f32 %v759, %v824
      %v857 = vadd.f32 %v760, %v825
      %v858 = vadd.f32 %v761, %v826
      %v859 = vadd.f32 %v762, %v827
      %v860 = vadd.f32 %v763, %v828
      %v861 = vadd.f32 %v764, %v829
      %v862 = vadd.f32 %v765, %v830
      %v863 = vadd.f32 %v766, %v831
      %v864 = vadd.f32 %v767, %v832
      %v865 = vadd.f32 %v768, %v833
      %v866 = vadd.f32 %v769, %v834
      %v867 = vld [vmem:[%s672 + $0x2] sm:$0xff]
      %v868 = vld [vmem:[%s672 + $0xa] sm:$0xff]
      %v869 = vld [vmem:[%s672 + $0x1a] sm:$0xff]
      %v870 = vld [vmem:[%s672 + $0x22] sm:$0xff]
      %v871 = vld [vmem:[%s672 + $0x32] sm:$0xff]
      %v872 = vld [vmem:[%s672 + $0x3a] sm:$0xff]
      %v873 = vld [vmem:[%s672 + $0x4a] sm:$0xff]
      %v874 = vld [vmem:[%s672 + $0x52] sm:$0xff]
      %v875 = vld [vmem:[%s672 + $0x62] sm:$0xff]
      %v876 = vld [vmem:[%s672 + $0x6a] sm:$0xff]
      %v877 = vld [vmem:[%s672 + $0x7a] sm:$0xff]
      %v878 = vld [vmem:[%s672 + $0x82] sm:$0xff]
      %v879 = vld [vmem:[%s672 + $0x92] sm:$0xff]
      %v880 = vld [vmem:[%s672 + $0x9a] sm:$0xff]
      %v881 = vld [vmem:[%s672 + $0xaa] sm:$0xff]
      %v882 = vld [vmem:[%s672 + $0xb2] sm:$0xff]
      %v883 = vld [vmem:[%s672 + $0xc2] sm:$0xff]
      %v884 = vld [vmem:[%s672 + $0xca] sm:$0xff]
      %v885 = vld [vmem:[%s672 + $0xda] sm:$0xff]
      %v886 = vld [vmem:[%s672 + $0xe2] sm:$0xff]
      %v887 = vld [vmem:[%s672 + $0xf2] sm:$0xff]
      %v888 = vld [vmem:[%s672 + $0xfa] sm:$0xff]
      %v889 = vld [vmem:[%s672 + $0x10a] sm:$0xff]
      %v890 = vld [vmem:[%s672 + $0x112] sm:$0xff]
      %v891 = vld [vmem:[%s672 + $0x122] sm:$0xff]
      %v892 = vld [vmem:[%s672 + $0x12a] sm:$0xff]
      %v893 = vld [vmem:[%s672 + $0x13a] sm:$0xff]
      %v894 = vld [vmem:[%s672 + $0x142] sm:$0xff]
      %v895 = vld [vmem:[%s672 + $0x152] sm:$0xff]
      %v896 = vld [vmem:[%s672 + $0x15a] sm:$0xff]
      %v897 = vld [vmem:[%s672 + $0x16a] sm:$0xff]
      %v898 = vld [vmem:[%s672 + $0x172] sm:$0xff]
      %v899 = vperm.slane %v215, 7
      %v900 = vmul.f32 %v867, %v899
      %v901 = vmul.f32 %v868, %v899
      %v902 = vmul.f32 %v869, %v899
      %v903 = vmul.f32 %v870, %v899
      %v904 = vmul.f32 %v871, %v899
      %v905 = vmul.f32 %v872, %v899
      %v906 = vmul.f32 %v873, %v899
      %v907 = vmul.f32 %v874, %v899
      %v908 = vmul.f32 %v875, %v899
      %v909 = vmul.f32 %v876, %v899
      %v910 = vmul.f32 %v877, %v899
      %v911 = vmul.f32 %v878, %v899
      %v912 = vmul.f32 %v879, %v899
      %v913 = vmul.f32 %v880, %v899
      %v914 = vmul.f32 %v881, %v899
      %v915 = vmul.f32 %v882, %v899
      %v916 = vmul.f32 %v883, %v899
      %v917 = vmul.f32 %v884, %v899
      %v918 = vmul.f32 %v885, %v899
      %v919 = vmul.f32 %v886, %v899
      %v920 = vmul.f32 %v887, %v899
      %v921 = vmul.f32 %v888, %v899
      %v922 = vmul.f32 %v889, %v899
      %v923 = vmul.f32 %v890, %v899
      %v924 = vmul.f32 %v891, %v899
      %v925 = vmul.f32 %v892, %v899
      %v926 = vmul.f32 %v893, %v899
      %v927 = vmul.f32 %v894, %v899
      %v928 = vmul.f32 %v895, %v899
      %v929 = vmul.f32 %v896, %v899
      %v930 = vmul.f32 %v897, %v899
      %v931 = vmul.f32 %v898, %v899
      %v932 = vadd.f32 %v835, %v900
      %v933 = vadd.f32 %v836, %v901
      %v934 = vadd.f32 %v837, %v902
      %v935 = vadd.f32 %v838, %v903
      %v936 = vadd.f32 %v839, %v904
      %v937 = vadd.f32 %v840, %v905
      %v938 = vadd.f32 %v841, %v906
      %v939 = vadd.f32 %v842, %v907
      %v940 = vadd.f32 %v843, %v908
      %v941 = vadd.f32 %v844, %v909
      %v942 = vadd.f32 %v845, %v910
      %v943 = vadd.f32 %v846, %v911
      %v944 = vadd.f32 %v847, %v912
      %v945 = vadd.f32 %v848, %v913
      %v946 = vadd.f32 %v849, %v914
      %v947 = vadd.f32 %v850, %v915
      %v948 = vadd.f32 %v851, %v916
      %v949 = vadd.f32 %v852, %v917
      %v950 = vadd.f32 %v853, %v918
      %v951 = vadd.f32 %v854, %v919
      %v952 = vadd.f32 %v855, %v920
      %v953 = vadd.f32 %v856, %v921
      %v954 = vadd.f32 %v857, %v922
      %v955 = vadd.f32 %v858, %v923
      %v956 = vadd.f32 %v859, %v924
      %v957 = vadd.f32 %v860, %v925
      %v958 = vadd.f32 %v861, %v926
      %v959 = vadd.f32 %v862, %v927
      %v960 = vadd.f32 %v863, %v928
      %v961 = vadd.f32 %v864, %v929
      %v962 = vadd.f32 %v865, %v930
      %v963 = vadd.f32 %v866, %v931
      %v964 = vld [vmem:[%s672 + $0x3] sm:$0xff]
      %v965 = vld [vmem:[%s672 + $0xb] sm:$0xff]
      %v966 = vld [vmem:[%s672 + $0x1b] sm:$0xff]
      %v967 = vld [vmem:[%s672 + $0x23] sm:$0xff]
      %v968 = vld [vmem:[%s672 + $0x33] sm:$0xff]
      %v969 = vld [vmem:[%s672 + $0x3b] sm:$0xff]
      %v970 = vld [vmem:[%s672 + $0x4b] sm:$0xff]
      %v971 = vld [vmem:[%s672 + $0x53] sm:$0xff]
      %v972 = vld [vmem:[%s672 + $0x63] sm:$0xff]
      %v973 = vld [vmem:[%s672 + $0x6b] sm:$0xff]
      %v974 = vld [vmem:[%s672 + $0x7b] sm:$0xff]
      %v975 = vld [vmem:[%s672 + $0x83] sm:$0xff]
      %v976 = vld [vmem:[%s672 + $0x93] sm:$0xff]
      %v977 = vld [vmem:[%s672 + $0x9b] sm:$0xff]
      %v978 = vld [vmem:[%s672 + $0xab] sm:$0xff]
      %v979 = vld [vmem:[%s672 + $0xb3] sm:$0xff]
      %v980 = vld [vmem:[%s672 + $0xc3] sm:$0xff]
      %v981 = vld [vmem:[%s672 + $0xcb] sm:$0xff]
      %v982 = vld [vmem:[%s672 + $0xdb] sm:$0xff]
      %v983 = vld [vmem:[%s672 + $0xe3] sm:$0xff]
      %v984 = vld [vmem:[%s672 + $0xf3] sm:$0xff]
      %v985 = vld [vmem:[%s672 + $0xfb] sm:$0xff]
      %v986 = vld [vmem:[%s672 + $0x10b] sm:$0xff]
      %v987 = vld [vmem:[%s672 + $0x113] sm:$0xff]
      %v988 = vld [vmem:[%s672 + $0x123] sm:$0xff]
      %v989 = vld [vmem:[%s672 + $0x12b] sm:$0xff]
      %v990 = vld [vmem:[%s672 + $0x13b] sm:$0xff]
      %v991 = vld [vmem:[%s672 + $0x143] sm:$0xff]
      %v992 = vld [vmem:[%s672 + $0x153] sm:$0xff]
      %v993 = vld [vmem:[%s672 + $0x15b] sm:$0xff]
      %v994 = vld [vmem:[%s672 + $0x16b] sm:$0xff]
      %v995 = vld [vmem:[%s672 + $0x173] sm:$0xff]
      %v996 = vperm.slane %v216, 0
      %v997 = vmul.f32 %v964, %v996
      %v998 = vmul.f32 %v965, %v996
      %v999 = vmul.f32 %v966, %v996
      %v1000 = vmul.f32 %v967, %v996
      %v1001 = vmul.f32 %v968, %v996
      %v1002 = vmul.f32 %v969, %v996
      %v1003 = vmul.f32 %v970, %v996
      %v1004 = vmul.f32 %v971, %v996
      %v1005 = vmul.f32 %v972, %v996
      %v1006 = vmul.f32 %v973, %v996
      %v1007 = vmul.f32 %v974, %v996
      %v1008 = vmul.f32 %v975, %v996
      %v1009 = vmul.f32 %v976, %v996
      %v1010 = vmul.f32 %v977, %v996
      %v1011 = vmul.f32 %v978, %v996
      %v1012 = vmul.f32 %v979, %v996
      %v1013 = vmul.f32 %v980, %v996
      %v1014 = vmul.f32 %v981, %v996
      %v1015 = vmul.f32 %v982, %v996
      %v1016 = vmul.f32 %v983, %v996
      %v1017 = vmul.f32 %v984, %v996
      %v1018 = vmul.f32 %v985, %v996
      %v1019 = vmul.f32 %v986, %v996
      %v1020 = vmul.f32 %v987, %v996
      %v1021 = vmul.f32 %v988, %v996
      %v1022 = vmul.f32 %v989, %v996
      %v1023 = vmul.f32 %v990, %v996
      %v1024 = vmul.f32 %v991, %v996
      %v1025 = vmul.f32 %v992, %v996
      %v1026 = vmul.f32 %v993, %v996
      %v1027 = vmul.f32 %v994, %v996
      %v1028 = vmul.f32 %v995, %v996
      %v1029 = vadd.f32 %v932, %v997
      %v1030 = vadd.f32 %v933, %v998
      %v1031 = vadd.f32 %v934, %v999
      %v1032 = vadd.f32 %v935, %v1000
      %v1033 = vadd.f32 %v936, %v1001
      %v1034 = vadd.f32 %v937, %v1002
      %v1035 = vadd.f32 %v938, %v1003
      %v1036 = vadd.f32 %v939, %v1004
      %v1037 = vadd.f32 %v940, %v1005
      %v1038 = vadd.f32 %v941, %v1006
      %v1039 = vadd.f32 %v942, %v1007
      %v1040 = vadd.f32 %v943, %v1008
      %v1041 = vadd.f32 %v944, %v1009
      %v1042 = vadd.f32 %v945, %v1010
      %v1043 = vadd.f32 %v946, %v1011
      %v1044 = vadd.f32 %v947, %v1012
      %v1045 = vadd.f32 %v948, %v1013
      %v1046 = vadd.f32 %v949, %v1014
      %v1047 = vadd.f32 %v950, %v1015
      %v1048 = vadd.f32 %v951, %v1016
      %v1049 = vadd.f32 %v952, %v1017
      %v1050 = vadd.f32 %v953, %v1018
      %v1051 = vadd.f32 %v954, %v1019
      %v1052 = vadd.f32 %v955, %v1020
      %v1053 = vadd.f32 %v956, %v1021
      %v1054 = vadd.f32 %v957, %v1022
      %v1055 = vadd.f32 %v958, %v1023
      %v1056 = vadd.f32 %v959, %v1024
      %v1057 = vadd.f32 %v960, %v1025
      %v1058 = vadd.f32 %v961, %v1026
      %v1059 = vadd.f32 %v962, %v1027
      %v1060 = vadd.f32 %v963, %v1028
      %v1061 = vld [vmem:[%s672 + $0x4] sm:$0xff]
      %v1062 = vld [vmem:[%s672 + $0xc] sm:$0xff]
      %v1063 = vld [vmem:[%s672 + $0x1c] sm:$0xff]
      %v1064 = vld [vmem:[%s672 + $0x24] sm:$0xff]
      %v1065 = vld [vmem:[%s672 + $0x34] sm:$0xff]
      %v1066 = vld [vmem:[%s672 + $0x3c] sm:$0xff]
      %v1067 = vld [vmem:[%s672 + $0x4c] sm:$0xff]
      %v1068 = vld [vmem:[%s672 + $0x54] sm:$0xff]
      %v1069 = vld [vmem:[%s672 + $0x64] sm:$0xff]
      %v1070 = vld [vmem:[%s672 + $0x6c] sm:$0xff]
      %v1071 = vld [vmem:[%s672 + $0x7c] sm:$0xff]
      %v1072 = vld [vmem:[%s672 + $0x84] sm:$0xff]
      %v1073 = vld [vmem:[%s672 + $0x94] sm:$0xff]
      %v1074 = vld [vmem:[%s672 + $0x9c] sm:$0xff]
      %v1075 = vld [vmem:[%s672 + $0xac] sm:$0xff]
      %v1076 = vld [vmem:[%s672 + $0xb4] sm:$0xff]
      %v1077 = vld [vmem:[%s672 + $0xc4] sm:$0xff]
      %v1078 = vld [vmem:[%s672 + $0xcc] sm:$0xff]
      %v1079 = vld [vmem:[%s672 + $0xdc] sm:$0xff]
      %v1080 = vld [vmem:[%s672 + $0xe4] sm:$0xff]
      %v1081 = vld [vmem:[%s672 + $0xf4] sm:$0xff]
      %v1082 = vld [vmem:[%s672 + $0xfc] sm:$0xff]
      %v1083 = vld [vmem:[%s672 + $0x10c] sm:$0xff]
      %v1084 = vld [vmem:[%s672 + $0x114] sm:$0xff]
      %v1085 = vld [vmem:[%s672 + $0x124] sm:$0xff]
      %v1086 = vld [vmem:[%s672 + $0x12c] sm:$0xff]
      %v1087 = vld [vmem:[%s672 + $0x13c] sm:$0xff]
      %v1088 = vld [vmem:[%s672 + $0x144] sm:$0xff]
      %v1089 = vld [vmem:[%s672 + $0x154] sm:$0xff]
      %v1090 = vld [vmem:[%s672 + $0x15c] sm:$0xff]
      %v1091 = vld [vmem:[%s672 + $0x16c] sm:$0xff]
      %v1092 = vld [vmem:[%s672 + $0x174] sm:$0xff]
      %v1093 = vperm.slane %v216, 1
      %v1094 = vmul.f32 %v1061, %v1093
      %v1095 = vmul.f32 %v1062, %v1093
      %v1096 = vmul.f32 %v1063, %v1093
      %v1097 = vmul.f32 %v1064, %v1093
      %v1098 = vmul.f32 %v1065, %v1093
      %v1099 = vmul.f32 %v1066, %v1093
      %v1100 = vmul.f32 %v1067, %v1093
      %v1101 = vmul.f32 %v1068, %v1093
      %v1102 = vmul.f32 %v1069, %v1093
      %v1103 = vmul.f32 %v1070, %v1093
      %v1104 = vmul.f32 %v1071, %v1093
      %v1105 = vmul.f32 %v1072, %v1093
      %v1106 = vmul.f32 %v1073, %v1093
      %v1107 = vmul.f32 %v1074, %v1093
      %v1108 = vmul.f32 %v1075, %v1093
      %v1109 = vmul.f32 %v1076, %v1093
      %v1110 = vmul.f32 %v1077, %v1093
      %v1111 = vmul.f32 %v1078, %v1093
      %v1112 = vmul.f32 %v1079, %v1093
      %v1113 = vmul.f32 %v1080, %v1093
      %v1114 = vmul.f32 %v1081, %v1093
      %v1115 = vmul.f32 %v1082, %v1093
      %v1116 = vmul.f32 %v1083, %v1093
      %v1117 = vmul.f32 %v1084, %v1093
      %v1118 = vmul.f32 %v1085, %v1093
      %v1119 = vmul.f32 %v1086, %v1093
      %v1120 = vmul.f32 %v1087, %v1093
      %v1121 = vmul.f32 %v1088, %v1093
      %v1122 = vmul.f32 %v1089, %v1093
      %v1123 = vmul.f32 %v1090, %v1093
      %v1124 = vmul.f32 %v1091, %v1093
      %v1125 = vmul.f32 %v1092, %v1093
      %v1126 = vadd.f32 %v1029, %v1094
      %v1127 = vadd.f32 %v1030, %v1095
      %v1128 = vadd.f32 %v1031, %v1096
      %v1129 = vadd.f32 %v1032, %v1097
      %v1130 = vadd.f32 %v1033, %v1098
      %v1131 = vadd.f32 %v1034, %v1099
      %v1132 = vadd.f32 %v1035, %v1100
      %v1133 = vadd.f32 %v1036, %v1101
      %v1134 = vadd.f32 %v1037, %v1102
      %v1135 = vadd.f32 %v1038, %v1103
      %v1136 = vadd.f32 %v1039, %v1104
      %v1137 = vadd.f32 %v1040, %v1105
      %v1138 = vadd.f32 %v1041, %v1106
      %v1139 = vadd.f32 %v1042, %v1107
      %v1140 = vadd.f32 %v1043, %v1108
      %v1141 = vadd.f32 %v1044, %v1109
      %v1142 = vadd.f32 %v1045, %v1110
      %v1143 = vadd.f32 %v1046, %v1111
      %v1144 = vadd.f32 %v1047, %v1112
      %v1145 = vadd.f32 %v1048, %v1113
      %v1146 = vadd.f32 %v1049, %v1114
      %v1147 = vadd.f32 %v1050, %v1115
      %v1148 = vadd.f32 %v1051, %v1116
      %v1149 = vadd.f32 %v1052, %v1117
      %v1150 = vadd.f32 %v1053, %v1118
      %v1151 = vadd.f32 %v1054, %v1119
      %v1152 = vadd.f32 %v1055, %v1120
      %v1153 = vadd.f32 %v1056, %v1121
      %v1154 = vadd.f32 %v1057, %v1122
      %v1155 = vadd.f32 %v1058, %v1123
      %v1156 = vadd.f32 %v1059, %v1124
      %v1157 = vadd.f32 %v1060, %v1125
      %s1158 = scalar_lea.vmem %s203, 48
      %v1159 = vld [vmem:[%s1158] sm:$0xff]
      %v1160 = vld [vmem:[%s1158 + $0x8] sm:$0xff]
      %v1161 = vld [vmem:[%s1158 + $0x18] sm:$0xff]
      %v1162 = vld [vmem:[%s1158 + $0x20] sm:$0xff]
      %v1163 = vld [vmem:[%s1158 + $0x30] sm:$0xff]
      %v1164 = vld [vmem:[%s1158 + $0x38] sm:$0xff]
      %v1165 = vld [vmem:[%s1158 + $0x48] sm:$0xff]
      %v1166 = vld [vmem:[%s1158 + $0x50] sm:$0xff]
      %v1167 = vld [vmem:[%s1158 + $0x60] sm:$0xff]
      %v1168 = vld [vmem:[%s1158 + $0x68] sm:$0xff]
      %v1169 = vld [vmem:[%s1158 + $0x78] sm:$0xff]
      %v1170 = vld [vmem:[%s1158 + $0x80] sm:$0xff]
      %v1171 = vld [vmem:[%s1158 + $0x90] sm:$0xff]
      %v1172 = vld [vmem:[%s1158 + $0x98] sm:$0xff]
      %v1173 = vld [vmem:[%s1158 + $0xa8] sm:$0xff]
      %v1174 = vld [vmem:[%s1158 + $0xb0] sm:$0xff]
      %v1175 = vld [vmem:[%s1158 + $0xc0] sm:$0xff]
      %v1176 = vld [vmem:[%s1158 + $0xc8] sm:$0xff]
      %v1177 = vld [vmem:[%s1158 + $0xd8] sm:$0xff]
      %v1178 = vld [vmem:[%s1158 + $0xe0] sm:$0xff]
      %v1179 = vld [vmem:[%s1158 + $0xf0] sm:$0xff]
      %v1180 = vld [vmem:[%s1158 + $0xf8] sm:$0xff]
      %v1181 = vld [vmem:[%s1158 + $0x108] sm:$0xff]
      %v1182 = vld [vmem:[%s1158 + $0x110] sm:$0xff]
      %v1183 = vld [vmem:[%s1158 + $0x120] sm:$0xff]
      %v1184 = vld [vmem:[%s1158 + $0x128] sm:$0xff]
      %v1185 = vld [vmem:[%s1158 + $0x138] sm:$0xff]
      %v1186 = vld [vmem:[%s1158 + $0x140] sm:$0xff]
      %v1187 = vld [vmem:[%s1158 + $0x150] sm:$0xff]
      %v1188 = vld [vmem:[%s1158 + $0x158] sm:$0xff]
      %v1189 = vld [vmem:[%s1158 + $0x168] sm:$0xff]
      %v1190 = vld [vmem:[%s1158 + $0x170] sm:$0xff]
      %v1191 = vperm.slane %v216, 2
      %v1192 = vmul.f32 %v1159, %v1191
      %v1193 = vmul.f32 %v1160, %v1191
      %v1194 = vmul.f32 %v1161, %v1191
      %v1195 = vmul.f32 %v1162, %v1191
      %v1196 = vmul.f32 %v1163, %v1191
      %v1197 = vmul.f32 %v1164, %v1191
      %v1198 = vmul.f32 %v1165, %v1191
      %v1199 = vmul.f32 %v1166, %v1191
      %v1200 = vmul.f32 %v1167, %v1191
      %v1201 = vmul.f32 %v1168, %v1191
      %v1202 = vmul.f32 %v1169, %v1191
      %v1203 = vmul.f32 %v1170, %v1191
      %v1204 = vmul.f32 %v1171, %v1191
      %v1205 = vmul.f32 %v1172, %v1191
      %v1206 = vmul.f32 %v1173, %v1191
      %v1207 = vmul.f32 %v1174, %v1191
      %v1208 = vmul.f32 %v1175, %v1191
      %v1209 = vmul.f32 %v1176, %v1191
      %v1210 = vmul.f32 %v1177, %v1191
      %v1211 = vmul.f32 %v1178, %v1191
      %v1212 = vmul.f32 %v1179, %v1191
      %v1213 = vmul.f32 %v1180, %v1191
      %v1214 = vmul.f32 %v1181, %v1191
      %v1215 = vmul.f32 %v1182, %v1191
      %v1216 = vmul.f32 %v1183, %v1191
      %v1217 = vmul.f32 %v1184, %v1191
      %v1218 = vmul.f32 %v1185, %v1191
      %v1219 = vmul.f32 %v1186, %v1191
      %v1220 = vmul.f32 %v1187, %v1191
      %v1221 = vmul.f32 %v1188, %v1191
      %v1222 = vmul.f32 %v1189, %v1191
      %v1223 = vmul.f32 %v1190, %v1191
      %v1224 = vadd.f32 %v1126, %v1192
      %v1225 = vadd.f32 %v1127, %v1193
      %v1226 = vadd.f32 %v1128, %v1194
      %v1227 = vadd.f32 %v1129, %v1195
      %v1228 = vadd.f32 %v1130, %v1196
      %v1229 = vadd.f32 %v1131, %v1197
      %v1230 = vadd.f32 %v1132, %v1198
      %v1231 = vadd.f32 %v1133, %v1199
      %v1232 = vadd.f32 %v1134, %v1200
      %v1233 = vadd.f32 %v1135, %v1201
      %v1234 = vadd.f32 %v1136, %v1202
      %v1235 = vadd.f32 %v1137, %v1203
      %v1236 = vadd.f32 %v1138, %v1204
      %v1237 = vadd.f32 %v1139, %v1205
      %v1238 = vadd.f32 %v1140, %v1206
      %v1239 = vadd.f32 %v1141, %v1207
      %v1240 = vadd.f32 %v1142, %v1208
      %v1241 = vadd.f32 %v1143, %v1209
      %v1242 = vadd.f32 %v1144, %v1210
      %v1243 = vadd.f32 %v1145, %v1211
      %v1244 = vadd.f32 %v1146, %v1212
      %v1245 = vadd.f32 %v1147, %v1213
      %v1246 = vadd.f32 %v1148, %v1214
      %v1247 = vadd.f32 %v1149, %v1215
      %v1248 = vadd.f32 %v1150, %v1216
      %v1249 = vadd.f32 %v1151, %v1217
      %v1250 = vadd.f32 %v1152, %v1218
      %v1251 = vadd.f32 %v1153, %v1219
      %v1252 = vadd.f32 %v1154, %v1220
      %v1253 = vadd.f32 %v1155, %v1221
      %v1254 = vadd.f32 %v1156, %v1222
      %v1255 = vadd.f32 %v1157, %v1223
      %v1256 = vld [vmem:[%s1158 + $0x1] sm:$0xff]
      %v1257 = vld [vmem:[%s1158 + $0x9] sm:$0xff]
      %v1258 = vld [vmem:[%s1158 + $0x19] sm:$0xff]
      %v1259 = vld [vmem:[%s1158 + $0x21] sm:$0xff]
      %v1260 = vld [vmem:[%s1158 + $0x31] sm:$0xff]
      %v1261 = vld [vmem:[%s1158 + $0x39] sm:$0xff]
      %v1262 = vld [vmem:[%s1158 + $0x49] sm:$0xff]
      %v1263 = vld [vmem:[%s1158 + $0x51] sm:$0xff]
      %v1264 = vld [vmem:[%s1158 + $0x61] sm:$0xff]
      %v1265 = vld [vmem:[%s1158 + $0x69] sm:$0xff]
      %v1266 = vld [vmem:[%s1158 + $0x79] sm:$0xff]
      %v1267 = vld [vmem:[%s1158 + $0x81] sm:$0xff]
      %v1268 = vld [vmem:[%s1158 + $0x91] sm:$0xff]
      %v1269 = vld [vmem:[%s1158 + $0x99] sm:$0xff]
      %v1270 = vld [vmem:[%s1158 + $0xa9] sm:$0xff]
      %v1271 = vld [vmem:[%s1158 + $0xb1] sm:$0xff]
      %v1272 = vld [vmem:[%s1158 + $0xc1] sm:$0xff]
      %v1273 = vld [vmem:[%s1158 + $0xc9] sm:$0xff]
      %v1274 = vld [vmem:[%s1158 + $0xd9] sm:$0xff]
      %v1275 = vld [vmem:[%s1158 + $0xe1] sm:$0xff]
      %v1276 = vld [vmem:[%s1158 + $0xf1] sm:$0xff]
      %v1277 = vld [vmem:[%s1158 + $0xf9] sm:$0xff]
      %v1278 = vld [vmem:[%s1158 + $0x109] sm:$0xff]
      %v1279 = vld [vmem:[%s1158 + $0x111] sm:$0xff]
      %v1280 = vld [vmem:[%s1158 + $0x121] sm:$0xff]
      %v1281 = vld [vmem:[%s1158 + $0x129] sm:$0xff]
      %v1282 = vld [vmem:[%s1158 + $0x139] sm:$0xff]
      %v1283 = vld [vmem:[%s1158 + $0x141] sm:$0xff]
      %v1284 = vld [vmem:[%s1158 + $0x151] sm:$0xff]
      %v1285 = vld [vmem:[%s1158 + $0x159] sm:$0xff]
      %v1286 = vld [vmem:[%s1158 + $0x169] sm:$0xff]
      %v1287 = vld [vmem:[%s1158 + $0x171] sm:$0xff]
      %v1288 = vperm.slane %v216, 3
      %v1289 = vmul.f32 %v1256, %v1288
      %v1290 = vmul.f32 %v1257, %v1288
      %v1291 = vmul.f32 %v1258, %v1288
      %v1292 = vmul.f32 %v1259, %v1288
      %v1293 = vmul.f32 %v1260, %v1288
      %v1294 = vmul.f32 %v1261, %v1288
      %v1295 = vmul.f32 %v1262, %v1288
      %v1296 = vmul.f32 %v1263, %v1288
      %v1297 = vmul.f32 %v1264, %v1288
      %v1298 = vmul.f32 %v1265, %v1288
      %v1299 = vmul.f32 %v1266, %v1288
      %v1300 = vmul.f32 %v1267, %v1288
      %v1301 = vmul.f32 %v1268, %v1288
      %v1302 = vmul.f32 %v1269, %v1288
      %v1303 = vmul.f32 %v1270, %v1288
      %v1304 = vmul.f32 %v1271, %v1288
      %v1305 = vmul.f32 %v1272, %v1288
      %v1306 = vmul.f32 %v1273, %v1288
      %v1307 = vmul.f32 %v1274, %v1288
      %v1308 = vmul.f32 %v1275, %v1288
      %v1309 = vmul.f32 %v1276, %v1288
      %v1310 = vmul.f32 %v1277, %v1288
      %v1311 = vmul.f32 %v1278, %v1288
      %v1312 = vmul.f32 %v1279, %v1288
      %v1313 = vmul.f32 %v1280, %v1288
      %v1314 = vmul.f32 %v1281, %v1288
      %v1315 = vmul.f32 %v1282, %v1288
      %v1316 = vmul.f32 %v1283, %v1288
      %v1317 = vmul.f32 %v1284, %v1288
      %v1318 = vmul.f32 %v1285, %v1288
      %v1319 = vmul.f32 %v1286, %v1288
      %v1320 = vmul.f32 %v1287, %v1288
      %v1321 = vadd.f32 %v1224, %v1289
      %v1322 = vadd.f32 %v1225, %v1290
      %v1323 = vadd.f32 %v1226, %v1291
      %v1324 = vadd.f32 %v1227, %v1292
      %v1325 = vadd.f32 %v1228, %v1293
      %v1326 = vadd.f32 %v1229, %v1294
      %v1327 = vadd.f32 %v1230, %v1295
      %v1328 = vadd.f32 %v1231, %v1296
      %v1329 = vadd.f32 %v1232, %v1297
      %v1330 = vadd.f32 %v1233, %v1298
      %v1331 = vadd.f32 %v1234, %v1299
      %v1332 = vadd.f32 %v1235, %v1300
      %v1333 = vadd.f32 %v1236, %v1301
      %v1334 = vadd.f32 %v1237, %v1302
      %v1335 = vadd.f32 %v1238, %v1303
      %v1336 = vadd.f32 %v1239, %v1304
      %v1337 = vadd.f32 %v1240, %v1305
      %v1338 = vadd.f32 %v1241, %v1306
      %v1339 = vadd.f32 %v1242, %v1307
      %v1340 = vadd.f32 %v1243, %v1308
      %v1341 = vadd.f32 %v1244, %v1309
      %v1342 = vadd.f32 %v1245, %v1310
      %v1343 = vadd.f32 %v1246, %v1311
      %v1344 = vadd.f32 %v1247, %v1312
      %v1345 = vadd.f32 %v1248, %v1313
      %v1346 = vadd.f32 %v1249, %v1314
      %v1347 = vadd.f32 %v1250, %v1315
      %v1348 = vadd.f32 %v1251, %v1316
      %v1349 = vadd.f32 %v1252, %v1317
      %v1350 = vadd.f32 %v1253, %v1318
      %v1351 = vadd.f32 %v1254, %v1319
      %v1352 = vadd.f32 %v1255, %v1320
      %v1353 = vld [vmem:[%s1158 + $0x2] sm:$0xff]
      %v1354 = vld [vmem:[%s1158 + $0xa] sm:$0xff]
      %v1355 = vld [vmem:[%s1158 + $0x1a] sm:$0xff]
      %v1356 = vld [vmem:[%s1158 + $0x22] sm:$0xff]
      %v1357 = vld [vmem:[%s1158 + $0x32] sm:$0xff]
      %v1358 = vld [vmem:[%s1158 + $0x3a] sm:$0xff]
      %v1359 = vld [vmem:[%s1158 + $0x4a] sm:$0xff]
      %v1360 = vld [vmem:[%s1158 + $0x52] sm:$0xff]
      %v1361 = vld [vmem:[%s1158 + $0x62] sm:$0xff]
      %v1362 = vld [vmem:[%s1158 + $0x6a] sm:$0xff]
      %v1363 = vld [vmem:[%s1158 + $0x7a] sm:$0xff]
      %v1364 = vld [vmem:[%s1158 + $0x82] sm:$0xff]
      %v1365 = vld [vmem:[%s1158 + $0x92] sm:$0xff]
      %v1366 = vld [vmem:[%s1158 + $0x9a] sm:$0xff]
      %v1367 = vld [vmem:[%s1158 + $0xaa] sm:$0xff]
      %v1368 = vld [vmem:[%s1158 + $0xb2] sm:$0xff]
      %v1369 = vld [vmem:[%s1158 + $0xc2] sm:$0xff]
      %v1370 = vld [vmem:[%s1158 + $0xca] sm:$0xff]
      %v1371 = vld [vmem:[%s1158 + $0xda] sm:$0xff]
      %v1372 = vld [vmem:[%s1158 + $0xe2] sm:$0xff]
      %v1373 = vld [vmem:[%s1158 + $0xf2] sm:$0xff]
      %v1374 = vld [vmem:[%s1158 + $0xfa] sm:$0xff]
      %v1375 = vld [vmem:[%s1158 + $0x10a] sm:$0xff]
      %v1376 = vld [vmem:[%s1158 + $0x112] sm:$0xff]
      %v1377 = vld [vmem:[%s1158 + $0x122] sm:$0xff]
      %v1378 = vld [vmem:[%s1158 + $0x12a] sm:$0xff]
      %v1379 = vld [vmem:[%s1158 + $0x13a] sm:$0xff]
      %v1380 = vld [vmem:[%s1158 + $0x142] sm:$0xff]
      %v1381 = vld [vmem:[%s1158 + $0x152] sm:$0xff]
      %v1382 = vld [vmem:[%s1158 + $0x15a] sm:$0xff]
      %v1383 = vld [vmem:[%s1158 + $0x16a] sm:$0xff]
      %v1384 = vld [vmem:[%s1158 + $0x172] sm:$0xff]
      %v1385 = vperm.slane %v216, 4
      %v1386 = vmul.f32 %v1353, %v1385
      %v1387 = vmul.f32 %v1354, %v1385
      %v1388 = vmul.f32 %v1355, %v1385
      %v1389 = vmul.f32 %v1356, %v1385
      %v1390 = vmul.f32 %v1357, %v1385
      %v1391 = vmul.f32 %v1358, %v1385
      %v1392 = vmul.f32 %v1359, %v1385
      %v1393 = vmul.f32 %v1360, %v1385
      %v1394 = vmul.f32 %v1361, %v1385
      %v1395 = vmul.f32 %v1362, %v1385
      %v1396 = vmul.f32 %v1363, %v1385
      %v1397 = vmul.f32 %v1364, %v1385
      %v1398 = vmul.f32 %v1365, %v1385
      %v1399 = vmul.f32 %v1366, %v1385
      %v1400 = vmul.f32 %v1367, %v1385
      %v1401 = vmul.f32 %v1368, %v1385
      %v1402 = vmul.f32 %v1369, %v1385
      %v1403 = vmul.f32 %v1370, %v1385
      %v1404 = vmul.f32 %v1371, %v1385
      %v1405 = vmul.f32 %v1372, %v1385
      %v1406 = vmul.f32 %v1373, %v1385
      %v1407 = vmul.f32 %v1374, %v1385
      %v1408 = vmul.f32 %v1375, %v1385
      %v1409 = vmul.f32 %v1376, %v1385
      %v1410 = vmul.f32 %v1377, %v1385
      %v1411 = vmul.f32 %v1378, %v1385
      %v1412 = vmul.f32 %v1379, %v1385
      %v1413 = vmul.f32 %v1380, %v1385
      %v1414 = vmul.f32 %v1381, %v1385
      %v1415 = vmul.f32 %v1382, %v1385
      %v1416 = vmul.f32 %v1383, %v1385
      %v1417 = vmul.f32 %v1384, %v1385
      %v1418 = vadd.f32 %v1321, %v1386
      %v1419 = vadd.f32 %v1322, %v1387
      %v1420 = vadd.f32 %v1323, %v1388
      %v1421 = vadd.f32 %v1324, %v1389
      %v1422 = vadd.f32 %v1325, %v1390
      %v1423 = vadd.f32 %v1326, %v1391
      %v1424 = vadd.f32 %v1327, %v1392
      %v1425 = vadd.f32 %v1328, %v1393
      %v1426 = vadd.f32 %v1329, %v1394
      %v1427 = vadd.f32 %v1330, %v1395
      %v1428 = vadd.f32 %v1331, %v1396
      %v1429 = vadd.f32 %v1332, %v1397
      %v1430 = vadd.f32 %v1333, %v1398
      %v1431 = vadd.f32 %v1334, %v1399
      %v1432 = vadd.f32 %v1335, %v1400
      %v1433 = vadd.f32 %v1336, %v1401
      %v1434 = vadd.f32 %v1337, %v1402
      %v1435 = vadd.f32 %v1338, %v1403
      %v1436 = vadd.f32 %v1339, %v1404
      %v1437 = vadd.f32 %v1340, %v1405
      %v1438 = vadd.f32 %v1341, %v1406
      %v1439 = vadd.f32 %v1342, %v1407
      %v1440 = vadd.f32 %v1343, %v1408
      %v1441 = vadd.f32 %v1344, %v1409
      %v1442 = vadd.f32 %v1345, %v1410
      %v1443 = vadd.f32 %v1346, %v1411
      %v1444 = vadd.f32 %v1347, %v1412
      %v1445 = vadd.f32 %v1348, %v1413
      %v1446 = vadd.f32 %v1349, %v1414
      %v1447 = vadd.f32 %v1350, %v1415
      %v1448 = vadd.f32 %v1351, %v1416
      %v1449 = vadd.f32 %v1352, %v1417
      %v1450 = vld [vmem:[%s1158 + $0x3] sm:$0xff]
      %v1451 = vld [vmem:[%s1158 + $0xb] sm:$0xff]
      %v1452 = vld [vmem:[%s1158 + $0x1b] sm:$0xff]
      %v1453 = vld [vmem:[%s1158 + $0x23] sm:$0xff]
      %v1454 = vld [vmem:[%s1158 + $0x33] sm:$0xff]
      %v1455 = vld [vmem:[%s1158 + $0x3b] sm:$0xff]
      %v1456 = vld [vmem:[%s1158 + $0x4b] sm:$0xff]
      %v1457 = vld [vmem:[%s1158 + $0x53] sm:$0xff]
      %v1458 = vld [vmem:[%s1158 + $0x63] sm:$0xff]
      %v1459 = vld [vmem:[%s1158 + $0x6b] sm:$0xff]
      %v1460 = vld [vmem:[%s1158 + $0x7b] sm:$0xff]
      %v1461 = vld [vmem:[%s1158 + $0x83] sm:$0xff]
      %v1462 = vld [vmem:[%s1158 + $0x93] sm:$0xff]
      %v1463 = vld [vmem:[%s1158 + $0x9b] sm:$0xff]
      %v1464 = vld [vmem:[%s1158 + $0xab] sm:$0xff]
      %v1465 = vld [vmem:[%s1158 + $0xb3] sm:$0xff]
      %v1466 = vld [vmem:[%s1158 + $0xc3] sm:$0xff]
      %v1467 = vld [vmem:[%s1158 + $0xcb] sm:$0xff]
      %v1468 = vld [vmem:[%s1158 + $0xdb] sm:$0xff]
      %v1469 = vld [vmem:[%s1158 + $0xe3] sm:$0xff]
      %v1470 = vld [vmem:[%s1158 + $0xf3] sm:$0xff]
      %v1471 = vld [vmem:[%s1158 + $0xfb] sm:$0xff]
      %v1472 = vld [vmem:[%s1158 + $0x10b] sm:$0xff]
      %v1473 = vld [vmem:[%s1158 + $0x113] sm:$0xff]
      %v1474 = vld [vmem:[%s1158 + $0x123] sm:$0xff]
      %v1475 = vld [vmem:[%s1158 + $0x12b] sm:$0xff]
      %v1476 = vld [vmem:[%s1158 + $0x13b] sm:$0xff]
      %v1477 = vld [vmem:[%s1158 + $0x143] sm:$0xff]
      %v1478 = vld [vmem:[%s1158 + $0x153] sm:$0xff]
      %v1479 = vld [vmem:[%s1158 + $0x15b] sm:$0xff]
      %v1480 = vld [vmem:[%s1158 + $0x16b] sm:$0xff]
      %v1481 = vld [vmem:[%s1158 + $0x173] sm:$0xff]
      %v1482 = vperm.slane %v216, 5
      %v1483 = vmul.f32 %v1450, %v1482
      %v1484 = vmul.f32 %v1451, %v1482
      %v1485 = vmul.f32 %v1452, %v1482
      %v1486 = vmul.f32 %v1453, %v1482
      %v1487 = vmul.f32 %v1454, %v1482
      %v1488 = vmul.f32 %v1455, %v1482
      %v1489 = vmul.f32 %v1456, %v1482
      %v1490 = vmul.f32 %v1457, %v1482
      %v1491 = vmul.f32 %v1458, %v1482
      %v1492 = vmul.f32 %v1459, %v1482
      %v1493 = vmul.f32 %v1460, %v1482
      %v1494 = vmul.f32 %v1461, %v1482
      %v1495 = vmul.f32 %v1462, %v1482
      %v1496 = vmul.f32 %v1463, %v1482
      %v1497 = vmul.f32 %v1464, %v1482
      %v1498 = vmul.f32 %v1465, %v1482
      %v1499 = vmul.f32 %v1466, %v1482
      %v1500 = vmul.f32 %v1467, %v1482
      %v1501 = vmul.f32 %v1468, %v1482
      %v1502 = vmul.f32 %v1469, %v1482
      %v1503 = vmul.f32 %v1470, %v1482
      %v1504 = vmul.f32 %v1471, %v1482
      %v1505 = vmul.f32 %v1472, %v1482
      %v1506 = vmul.f32 %v1473, %v1482
      %v1507 = vmul.f32 %v1474, %v1482
      %v1508 = vmul.f32 %v1475, %v1482
      %v1509 = vmul.f32 %v1476, %v1482
      %v1510 = vmul.f32 %v1477, %v1482
      %v1511 = vmul.f32 %v1478, %v1482
      %v1512 = vmul.f32 %v1479, %v1482
      %v1513 = vmul.f32 %v1480, %v1482
      %v1514 = vmul.f32 %v1481, %v1482
      %v1515 = vadd.f32 %v1418, %v1483
      %v1516 = vadd.f32 %v1419, %v1484
      %v1517 = vadd.f32 %v1420, %v1485
      %v1518 = vadd.f32 %v1421, %v1486
      %v1519 = vadd.f32 %v1422, %v1487
      %v1520 = vadd.f32 %v1423, %v1488
      %v1521 = vadd.f32 %v1424, %v1489
      %v1522 = vadd.f32 %v1425, %v1490
      %v1523 = vadd.f32 %v1426, %v1491
      %v1524 = vadd.f32 %v1427, %v1492
      %v1525 = vadd.f32 %v1428, %v1493
      %v1526 = vadd.f32 %v1429, %v1494
      %v1527 = vadd.f32 %v1430, %v1495
      %v1528 = vadd.f32 %v1431, %v1496
      %v1529 = vadd.f32 %v1432, %v1497
      %v1530 = vadd.f32 %v1433, %v1498
      %v1531 = vadd.f32 %v1434, %v1499
      %v1532 = vadd.f32 %v1435, %v1500
      %v1533 = vadd.f32 %v1436, %v1501
      %v1534 = vadd.f32 %v1437, %v1502
      %v1535 = vadd.f32 %v1438, %v1503
      %v1536 = vadd.f32 %v1439, %v1504
      %v1537 = vadd.f32 %v1440, %v1505
      %v1538 = vadd.f32 %v1441, %v1506
      %v1539 = vadd.f32 %v1442, %v1507
      %v1540 = vadd.f32 %v1443, %v1508
      %v1541 = vadd.f32 %v1444, %v1509
      %v1542 = vadd.f32 %v1445, %v1510
      %v1543 = vadd.f32 %v1446, %v1511
      %v1544 = vadd.f32 %v1447, %v1512
      %v1545 = vadd.f32 %v1448, %v1513
      %v1546 = vadd.f32 %v1449, %v1514
      %v1547 = vld [vmem:[%s1158 + $0x4] sm:$0xff]
      %v1548 = vld [vmem:[%s1158 + $0xc] sm:$0xff]
      %v1549 = vld [vmem:[%s1158 + $0x1c] sm:$0xff]
      %v1550 = vld [vmem:[%s1158 + $0x24] sm:$0xff]
      %v1551 = vld [vmem:[%s1158 + $0x34] sm:$0xff]
      %v1552 = vld [vmem:[%s1158 + $0x3c] sm:$0xff]
      %v1553 = vld [vmem:[%s1158 + $0x4c] sm:$0xff]
      %v1554 = vld [vmem:[%s1158 + $0x54] sm:$0xff]
      %v1555 = vld [vmem:[%s1158 + $0x64] sm:$0xff]
      %v1556 = vld [vmem:[%s1158 + $0x6c] sm:$0xff]
      %v1557 = vld [vmem:[%s1158 + $0x7c] sm:$0xff]
      %v1558 = vld [vmem:[%s1158 + $0x84] sm:$0xff]
      %v1559 = vld [vmem:[%s1158 + $0x94] sm:$0xff]
      %v1560 = vld [vmem:[%s1158 + $0x9c] sm:$0xff]
      %v1561 = vld [vmem:[%s1158 + $0xac] sm:$0xff]
      %v1562 = vld [vmem:[%s1158 + $0xb4] sm:$0xff]
      %v1563 = vld [vmem:[%s1158 + $0xc4] sm:$0xff]
      %v1564 = vld [vmem:[%s1158 + $0xcc] sm:$0xff]
      %v1565 = vld [vmem:[%s1158 + $0xdc] sm:$0xff]
      %v1566 = vld [vmem:[%s1158 + $0xe4] sm:$0xff]
      %v1567 = vld [vmem:[%s1158 + $0xf4] sm:$0xff]
      %v1568 = vld [vmem:[%s1158 + $0xfc] sm:$0xff]
      %v1569 = vld [vmem:[%s1158 + $0x10c] sm:$0xff]
      %v1570 = vld [vmem:[%s1158 + $0x114] sm:$0xff]
      %v1571 = vld [vmem:[%s1158 + $0x124] sm:$0xff]
      %v1572 = vld [vmem:[%s1158 + $0x12c] sm:$0xff]
      %v1573 = vld [vmem:[%s1158 + $0x13c] sm:$0xff]
      %v1574 = vld [vmem:[%s1158 + $0x144] sm:$0xff]
      %v1575 = vld [vmem:[%s1158 + $0x154] sm:$0xff]
      %v1576 = vld [vmem:[%s1158 + $0x15c] sm:$0xff]
      %v1577 = vld [vmem:[%s1158 + $0x16c] sm:$0xff]
      %v1578 = vld [vmem:[%s1158 + $0x174] sm:$0xff]
      %v1579 = vperm.slane %v216, 6
      %v1580 = vmul.f32 %v1547, %v1579
      %v1581 = vmul.f32 %v1548, %v1579
      %v1582 = vmul.f32 %v1549, %v1579
      %v1583 = vmul.f32 %v1550, %v1579
      %v1584 = vmul.f32 %v1551, %v1579
      %v1585 = vmul.f32 %v1552, %v1579
      %v1586 = vmul.f32 %v1553, %v1579
      %v1587 = vmul.f32 %v1554, %v1579
      %v1588 = vmul.f32 %v1555, %v1579
      %v1589 = vmul.f32 %v1556, %v1579
      %v1590 = vmul.f32 %v1557, %v1579
      %v1591 = vmul.f32 %v1558, %v1579
      %v1592 = vmul.f32 %v1559, %v1579
      %v1593 = vmul.f32 %v1560, %v1579
      %v1594 = vmul.f32 %v1561, %v1579
      %v1595 = vmul.f32 %v1562, %v1579
      %v1596 = vmul.f32 %v1563, %v1579
      %v1597 = vmul.f32 %v1564, %v1579
      %v1598 = vmul.f32 %v1565, %v1579
      %v1599 = vmul.f32 %v1566, %v1579
      %v1600 = vmul.f32 %v1567, %v1579
      %v1601 = vmul.f32 %v1568, %v1579
      %v1602 = vmul.f32 %v1569, %v1579
      %v1603 = vmul.f32 %v1570, %v1579
      %v1604 = vmul.f32 %v1571, %v1579
      %v1605 = vmul.f32 %v1572, %v1579
      %v1606 = vmul.f32 %v1573, %v1579
      %v1607 = vmul.f32 %v1574, %v1579
      %v1608 = vmul.f32 %v1575, %v1579
      %v1609 = vmul.f32 %v1576, %v1579
      %v1610 = vmul.f32 %v1577, %v1579
      %v1611 = vmul.f32 %v1578, %v1579
      %v1612 = vadd.f32 %v1515, %v1580
      %v1613 = vadd.f32 %v1516, %v1581
      %v1614 = vadd.f32 %v1517, %v1582
      %v1615 = vadd.f32 %v1518, %v1583
      %v1616 = vadd.f32 %v1519, %v1584
      %v1617 = vadd.f32 %v1520, %v1585
      %v1618 = vadd.f32 %v1521, %v1586
      %v1619 = vadd.f32 %v1522, %v1587
      %v1620 = vadd.f32 %v1523, %v1588
      %v1621 = vadd.f32 %v1524, %v1589
      %v1622 = vadd.f32 %v1525, %v1590
      %v1623 = vadd.f32 %v1526, %v1591
      %v1624 = vadd.f32 %v1527, %v1592
      %v1625 = vadd.f32 %v1528, %v1593
      %v1626 = vadd.f32 %v1529, %v1594
      %v1627 = vadd.f32 %v1530, %v1595
      %v1628 = vadd.f32 %v1531, %v1596
      %v1629 = vadd.f32 %v1532, %v1597
      %v1630 = vadd.f32 %v1533, %v1598
      %v1631 = vadd.f32 %v1534, %v1599
      %v1632 = vadd.f32 %v1535, %v1600
      %v1633 = vadd.f32 %v1536, %v1601
      %v1634 = vadd.f32 %v1537, %v1602
      %v1635 = vadd.f32 %v1538, %v1603
      %v1636 = vadd.f32 %v1539, %v1604
      %v1637 = vadd.f32 %v1540, %v1605
      %v1638 = vadd.f32 %v1541, %v1606
      %v1639 = vadd.f32 %v1542, %v1607
      %v1640 = vadd.f32 %v1543, %v1608
      %v1641 = vadd.f32 %v1544, %v1609
      %v1642 = vadd.f32 %v1545, %v1610
      %v1643 = vadd.f32 %v1546, %v1611
      %s1644 = scalar_lea.vmem %s203, 72
      %v1645 = vld [vmem:[%s1644] sm:$0xff]
      %v1646 = vld [vmem:[%s1644 + $0x8] sm:$0xff]
      %v1647 = vld [vmem:[%s1644 + $0x18] sm:$0xff]
      %v1648 = vld [vmem:[%s1644 + $0x20] sm:$0xff]
      %v1649 = vld [vmem:[%s1644 + $0x30] sm:$0xff]
      %v1650 = vld [vmem:[%s1644 + $0x38] sm:$0xff]
      %v1651 = vld [vmem:[%s1644 + $0x48] sm:$0xff]
      %v1652 = vld [vmem:[%s1644 + $0x50] sm:$0xff]
      %v1653 = vld [vmem:[%s1644 + $0x60] sm:$0xff]
      %v1654 = vld [vmem:[%s1644 + $0x68] sm:$0xff]
      %v1655 = vld [vmem:[%s1644 + $0x78] sm:$0xff]
      %v1656 = vld [vmem:[%s1644 + $0x80] sm:$0xff]
      %v1657 = vld [vmem:[%s1644 + $0x90] sm:$0xff]
      %v1658 = vld [vmem:[%s1644 + $0x98] sm:$0xff]
      %v1659 = vld [vmem:[%s1644 + $0xa8] sm:$0xff]
      %v1660 = vld [vmem:[%s1644 + $0xb0] sm:$0xff]
      %v1661 = vld [vmem:[%s1644 + $0xc0] sm:$0xff]
      %v1662 = vld [vmem:[%s1644 + $0xc8] sm:$0xff]
      %v1663 = vld [vmem:[%s1644 + $0xd8] sm:$0xff]
      %v1664 = vld [vmem:[%s1644 + $0xe0] sm:$0xff]
      %v1665 = vld [vmem:[%s1644 + $0xf0] sm:$0xff]
      %v1666 = vld [vmem:[%s1644 + $0xf8] sm:$0xff]
      %v1667 = vld [vmem:[%s1644 + $0x108] sm:$0xff]
      %v1668 = vld [vmem:[%s1644 + $0x110] sm:$0xff]
      %v1669 = vld [vmem:[%s1644 + $0x120] sm:$0xff]
      %v1670 = vld [vmem:[%s1644 + $0x128] sm:$0xff]
      %v1671 = vld [vmem:[%s1644 + $0x138] sm:$0xff]
      %v1672 = vld [vmem:[%s1644 + $0x140] sm:$0xff]
      %v1673 = vld [vmem:[%s1644 + $0x150] sm:$0xff]
      %v1674 = vld [vmem:[%s1644 + $0x158] sm:$0xff]
      %v1675 = vld [vmem:[%s1644 + $0x168] sm:$0xff]
      %v1676 = vld [vmem:[%s1644 + $0x170] sm:$0xff]
      %v1677 = vperm.slane %v216, 7
      %v1678 = vmul.f32 %v1645, %v1677
      %v1679 = vmul.f32 %v1646, %v1677
      %v1680 = vmul.f32 %v1647, %v1677
      %v1681 = vmul.f32 %v1648, %v1677
      %v1682 = vmul.f32 %v1649, %v1677
      %v1683 = vmul.f32 %v1650, %v1677
      %v1684 = vmul.f32 %v1651, %v1677
      %v1685 = vmul.f32 %v1652, %v1677
      %v1686 = vmul.f32 %v1653, %v1677
      %v1687 = vmul.f32 %v1654, %v1677
      %v1688 = vmul.f32 %v1655, %v1677
      %v1689 = vmul.f32 %v1656, %v1677
      %v1690 = vmul.f32 %v1657, %v1677
      %v1691 = vmul.f32 %v1658, %v1677
      %v1692 = vmul.f32 %v1659, %v1677
      %v1693 = vmul.f32 %v1660, %v1677
      %v1694 = vmul.f32 %v1661, %v1677
      %v1695 = vmul.f32 %v1662, %v1677
      %v1696 = vmul.f32 %v1663, %v1677
      %v1697 = vmul.f32 %v1664, %v1677
      %v1698 = vmul.f32 %v1665, %v1677
      %v1699 = vmul.f32 %v1666, %v1677
      %v1700 = vmul.f32 %v1667, %v1677
      %v1701 = vmul.f32 %v1668, %v1677
      %v1702 = vmul.f32 %v1669, %v1677
      %v1703 = vmul.f32 %v1670, %v1677
      %v1704 = vmul.f32 %v1671, %v1677
      %v1705 = vmul.f32 %v1672, %v1677
      %v1706 = vmul.f32 %v1673, %v1677
      %v1707 = vmul.f32 %v1674, %v1677
      %v1708 = vmul.f32 %v1675, %v1677
      %v1709 = vmul.f32 %v1676, %v1677
      %v1710 = vadd.f32 %v1612, %v1678
      %v1711 = vadd.f32 %v1613, %v1679
      %v1712 = vadd.f32 %v1614, %v1680
      %v1713 = vadd.f32 %v1615, %v1681
      %v1714 = vadd.f32 %v1616, %v1682
      %v1715 = vadd.f32 %v1617, %v1683
      %v1716 = vadd.f32 %v1618, %v1684
      %v1717 = vadd.f32 %v1619, %v1685
      %v1718 = vadd.f32 %v1620, %v1686
      %v1719 = vadd.f32 %v1621, %v1687
      %v1720 = vadd.f32 %v1622, %v1688
      %v1721 = vadd.f32 %v1623, %v1689
      %v1722 = vadd.f32 %v1624, %v1690
      %v1723 = vadd.f32 %v1625, %v1691
      %v1724 = vadd.f32 %v1626, %v1692
      %v1725 = vadd.f32 %v1627, %v1693
      %v1726 = vadd.f32 %v1628, %v1694
      %v1727 = vadd.f32 %v1629, %v1695
      %v1728 = vadd.f32 %v1630, %v1696
      %v1729 = vadd.f32 %v1631, %v1697
      %v1730 = vadd.f32 %v1632, %v1698
      %v1731 = vadd.f32 %v1633, %v1699
      %v1732 = vadd.f32 %v1634, %v1700
      %v1733 = vadd.f32 %v1635, %v1701
      %v1734 = vadd.f32 %v1636, %v1702
      %v1735 = vadd.f32 %v1637, %v1703
      %v1736 = vadd.f32 %v1638, %v1704
      %v1737 = vadd.f32 %v1639, %v1705
      %v1738 = vadd.f32 %v1640, %v1706
      %v1739 = vadd.f32 %v1641, %v1707
      %v1740 = vadd.f32 %v1642, %v1708
      %v1741 = vadd.f32 %v1643, %v1709
      %v1742 = vld [vmem:[%s1644 + $0x1] sm:$0xff]
      %v1743 = vld [vmem:[%s1644 + $0x9] sm:$0xff]
      %v1744 = vld [vmem:[%s1644 + $0x19] sm:$0xff]
      %v1745 = vld [vmem:[%s1644 + $0x21] sm:$0xff]
      %v1746 = vld [vmem:[%s1644 + $0x31] sm:$0xff]
      %v1747 = vld [vmem:[%s1644 + $0x39] sm:$0xff]
      %v1748 = vld [vmem:[%s1644 + $0x49] sm:$0xff]
      %v1749 = vld [vmem:[%s1644 + $0x51] sm:$0xff]
      %v1750 = vld [vmem:[%s1644 + $0x61] sm:$0xff]
      %v1751 = vld [vmem:[%s1644 + $0x69] sm:$0xff]
      %v1752 = vld [vmem:[%s1644 + $0x79] sm:$0xff]
      %v1753 = vld [vmem:[%s1644 + $0x81] sm:$0xff]
      %v1754 = vld [vmem:[%s1644 + $0x91] sm:$0xff]
      %v1755 = vld [vmem:[%s1644 + $0x99] sm:$0xff]
      %v1756 = vld [vmem:[%s1644 + $0xa9] sm:$0xff]
      %v1757 = vld [vmem:[%s1644 + $0xb1] sm:$0xff]
      %v1758 = vld [vmem:[%s1644 + $0xc1] sm:$0xff]
      %v1759 = vld [vmem:[%s1644 + $0xc9] sm:$0xff]
      %v1760 = vld [vmem:[%s1644 + $0xd9] sm:$0xff]
      %v1761 = vld [vmem:[%s1644 + $0xe1] sm:$0xff]
      %v1762 = vld [vmem:[%s1644 + $0xf1] sm:$0xff]
      %v1763 = vld [vmem:[%s1644 + $0xf9] sm:$0xff]
      %v1764 = vld [vmem:[%s1644 + $0x109] sm:$0xff]
      %v1765 = vld [vmem:[%s1644 + $0x111] sm:$0xff]
      %v1766 = vld [vmem:[%s1644 + $0x121] sm:$0xff]
      %v1767 = vld [vmem:[%s1644 + $0x129] sm:$0xff]
      %v1768 = vld [vmem:[%s1644 + $0x139] sm:$0xff]
      %v1769 = vld [vmem:[%s1644 + $0x141] sm:$0xff]
      %v1770 = vld [vmem:[%s1644 + $0x151] sm:$0xff]
      %v1771 = vld [vmem:[%s1644 + $0x159] sm:$0xff]
      %v1772 = vld [vmem:[%s1644 + $0x169] sm:$0xff]
      %v1773 = vld [vmem:[%s1644 + $0x171] sm:$0xff]
      %v1774 = vperm.slane %v217, 0
      %v1775 = vmul.f32 %v1742, %v1774
      %v1776 = vmul.f32 %v1743, %v1774
      %v1777 = vmul.f32 %v1744, %v1774
      %v1778 = vmul.f32 %v1745, %v1774
      %v1779 = vmul.f32 %v1746, %v1774
      %v1780 = vmul.f32 %v1747, %v1774
      %v1781 = vmul.f32 %v1748, %v1774
      %v1782 = vmul.f32 %v1749, %v1774
      %v1783 = vmul.f32 %v1750, %v1774
      %v1784 = vmul.f32 %v1751, %v1774
      %v1785 = vmul.f32 %v1752, %v1774
      %v1786 = vmul.f32 %v1753, %v1774
      %v1787 = vmul.f32 %v1754, %v1774
      %v1788 = vmul.f32 %v1755, %v1774
      %v1789 = vmul.f32 %v1756, %v1774
      %v1790 = vmul.f32 %v1757, %v1774
      %v1791 = vmul.f32 %v1758, %v1774
      %v1792 = vmul.f32 %v1759, %v1774
      %v1793 = vmul.f32 %v1760, %v1774
      %v1794 = vmul.f32 %v1761, %v1774
      %v1795 = vmul.f32 %v1762, %v1774
      %v1796 = vmul.f32 %v1763, %v1774
      %v1797 = vmul.f32 %v1764, %v1774
      %v1798 = vmul.f32 %v1765, %v1774
      %v1799 = vmul.f32 %v1766, %v1774
      %v1800 = vmul.f32 %v1767, %v1774
      %v1801 = vmul.f32 %v1768, %v1774
      %v1802 = vmul.f32 %v1769, %v1774
      %v1803 = vmul.f32 %v1770, %v1774
      %v1804 = vmul.f32 %v1771, %v1774
      %v1805 = vmul.f32 %v1772, %v1774
      %v1806 = vmul.f32 %v1773, %v1774
      %v1807 = vadd.f32 %v1710, %v1775
      %v1808 = vadd.f32 %v1711, %v1776
      %v1809 = vadd.f32 %v1712, %v1777
      %v1810 = vadd.f32 %v1713, %v1778
      %v1811 = vadd.f32 %v1714, %v1779
      %v1812 = vadd.f32 %v1715, %v1780
      %v1813 = vadd.f32 %v1716, %v1781
      %v1814 = vadd.f32 %v1717, %v1782
      %v1815 = vadd.f32 %v1718, %v1783
      %v1816 = vadd.f32 %v1719, %v1784
      %v1817 = vadd.f32 %v1720, %v1785
      %v1818 = vadd.f32 %v1721, %v1786
      %v1819 = vadd.f32 %v1722, %v1787
      %v1820 = vadd.f32 %v1723, %v1788
      %v1821 = vadd.f32 %v1724, %v1789
      %v1822 = vadd.f32 %v1725, %v1790
      %v1823 = vadd.f32 %v1726, %v1791
      %v1824 = vadd.f32 %v1727, %v1792
      %v1825 = vadd.f32 %v1728, %v1793
      %v1826 = vadd.f32 %v1729, %v1794
      %v1827 = vadd.f32 %v1730, %v1795
      %v1828 = vadd.f32 %v1731, %v1796
      %v1829 = vadd.f32 %v1732, %v1797
      %v1830 = vadd.f32 %v1733, %v1798
      %v1831 = vadd.f32 %v1734, %v1799
      %v1832 = vadd.f32 %v1735, %v1800
      %v1833 = vadd.f32 %v1736, %v1801
      %v1834 = vadd.f32 %v1737, %v1802
      %v1835 = vadd.f32 %v1738, %v1803
      %v1836 = vadd.f32 %v1739, %v1804
      %v1837 = vadd.f32 %v1740, %v1805
      %v1838 = vadd.f32 %v1741, %v1806
      %v1839 = vld [vmem:[%s1644 + $0x2] sm:$0xff]
      %v1840 = vld [vmem:[%s1644 + $0xa] sm:$0xff]
      %v1841 = vld [vmem:[%s1644 + $0x1a] sm:$0xff]
      %v1842 = vld [vmem:[%s1644 + $0x22] sm:$0xff]
      %v1843 = vld [vmem:[%s1644 + $0x32] sm:$0xff]
      %v1844 = vld [vmem:[%s1644 + $0x3a] sm:$0xff]
      %v1845 = vld [vmem:[%s1644 + $0x4a] sm:$0xff]
      %v1846 = vld [vmem:[%s1644 + $0x52] sm:$0xff]
      %v1847 = vld [vmem:[%s1644 + $0x62] sm:$0xff]
      %v1848 = vld [vmem:[%s1644 + $0x6a] sm:$0xff]
      %v1849 = vld [vmem:[%s1644 + $0x7a] sm:$0xff]
      %v1850 = vld [vmem:[%s1644 + $0x82] sm:$0xff]
      %v1851 = vld [vmem:[%s1644 + $0x92] sm:$0xff]
      %v1852 = vld [vmem:[%s1644 + $0x9a] sm:$0xff]
      %v1853 = vld [vmem:[%s1644 + $0xaa] sm:$0xff]
      %v1854 = vld [vmem:[%s1644 + $0xb2] sm:$0xff]
      %v1855 = vld [vmem:[%s1644 + $0xc2] sm:$0xff]
      %v1856 = vld [vmem:[%s1644 + $0xca] sm:$0xff]
      %v1857 = vld [vmem:[%s1644 + $0xda] sm:$0xff]
      %v1858 = vld [vmem:[%s1644 + $0xe2] sm:$0xff]
      %v1859 = vld [vmem:[%s1644 + $0xf2] sm:$0xff]
      %v1860 = vld [vmem:[%s1644 + $0xfa] sm:$0xff]
      %v1861 = vld [vmem:[%s1644 + $0x10a] sm:$0xff]
      %v1862 = vld [vmem:[%s1644 + $0x112] sm:$0xff]
      %v1863 = vld [vmem:[%s1644 + $0x122] sm:$0xff]
      %v1864 = vld [vmem:[%s1644 + $0x12a] sm:$0xff]
      %v1865 = vld [vmem:[%s1644 + $0x13a] sm:$0xff]
      %v1866 = vld [vmem:[%s1644 + $0x142] sm:$0xff]
      %v1867 = vld [vmem:[%s1644 + $0x152] sm:$0xff]
      %v1868 = vld [vmem:[%s1644 + $0x15a] sm:$0xff]
      %v1869 = vld [vmem:[%s1644 + $0x16a] sm:$0xff]
      %v1870 = vld [vmem:[%s1644 + $0x172] sm:$0xff]
      %v1871 = vperm.slane %v217, 1
      %v1872 = vmul.f32 %v1839, %v1871
      %v1873 = vmul.f32 %v1840, %v1871
      %v1874 = vmul.f32 %v1841, %v1871
      %v1875 = vmul.f32 %v1842, %v1871
      %v1876 = vmul.f32 %v1843, %v1871
      %v1877 = vmul.f32 %v1844, %v1871
      %v1878 = vmul.f32 %v1845, %v1871
      %v1879 = vmul.f32 %v1846, %v1871
      %v1880 = vmul.f32 %v1847, %v1871
      %v1881 = vmul.f32 %v1848, %v1871
      %v1882 = vmul.f32 %v1849, %v1871
      %v1883 = vmul.f32 %v1850, %v1871
      %v1884 = vmul.f32 %v1851, %v1871
      %v1885 = vmul.f32 %v1852, %v1871
      %v1886 = vmul.f32 %v1853, %v1871
      %v1887 = vmul.f32 %v1854, %v1871
      %v1888 = vmul.f32 %v1855, %v1871
      %v1889 = vmul.f32 %v1856, %v1871
      %v1890 = vmul.f32 %v1857, %v1871
      %v1891 = vmul.f32 %v1858, %v1871
      %v1892 = vmul.f32 %v1859, %v1871
      %v1893 = vmul.f32 %v1860, %v1871
      %v1894 = vmul.f32 %v1861, %v1871
      %v1895 = vmul.f32 %v1862, %v1871
      %v1896 = vmul.f32 %v1863, %v1871
      %v1897 = vmul.f32 %v1864, %v1871
      %v1898 = vmul.f32 %v1865, %v1871
      %v1899 = vmul.f32 %v1866, %v1871
      %v1900 = vmul.f32 %v1867, %v1871
      %v1901 = vmul.f32 %v1868, %v1871
      %v1902 = vmul.f32 %v1869, %v1871
      %v1903 = vmul.f32 %v1870, %v1871
      %v1904 = vadd.f32 %v1807, %v1872
      %v1905 = vadd.f32 %v1808, %v1873
      %v1906 = vadd.f32 %v1809, %v1874
      %v1907 = vadd.f32 %v1810, %v1875
      %v1908 = vadd.f32 %v1811, %v1876
      %v1909 = vadd.f32 %v1812, %v1877
      %v1910 = vadd.f32 %v1813, %v1878
      %v1911 = vadd.f32 %v1814, %v1879
      %v1912 = vadd.f32 %v1815, %v1880
      %v1913 = vadd.f32 %v1816, %v1881
      %v1914 = vadd.f32 %v1817, %v1882
      %v1915 = vadd.f32 %v1818, %v1883
      %v1916 = vadd.f32 %v1819, %v1884
      %v1917 = vadd.f32 %v1820, %v1885
      %v1918 = vadd.f32 %v1821, %v1886
      %v1919 = vadd.f32 %v1822, %v1887
      %v1920 = vadd.f32 %v1823, %v1888
      %v1921 = vadd.f32 %v1824, %v1889
      %v1922 = vadd.f32 %v1825, %v1890
      %v1923 = vadd.f32 %v1826, %v1891
      %v1924 = vadd.f32 %v1827, %v1892
      %v1925 = vadd.f32 %v1828, %v1893
      %v1926 = vadd.f32 %v1829, %v1894
      %v1927 = vadd.f32 %v1830, %v1895
      %v1928 = vadd.f32 %v1831, %v1896
      %v1929 = vadd.f32 %v1832, %v1897
      %v1930 = vadd.f32 %v1833, %v1898
      %v1931 = vadd.f32 %v1834, %v1899
      %v1932 = vadd.f32 %v1835, %v1900
      %v1933 = vadd.f32 %v1836, %v1901
      %v1934 = vadd.f32 %v1837, %v1902
      %v1935 = vadd.f32 %v1838, %v1903
      %v1936 = vld [vmem:[%s1644 + $0x3] sm:$0xff]
      %v1937 = vld [vmem:[%s1644 + $0xb] sm:$0xff]
      %v1938 = vld [vmem:[%s1644 + $0x1b] sm:$0xff]
      %v1939 = vld [vmem:[%s1644 + $0x23] sm:$0xff]
      %v1940 = vld [vmem:[%s1644 + $0x33] sm:$0xff]
      %v1941 = vld [vmem:[%s1644 + $0x3b] sm:$0xff]
      %v1942 = vld [vmem:[%s1644 + $0x4b] sm:$0xff]
      %v1943 = vld [vmem:[%s1644 + $0x53] sm:$0xff]
      %v1944 = vld [vmem:[%s1644 + $0x63] sm:$0xff]
      %v1945 = vld [vmem:[%s1644 + $0x6b] sm:$0xff]
      %v1946 = vld [vmem:[%s1644 + $0x7b] sm:$0xff]
      %v1947 = vld [vmem:[%s1644 + $0x83] sm:$0xff]
      %v1948 = vld [vmem:[%s1644 + $0x93] sm:$0xff]
      %v1949 = vld [vmem:[%s1644 + $0x9b] sm:$0xff]
      %v1950 = vld [vmem:[%s1644 + $0xab] sm:$0xff]
      %v1951 = vld [vmem:[%s1644 + $0xb3] sm:$0xff]
      %v1952 = vld [vmem:[%s1644 + $0xc3] sm:$0xff]
      %v1953 = vld [vmem:[%s1644 + $0xcb] sm:$0xff]
      %v1954 = vld [vmem:[%s1644 + $0xdb] sm:$0xff]
      %v1955 = vld [vmem:[%s1644 + $0xe3] sm:$0xff]
      %v1956 = vld [vmem:[%s1644 + $0xf3] sm:$0xff]
      %v1957 = vld [vmem:[%s1644 + $0xfb] sm:$0xff]
      %v1958 = vld [vmem:[%s1644 + $0x10b] sm:$0xff]
      %v1959 = vld [vmem:[%s1644 + $0x113] sm:$0xff]
      %v1960 = vld [vmem:[%s1644 + $0x123] sm:$0xff]
      %v1961 = vld [vmem:[%s1644 + $0x12b] sm:$0xff]
      %v1962 = vld [vmem:[%s1644 + $0x13b] sm:$0xff]
      %v1963 = vld [vmem:[%s1644 + $0x143] sm:$0xff]
      %v1964 = vld [vmem:[%s1644 + $0x153] sm:$0xff]
      %v1965 = vld [vmem:[%s1644 + $0x15b] sm:$0xff]
      %v1966 = vld [vmem:[%s1644 + $0x16b] sm:$0xff]
      %v1967 = vld [vmem:[%s1644 + $0x173] sm:$0xff]
      %v1968 = vperm.slane %v217, 2
      %v1969 = vmul.f32 %v1936, %v1968
      %v1970 = vmul.f32 %v1937, %v1968
      %v1971 = vmul.f32 %v1938, %v1968
      %v1972 = vmul.f32 %v1939, %v1968
      %v1973 = vmul.f32 %v1940, %v1968
      %v1974 = vmul.f32 %v1941, %v1968
      %v1975 = vmul.f32 %v1942, %v1968
      %v1976 = vmul.f32 %v1943, %v1968
      %v1977 = vmul.f32 %v1944, %v1968
      %v1978 = vmul.f32 %v1945, %v1968
      %v1979 = vmul.f32 %v1946, %v1968
      %v1980 = vmul.f32 %v1947, %v1968
      %v1981 = vmul.f32 %v1948, %v1968
      %v1982 = vmul.f32 %v1949, %v1968
      %v1983 = vmul.f32 %v1950, %v1968
      %v1984 = vmul.f32 %v1951, %v1968
      %v1985 = vmul.f32 %v1952, %v1968
      %v1986 = vmul.f32 %v1953, %v1968
      %v1987 = vmul.f32 %v1954, %v1968
      %v1988 = vmul.f32 %v1955, %v1968
      %v1989 = vmul.f32 %v1956, %v1968
      %v1990 = vmul.f32 %v1957, %v1968
      %v1991 = vmul.f32 %v1958, %v1968
      %v1992 = vmul.f32 %v1959, %v1968
      %v1993 = vmul.f32 %v1960, %v1968
      %v1994 = vmul.f32 %v1961, %v1968
      %v1995 = vmul.f32 %v1962, %v1968
      %v1996 = vmul.f32 %v1963, %v1968
      %v1997 = vmul.f32 %v1964, %v1968
      %v1998 = vmul.f32 %v1965, %v1968
      %v1999 = vmul.f32 %v1966, %v1968
      %v2000 = vmul.f32 %v1967, %v1968
      %v2001 = vadd.f32 %v1904, %v1969
      %v2002 = vadd.f32 %v1905, %v1970
      %v2003 = vadd.f32 %v1906, %v1971
      %v2004 = vadd.f32 %v1907, %v1972
      %v2005 = vadd.f32 %v1908, %v1973
      %v2006 = vadd.f32 %v1909, %v1974
      %v2007 = vadd.f32 %v1910, %v1975
      %v2008 = vadd.f32 %v1911, %v1976
      %v2009 = vadd.f32 %v1912, %v1977
      %v2010 = vadd.f32 %v1913, %v1978
      %v2011 = vadd.f32 %v1914, %v1979
      %v2012 = vadd.f32 %v1915, %v1980
      %v2013 = vadd.f32 %v1916, %v1981
      %v2014 = vadd.f32 %v1917, %v1982
      %v2015 = vadd.f32 %v1918, %v1983
      %v2016 = vadd.f32 %v1919, %v1984
      %v2017 = vadd.f32 %v1920, %v1985
      %v2018 = vadd.f32 %v1921, %v1986
      %v2019 = vadd.f32 %v1922, %v1987
      %v2020 = vadd.f32 %v1923, %v1988
      %v2021 = vadd.f32 %v1924, %v1989
      %v2022 = vadd.f32 %v1925, %v1990
      %v2023 = vadd.f32 %v1926, %v1991
      %v2024 = vadd.f32 %v1927, %v1992
      %v2025 = vadd.f32 %v1928, %v1993
      %v2026 = vadd.f32 %v1929, %v1994
      %v2027 = vadd.f32 %v1930, %v1995
      %v2028 = vadd.f32 %v1931, %v1996
      %v2029 = vadd.f32 %v1932, %v1997
      %v2030 = vadd.f32 %v1933, %v1998
      %v2031 = vadd.f32 %v1934, %v1999
      %v2032 = vadd.f32 %v1935, %v2000
      %v2033 = vld [vmem:[%s1644 + $0x4] sm:$0xff]
      %v2034 = vld [vmem:[%s1644 + $0xc] sm:$0xff]
      %v2035 = vld [vmem:[%s1644 + $0x1c] sm:$0xff]
      %v2036 = vld [vmem:[%s1644 + $0x24] sm:$0xff]
      %v2037 = vld [vmem:[%s1644 + $0x34] sm:$0xff]
      %v2038 = vld [vmem:[%s1644 + $0x3c] sm:$0xff]
      %v2039 = vld [vmem:[%s1644 + $0x4c] sm:$0xff]
      %v2040 = vld [vmem:[%s1644 + $0x54] sm:$0xff]
      %v2041 = vld [vmem:[%s1644 + $0x64] sm:$0xff]
      %v2042 = vld [vmem:[%s1644 + $0x6c] sm:$0xff]
      %v2043 = vld [vmem:[%s1644 + $0x7c] sm:$0xff]
      %v2044 = vld [vmem:[%s1644 + $0x84] sm:$0xff]
      %v2045 = vld [vmem:[%s1644 + $0x94] sm:$0xff]
      %v2046 = vld [vmem:[%s1644 + $0x9c] sm:$0xff]
      %v2047 = vld [vmem:[%s1644 + $0xac] sm:$0xff]
      %v2048 = vld [vmem:[%s1644 + $0xb4] sm:$0xff]
      %v2049 = vld [vmem:[%s1644 + $0xc4] sm:$0xff]
      %v2050 = vld [vmem:[%s1644 + $0xcc] sm:$0xff]
      %v2051 = vld [vmem:[%s1644 + $0xdc] sm:$0xff]
      %v2052 = vld [vmem:[%s1644 + $0xe4] sm:$0xff]
      %v2053 = vld [vmem:[%s1644 + $0xf4] sm:$0xff]
      %v2054 = vld [vmem:[%s1644 + $0xfc] sm:$0xff]
      %v2055 = vld [vmem:[%s1644 + $0x10c] sm:$0xff]
      %v2056 = vld [vmem:[%s1644 + $0x114] sm:$0xff]
      %v2057 = vld [vmem:[%s1644 + $0x124] sm:$0xff]
      %v2058 = vld [vmem:[%s1644 + $0x12c] sm:$0xff]
      %v2059 = vld [vmem:[%s1644 + $0x13c] sm:$0xff]
      %v2060 = vld [vmem:[%s1644 + $0x144] sm:$0xff]
      %v2061 = vld [vmem:[%s1644 + $0x154] sm:$0xff]
      %v2062 = vld [vmem:[%s1644 + $0x15c] sm:$0xff]
      %v2063 = vld [vmem:[%s1644 + $0x16c] sm:$0xff]
      %v2064 = vld [vmem:[%s1644 + $0x174] sm:$0xff]
      %v2065 = vperm.slane %v217, 3
      %v2066 = vmul.f32 %v2033, %v2065
      %v2067 = vmul.f32 %v2034, %v2065
      %v2068 = vmul.f32 %v2035, %v2065
      %v2069 = vmul.f32 %v2036, %v2065
      %v2070 = vmul.f32 %v2037, %v2065
      %v2071 = vmul.f32 %v2038, %v2065
      %v2072 = vmul.f32 %v2039, %v2065
      %v2073 = vmul.f32 %v2040, %v2065
      %v2074 = vmul.f32 %v2041, %v2065
      %v2075 = vmul.f32 %v2042, %v2065
      %v2076 = vmul.f32 %v2043, %v2065
      %v2077 = vmul.f32 %v2044, %v2065
      %v2078 = vmul.f32 %v2045, %v2065
      %v2079 = vmul.f32 %v2046, %v2065
      %v2080 = vmul.f32 %v2047, %v2065
      %v2081 = vmul.f32 %v2048, %v2065
      %v2082 = vmul.f32 %v2049, %v2065
      %v2083 = vmul.f32 %v2050, %v2065
      %v2084 = vmul.f32 %v2051, %v2065
      %v2085 = vmul.f32 %v2052, %v2065
      %v2086 = vmul.f32 %v2053, %v2065
      %v2087 = vmul.f32 %v2054, %v2065
      %v2088 = vmul.f32 %v2055, %v2065
      %v2089 = vmul.f32 %v2056, %v2065
      %v2090 = vmul.f32 %v2057, %v2065
      %v2091 = vmul.f32 %v2058, %v2065
      %v2092 = vmul.f32 %v2059, %v2065
      %v2093 = vmul.f32 %v2060, %v2065
      %v2094 = vmul.f32 %v2061, %v2065
      %v2095 = vmul.f32 %v2062, %v2065
      %v2096 = vmul.f32 %v2063, %v2065
      %v2097 = vmul.f32 %v2064, %v2065
      %v2098 = vadd.f32 %v2001, %v2066
      %v2099 = vadd.f32 %v2002, %v2067
      %v2100 = vadd.f32 %v2003, %v2068
      %v2101 = vadd.f32 %v2004, %v2069
      %v2102 = vadd.f32 %v2005, %v2070
      %v2103 = vadd.f32 %v2006, %v2071
      %v2104 = vadd.f32 %v2007, %v2072
      %v2105 = vadd.f32 %v2008, %v2073
      %v2106 = vadd.f32 %v2009, %v2074
      %v2107 = vadd.f32 %v2010, %v2075
      %v2108 = vadd.f32 %v2011, %v2076
      %v2109 = vadd.f32 %v2012, %v2077
      %v2110 = vadd.f32 %v2013, %v2078
      %v2111 = vadd.f32 %v2014, %v2079
      %v2112 = vadd.f32 %v2015, %v2080
      %v2113 = vadd.f32 %v2016, %v2081
      %v2114 = vadd.f32 %v2017, %v2082
      %v2115 = vadd.f32 %v2018, %v2083
      %v2116 = vadd.f32 %v2019, %v2084
      %v2117 = vadd.f32 %v2020, %v2085
      %v2118 = vadd.f32 %v2021, %v2086
      %v2119 = vadd.f32 %v2022, %v2087
      %v2120 = vadd.f32 %v2023, %v2088
      %v2121 = vadd.f32 %v2024, %v2089
      %v2122 = vadd.f32 %v2025, %v2090
      %v2123 = vadd.f32 %v2026, %v2091
      %v2124 = vadd.f32 %v2027, %v2092
      %v2125 = vadd.f32 %v2028, %v2093
      %v2126 = vadd.f32 %v2029, %v2094
      %v2127 = vadd.f32 %v2030, %v2095
      %v2128 = vadd.f32 %v2031, %v2096
      %v2129 = vadd.f32 %v2032, %v2097
      %s2130 = scalar_lea.vmem %s203, 96
      %v2131 = vld [vmem:[%s2130] sm:$0xff]
      %v2132 = vld [vmem:[%s2130 + $0x8] sm:$0xff]
      %v2133 = vld [vmem:[%s2130 + $0x18] sm:$0xff]
      %v2134 = vld [vmem:[%s2130 + $0x20] sm:$0xff]
      %v2135 = vld [vmem:[%s2130 + $0x30] sm:$0xff]
      %v2136 = vld [vmem:[%s2130 + $0x38] sm:$0xff]
      %v2137 = vld [vmem:[%s2130 + $0x48] sm:$0xff]
      %v2138 = vld [vmem:[%s2130 + $0x50] sm:$0xff]
      %v2139 = vld [vmem:[%s2130 + $0x60] sm:$0xff]
      %v2140 = vld [vmem:[%s2130 + $0x68] sm:$0xff]
      %v2141 = vld [vmem:[%s2130 + $0x78] sm:$0xff]
      %v2142 = vld [vmem:[%s2130 + $0x80] sm:$0xff]
      %v2143 = vld [vmem:[%s2130 + $0x90] sm:$0xff]
      %v2144 = vld [vmem:[%s2130 + $0x98] sm:$0xff]
      %v2145 = vld [vmem:[%s2130 + $0xa8] sm:$0xff]
      %v2146 = vld [vmem:[%s2130 + $0xb0] sm:$0xff]
      %v2147 = vld [vmem:[%s2130 + $0xc0] sm:$0xff]
      %v2148 = vld [vmem:[%s2130 + $0xc8] sm:$0xff]
      %v2149 = vld [vmem:[%s2130 + $0xd8] sm:$0xff]
      %v2150 = vld [vmem:[%s2130 + $0xe0] sm:$0xff]
      %v2151 = vld [vmem:[%s2130 + $0xf0] sm:$0xff]
      %v2152 = vld [vmem:[%s2130 + $0xf8] sm:$0xff]
      %v2153 = vld [vmem:[%s2130 + $0x108] sm:$0xff]
      %v2154 = vld [vmem:[%s2130 + $0x110] sm:$0xff]
      %v2155 = vld [vmem:[%s2130 + $0x120] sm:$0xff]
      %v2156 = vld [vmem:[%s2130 + $0x128] sm:$0xff]
      %v2157 = vld [vmem:[%s2130 + $0x138] sm:$0xff]
      %v2158 = vld [vmem:[%s2130 + $0x140] sm:$0xff]
      %v2159 = vld [vmem:[%s2130 + $0x150] sm:$0xff]
      %v2160 = vld [vmem:[%s2130 + $0x158] sm:$0xff]
      %v2161 = vld [vmem:[%s2130 + $0x168] sm:$0xff]
      %v2162 = vld [vmem:[%s2130 + $0x170] sm:$0xff]
      %v2163 = vperm.slane %v217, 4
      %v2164 = vmul.f32 %v2131, %v2163
      %v2165 = vmul.f32 %v2132, %v2163
      %v2166 = vmul.f32 %v2133, %v2163
      %v2167 = vmul.f32 %v2134, %v2163
      %v2168 = vmul.f32 %v2135, %v2163
      %v2169 = vmul.f32 %v2136, %v2163
      %v2170 = vmul.f32 %v2137, %v2163
      %v2171 = vmul.f32 %v2138, %v2163
      %v2172 = vmul.f32 %v2139, %v2163
      %v2173 = vmul.f32 %v2140, %v2163
      %v2174 = vmul.f32 %v2141, %v2163
      %v2175 = vmul.f32 %v2142, %v2163
      %v2176 = vmul.f32 %v2143, %v2163
      %v2177 = vmul.f32 %v2144, %v2163
      %v2178 = vmul.f32 %v2145, %v2163
      %v2179 = vmul.f32 %v2146, %v2163
      %v2180 = vmul.f32 %v2147, %v2163
      %v2181 = vmul.f32 %v2148, %v2163
      %v2182 = vmul.f32 %v2149, %v2163
      %v2183 = vmul.f32 %v2150, %v2163
      %v2184 = vmul.f32 %v2151, %v2163
      %v2185 = vmul.f32 %v2152, %v2163
      %v2186 = vmul.f32 %v2153, %v2163
      %v2187 = vmul.f32 %v2154, %v2163
      %v2188 = vmul.f32 %v2155, %v2163
      %v2189 = vmul.f32 %v2156, %v2163
      %v2190 = vmul.f32 %v2157, %v2163
      %v2191 = vmul.f32 %v2158, %v2163
      %v2192 = vmul.f32 %v2159, %v2163
      %v2193 = vmul.f32 %v2160, %v2163
      %v2194 = vmul.f32 %v2161, %v2163
      %v2195 = vmul.f32 %v2162, %v2163
      %v2196 = vadd.f32 %v2098, %v2164
      %v2197 = vadd.f32 %v2099, %v2165
      %v2198 = vadd.f32 %v2100, %v2166
      %v2199 = vadd.f32 %v2101, %v2167
      %v2200 = vadd.f32 %v2102, %v2168
      %v2201 = vadd.f32 %v2103, %v2169
      %v2202 = vadd.f32 %v2104, %v2170
      %v2203 = vadd.f32 %v2105, %v2171
      %v2204 = vadd.f32 %v2106, %v2172
      %v2205 = vadd.f32 %v2107, %v2173
      %v2206 = vadd.f32 %v2108, %v2174
      %v2207 = vadd.f32 %v2109, %v2175
      %v2208 = vadd.f32 %v2110, %v2176
      %v2209 = vadd.f32 %v2111, %v2177
      %v2210 = vadd.f32 %v2112, %v2178
      %v2211 = vadd.f32 %v2113, %v2179
      %v2212 = vadd.f32 %v2114, %v2180
      %v2213 = vadd.f32 %v2115, %v2181
      %v2214 = vadd.f32 %v2116, %v2182
      %v2215 = vadd.f32 %v2117, %v2183
      %v2216 = vadd.f32 %v2118, %v2184
      %v2217 = vadd.f32 %v2119, %v2185
      %v2218 = vadd.f32 %v2120, %v2186
      %v2219 = vadd.f32 %v2121, %v2187
      %v2220 = vadd.f32 %v2122, %v2188
      %v2221 = vadd.f32 %v2123, %v2189
      %v2222 = vadd.f32 %v2124, %v2190
      %v2223 = vadd.f32 %v2125, %v2191
      %v2224 = vadd.f32 %v2126, %v2192
      %v2225 = vadd.f32 %v2127, %v2193
      %v2226 = vadd.f32 %v2128, %v2194
      %v2227 = vadd.f32 %v2129, %v2195
      %v2228 = vld [vmem:[%s2130 + $0x1] sm:$0xff]
      %v2229 = vld [vmem:[%s2130 + $0x9] sm:$0xff]
      %v2230 = vld [vmem:[%s2130 + $0x19] sm:$0xff]
      %v2231 = vld [vmem:[%s2130 + $0x21] sm:$0xff]
      %v2232 = vld [vmem:[%s2130 + $0x31] sm:$0xff]
      %v2233 = vld [vmem:[%s2130 + $0x39] sm:$0xff]
      %v2234 = vld [vmem:[%s2130 + $0x49] sm:$0xff]
      %v2235 = vld [vmem:[%s2130 + $0x51] sm:$0xff]
      %v2236 = vld [vmem:[%s2130 + $0x61] sm:$0xff]
      %v2237 = vld [vmem:[%s2130 + $0x69] sm:$0xff]
      %v2238 = vld [vmem:[%s2130 + $0x79] sm:$0xff]
      %v2239 = vld [vmem:[%s2130 + $0x81] sm:$0xff]
      %v2240 = vld [vmem:[%s2130 + $0x91] sm:$0xff]
      %v2241 = vld [vmem:[%s2130 + $0x99] sm:$0xff]
      %v2242 = vld [vmem:[%s2130 + $0xa9] sm:$0xff]
      %v2243 = vld [vmem:[%s2130 + $0xb1] sm:$0xff]
      %v2244 = vld [vmem:[%s2130 + $0xc1] sm:$0xff]
      %v2245 = vld [vmem:[%s2130 + $0xc9] sm:$0xff]
      %v2246 = vld [vmem:[%s2130 + $0xd9] sm:$0xff]
      %v2247 = vld [vmem:[%s2130 + $0xe1] sm:$0xff]
      %v2248 = vld [vmem:[%s2130 + $0xf1] sm:$0xff]
      %v2249 = vld [vmem:[%s2130 + $0xf9] sm:$0xff]
      %v2250 = vld [vmem:[%s2130 + $0x109] sm:$0xff]
      %v2251 = vld [vmem:[%s2130 + $0x111] sm:$0xff]
      %v2252 = vld [vmem:[%s2130 + $0x121] sm:$0xff]
      %v2253 = vld [vmem:[%s2130 + $0x129] sm:$0xff]
      %v2254 = vld [vmem:[%s2130 + $0x139] sm:$0xff]
      %v2255 = vld [vmem:[%s2130 + $0x141] sm:$0xff]
      %v2256 = vld [vmem:[%s2130 + $0x151] sm:$0xff]
      %v2257 = vld [vmem:[%s2130 + $0x159] sm:$0xff]
      %v2258 = vld [vmem:[%s2130 + $0x169] sm:$0xff]
      %v2259 = vld [vmem:[%s2130 + $0x171] sm:$0xff]
      %v2260 = vperm.slane %v217, 5
      %v2261 = vmul.f32 %v2228, %v2260
      %v2262 = vmul.f32 %v2229, %v2260
      %v2263 = vmul.f32 %v2230, %v2260
      %v2264 = vmul.f32 %v2231, %v2260
      %v2265 = vmul.f32 %v2232, %v2260
      %v2266 = vmul.f32 %v2233, %v2260
      %v2267 = vmul.f32 %v2234, %v2260
      %v2268 = vmul.f32 %v2235, %v2260
      %v2269 = vmul.f32 %v2236, %v2260
      %v2270 = vmul.f32 %v2237, %v2260
      %v2271 = vmul.f32 %v2238, %v2260
      %v2272 = vmul.f32 %v2239, %v2260
      %v2273 = vmul.f32 %v2240, %v2260
      %v2274 = vmul.f32 %v2241, %v2260
      %v2275 = vmul.f32 %v2242, %v2260
      %v2276 = vmul.f32 %v2243, %v2260
      %v2277 = vmul.f32 %v2244, %v2260
      %v2278 = vmul.f32 %v2245, %v2260
      %v2279 = vmul.f32 %v2246, %v2260
      %v2280 = vmul.f32 %v2247, %v2260
      %v2281 = vmul.f32 %v2248, %v2260
      %v2282 = vmul.f32 %v2249, %v2260
      %v2283 = vmul.f32 %v2250, %v2260
      %v2284 = vmul.f32 %v2251, %v2260
      %v2285 = vmul.f32 %v2252, %v2260
      %v2286 = vmul.f32 %v2253, %v2260
      %v2287 = vmul.f32 %v2254, %v2260
      %v2288 = vmul.f32 %v2255, %v2260
      %v2289 = vmul.f32 %v2256, %v2260
      %v2290 = vmul.f32 %v2257, %v2260
      %v2291 = vmul.f32 %v2258, %v2260
      %v2292 = vmul.f32 %v2259, %v2260
      %v2293 = vadd.f32 %v2196, %v2261
      %v2294 = vadd.f32 %v2197, %v2262
      %v2295 = vadd.f32 %v2198, %v2263
      %v2296 = vadd.f32 %v2199, %v2264
      %v2297 = vadd.f32 %v2200, %v2265
      %v2298 = vadd.f32 %v2201, %v2266
      %v2299 = vadd.f32 %v2202, %v2267
      %v2300 = vadd.f32 %v2203, %v2268
      %v2301 = vadd.f32 %v2204, %v2269
      %v2302 = vadd.f32 %v2205, %v2270
      %v2303 = vadd.f32 %v2206, %v2271
      %v2304 = vadd.f32 %v2207, %v2272
      %v2305 = vadd.f32 %v2208, %v2273
      %v2306 = vadd.f32 %v2209, %v2274
      %v2307 = vadd.f32 %v2210, %v2275
      %v2308 = vadd.f32 %v2211, %v2276
      %v2309 = vadd.f32 %v2212, %v2277
      %v2310 = vadd.f32 %v2213, %v2278
      %v2311 = vadd.f32 %v2214, %v2279
      %v2312 = vadd.f32 %v2215, %v2280
      %v2313 = vadd.f32 %v2216, %v2281
      %v2314 = vadd.f32 %v2217, %v2282
      %v2315 = vadd.f32 %v2218, %v2283
      %v2316 = vadd.f32 %v2219, %v2284
      %v2317 = vadd.f32 %v2220, %v2285
      %v2318 = vadd.f32 %v2221, %v2286
      %v2319 = vadd.f32 %v2222, %v2287
      %v2320 = vadd.f32 %v2223, %v2288
      %v2321 = vadd.f32 %v2224, %v2289
      %v2322 = vadd.f32 %v2225, %v2290
      %v2323 = vadd.f32 %v2226, %v2291
      %v2324 = vadd.f32 %v2227, %v2292
      %v2325 = vld [vmem:[%s2130 + $0x2] sm:$0xff]
      %v2326 = vld [vmem:[%s2130 + $0xa] sm:$0xff]
      %v2327 = vld [vmem:[%s2130 + $0x1a] sm:$0xff]
      %v2328 = vld [vmem:[%s2130 + $0x22] sm:$0xff]
      %v2329 = vld [vmem:[%s2130 + $0x32] sm:$0xff]
      %v2330 = vld [vmem:[%s2130 + $0x3a] sm:$0xff]
      %v2331 = vld [vmem:[%s2130 + $0x4a] sm:$0xff]
      %v2332 = vld [vmem:[%s2130 + $0x52] sm:$0xff]
      %v2333 = vld [vmem:[%s2130 + $0x62] sm:$0xff]
      %v2334 = vld [vmem:[%s2130 + $0x6a] sm:$0xff]
      %v2335 = vld [vmem:[%s2130 + $0x7a] sm:$0xff]
      %v2336 = vld [vmem:[%s2130 + $0x82] sm:$0xff]
      %v2337 = vld [vmem:[%s2130 + $0x92] sm:$0xff]
      %v2338 = vld [vmem:[%s2130 + $0x9a] sm:$0xff]
      %v2339 = vld [vmem:[%s2130 + $0xaa] sm:$0xff]
      %v2340 = vld [vmem:[%s2130 + $0xb2] sm:$0xff]
      %v2341 = vld [vmem:[%s2130 + $0xc2] sm:$0xff]
      %v2342 = vld [vmem:[%s2130 + $0xca] sm:$0xff]
      %v2343 = vld [vmem:[%s2130 + $0xda] sm:$0xff]
      %v2344 = vld [vmem:[%s2130 + $0xe2] sm:$0xff]
      %v2345 = vld [vmem:[%s2130 + $0xf2] sm:$0xff]
      %v2346 = vld [vmem:[%s2130 + $0xfa] sm:$0xff]
      %v2347 = vld [vmem:[%s2130 + $0x10a] sm:$0xff]
      %v2348 = vld [vmem:[%s2130 + $0x112] sm:$0xff]
      %v2349 = vld [vmem:[%s2130 + $0x122] sm:$0xff]
      %v2350 = vld [vmem:[%s2130 + $0x12a] sm:$0xff]
      %v2351 = vld [vmem:[%s2130 + $0x13a] sm:$0xff]
      %v2352 = vld [vmem:[%s2130 + $0x142] sm:$0xff]
      %v2353 = vld [vmem:[%s2130 + $0x152] sm:$0xff]
      %v2354 = vld [vmem:[%s2130 + $0x15a] sm:$0xff]
      %v2355 = vld [vmem:[%s2130 + $0x16a] sm:$0xff]
      %v2356 = vld [vmem:[%s2130 + $0x172] sm:$0xff]
      %v2357 = vperm.slane %v217, 6
      %v2358 = vmul.f32 %v2325, %v2357
      %v2359 = vmul.f32 %v2326, %v2357
      %v2360 = vmul.f32 %v2327, %v2357
      %v2361 = vmul.f32 %v2328, %v2357
      %v2362 = vmul.f32 %v2329, %v2357
      %v2363 = vmul.f32 %v2330, %v2357
      %v2364 = vmul.f32 %v2331, %v2357
      %v2365 = vmul.f32 %v2332, %v2357
      %v2366 = vmul.f32 %v2333, %v2357
      %v2367 = vmul.f32 %v2334, %v2357
      %v2368 = vmul.f32 %v2335, %v2357
      %v2369 = vmul.f32 %v2336, %v2357
      %v2370 = vmul.f32 %v2337, %v2357
      %v2371 = vmul.f32 %v2338, %v2357
      %v2372 = vmul.f32 %v2339, %v2357
      %v2373 = vmul.f32 %v2340, %v2357
      %v2374 = vmul.f32 %v2341, %v2357
      %v2375 = vmul.f32 %v2342, %v2357
      %v2376 = vmul.f32 %v2343, %v2357
      %v2377 = vmul.f32 %v2344, %v2357
      %v2378 = vmul.f32 %v2345, %v2357
      %v2379 = vmul.f32 %v2346, %v2357
      %v2380 = vmul.f32 %v2347, %v2357
      %v2381 = vmul.f32 %v2348, %v2357
      %v2382 = vmul.f32 %v2349, %v2357
      %v2383 = vmul.f32 %v2350, %v2357
      %v2384 = vmul.f32 %v2351, %v2357
      %v2385 = vmul.f32 %v2352, %v2357
      %v2386 = vmul.f32 %v2353, %v2357
      %v2387 = vmul.f32 %v2354, %v2357
      %v2388 = vmul.f32 %v2355, %v2357
      %v2389 = vmul.f32 %v2356, %v2357
      %v2390 = vadd.f32 %v2293, %v2358
      %v2391 = vadd.f32 %v2294, %v2359
      %v2392 = vadd.f32 %v2295, %v2360
      %v2393 = vadd.f32 %v2296, %v2361
      %v2394 = vadd.f32 %v2297, %v2362
      %v2395 = vadd.f32 %v2298, %v2363
      %v2396 = vadd.f32 %v2299, %v2364
      %v2397 = vadd.f32 %v2300, %v2365
      %v2398 = vadd.f32 %v2301, %v2366
      %v2399 = vadd.f32 %v2302, %v2367
      %v2400 = vadd.f32 %v2303, %v2368
      %v2401 = vadd.f32 %v2304, %v2369
      %v2402 = vadd.f32 %v2305, %v2370
      %v2403 = vadd.f32 %v2306, %v2371
      %v2404 = vadd.f32 %v2307, %v2372
      %v2405 = vadd.f32 %v2308, %v2373
      %v2406 = vadd.f32 %v2309, %v2374
      %v2407 = vadd.f32 %v2310, %v2375
      %v2408 = vadd.f32 %v2311, %v2376
      %v2409 = vadd.f32 %v2312, %v2377
      %v2410 = vadd.f32 %v2313, %v2378
      %v2411 = vadd.f32 %v2314, %v2379
      %v2412 = vadd.f32 %v2315, %v2380
      %v2413 = vadd.f32 %v2316, %v2381
      %v2414 = vadd.f32 %v2317, %v2382
      %v2415 = vadd.f32 %v2318, %v2383
      %v2416 = vadd.f32 %v2319, %v2384
      %v2417 = vadd.f32 %v2320, %v2385
      %v2418 = vadd.f32 %v2321, %v2386
      %v2419 = vadd.f32 %v2322, %v2387
      %v2420 = vadd.f32 %v2323, %v2388
      %v2421 = vadd.f32 %v2324, %v2389
      %v2422 = vld [vmem:[%s2130 + $0x3] sm:$0xff]
      %v2423 = vld [vmem:[%s2130 + $0xb] sm:$0xff]
      %v2424 = vld [vmem:[%s2130 + $0x1b] sm:$0xff]
      %v2425 = vld [vmem:[%s2130 + $0x23] sm:$0xff]
      %v2426 = vld [vmem:[%s2130 + $0x33] sm:$0xff]
      %v2427 = vld [vmem:[%s2130 + $0x3b] sm:$0xff]
      %v2428 = vld [vmem:[%s2130 + $0x4b] sm:$0xff]
      %v2429 = vld [vmem:[%s2130 + $0x53] sm:$0xff]
      %v2430 = vld [vmem:[%s2130 + $0x63] sm:$0xff]
      %v2431 = vld [vmem:[%s2130 + $0x6b] sm:$0xff]
      %v2432 = vld [vmem:[%s2130 + $0x7b] sm:$0xff]
      %v2433 = vld [vmem:[%s2130 + $0x83] sm:$0xff]
      %v2434 = vld [vmem:[%s2130 + $0x93] sm:$0xff]
      %v2435 = vld [vmem:[%s2130 + $0x9b] sm:$0xff]
      %v2436 = vld [vmem:[%s2130 + $0xab] sm:$0xff]
      %v2437 = vld [vmem:[%s2130 + $0xb3] sm:$0xff]
      %v2438 = vld [vmem:[%s2130 + $0xc3] sm:$0xff]
      %v2439 = vld [vmem:[%s2130 + $0xcb] sm:$0xff]
      %v2440 = vld [vmem:[%s2130 + $0xdb] sm:$0xff]
      %v2441 = vld [vmem:[%s2130 + $0xe3] sm:$0xff]
      %v2442 = vld [vmem:[%s2130 + $0xf3] sm:$0xff]
      %v2443 = vld [vmem:[%s2130 + $0xfb] sm:$0xff]
      %v2444 = vld [vmem:[%s2130 + $0x10b] sm:$0xff]
      %v2445 = vld [vmem:[%s2130 + $0x113] sm:$0xff]
      %v2446 = vld [vmem:[%s2130 + $0x123] sm:$0xff]
      %v2447 = vld [vmem:[%s2130 + $0x12b] sm:$0xff]
      %v2448 = vld [vmem:[%s2130 + $0x13b] sm:$0xff]
      %v2449 = vld [vmem:[%s2130 + $0x143] sm:$0xff]
      %v2450 = vld [vmem:[%s2130 + $0x153] sm:$0xff]
      %v2451 = vld [vmem:[%s2130 + $0x15b] sm:$0xff]
      %v2452 = vld [vmem:[%s2130 + $0x16b] sm:$0xff]
      %v2453 = vld [vmem:[%s2130 + $0x173] sm:$0xff]
      %v2454 = vperm.slane %v217, 7
      %v2455 = vmul.f32 %v2422, %v2454
      %v2456 = vmul.f32 %v2423, %v2454
      %v2457 = vmul.f32 %v2424, %v2454
      %v2458 = vmul.f32 %v2425, %v2454
      %v2459 = vmul.f32 %v2426, %v2454
      %v2460 = vmul.f32 %v2427, %v2454
      %v2461 = vmul.f32 %v2428, %v2454
      %v2462 = vmul.f32 %v2429, %v2454
      %v2463 = vmul.f32 %v2430, %v2454
      %v2464 = vmul.f32 %v2431, %v2454
      %v2465 = vmul.f32 %v2432, %v2454
      %v2466 = vmul.f32 %v2433, %v2454
      %v2467 = vmul.f32 %v2434, %v2454
      %v2468 = vmul.f32 %v2435, %v2454
      %v2469 = vmul.f32 %v2436, %v2454
      %v2470 = vmul.f32 %v2437, %v2454
      %v2471 = vmul.f32 %v2438, %v2454
      %v2472 = vmul.f32 %v2439, %v2454
      %v2473 = vmul.f32 %v2440, %v2454
      %v2474 = vmul.f32 %v2441, %v2454
      %v2475 = vmul.f32 %v2442, %v2454
      %v2476 = vmul.f32 %v2443, %v2454
      %v2477 = vmul.f32 %v2444, %v2454
      %v2478 = vmul.f32 %v2445, %v2454
      %v2479 = vmul.f32 %v2446, %v2454
      %v2480 = vmul.f32 %v2447, %v2454
      %v2481 = vmul.f32 %v2448, %v2454
      %v2482 = vmul.f32 %v2449, %v2454
      %v2483 = vmul.f32 %v2450, %v2454
      %v2484 = vmul.f32 %v2451, %v2454
      %v2485 = vmul.f32 %v2452, %v2454
      %v2486 = vmul.f32 %v2453, %v2454
      %v2487 = vadd.f32 %v2390, %v2455
      %v2488 = vadd.f32 %v2391, %v2456
      %v2489 = vadd.f32 %v2392, %v2457
      %v2490 = vadd.f32 %v2393, %v2458
      %v2491 = vadd.f32 %v2394, %v2459
      %v2492 = vadd.f32 %v2395, %v2460
      %v2493 = vadd.f32 %v2396, %v2461
      %v2494 = vadd.f32 %v2397, %v2462
      %v2495 = vadd.f32 %v2398, %v2463
      %v2496 = vadd.f32 %v2399, %v2464
      %v2497 = vadd.f32 %v2400, %v2465
      %v2498 = vadd.f32 %v2401, %v2466
      %v2499 = vadd.f32 %v2402, %v2467
      %v2500 = vadd.f32 %v2403, %v2468
      %v2501 = vadd.f32 %v2404, %v2469
      %v2502 = vadd.f32 %v2405, %v2470
      %v2503 = vadd.f32 %v2406, %v2471
      %v2504 = vadd.f32 %v2407, %v2472
      %v2505 = vadd.f32 %v2408, %v2473
      %v2506 = vadd.f32 %v2409, %v2474
      %v2507 = vadd.f32 %v2410, %v2475
      %v2508 = vadd.f32 %v2411, %v2476
      %v2509 = vadd.f32 %v2412, %v2477
      %v2510 = vadd.f32 %v2413, %v2478
      %v2511 = vadd.f32 %v2414, %v2479
      %v2512 = vadd.f32 %v2415, %v2480
      %v2513 = vadd.f32 %v2416, %v2481
      %v2514 = vadd.f32 %v2417, %v2482
      %v2515 = vadd.f32 %v2418, %v2483
      %v2516 = vadd.f32 %v2419, %v2484
      %v2517 = vadd.f32 %v2420, %v2485
      %v2518 = vadd.f32 %v2421, %v2486
      %v2519 = vld [vmem:[%s2130 + $0x4] sm:$0xff]
      %v2520 = vld [vmem:[%s2130 + $0xc] sm:$0xff]
      %v2521 = vld [vmem:[%s2130 + $0x1c] sm:$0xff]
      %v2522 = vld [vmem:[%s2130 + $0x24] sm:$0xff]
      %v2523 = vld [vmem:[%s2130 + $0x34] sm:$0xff]
      %v2524 = vld [vmem:[%s2130 + $0x3c] sm:$0xff]
      %v2525 = vld [vmem:[%s2130 + $0x4c] sm:$0xff]
      %v2526 = vld [vmem:[%s2130 + $0x54] sm:$0xff]
      %v2527 = vld [vmem:[%s2130 + $0x64] sm:$0xff]
      %v2528 = vld [vmem:[%s2130 + $0x6c] sm:$0xff]
      %v2529 = vld [vmem:[%s2130 + $0x7c] sm:$0xff]
      %v2530 = vld [vmem:[%s2130 + $0x84] sm:$0xff]
      %v2531 = vld [vmem:[%s2130 + $0x94] sm:$0xff]
      %v2532 = vld [vmem:[%s2130 + $0x9c] sm:$0xff]
      %v2533 = vld [vmem:[%s2130 + $0xac] sm:$0xff]
      %v2534 = vld [vmem:[%s2130 + $0xb4] sm:$0xff]
      %v2535 = vld [vmem:[%s2130 + $0xc4] sm:$0xff]
      %v2536 = vld [vmem:[%s2130 + $0xcc] sm:$0xff]
      %v2537 = vld [vmem:[%s2130 + $0xdc] sm:$0xff]
      %v2538 = vld [vmem:[%s2130 + $0xe4] sm:$0xff]
      %v2539 = vld [vmem:[%s2130 + $0xf4] sm:$0xff]
      %v2540 = vld [vmem:[%s2130 + $0xfc] sm:$0xff]
      %v2541 = vld [vmem:[%s2130 + $0x10c] sm:$0xff]
      %v2542 = vld [vmem:[%s2130 + $0x114] sm:$0xff]
      %v2543 = vld [vmem:[%s2130 + $0x124] sm:$0xff]
      %v2544 = vld [vmem:[%s2130 + $0x12c] sm:$0xff]
      %v2545 = vld [vmem:[%s2130 + $0x13c] sm:$0xff]
      %v2546 = vld [vmem:[%s2130 + $0x144] sm:$0xff]
      %v2547 = vld [vmem:[%s2130 + $0x154] sm:$0xff]
      %v2548 = vld [vmem:[%s2130 + $0x15c] sm:$0xff]
      %v2549 = vld [vmem:[%s2130 + $0x16c] sm:$0xff]
      %v2550 = vld [vmem:[%s2130 + $0x174] sm:$0xff]
      %v2551 = vperm.slane %v218, 0
      %v2552 = vmul.f32 %v2519, %v2551
      %v2553 = vmul.f32 %v2520, %v2551
      %v2554 = vmul.f32 %v2521, %v2551
      %v2555 = vmul.f32 %v2522, %v2551
      %v2556 = vmul.f32 %v2523, %v2551
      %v2557 = vmul.f32 %v2524, %v2551
      %v2558 = vmul.f32 %v2525, %v2551
      %v2559 = vmul.f32 %v2526, %v2551
      %v2560 = vmul.f32 %v2527, %v2551
      %v2561 = vmul.f32 %v2528, %v2551
      %v2562 = vmul.f32 %v2529, %v2551
      %v2563 = vmul.f32 %v2530, %v2551
      %v2564 = vmul.f32 %v2531, %v2551
      %v2565 = vmul.f32 %v2532, %v2551
      %v2566 = vmul.f32 %v2533, %v2551
      %v2567 = vmul.f32 %v2534, %v2551
      %v2568 = vmul.f32 %v2535, %v2551
      %v2569 = vmul.f32 %v2536, %v2551
      %v2570 = vmul.f32 %v2537, %v2551
      %v2571 = vmul.f32 %v2538, %v2551
      %v2572 = vmul.f32 %v2539, %v2551
      %v2573 = vmul.f32 %v2540, %v2551
      %v2574 = vmul.f32 %v2541, %v2551
      %v2575 = vmul.f32 %v2542, %v2551
      %v2576 = vmul.f32 %v2543, %v2551
      %v2577 = vmul.f32 %v2544, %v2551
      %v2578 = vmul.f32 %v2545, %v2551
      %v2579 = vmul.f32 %v2546, %v2551
      %v2580 = vmul.f32 %v2547, %v2551
      %v2581 = vmul.f32 %v2548, %v2551
      %v2582 = vmul.f32 %v2549, %v2551
      %v2583 = vmul.f32 %v2550, %v2551
      %v2584 = vadd.f32 %v2487, %v2552
      %v2585 = vadd.f32 %v2488, %v2553
      %v2586 = vadd.f32 %v2489, %v2554
      %v2587 = vadd.f32 %v2490, %v2555
      %v2588 = vadd.f32 %v2491, %v2556
      %v2589 = vadd.f32 %v2492, %v2557
      %v2590 = vadd.f32 %v2493, %v2558
      %v2591 = vadd.f32 %v2494, %v2559
      %v2592 = vadd.f32 %v2495, %v2560
      %v2593 = vadd.f32 %v2496, %v2561
      %v2594 = vadd.f32 %v2497, %v2562
      %v2595 = vadd.f32 %v2498, %v2563
      %v2596 = vadd.f32 %v2499, %v2564
      %v2597 = vadd.f32 %v2500, %v2565
      %v2598 = vadd.f32 %v2501, %v2566
      %v2599 = vadd.f32 %v2502, %v2567
      %v2600 = vadd.f32 %v2503, %v2568
      %v2601 = vadd.f32 %v2504, %v2569
      %v2602 = vadd.f32 %v2505, %v2570
      %v2603 = vadd.f32 %v2506, %v2571
      %v2604 = vadd.f32 %v2507, %v2572
      %v2605 = vadd.f32 %v2508, %v2573
      %v2606 = vadd.f32 %v2509, %v2574
      %v2607 = vadd.f32 %v2510, %v2575
      %v2608 = vadd.f32 %v2511, %v2576
      %v2609 = vadd.f32 %v2512, %v2577
      %v2610 = vadd.f32 %v2513, %v2578
      %v2611 = vadd.f32 %v2514, %v2579
      %v2612 = vadd.f32 %v2515, %v2580
      %v2613 = vadd.f32 %v2516, %v2581
      %v2614 = vadd.f32 %v2517, %v2582
      %v2615 = vadd.f32 %v2518, %v2583
      %vm2616 = vcmask 261120
      %2617 = vst.msk [vmem:[%s208] sm:$0xff] %vm2616, %v2584
      %2618 = vst.msk [vmem:[%s208 + $0x8] sm:$0xff] %vm2616, %v2585
      %2619 = vst.msk [vmem:[%s208 + $0x10] sm:$0xff] %vm2616, %v2586
      %2620 = vst.msk [vmem:[%s208 + $0x18] sm:$0xff] %vm2616, %v2587
      %2621 = vst.msk [vmem:[%s208 + $0x20] sm:$0xff] %vm2616, %v2588
      %2622 = vst.msk [vmem:[%s208 + $0x28] sm:$0xff] %vm2616, %v2589
      %2623 = vst.msk [vmem:[%s208 + $0x30] sm:$0xff] %vm2616, %v2590
      %2624 = vst.msk [vmem:[%s208 + $0x38] sm:$0xff] %vm2616, %v2591
      %2625 = vst.msk [vmem:[%s208 + $0x40] sm:$0xff] %vm2616, %v2592
      %2626 = vst.msk [vmem:[%s208 + $0x48] sm:$0xff] %vm2616, %v2593
      %2627 = vst.msk [vmem:[%s208 + $0x50] sm:$0xff] %vm2616, %v2594
      %2628 = vst.msk [vmem:[%s208 + $0x58] sm:$0xff] %vm2616, %v2595
      %2629 = vst.msk [vmem:[%s208 + $0x60] sm:$0xff] %vm2616, %v2596
      %2630 = vst.msk [vmem:[%s208 + $0x68] sm:$0xff] %vm2616, %v2597
      %2631 = vst.msk [vmem:[%s208 + $0x70] sm:$0xff] %vm2616, %v2598
      %2632 = vst.msk [vmem:[%s208 + $0x78] sm:$0xff] %vm2616, %v2599
      %2633 = vst.msk [vmem:[%s208 + $0x80] sm:$0xff] %vm2616, %v2600
      %2634 = vst.msk [vmem:[%s208 + $0x88] sm:$0xff] %vm2616, %v2601
      %2635 = vst.msk [vmem:[%s208 + $0x90] sm:$0xff] %vm2616, %v2602
      %2636 = vst.msk [vmem:[%s208 + $0x98] sm:$0xff] %vm2616, %v2603
      %2637 = vst.msk [vmem:[%s208 + $0xa0] sm:$0xff] %vm2616, %v2604
      %2638 = vst.msk [vmem:[%s208 + $0xa8] sm:$0xff] %vm2616, %v2605
      %2639 = vst.msk [vmem:[%s208 + $0xb0] sm:$0xff] %vm2616, %v2606
      %2640 = vst.msk [vmem:[%s208 + $0xb8] sm:$0xff] %vm2616, %v2607
      %2641 = vst.msk [vmem:[%s208 + $0xc0] sm:$0xff] %vm2616, %v2608
      %2642 = vst.msk [vmem:[%s208 + $0xc8] sm:$0xff] %vm2616, %v2609
      %2643 = vst.msk [vmem:[%s208 + $0xd0] sm:$0xff] %vm2616, %v2610
      %2644 = vst.msk [vmem:[%s208 + $0xd8] sm:$0xff] %vm2616, %v2611
      %2645 = vst.msk [vmem:[%s208 + $0xe0] sm:$0xff] %vm2616, %v2612
      %2646 = vst.msk [vmem:[%s208 + $0xe8] sm:$0xff] %vm2616, %v2613
      %2647 = vst.msk [vmem:[%s208 + $0xf0] sm:$0xff] %vm2616, %v2614
      %2648 = vst.msk [vmem:[%s208 + $0xf8] sm:$0xff] %vm2616, %v2615
      %v2649 = vsel %vm2616, %v2584, 0.0
      %v2650 = vsel %vm2616, %v2585, 0.0
      %v2651 = vadd.f32 %v2649, %v2650
      %v2652 = vsel %vm2616, %v2586, 0.0
      %v2653 = vadd.f32 %v2651, %v2652
      %v2654 = vsel %vm2616, %v2587, 0.0
      %v2655 = vadd.f32 %v2653, %v2654
      %v2656 = vsel %vm2616, %v2588, 0.0
      %v2657 = vadd.f32 %v2655, %v2656
      %v2658 = vsel %vm2616, %v2589, 0.0
      %v2659 = vadd.f32 %v2657, %v2658
      %v2660 = vsel %vm2616, %v2590, 0.0
      %v2661 = vadd.f32 %v2659, %v2660
      %v2662 = vsel %vm2616, %v2591, 0.0
      %v2663 = vadd.f32 %v2661, %v2662
      %v2664 = vsel %vm2616, %v2592, 0.0
      %v2665 = vadd.f32 %v2663, %v2664
      %v2666 = vsel %vm2616, %v2593, 0.0
      %v2667 = vadd.f32 %v2665, %v2666
      %v2668 = vsel %vm2616, %v2594, 0.0
      %v2669 = vadd.f32 %v2667, %v2668
      %v2670 = vsel %vm2616, %v2595, 0.0
      %v2671 = vadd.f32 %v2669, %v2670
      %v2672 = vsel %vm2616, %v2596, 0.0
      %v2673 = vadd.f32 %v2671, %v2672
      %v2674 = vsel %vm2616, %v2597, 0.0
      %v2675 = vadd.f32 %v2673, %v2674
      %v2676 = vsel %vm2616, %v2598, 0.0
      %v2677 = vadd.f32 %v2675, %v2676
      %v2678 = vsel %vm2616, %v2599, 0.0
      %v2679 = vadd.f32 %v2677, %v2678
      %v2680 = vsel %vm2616, %v2600, 0.0
      %v2681 = vadd.f32 %v2679, %v2680
      %v2682 = vsel %vm2616, %v2601, 0.0
      %v2683 = vadd.f32 %v2681, %v2682
      %v2684 = vsel %vm2616, %v2602, 0.0
      %v2685 = vadd.f32 %v2683, %v2684
      %v2686 = vsel %vm2616, %v2603, 0.0
      %v2687 = vadd.f32 %v2685, %v2686
      %v2688 = vsel %vm2616, %v2604, 0.0
      %v2689 = vadd.f32 %v2687, %v2688
      %v2690 = vsel %vm2616, %v2605, 0.0
      %v2691 = vadd.f32 %v2689, %v2690
      %v2692 = vsel %vm2616, %v2606, 0.0
      %v2693 = vadd.f32 %v2691, %v2692
      %v2694 = vsel %vm2616, %v2607, 0.0
      %v2695 = vadd.f32 %v2693, %v2694
      %v2696 = vsel %vm2616, %v2608, 0.0
      %v2697 = vadd.f32 %v2695, %v2696
      %v2698 = vsel %vm2616, %v2609, 0.0
      %v2699 = vadd.f32 %v2697, %v2698
      %v2700 = vsel %vm2616, %v2610, 0.0
      %v2701 = vadd.f32 %v2699, %v2700
      %v2702 = vsel %vm2616, %v2611, 0.0
      %v2703 = vadd.f32 %v2701, %v2702
      %v2704 = vsel %vm2616, %v2612, 0.0
      %v2705 = vadd.f32 %v2703, %v2704
      %v2706 = vsel %vm2616, %v2613, 0.0
      %v2707 = vadd.f32 %v2705, %v2706
      %v2708 = vsel %vm2616, %v2614, 0.0
      %v2709 = vadd.f32 %v2707, %v2708
      %v2710 = vsel %vm2616, %v2615, 0.0
      %v2711 = vadd.f32 %v2709, %v2710
      %v2712 = vrot.slane %v2711, 4
      %v2713 = vadd.f32 %v2711, %v2712
      %v2714 = vrot.slane %v2713, 2
      %v2715 = vadd.f32 %v2713, %v2714
      %v2716 = vrot.slane %v2715, 1
      %v2717 = vadd.f32 %v2715, %v2716
      %vm2718 = vcmask 253952
      %2719 = vst.msk [vmem:[%s211] sm:$0x1] %vm2718, %v2717
      %v2720 = vmul.f32 %v2584, %v2584
      %v2721 = vmul.f32 %v2585, %v2585
      %v2722 = vmul.f32 %v2586, %v2586
      %v2723 = vmul.f32 %v2587, %v2587
      %v2724 = vmul.f32 %v2588, %v2588
      %v2725 = vmul.f32 %v2589, %v2589
      %v2726 = vmul.f32 %v2590, %v2590
      %v2727 = vmul.f32 %v2591, %v2591
      %v2728 = vmul.f32 %v2592, %v2592
      %v2729 = vmul.f32 %v2593, %v2593
      %v2730 = vmul.f32 %v2594, %v2594
      %v2731 = vmul.f32 %v2595, %v2595
      %v2732 = vmul.f32 %v2596, %v2596
      %v2733 = vmul.f32 %v2597, %v2597
      %v2734 = vmul.f32 %v2598, %v2598
      %v2735 = vmul.f32 %v2599, %v2599
      %v2736 = vmul.f32 %v2600, %v2600
      %v2737 = vmul.f32 %v2601, %v2601
      %v2738 = vmul.f32 %v2602, %v2602
      %v2739 = vmul.f32 %v2603, %v2603
      %v2740 = vmul.f32 %v2604, %v2604
      %v2741 = vmul.f32 %v2605, %v2605
      %v2742 = vmul.f32 %v2606, %v2606
      %v2743 = vmul.f32 %v2607, %v2607
      %v2744 = vmul.f32 %v2608, %v2608
      %v2745 = vmul.f32 %v2609, %v2609
      %v2746 = vmul.f32 %v2610, %v2610
      %v2747 = vmul.f32 %v2611, %v2611
      %v2748 = vmul.f32 %v2612, %v2612
      %v2749 = vmul.f32 %v2613, %v2613
      %v2750 = vmul.f32 %v2614, %v2614
      %v2751 = vmul.f32 %v2615, %v2615
      %v2752 = vsel %vm2616, %v2720, 0.0
      %v2753 = vsel %vm2616, %v2721, 0.0
      %v2754 = vadd.f32 %v2752, %v2753
      %v2755 = vsel %vm2616, %v2722, 0.0
      %v2756 = vadd.f32 %v2754, %v2755
      %v2757 = vsel %vm2616, %v2723, 0.0
      %v2758 = vadd.f32 %v2756, %v2757
      %v2759 = vsel %vm2616, %v2724, 0.0
      %v2760 = vadd.f32 %v2758, %v2759
      %v2761 = vsel %vm2616, %v2725, 0.0
      %v2762 = vadd.f32 %v2760, %v2761
      %v2763 = vsel %vm2616, %v2726, 0.0
      %v2764 = vadd.f32 %v2762, %v2763
      %v2765 = vsel %vm2616, %v2727, 0.0
      %v2766 = vadd.f32 %v2764, %v2765
      %v2767 = vsel %vm2616, %v2728, 0.0
      %v2768 = vadd.f32 %v2766, %v2767
      %v2769 = vsel %vm2616, %v2729, 0.0
      %v2770 = vadd.f32 %v2768, %v2769
      %v2771 = vsel %vm2616, %v2730, 0.0
      %v2772 = vadd.f32 %v2770, %v2771
      %v2773 = vsel %vm2616, %v2731, 0.0
      %v2774 = vadd.f32 %v2772, %v2773
      %v2775 = vsel %vm2616, %v2732, 0.0
      %v2776 = vadd.f32 %v2774, %v2775
      %v2777 = vsel %vm2616, %v2733, 0.0
      %v2778 = vadd.f32 %v2776, %v2777
      %v2779 = vsel %vm2616, %v2734, 0.0
      %v2780 = vadd.f32 %v2778, %v2779
      %v2781 = vsel %vm2616, %v2735, 0.0
      %v2782 = vadd.f32 %v2780, %v2781
      %v2783 = vsel %vm2616, %v2736, 0.0
      %v2784 = vadd.f32 %v2782, %v2783
      %v2785 = vsel %vm2616, %v2737, 0.0
      %v2786 = vadd.f32 %v2784, %v2785
      %v2787 = vsel %vm2616, %v2738, 0.0
      %v2788 = vadd.f32 %v2786, %v2787
      %v2789 = vsel %vm2616, %v2739, 0.0
      %v2790 = vadd.f32 %v2788, %v2789
      %v2791 = vsel %vm2616, %v2740, 0.0
      %v2792 = vadd.f32 %v2790, %v2791
      %v2793 = vsel %vm2616, %v2741, 0.0
      %v2794 = vadd.f32 %v2792, %v2793
      %v2795 = vsel %vm2616, %v2742, 0.0
      %v2796 = vadd.f32 %v2794, %v2795
      %v2797 = vsel %vm2616, %v2743, 0.0
      %v2798 = vadd.f32 %v2796, %v2797
      %v2799 = vsel %vm2616, %v2744, 0.0
      %v2800 = vadd.f32 %v2798, %v2799
      %v2801 = vsel %vm2616, %v2745, 0.0
      %v2802 = vadd.f32 %v2800, %v2801
      %v2803 = vsel %vm2616, %v2746, 0.0
      %v2804 = vadd.f32 %v2802, %v2803
      %v2805 = vsel %vm2616, %v2747, 0.0
      %v2806 = vadd.f32 %v2804, %v2805
      %v2807 = vsel %vm2616, %v2748, 0.0
      %v2808 = vadd.f32 %v2806, %v2807
      %v2809 = vsel %vm2616, %v2749, 0.0
      %v2810 = vadd.f32 %v2808, %v2809
      %v2811 = vsel %vm2616, %v2750, 0.0
      %v2812 = vadd.f32 %v2810, %v2811
      %v2813 = vsel %vm2616, %v2751, 0.0
      %v2814 = vadd.f32 %v2812, %v2813
      %v2815 = vrot.slane %v2814, 4
      %v2816 = vadd.f32 %v2814, %v2815
      %v2817 = vrot.slane %v2816, 2
      %v2818 = vadd.f32 %v2816, %v2817
      %v2819 = vrot.slane %v2818, 1
      %v2820 = vadd.f32 %v2818, %v2819
      %2821 = vst.msk [vmem:[%s214] sm:$0x1] %vm2718, %v2820
      %p2822 = scmp.lt.s32.totalorder %s16, 1
      %s2823 = scalar_select %p2822, %s16, 1
      %s2824 = smul.addr %s2823, 32
      %s2825 = smul.addr %s2824, 8
      %s2826 = scalar_lea.vmem %s2, %s2825
      %p2827 = scmp.lt.s32.totalorder %s16, 1
      %s2828 = scalar_select %p2827, %s16, 1
      %s2829 = scalar_lea.vmem %s3, %s2828
      %p2830 = scmp.lt.s32.totalorder %s16, 1
      %s2831 = scalar_select %p2830, %s16, 1
      %s2832 = scalar_lea.vmem %s4, %s2831
      // Predicated region
      $region29: #{gsconv_jilian_forward.14} parent=27 // pred_check
        %p2833 = pneg %p81
      $region30: #{gsconv_jilian_forward.14} parent=27 // pred_check_branch
        %2835 = sbr.rel (%p2833) target = $region32
      $region31: #{gsconv_jilian_forward.14} parent=27 // pred_region
        _
      $region32: #{gsconv_jilian_forward.14} parent=27 // pred_fallthru
        _
      // Predicated region
      $region33: #{gsconv_jilian_forward.14} parent=27 // pred_check
        %p2836 = pneg %p107
      $region34: #{gsconv_jilian_forward.14} parent=27 // pred_check_branch
        %2838 = sbr.rel (%p2836) target = $region36
      $region35: #{gsconv_jilian_forward.14} parent=27 // pred_region
        _
      $region36: #{gsconv_jilian_forward.14} parent=27 // pred_fallthru
        _
      // Predicated region
      $region37: #{gsconv_jilian_forward.14} parent=27 // pred_check
        %p2839 = pneg %p133
      $region38: #{gsconv_jilian_forward.14} parent=27 // pred_check_branch
        %2841 = sbr.rel (%p2839) target = $region40
      $region39: #{gsconv_jilian_forward.14} parent=27 // pred_region
        _
      $region40: #{gsconv_jilian_forward.14} parent=27 // pred_fallthru
        _
    $region28: #{gsconv_jilian_forward.14} parent=5 // pred_fallthru
      _
    %p2842 = scmp.le.s32.totalorder 2, %s11
    // Predicated region
    $region41: #{gsconv_jilian_forward.14} parent=5 // pred_check
      %p2843 = pneg %p2842
    $region42: #{gsconv_jilian_forward.14} parent=5 // pred_check_branch
      %2845 = sbr.rel (%p2843) target = $region44
    $region43: #{gsconv_jilian_forward.14} parent=5 // pred_region
      %s2846 = ssub.s32 %s11, 2
      // Predicated region
      $region45: #{gsconv_jilian_forward.14} parent=43 // pred_check
        %p2847 = pneg %p87
      $region46: #{gsconv_jilian_forward.14} parent=43 // pred_check_branch
        %2849 = sbr.rel (%p2847) target = $region48
      $region47: #{gsconv_jilian_forward.14} parent=43 // pred_region
        %p2850 = scmp.lt.s32.totalorder %s17, 1
        %s2851 = scalar_select %p2850, %s17, 1
        %s2852 = smul.addr %s2851, 32
        %s2853 = smul.addr %s2852, 8
        %s2854 = scalar_lea.vmem %s2, %s2853
      $region48: #{gsconv_jilian_forward.14} parent=43 // pred_fallthru
        _
      // Predicated region
      $region49: #{gsconv_jilian_forward.14} parent=43 // pred_check
        %p2855 = pneg %p113
      $region50: #{gsconv_jilian_forward.14} parent=43 // pred_check_branch
        %2857 = sbr.rel (%p2855) target = $region52
      $region51: #{gsconv_jilian_forward.14} parent=43 // pred_region
        %p2858 = scmp.lt.s32.totalorder %s17, 1
        %s2859 = scalar_select %p2858, %s17, 1
        %s2860 = scalar_lea.vmem %s3, %s2859
      $region52: #{gsconv_jilian_forward.14} parent=43 // pred_fallthru
        _
      // Predicated region
      $region53: #{gsconv_jilian_forward.14} parent=43 // pred_check
        %p2861 = pneg %p139
      $region54: #{gsconv_jilian_forward.14} parent=43 // pred_check_branch
        %2863 = sbr.rel (%p2861) target = $region56
      $region55: #{gsconv_jilian_forward.14} parent=43 // pred_region
        %p2864 = scmp.lt.s32.totalorder %s17, 1
        %s2865 = scalar_select %p2864, %s17, 1
        %s2866 = scalar_lea.vmem %s4, %s2865
      $region56: #{gsconv_jilian_forward.14} parent=43 // pred_fallthru
        _
    $region44: #{gsconv_jilian_forward.14} parent=5 // pred_fallthru
      _
  $region6: #{gsconv_jilian_forward.14} parent=0 // loop_footer
    %s15 = sadd.s32 1, %s11
  $region7: #{gsconv_jilian_forward.14} parent=0 // loop_footer_branch
    %10 = sbr.rel target = $region3
  $region8: #{gsconv_jilian_forward.14} parent=0 // loop_exit
    _

</llo_original>
